<compile_context>
chip_gen: v7x
topology: tpu7x:2x2x1
jax: 0.10.0
libtpu: 0.0.40
codegen_flags: <defaults>
</compile_context>

<pallas_src>
import functools

import jax
import jax.numpy as jnp
from jax.experimental import pallas as pl
from jax.experimental.pallas import tpu as pltpu

# 48 MiB: above the 32 MiB scoped default (helps v5e/v6e with 128 MiB physical VMEM)
# while staying comfortably under v7x's 64 MiB physical VMEM.
VMEM_LIMIT = 48 * 1024 * 1024


# ----------------------------------------------------------------------------
# Tiling helpers
# ----------------------------------------------------------------------------
def _pick_lane_tile(n, cap=2048):
    """Largest lane-dense tile (multiple of 128, <= cap) dividing n, else full n."""
    for t in (2048, 1024, 512, 256, 128):
        if t <= cap and n % t == 0:
            return t
    return n


def _pick_query_tile(m):
    """Lane-dense query tile; prefer >=2 tiles so both v7x TensorCores get work."""
    for t in (512, 256, 128):
        if m % t == 0 and m // t >= 2:
            return t
    for t in (512, 256, 128):
        if m % t == 0:
            return t
    return m


# ----------------------------------------------------------------------------
# Pallas kernel 1: 1x1 conv (per-pixel channel matmul), used for proj_q and
# the fused proj_k/proj_v (stacked weights).
# ----------------------------------------------------------------------------
def pointwise_conv_kernel(x_ref, w_ref, b_ref, o_ref):
    # x_ref: (1, Cin, T) bf16   w_ref: (Cout, Cin) bf16   b_ref: (Cout, 1) f32
    y = jnp.dot(w_ref[...], x_ref[0], preferred_element_type=jnp.float32)
    o_ref[0] = (y + b_ref[...]).astype(o_ref.dtype)


def pointwise_conv(x_bcp, w, b, out_dtype=jnp.bfloat16):
    """1x1 conv: (B, Cin, P) -> (B, Cout, P), tiled over (batch, spatial lane tiles)."""
    B, Cin, P = x_bcp.shape
    Cout = w.shape[0]
    T = _pick_lane_tile(P)
    return pl.pallas_call(
        pointwise_conv_kernel,
        out_shape=jax.ShapeDtypeStruct((B, Cout, P), out_dtype),
        grid=(B, P // T),
        in_specs=[
            pl.BlockSpec((1, Cin, T), lambda i, j: (i, 0, j)),
            pl.BlockSpec((Cout, Cin), lambda i, j: (0, 0)),
            pl.BlockSpec((Cout, 1), lambda i, j: (0, 0)),
        ],
        out_specs=pl.BlockSpec((1, Cout, T), lambda i, j: (i, 0, j)),
        compiler_params=pltpu.CompilerParams(
            dimension_semantics=("parallel", "parallel"),
            vmem_limit_bytes=VMEM_LIMIT,
        ),
    )(x_bcp, w, b.reshape(Cout, 1))


# ----------------------------------------------------------------------------
# Pallas kernel 2: deformable bilinear sampling as an MXU matmul against a
# precomputed bilinear-weight matrix (replaces take_along_axis gathers).
# ----------------------------------------------------------------------------
def sample_matmul_kernel(w_ref, x_ref, o_ref):
    # w_ref: (1, Tn, S) bf16 bilinear weights, x_ref: (1, gc, S) bf16, o_ref: (1, gc, Tn)
    y = jax.lax.dot_general(x_ref[0], w_ref[0], (((1,), (1,)), ((), ())),
                            preferred_element_type=jnp.float32)
    o_ref[0] = y.astype(o_ref.dtype)


def sample_matmul(w_sample, x_grp, out_dtype=jnp.bfloat16):
    """x_sampled[g, c, n] = sum_s w_sample[g, n, s] * x_grp[g, c, s]."""
    Bg, Ns, S = w_sample.shape
    gc = x_grp.shape[1]
    Tn = _pick_lane_tile(Ns, cap=1024)
    return pl.pallas_call(
        sample_matmul_kernel,
        out_shape=jax.ShapeDtypeStruct((Bg, gc, Ns), out_dtype),
        grid=(Bg, Ns // Tn),
        in_specs=[
            pl.BlockSpec((1, Tn, S), lambda g, n: (g, n, 0)),
            pl.BlockSpec((1, gc, S), lambda g, n: (g, 0, 0)),
        ],
        out_specs=pl.BlockSpec((1, gc, Tn), lambda g, n: (g, 0, n)),
        compiler_params=pltpu.CompilerParams(
            dimension_semantics=("parallel", "parallel"),
            vmem_limit_bytes=VMEM_LIMIT,
        ),
    )(w_sample, x_grp)


# ----------------------------------------------------------------------------
# Pallas kernel 3: fused attention core.  All heads + dwc-PE residual + proj_out
# in one kernel; k/v/wo/bo stay resident across query tiles.
# ----------------------------------------------------------------------------
def dattn_fused_kernel(q_ref, kv_ref, lepe_ref, wo_ref, bo_ref, y_ref, *, scale):
    # q_ref:    (1, h, Dh, Tm) bf16
    # kv_ref:   (1, 2, h, Dh, Ns) bf16   (stacked proj_k / proj_v outputs)
    # lepe_ref: (1, h, Dh, Tm) bf16      (dwc positional-encoding residual)
    # wo_ref:   (C, C) bf16   bo_ref: (C, 1) f32   y_ref: (1, C, Tm) f32
    h, Dh, Tm = q_ref.shape[1], q_ref.shape[2], q_ref.shape[3]
    C = h * Dh

    q = q_ref[0]                         # (h, Dh, Tm)
    k = kv_ref[0, 0]                     # (h, Dh, Ns)
    v = kv_ref[0, 1]                     # (h, Dh, Ns)

    # scores[h, m, n] = sum_d q[h, d, m] * k[h, d, n]   (bf16 x bf16 -> f32 acc)
    s = jax.lax.dot_general(q, k, (((1,), (1,)), ((0,), (0,))),
                            preferred_element_type=jnp.float32)       # (h, Tm, Ns)
    m = jnp.max(s, axis=-1, keepdims=True)
    p = jnp.exp((s - m) * scale)         # == softmax numerator of (scale * s), f32
    l = jnp.sum(p, axis=-1, keepdims=True)
    p = p * pl.reciprocal(l, approx=True)

    # out[h, d, m] = sum_n v[h, d, n] * p[h, m, n]
    out = jax.lax.dot_general(v.astype(jnp.float32), p,
                              (((2,), (2,)), ((0,), (0,))),
                              preferred_element_type=jnp.float32)     # (h, Dh, Tm)
    out = out + lepe_ref[0].astype(jnp.float32)
    out = out.reshape(C, Tm)

    # fused proj_out: y = wo @ out + bo   (lane-dense (C, Tm) store)
    y = jnp.dot(wo_ref[...], out.astype(jnp.bfloat16),
                preferred_element_type=jnp.float32)
    y_ref[0] = y + bo_ref[...]


def dattn_fused(q_h, kv_h, lepe_h, wo, bo, scale):
    """q_h/lepe_h: (B, h, Dh, M) bf16, kv_h: (B, 2, h, Dh, Ns) bf16 -> (B, C, M) f32."""
    B, Hh, Dh, M = q_h.shape
    Ns = kv_h.shape[-1]
    C = Hh * Dh
    Tm = _pick_query_tile(M)
    kernel = functools.partial(dattn_fused_kernel, scale=scale)
    return pl.pallas_call(
        kernel,
        out_shape=jax.ShapeDtypeStruct((B, C, M), jnp.float32),
        grid=(B, M // Tm),
        in_specs=[
            pl.BlockSpec((1, Hh, Dh, Tm), lambda b, m: (b, 0, 0, m)),
            pl.BlockSpec((1, 2, Hh, Dh, Ns), lambda b, m: (b, 0, 0, 0, 0)),
            pl.BlockSpec((1, Hh, Dh, Tm), lambda b, m: (b, 0, 0, m)),
            pl.BlockSpec((C, C), lambda b, m: (0, 0)),
            pl.BlockSpec((C, 1), lambda b, m: (0, 0)),
        ],
        out_specs=pl.BlockSpec((1, C, Tm), lambda b, m: (b, 0, m)),
        compiler_params=pltpu.CompilerParams(
            dimension_semantics=("parallel", "parallel"),
            vmem_limit_bytes=VMEM_LIMIT,
        ),
    )(q_h, kv_h, lepe_h, wo, bo.reshape(C, 1))


# ----------------------------------------------------------------------------
# Plain-JAX helpers (offset head, dwc-PE conv, bilinear-weight construction)
# ----------------------------------------------------------------------------
def depthwise_conv3x3(x, w, b):
    # x: (N, C, H, W) f32; w: (C, 1, 3, 3); b: (C,)
    c = x.shape[1]
    y = jax.lax.conv_general_dilated(
        x, w, window_strides=(1, 1), padding=((1, 1), (1, 1)),
        dimension_numbers=("NCHW", "OIHW", "NCHW"), feature_group_count=c)
    return y + b[None, :, None, None]


def layernorm_channels(x, gamma, beta, eps=1e-5):
    # LayerNormProxy: LayerNorm over the channel dim of an NCHW tensor.
    mu = jnp.mean(x, axis=1, keepdims=True)
    var = jnp.mean((x - mu) ** 2, axis=1, keepdims=True)
    xn = (x - mu) * jax.lax.rsqrt(var + eps)
    return xn * gamma[None, :, None, None] + beta[None, :, None, None]


def hardswish(x):
    return x * jnp.clip(x + 3.0, 0.0, 6.0) / 6.0


def ref_points(hk, wk):
    ry = (jnp.linspace(0.5, hk - 0.5, hk, dtype=jnp.float32) / (hk - 1.0)) * 2.0 - 1.0
    rx = (jnp.linspace(0.5, wk - 0.5, wk, dtype=jnp.float32) / (wk - 1.0)) * 2.0 - 1.0
    gy, gx = jnp.meshgrid(ry, rx, indexing="ij")
    return jnp.stack((gy, gx), axis=-1)                                # (Hk, Wk, 2) = (y, x)


def bilinear_weight_matrix(pos_xy, H, W):
    """(Bg, Hk, Wk, 2) grid (x, y) in [-1,1] -> (Bg, Ns, H*W) bilinear weights.

    Matches F.grid_sample(mode='bilinear', align_corners=True, padding='zeros'):
    out-of-range corner weights are zeroed (the validity mask is what reproduces
    PyTorch's zero padding).  One-hot construction -- no dynamic gathers.
    """
    # TODO(synk): for very large H*W this dense (Ns x HW) matrix should be tiled /
    # built inside a Pallas gather kernel instead of materialized in HBM.
    Bg, Hk, Wk, _ = pos_xy.shape
    Ns = Hk * Wk
    g = pos_xy.reshape(Bg, Ns, 2).astype(jnp.float32)
    gx = (g[..., 0] + 1.0) * 0.5 * (W - 1)
    gy = (g[..., 1] + 1.0) * 0.5 * (H - 1)
    x0 = jnp.floor(gx)
    y0 = jnp.floor(gy)
    x1 = x0 + 1.0
    y1 = y0 + 1.0
    cols = jax.lax.broadcasted_iota(jnp.int32, (1, 1, H * W), 2)

    def corner(xc, yc, wgt):
        valid = (xc >= 0) & (xc <= W - 1) & (yc >= 0) & (yc <= H - 1)
        xi = jnp.clip(xc, 0, W - 1).astype(jnp.int32)
        yi = jnp.clip(yc, 0, H - 1).astype(jnp.int32)
        idx = (yi * W + xi)[..., None]                                  # (Bg, Ns, 1)
        wv = (wgt * valid.astype(jnp.float32))[..., None]               # (Bg, Ns, 1)
        return jnp.where(cols == idx, wv, 0.0)

    return (corner(x0, y0, (x1 - gx) * (y1 - gy)) +
            corner(x1, y0, (gx - x0) * (y1 - gy)) +
            corner(x0, y1, (x1 - gx) * (gy - y0)) +
            corner(x1, y1, (gx - x0) * (gy - y0)))


def grid_sample_bilinear(img, grid_xy):
    # Reference-path bilinear sampler (take_along_axis gathers), f32.
    n, c, h, w = img.shape
    hg, wg = grid_xy.shape[1], grid_xy.shape[2]
    gx = (grid_xy[..., 0] + 1.0) * 0.5 * (w - 1)
    gy = (grid_xy[..., 1] + 1.0) * 0.5 * (h - 1)
    x0 = jnp.floor(gx)
    y0 = jnp.floor(gy)
    x1 = x0 + 1.0
    y1 = y0 + 1.0
    flat = img.reshape(n, c, h * w)

    def corner(xc, yc, wgt):
        valid = (xc >= 0) & (xc <= w - 1) & (yc >= 0) & (yc <= h - 1)
        xi = jnp.clip(xc, 0, w - 1).astype(jnp.int32)
        yi = jnp.clip(yc, 0, h - 1).astype(jnp.int32)
        idx = jnp.broadcast_to((yi * w + xi).reshape(n, 1, hg * wg), (n, c, hg * wg))
        vals = jnp.take_along_axis(flat, idx, axis=2)
        wm = (wgt * valid.astype(img.dtype)).reshape(n, 1, hg * wg)
        return vals * wm

    out = (corner(x0, y0, (x1 - gx) * (y1 - gy)) +
           corner(x1, y0, (gx - x0) * (y1 - gy)) +
           corner(x0, y1, (x1 - gx) * (gy - y0)) +
           corner(x1, y1, (gx - x0) * (gy - y0)))
    return out.reshape(n, c, hg, wg)


# ----------------------------------------------------------------------------
# Full DAttention forward (use_pallas=False gives the pure-JAX reference path)
# ----------------------------------------------------------------------------
def dattention_forward(x, params, *, n_heads, n_groups, offset_range_factor=4.0,
                       use_pallas=True):
    B, C, H, W = x.shape
    Dh = C // n_heads
    gc = C // n_groups
    scale = Dh ** (-0.5)
    HW = H * W
    cdt = jnp.bfloat16

    # --- single dtype cast per big operand (bf16 storage, f32 accumulation) ---
    xb = x.astype(cdt)
    wq = params["wq"].astype(cdt)
    bq = params["bq"].astype(jnp.float32)
    wkv = jnp.concatenate([params["wk"], params["wv"]], axis=0).astype(cdt)   # (2C, C)
    bkv = jnp.concatenate([params["bk"], params["bv"]], axis=0).astype(jnp.float32)
    wo = params["wo"].astype(cdt)
    bo = params["bo"].astype(jnp.float32)

    def pconv(inp, w, b):
        if use_pallas:
            return pointwise_conv(inp, w, b)
        y = jnp.einsum("oc,bcp->bop", w.astype(jnp.float32), inp.astype(jnp.float32),
                       precision="highest") + b[None, :, None]
        return y.astype(cdt)

    x_flat = xb.reshape(B, C, HW)

    # --- q projection (1x1 conv) ---
    q_flat = pconv(x_flat, wq, bq)                                       # (B, C, HW) bf16
    q = q_flat.reshape(B, C, H, W)

    # --- offset head (tiny; f32) ---
    # TODO(synk): 3x3 depthwise conv + LayerNorm + Hardswish offset head kept in plain JAX
    # (small halo conv; no single-kernel Pallas mapping worth the extra DMA traffic).
    q_off = q.astype(jnp.float32).reshape(B * n_groups, gc, H, W)
    off = depthwise_conv3x3(q_off, params["off_dw_w"], params["off_dw_b"])
    off = layernorm_channels(off, params["off_ln_g"], params["off_ln_b"])
    off = hardswish(off)
    off = jnp.einsum("oc,nchw->nohw", params["off_pw_w"], off,
                     precision="highest")                                # (B*g, 2, Hk, Wk)
    Hk, Wk = off.shape[2], off.shape[3]
    n_sample = Hk * Wk
    off_range = jnp.array([1.0 / (Hk - 1.0), 1.0 / (Wk - 1.0)],
                          jnp.float32).reshape(1, 2, 1, 1)
    off = jnp.tanh(off) * off_range * offset_range_factor
    off = jnp.transpose(off, (0, 2, 3, 1))                               # (B*g, Hk, Wk, 2)=(y,x)
    pos = off + ref_points(Hk, Wk)[None]        # offset_range_factor >= 0 -> no clamp
    pos_xy = pos[..., ::-1]                                              # grid_sample order (x, y)

    # --- deformable bilinear sampling ---
    x_grp = xb.reshape(B * n_groups, gc, HW)
    if use_pallas:
        w_samp = bilinear_weight_matrix(pos_xy, H, W).astype(cdt)        # (Bg, Ns, HW)
        x_sampled = sample_matmul(w_samp, x_grp)                         # (Bg, gc, Ns) bf16
    else:
        x_sampled = grid_sample_bilinear(
            x_grp.reshape(B * n_groups, gc, H, W).astype(jnp.float32), pos_xy)
        x_sampled = x_sampled.reshape(B * n_groups, gc, n_sample).astype(cdt)
    x_sampled = x_sampled.reshape(B, C, n_sample)

    # --- fused k / v projections on sampled points (stacked weights) ---
    kv_flat = pconv(x_sampled, wkv, bkv)                                 # (B, 2C, Ns) bf16

    # --- dwc positional encoding on q (use_pe and dwc_pe) ---
    # TODO(synk): 3x3 depthwise rpe_table conv kept in plain JAX.
    lepe = depthwise_conv3x3(q.astype(jnp.float32), params["rpe_w"], params["rpe_b"])
    lepe = lepe.reshape(B, C, HW).astype(cdt)

    # --- multi-head attention core (+ fused proj_out on the Pallas path) ---
    q_h = q_flat.reshape(B, n_heads, Dh, HW)                             # view, no transpose
    kv_h = kv_flat.reshape(B, 2, n_heads, Dh, n_sample)                  # view, stacked k/v
    lepe_h = lepe.reshape(B, n_heads, Dh, HW)
    if use_pallas:
        y = dattn_fused(q_h, kv_h, lepe_h, wo, bo, scale)                # (B, C, HW) f32
    else:
        qf = q_h.astype(jnp.float32)
        kf = kv_h[:, 0].astype(jnp.float32)
        vf = kv_h[:, 1].astype(jnp.float32)
        attn = jnp.einsum("bhdm,bhdn->bhmn", qf, kf, precision="highest") * scale
        attn = jax.nn.softmax(attn, axis=-1)
        out = jnp.einsum("bhmn,bhdn->bhdm", attn, vf, precision="highest")
        out = (out + lepe_h.astype(jnp.float32)).reshape(B, C, HW).astype(cdt)
        y = (jnp.einsum("oc,bcp->bop", wo.astype(jnp.float32), out.astype(jnp.float32),
                        precision="highest") + bo[None, :, None])

    # attn_drop / proj_drop are identity in eval mode
    return y.reshape(B, C, H, W)


# ----------------------------------------------------------------------------
# Parameter construction (deterministic, in-script)
# ----------------------------------------------------------------------------
def make_params(key, channel, n_groups):
    gc = channel // n_groups
    ks = jax.random.split(key, 15)

    def rnd(k, shape, s=0.1):
        return s * jax.random.normal(k, shape, jnp.float32)

    p = {}
    p["wq"], p["bq"] = rnd(ks[0], (channel, channel)), rnd(ks[1], (channel,), 0.05)
    p["wk"], p["bk"] = rnd(ks[2], (channel, channel)), rnd(ks[3], (channel,), 0.05)
    p["wv"], p["bv"] = rnd(ks[4], (channel, channel)), rnd(ks[5], (channel,), 0.05)
    p["wo"], p["bo"] = rnd(ks[6], (channel, channel)), rnd(ks[7], (channel,), 0.05)
    p["off_dw_w"] = rnd(ks[8], (gc, 1, 3, 3), 0.2)
    p["off_dw_b"] = rnd(ks[9], (gc,), 0.05)
    p["off_ln_g"] = 1.0 + rnd(ks[10], (gc,), 0.05)
    p["off_ln_b"] = rnd(ks[11], (gc,), 0.05)
    p["off_pw_w"] = rnd(ks[12], (2, gc), 0.2)
    p["rpe_w"] = rnd(ks[13], (channel, 1, 3, 3), 0.2)
    p["rpe_b"] = rnd(ks[14], (channel,), 0.05)
    return p


if __name__ == "__main__":
    # Small shapes consistent with the module: channel divisible by n_heads=8 and n_groups=4.
    B, C, H, W = 2, 64, 16, 16
    n_heads, n_groups = 8, 4

    key = jax.random.PRNGKey(0)
    kx, kp = jax.random.split(key)
    x = jax.random.normal(kx, (B, C, H, W), jnp.float32)
    params = make_params(kp, C, n_groups)

    fwd_pallas = jax.jit(functools.partial(
        dattention_forward, n_heads=n_heads, n_groups=n_groups, use_pallas=True))
    fwd_ref = jax.jit(functools.partial(
        dattention_forward, n_heads=n_heads, n_groups=n_groups, use_pallas=False))

    out = jax.block_until_ready(fwd_pallas(x, params))
    ref = jax.block_until_ready(fwd_ref(x, params))

    assert out.shape == (B, C, H, W)
    max_err = float(jnp.max(jnp.abs(out - ref)))
    # bf16 operands / approx reciprocal vs f32 reference: allow ~2e-2.
    assert max_err < 2e-2, f"mismatch vs f32 reference: {max_err}"

    print("KERNEL_OK")
</pallas_src>

<mosaic_0001>
module attributes {stable_mosaic.version = 11 : i64} {
  func.func @pointwise_conv_kernel(%arg0: i32, %arg1: i32, %arg2: memref<1x64x256xbf16, #tpu.memory_space<vmem>>, %arg3: memref<64x64xbf16, #tpu.memory_space<vmem>>, %arg4: memref<64x1xf32, #tpu.memory_space<vmem>>, %arg5: memref<1x64x256xbf16, #tpu.memory_space<vmem>>) attributes {dimension_semantics = [#tpu.dimension_semantics<parallel>, #tpu.dimension_semantics<parallel>], iteration_bounds = array<i64: 2, 1>, scalar_prefetch = 0 : i64, scratch_operands = 0 : i64, tpu.core_type = #tpu.core_type<tc>, window_params = [{transform_indices = @transform_0, window_bounds = array<i64: 1, 64, 256>}, {pipeline_mode = #tpu.pipeline_mode<synchronous>, transform_indices = @transform_1, window_bounds = array<i64: 64, 64>}, {pipeline_mode = #tpu.pipeline_mode<synchronous>, transform_indices = @transform_2, window_bounds = array<i64: 64, 1>}, {transform_indices = @transform_3, window_bounds = array<i64: 1, 64, 256>}]} {
    %c0 = arith.constant 0 : index
    %c0_0 = arith.constant 0 : index
    %0 = vector.load %arg3[%c0, %c0_0] : memref<64x64xbf16, #tpu.memory_space<vmem>>, vector<64x64xbf16>
    %c0_1 = arith.constant 0 : index
    %c0_2 = arith.constant 0 : index
    %c0_3 = arith.constant 0 : index
    %1 = vector.load %arg2[%c0_1, %c0_2, %c0_3] : memref<1x64x256xbf16, #tpu.memory_space<vmem>>, vector<1x64x256xbf16>
    %2 = vector.shape_cast %1 : vector<1x64x256xbf16> to vector<64x256xbf16>
    %cst = arith.constant dense<0.000000e+00> : vector<64x256xf32>
    %3 = tpu.matmul %0, %2, %cst {dimension_numbers = #tpu.dot_dimension_numbers<[1], [0], [0], [1], [0, 0, 1, 1], [], []>} : vector<64x64xbf16>, vector<64x256xbf16>, vector<64x256xf32> -> vector<64x256xf32>
    %c0_4 = arith.constant 0 : index
    %c0_5 = arith.constant 0 : index
    %4 = vector.load %arg4[%c0_4, %c0_5] : memref<64x1xf32, #tpu.memory_space<vmem>>, vector<64x1xf32>
    %5 = vector.broadcast %4 : vector<64x1xf32> to vector<64x256xf32>
    %6 = arith.addf %3, %5 : vector<64x256xf32>
    %7 = arith.truncf %6 : vector<64x256xf32> to vector<64x256xbf16>
    %c0_6 = arith.constant 0 : index
    %c0_7 = arith.constant 0 : index
    %c0_8 = arith.constant 0 : index
    %8 = vector.load %arg5[%c0_6, %c0_7, %c0_8] : memref<1x64x256xbf16, #tpu.memory_space<vmem>>, vector<1x64x256xbf16>
    %9 = vector.shape_cast %8 : vector<1x64x256xbf16> to vector<64x256xbf16>
    %10 = vector.shape_cast %7 : vector<64x256xbf16> to vector<1x64x256xbf16>
    tpu.vector_store %arg5[%c0_6, %c0_7, %c0_8], %10 {strides = array<i32>} : memref<1x64x256xbf16, #tpu.memory_space<vmem>>, vector<1x64x256xbf16>,
    return
  }
  func.func @transform_0(%arg0: i32, %arg1: i32) -> (i32, i32, i32) {
    %c0_i32 = arith.constant 0 : i32
    %c0_i32_0 = arith.constant 0 : i32
    return %arg0, %c0_i32, %arg1 : i32, i32, i32
  }
  func.func @transform_1(%arg0: i32, %arg1: i32) -> (i32, i32) {
    %c0_i32 = arith.constant 0 : i32
    %c0_i32_0 = arith.constant 0 : i32
    %c0_i32_1 = arith.constant 0 : i32
    return %c0_i32, %c0_i32_0 : i32, i32
  }
  func.func @transform_2(%arg0: i32, %arg1: i32) -> (i32, i32) {
    %c0_i32 = arith.constant 0 : i32
    %c0_i32_0 = arith.constant 0 : i32
    %c0_i32_1 = arith.constant 0 : i32
    return %c0_i32, %c0_i32_0 : i32, i32
  }
  func.func @transform_3(%arg0: i32, %arg1: i32) -> (i32, i32, i32) {
    %c0_i32 = arith.constant 0 : i32
    %c0_i32_0 = arith.constant 0 : i32
    return %arg0, %c0_i32, %arg1 : i32, i32, i32
  }
}

module attributes {stable_mosaic.version = 11 : i64} {
  func.func @sample_matmul_kernel(%arg0: i32, %arg1: i32, %arg2: memref<1x256x256xbf16, #tpu.memory_space<vmem>>, %arg3: memref<1x16x256xbf16, #tpu.memory_space<vmem>>, %arg4: memref<1x16x256xbf16, #tpu.memory_space<vmem>>) attributes {dimension_semantics = [#tpu.dimension_semantics<parallel>, #tpu.dimension_semantics<parallel>], iteration_bounds = array<i64: 8, 1>, scalar_prefetch = 0 : i64, scratch_operands = 0 : i64, tpu.core_type = #tpu.core_type<tc>, window_params = [{transform_indices = @transform_0, window_bounds = array<i64: 1, 256, 256>}, {transform_indices = @transform_1, window_bounds = array<i64: 1, 16, 256>}, {transform_indices = @transform_2, window_bounds = array<i64: 1, 16, 256>}]} {
    %c0 = arith.constant 0 : index
    %c0_0 = arith.constant 0 : index
    %c0_1 = arith.constant 0 : index
    %0 = vector.load %arg3[%c0, %c0_0, %c0_1] : memref<1x16x256xbf16, #tpu.memory_space<vmem>>, vector<1x16x256xbf16>
    %1 = vector.shape_cast %0 : vector<1x16x256xbf16> to vector<16x256xbf16>
    %c0_2 = arith.constant 0 : index
    %c0_3 = arith.constant 0 : index
    %c0_4 = arith.constant 0 : index
    %2 = vector.load %arg2[%c0_2, %c0_3, %c0_4] : memref<1x256x256xbf16, #tpu.memory_space<vmem>>, vector<1x256x256xbf16>
    %3 = vector.shape_cast %2 : vector<1x256x256xbf16> to vector<256x256xbf16>
    %cst = arith.constant dense<0.000000e+00> : vector<16x256xf32>
    %4 = tpu.matmul %1, %3, %cst {dimension_numbers = #tpu.dot_dimension_numbers<[1], [1], [0], [0], [0, 0, 1, 0], [], []>} : vector<16x256xbf16>, vector<256x256xbf16>, vector<16x256xf32> -> vector<16x256xf32>
    %5 = arith.truncf %4 : vector<16x256xf32> to vector<16x256xbf16>
    %c0_5 = arith.constant 0 : index
    %c0_6 = arith.constant 0 : index
    %c0_7 = arith.constant 0 : index
    %6 = vector.load %arg4[%c0_5, %c0_6, %c0_7] : memref<1x16x256xbf16, #tpu.memory_space<vmem>>, vector<1x16x256xbf16>
    %7 = vector.shape_cast %6 : vector<1x16x256xbf16> to vector<16x256xbf16>
    %8 = vector.shape_cast %5 : vector<16x256xbf16> to vector<1x16x256xbf16>
    tpu.vector_store %arg4[%c0_5, %c0_6, %c0_7], %8 {strides = array<i32>} : memref<1x16x256xbf16, #tpu.memory_space<vmem>>, vector<1x16x256xbf16>,
    return
  }
  func.func @transform_0(%arg0: i32, %arg1: i32) -> (i32, i32, i32) {
    %c0_i32 = arith.constant 0 : i32
    %c0_i32_0 = arith.constant 0 : i32
    return %arg0, %arg1, %c0_i32 : i32, i32, i32
  }
  func.func @transform_1(%arg0: i32, %arg1: i32) -> (i32, i32, i32) {
    %c0_i32 = arith.constant 0 : i32
    %c0_i32_0 = arith.constant 0 : i32
    %c0_i32_1 = arith.constant 0 : i32
    return %arg0, %c0_i32, %c0_i32_0 : i32, i32, i32
  }
  func.func @transform_2(%arg0: i32, %arg1: i32) -> (i32, i32, i32) {
    %c0_i32 = arith.constant 0 : i32
    %c0_i32_0 = arith.constant 0 : i32
    return %arg0, %c0_i32, %arg1 : i32, i32, i32
  }
}

module attributes {stable_mosaic.version = 11 : i64} {
  func.func @pointwise_conv_kernel(%arg0: i32, %arg1: i32, %arg2: memref<1x64x256xbf16, #tpu.memory_space<vmem>>, %arg3: memref<128x64xbf16, #tpu.memory_space<vmem>>, %arg4: memref<128x1xf32, #tpu.memory_space<vmem>>, %arg5: memref<1x128x256xbf16, #tpu.memory_space<vmem>>) attributes {dimension_semantics = [#tpu.dimension_semantics<parallel>, #tpu.dimension_semantics<parallel>], iteration_bounds = array<i64: 2, 1>, scalar_prefetch = 0 : i64, scratch_operands = 0 : i64, tpu.core_type = #tpu.core_type<tc>, window_params = [{transform_indices = @transform_0, window_bounds = array<i64: 1, 64, 256>}, {pipeline_mode = #tpu.pipeline_mode<synchronous>, transform_indices = @transform_1, window_bounds = array<i64: 128, 64>}, {pipeline_mode = #tpu.pipeline_mode<synchronous>, transform_indices = @transform_2, window_bounds = array<i64: 128, 1>}, {transform_indices = @transform_3, window_bounds = array<i64: 1, 128, 256>}]} {
    %c0 = arith.constant 0 : index
    %c0_0 = arith.constant 0 : index
    %0 = vector.load %arg3[%c0, %c0_0] : memref<128x64xbf16, #tpu.memory_space<vmem>>, vector<128x64xbf16>
    %c0_1 = arith.constant 0 : index
    %c0_2 = arith.constant 0 : index
    %c0_3 = arith.constant 0 : index
    %1 = vector.load %arg2[%c0_1, %c0_2, %c0_3] : memref<1x64x256xbf16, #tpu.memory_space<vmem>>, vector<1x64x256xbf16>
    %2 = vector.shape_cast %1 : vector<1x64x256xbf16> to vector<64x256xbf16>
    %cst = arith.constant dense<0.000000e+00> : vector<128x256xf32>
    %3 = tpu.matmul %0, %2, %cst {dimension_numbers = #tpu.dot_dimension_numbers<[1], [0], [0], [1], [0, 0, 1, 1], [], []>} : vector<128x64xbf16>, vector<64x256xbf16>, vector<128x256xf32> -> vector<128x256xf32>
    %c0_4 = arith.constant 0 : index
    %c0_5 = arith.constant 0 : index
    %4 = vector.load %arg4[%c0_4, %c0_5] : memref<128x1xf32, #tpu.memory_space<vmem>>, vector<128x1xf32>
    %5 = vector.broadcast %4 : vector<128x1xf32> to vector<128x256xf32>
    %6 = arith.addf %3, %5 : vector<128x256xf32>
    %7 = arith.truncf %6 : vector<128x256xf32> to vector<128x256xbf16>
    %c0_6 = arith.constant 0 : index
    %c0_7 = arith.constant 0 : index
    %c0_8 = arith.constant 0 : index
    %8 = vector.load %arg5[%c0_6, %c0_7, %c0_8] : memref<1x128x256xbf16, #tpu.memory_space<vmem>>, vector<1x128x256xbf16>
    %9 = vector.shape_cast %8 : vector<1x128x256xbf16> to vector<128x256xbf16>
    %10 = vector.shape_cast %7 : vector<128x256xbf16> to vector<1x128x256xbf16>
    tpu.vector_store %arg5[%c0_6, %c0_7, %c0_8], %10 {strides = array<i32>} : memref<1x128x256xbf16, #tpu.memory_space<vmem>>, vector<1x128x256xbf16>,
    return
  }
  func.func @transform_0(%arg0: i32, %arg1: i32) -> (i32, i32, i32) {
    %c0_i32 = arith.constant 0 : i32
    %c0_i32_0 = arith.constant 0 : i32
    return %arg0, %c0_i32, %arg1 : i32, i32, i32
  }
  func.func @transform_1(%arg0: i32, %arg1: i32) -> (i32, i32) {
    %c0_i32 = arith.constant 0 : i32
    %c0_i32_0 = arith.constant 0 : i32
    %c0_i32_1 = arith.constant 0 : i32
    return %c0_i32, %c0_i32_0 : i32, i32
  }
  func.func @transform_2(%arg0: i32, %arg1: i32) -> (i32, i32) {
    %c0_i32 = arith.constant 0 : i32
    %c0_i32_0 = arith.constant 0 : i32
    %c0_i32_1 = arith.constant 0 : i32
    return %c0_i32, %c0_i32_0 : i32, i32
  }
  func.func @transform_3(%arg0: i32, %arg1: i32) -> (i32, i32, i32) {
    %c0_i32 = arith.constant 0 : i32
    %c0_i32_0 = arith.constant 0 : i32
    return %arg0, %c0_i32, %arg1 : i32, i32, i32
  }
}

module attributes {stable_mosaic.version = 11 : i64} {
  func.func @dattn_fused_kernel(%arg0: i32, %arg1: i32, %arg2: memref<1x8x8x128xbf16, #tpu.memory_space<vmem>>, %arg3: memref<1x2x8x8x256xbf16, #tpu.memory_space<vmem>>, %arg4: memref<1x8x8x128xbf16, #tpu.memory_space<vmem>>, %arg5: memref<64x64xbf16, #tpu.memory_space<vmem>>, %arg6: memref<64x1xf32, #tpu.memory_space<vmem>>, %arg7: memref<1x64x128xf32, #tpu.memory_space<vmem>>) attributes {dimension_semantics = [#tpu.dimension_semantics<parallel>, #tpu.dimension_semantics<parallel>], iteration_bounds = array<i64: 2, 2>, scalar_prefetch = 0 : i64, scratch_operands = 0 : i64, tpu.core_type = #tpu.core_type<tc>, window_params = [{transform_indices = @transform_0, window_bounds = array<i64: 1, 8, 8, 128>}, {transform_indices = @transform_1, window_bounds = array<i64: 1, 2, 8, 8, 256>}, {transform_indices = @transform_2, window_bounds = array<i64: 1, 8, 8, 128>}, {pipeline_mode = #tpu.pipeline_mode<synchronous>, transform_indices = @transform_3, window_bounds = array<i64: 64, 64>}, {pipeline_mode = #tpu.pipeline_mode<synchronous>, transform_indices = @transform_4, window_bounds = array<i64: 64, 1>}, {transform_indices = @transform_5, window_bounds = array<i64: 1, 64, 128>}]} {
    %c0 = arith.constant 0 : index
    %c0_0 = arith.constant 0 : index
    %c0_1 = arith.constant 0 : index
    %c0_2 = arith.constant 0 : index
    %0 = vector.load %arg2[%c0, %c0_0, %c0_1, %c0_2] : memref<1x8x8x128xbf16, #tpu.memory_space<vmem>>, vector<1x8x8x128xbf16>
    %1 = vector.shape_cast %0 : vector<1x8x8x128xbf16> to vector<8x8x128xbf16>
    %c0_3 = arith.constant 0 : index
    %c0_4 = arith.constant 0 : index
    %c0_5 = arith.constant 0 : index
    %c0_6 = arith.constant 0 : index
    %c0_7 = arith.constant 0 : index
    %2 = vector.load %arg3[%c0_3, %c0_4, %c0_5, %c0_6, %c0_7] : memref<1x2x8x8x256xbf16, #tpu.memory_space<vmem>>, vector<1x1x8x8x256xbf16>
    %3 = vector.shape_cast %2 : vector<1x1x8x8x256xbf16> to vector<8x8x256xbf16>
    %c0_8 = arith.constant 0 : index
    %c1 = arith.constant 1 : index
    %c0_9 = arith.constant 0 : index
    %c0_10 = arith.constant 0 : index
    %c0_11 = arith.constant 0 : index
    %4 = vector.load %arg3[%c0_8, %c1, %c0_9, %c0_10, %c0_11] : memref<1x2x8x8x256xbf16, #tpu.memory_space<vmem>>, vector<1x1x8x8x256xbf16>
    %5 = vector.shape_cast %4 : vector<1x1x8x8x256xbf16> to vector<8x8x256xbf16>
    %cst = arith.constant dense<0.000000e+00> : vector<8x128x256xf32>
    %6 = tpu.matmul %1, %3, %cst {dimension_numbers = #tpu.dot_dimension_numbers<[1], [1], [2], [2], [0, 0, 0, 2, 1, 2], [0], [0]>} : vector<8x8x128xbf16>, vector<8x8x256xbf16>, vector<8x128x256xf32> -> vector<8x128x256xf32>
    %cst_12 = arith.constant dense<0xFF800000> : vector<8x128xf32>
    %7 = vector.multi_reduction <maximumf>, %6, %cst_12 [2] : vector<8x128x256xf32> to vector<8x128xf32>
    %8 = vector.shape_cast %7 : vector<8x128xf32> to vector<8x128x1xf32>
    %9 = vector.broadcast %8 : vector<8x128x1xf32> to vector<8x128x256xf32>
    %10 = arith.subf %6, %9 : vector<8x128x256xf32>
    %cst_13 = arith.constant 0.353553385 : f32
    %11 = vector.broadcast %cst_13 : f32 to vector<8x128x256xf32>
    %12 = arith.mulf %10, %11 : vector<8x128x256xf32>
    %13 = math.exp %12 : vector<8x128x256xf32>
    %cst_14 = arith.constant dense<0.000000e+00> : vector<8x128xf32>
    %14 = vector.multi_reduction <add>, %13, %cst_14 [2] : vector<8x128x256xf32> to vector<8x128xf32>
    %15 = vector.shape_cast %14 : vector<8x128xf32> to vector<8x128x1xf32>
    %16 = tpu.reciprocal %15 {approx = true} : vector<8x128x1xf32> -> vector<8x128x1xf32>
    %17 = vector.broadcast %16 : vector<8x128x1xf32> to vector<8x128x256xf32>
    %18 = arith.mulf %13, %17 : vector<8x128x256xf32>
    %19 = arith.extf %5 : vector<8x8x256xbf16> to vector<8x8x256xf32>
    %cst_15 = arith.constant dense<0.000000e+00> : vector<8x8x128xf32>
    %20 = tpu.matmul %19, %18, %cst_15 {dimension_numbers = #tpu.dot_dimension_numbers<[2], [2], [1], [1], [0, 0, 0, 1, 1, 1], [0], [0]>} : vector<8x8x256xf32>, vector<8x128x256xf32>, vector<8x8x128xf32> -> vector<8x8x128xf32>
    %c0_16 = arith.constant 0 : index
    %c0_17 = arith.constant 0 : index
    %c0_18 = arith.constant 0 : index
    %c0_19 = arith.constant 0 : index
    %21 = vector.load %arg4[%c0_16, %c0_17, %c0_18, %c0_19] : memref<1x8x8x128xbf16, #tpu.memory_space<vmem>>, vector<1x8x8x128xbf16>
    %22 = vector.shape_cast %21 : vector<1x8x8x128xbf16> to vector<8x8x128xbf16>
    %23 = arith.extf %22 : vector<8x8x128xbf16> to vector<8x8x128xf32>
    %24 = arith.addf %20, %23 : vector<8x8x128xf32>
    %25 = vector.shape_cast %24 : vector<8x8x128xf32> to vector<64x128xf32>
    %c0_20 = arith.constant 0 : index
    %c0_21 = arith.constant 0 : index
    %26 = vector.load %arg5[%c0_20, %c0_21] : memref<64x64xbf16, #tpu.memory_space<vmem>>, vector<64x64xbf16>
    %27 = arith.truncf %25 : vector<64x128xf32> to vector<64x128xbf16>
    %cst_22 = arith.constant dense<0.000000e+00> : vector<64x128xf32>
    %28 = tpu.matmul %26, %27, %cst_22 {dimension_numbers = #tpu.dot_dimension_numbers<[1], [0], [0], [1], [0, 0, 1, 1], [], []>} : vector<64x64xbf16>, vector<64x128xbf16>, vector<64x128xf32> -> vector<64x128xf32>
    %c0_23 = arith.constant 0 : index
    %c0_24 = arith.constant 0 : index
    %29 = vector.load %arg6[%c0_23, %c0_24] : memref<64x1xf32, #tpu.memory_space<vmem>>, vector<64x1xf32>
    %30 = vector.broadcast %29 : vector<64x1xf32> to vector<64x128xf32>
    %31 = arith.addf %28, %30 : vector<64x128xf32>
    %c0_25 = arith.constant 0 : index
    %c0_26 = arith.constant 0 : index
    %c0_27 = arith.constant 0 : index
    %32 = vector.load %arg7[%c0_25, %c0_26, %c0_27] : memref<1x64x128xf32, #tpu.memory_space<vmem>>, vector<1x64x128xf32>
    %33 = vector.shape_cast %32 : vector<1x64x128xf32> to vector<64x128xf32>
    %34 = vector.shape_cast %31 : vector<64x128xf32> to vector<1x64x128xf32>
    tpu.vector_store %arg7[%c0_25, %c0_26, %c0_27], %34 {strides = array<i32>} : memref<1x64x128xf32, #tpu.memory_space<vmem>>, vector<1x64x128xf32>,
    return
  }
  func.func @transform_0(%arg0: i32, %arg1: i32) -> (i32, i32, i32, i32) {
    %c0_i32 = arith.constant 0 : i32
    %c0_i32_0 = arith.constant 0 : i32
    %c0_i32_1 = arith.constant 0 : i32
    return %arg0, %c0_i32, %c0_i32_0, %arg1 : i32, i32, i32, i32
  }
  func.func @transform_1(%arg0: i32, %arg1: i32) -> (i32, i32, i32, i32, i32) {
    %c0_i32 = arith.constant 0 : i32
    %c0_i32_0 = arith.constant 0 : i32
    %c0_i32_1 = arith.constant 0 : i32
    %c0_i32_2 = arith.constant 0 : i32
    %c0_i32_3 = arith.constant 0 : i32
    return %arg0, %c0_i32, %c0_i32_0, %c0_i32_1, %c0_i32_2 : i32, i32, i32, i32, i32
  }
  func.func @transform_2(%arg0: i32, %arg1: i32) -> (i32, i32, i32, i32) {
    %c0_i32 = arith.constant 0 : i32
    %c0_i32_0 = arith.constant 0 : i32
    %c0_i32_1 = arith.constant 0 : i32
    return %arg0, %c0_i32, %c0_i32_0, %arg1 : i32, i32, i32, i32
  }
  func.func @transform_3(%arg0: i32, %arg1: i32) -> (i32, i32) {
    %c0_i32 = arith.constant 0 : i32
    %c0_i32_0 = arith.constant 0 : i32
    %c0_i32_1 = arith.constant 0 : i32
    return %c0_i32, %c0_i32_0 : i32, i32
  }
  func.func @transform_4(%arg0: i32, %arg1: i32) -> (i32, i32) {
    %c0_i32 = arith.constant 0 : i32
    %c0_i32_0 = arith.constant 0 : i32
    %c0_i32_1 = arith.constant 0 : i32
    return %c0_i32, %c0_i32_0 : i32, i32
  }
  func.func @transform_5(%arg0: i32, %arg1: i32) -> (i32, i32, i32) {
    %c0_i32 = arith.constant 0 : i32
    %c0_i32_0 = arith.constant 0 : i32
    return %arg0, %c0_i32, %arg1 : i32, i32, i32
  }
}

</mosaic_0001>

<llo_original>
// kernel: dattention_forward.4
$region0: #{dattention_forward.4}
  #allocation0 [shape = 'u32[]', space=smem, size = 0x4, offset = 0x4, fixed_abs, tag = 'smem constant byte address 0x4 - core index']
  #allocation1 [shape = 'u32[144,128]{1,0:T(1,128)}', space=vmem, size = 0x12000, scoped, tag = 'internal scratch']
  %s0 = inlined_call_operand.vmem [shape: bf16[2,64,256], index: 0, kind: input, shape index: {}]
  %s1 = inlined_call_operand.vmem [shape: bf16[64,64], index: 1, kind: input, shape index: {}]
  %s2 = inlined_call_operand.vmem [shape: f32[64,1], index: 2, kind: input, shape index: {}]
  %s3 = inlined_call_operand.vmem [shape: bf16[2,64,256], index: 3, kind: output, shape index: {}]
  %s4 = sld [smem:[#allocation0]]
  $region45: #{dattention_forward.4} parent=0
    _
  %s6 = ssub.s32 1, %s4
  %s7 = scalar_select 0, %s6, %s4
  loop: start=0, step=1, limit=4
  $region2: #{dattention_forward.4} parent=0 // loop_pre_header
    _
  $region3: #{dattention_forward.4} parent=0 // loop_header
    %s9 = sphi 0, %s13
    %p10 = scmp.ge.s32.totalorder %s9, 4
    %s16 = sphi 0, %s28
    %s17 = sphi 0, %s24
    %s18 = sphi 0, %s16
    %s19 = sphi 0, %s17
    %s20 = sphi 0, %s18
    %s21 = sphi 0, %s19
    %s33 = sphi 0, %s35
    %s36 = sphi 0, %s33
    %s37 = sphi 0, %s36
    %s53 = sphi 0, %s37
    %s57 = sphi 0, %s57
    %s59 = sphi 0, %s57
    %s60 = sphi 0, %s59
    %s74 = sphi 0, %s60
    %s78 = sphi 0, %s78
    %s80 = sphi 0, %s78
    %s81 = sphi 0, %s80
    %s95 = sphi 0, %s81
    %s103 = sphi 0, %s105
    %s106 = sphi 0, %s103
    %s107 = sphi 0, %s106
    %s123 = sphi 0, %s107
  $region4: #{dattention_forward.4} parent=0 // loop_header_branch
    %12 = sbr.rel (%p10) target = $region8
  $region5: #{dattention_forward.4} parent=0 // loop_body
    %s14 = ssub.s32 %s9, 1
    %s15 = ssub.s32 %s9, 2
    %s22 = sadd.s32 1, %s17
    %p23 = scmp.ge.s32.totalorder %s22, 1
    %s24 = scalar_select %p23, 0, %s22
    %s25 = sadd.s32 1, %s16
    %s26 = scalar_select %p23, %s25, %s16
    %p27 = scmp.ge.s32.totalorder %s26, 2
    %s28 = scalar_select %p27, 0, %s26
    %s29 = ssub.s32 %s16, %s28
    %s30 = ssub.s32 %s17, %s24
    %s31 = sor.u32 %s29, %s30
    %p32 = scmp.eq.s32.totalorder %s31, 0
    %s34 = sadd.s32 %s33, 1
    %s35 = scalar_select %p32, %s33, %s34
    %p38 = pneg %p32
    %p39 = scmp.eq.s32.totalorder %s9, 1
    %p40 = por %p38, %p39
    %p41 = scmp.ne.s32.totalorder %s33, %s36
    %p42 = scmp.eq.s32.totalorder %s9, 0
    %p43 = por %p41, %p42
    %p44 = scmp.ne.s32.totalorder %s33, %s36
    %p45 = scmp.eq.s32.totalorder %s14, 1
    %p46 = por %p44, %p45
    %p47 = scmp.ne.s32.totalorder %s36, %s37
    %p48 = scmp.eq.s32.totalorder %s14, 0
    %p49 = por %p47, %p48
    %p50 = scmp.ne.s32.totalorder %s36, %s37
    %p51 = scmp.eq.s32.totalorder %s15, 1
    %p52 = por %p50, %p51
    %p54 = scmp.ne.s32.totalorder %s37, %s53
    %p55 = scmp.eq.s32.totalorder %s15, 0
    %p56 = por %p54, %p55
    %s58 = sadd.s32 %s57, 1
    %p61 = scmp.eq.s32.totalorder %s9, 1
    %p62 = scmp.ne.s32.totalorder %s57, %s59
    %p63 = scmp.eq.s32.totalorder %s9, 0
    %p64 = por %p62, %p63
    %p65 = scmp.ne.s32.totalorder %s57, %s59
    %p66 = scmp.eq.s32.totalorder %s14, 1
    %p67 = por %p65, %p66
    %p68 = scmp.ne.s32.totalorder %s59, %s60
    %p69 = scmp.eq.s32.totalorder %s14, 0
    %p70 = por %p68, %p69
    %p71 = scmp.ne.s32.totalorder %s59, %s60
    %p72 = scmp.eq.s32.totalorder %s15, 1
    %p73 = por %p71, %p72
    %p75 = scmp.ne.s32.totalorder %s60, %s74
    %p76 = scmp.eq.s32.totalorder %s15, 0
    %p77 = por %p75, %p76
    %s79 = sadd.s32 %s78, 1
    %p82 = scmp.eq.s32.totalorder %s9, 1
    %p83 = scmp.ne.s32.totalorder %s78, %s80
    %p84 = scmp.eq.s32.totalorder %s9, 0
    %p85 = por %p83, %p84
    %p86 = scmp.ne.s32.totalorder %s78, %s80
    %p87 = scmp.eq.s32.totalorder %s14, 1
    %p88 = por %p86, %p87
    %p89 = scmp.ne.s32.totalorder %s80, %s81
    %p90 = scmp.eq.s32.totalorder %s14, 0
    %p91 = por %p89, %p90
    %p92 = scmp.ne.s32.totalorder %s80, %s81
    %p93 = scmp.eq.s32.totalorder %s15, 1
    %p94 = por %p92, %p93
    %p96 = scmp.ne.s32.totalorder %s81, %s95
    %p97 = scmp.eq.s32.totalorder %s15, 0
    %p98 = por %p96, %p97
    %s99 = ssub.s32 %s16, %s28
    %s100 = ssub.s32 %s17, %s24
    %s101 = sor.u32 %s99, %s100
    %p102 = scmp.eq.s32.totalorder %s101, 0
    %s104 = sadd.s32 %s103, 1
    %s105 = scalar_select %p102, %s103, %s104
    %p108 = pneg %p102
    %p109 = scmp.eq.s32.totalorder %s9, 1
    %p110 = por %p108, %p109
    %p111 = scmp.ne.s32.totalorder %s103, %s106
    %p112 = scmp.eq.s32.totalorder %s9, 0
    %p113 = por %p111, %p112
    %p114 = scmp.ne.s32.totalorder %s103, %s106
    %p115 = scmp.eq.s32.totalorder %s14, 1
    %p116 = por %p114, %p115
    %p117 = scmp.ne.s32.totalorder %s106, %s107
    %p118 = scmp.eq.s32.totalorder %s14, 0
    %p119 = por %p117, %p118
    %p120 = scmp.ne.s32.totalorder %s106, %s107
    %p121 = scmp.eq.s32.totalorder %s15, 1
    %p122 = por %p120, %p121
    %p124 = scmp.ne.s32.totalorder %s107, %s123
    %p125 = scmp.eq.s32.totalorder %s15, 0
    %p126 = por %p124, %p125
    %p127 = scmp.le.s32.totalorder 1, %s9
    %p128 = scmp.lt.s32.totalorder %s9, 3
    %p129 = pnand %p127, %p128
    %p130 = pneg %p129
    // Predicated region
    $region9: #{dattention_forward.4} parent=5 // pred_check
      _
    $region10: #{dattention_forward.4} parent=5 // pred_check_branch
      %132 = sbr.rel (%p129) target = $region12
    $region11: #{dattention_forward.4} parent=5 // pred_region
      %s133 = ssub.s32 %s9, 1
      // Predicated region
      $region13: #{dattention_forward.4} parent=11 // pred_check
        %p134 = pneg %p70
      $region14: #{dattention_forward.4} parent=11 // pred_check_branch
        %136 = sbr.rel (%p134) target = $region16
      $region15: #{dattention_forward.4} parent=11 // pred_region
        _
      $region16: #{dattention_forward.4} parent=11 // pred_fallthru
        _
      // Predicated region
      $region17: #{dattention_forward.4} parent=11 // pred_check
        %p137 = pneg %p91
      $region18: #{dattention_forward.4} parent=11 // pred_check_branch
        %139 = sbr.rel (%p137) target = $region20
      $region19: #{dattention_forward.4} parent=11 // pred_region
        _
      $region20: #{dattention_forward.4} parent=11 // pred_fallthru
        _
    $region12: #{dattention_forward.4} parent=5 // pred_fallthru
      _
    %p140 = scmp.lt.s32.totalorder %s9, 2
    // Predicated region
    $region21: #{dattention_forward.4} parent=5 // pred_check
      %p141 = pneg %p140
    $region22: #{dattention_forward.4} parent=5 // pred_check_branch
      %143 = sbr.rel (%p141) target = $region24
    $region23: #{dattention_forward.4} parent=5 // pred_region
      // Predicated region
      $region25: #{dattention_forward.4} parent=23 // pred_check
        %p144 = pneg %p43
      $region26: #{dattention_forward.4} parent=23 // pred_check_branch
        %146 = sbr.rel (%p144) target = $region28
      $region27: #{dattention_forward.4} parent=23 // pred_region
        %s147 = smul.u32 2, %s17
        %p148 = scmp.lt.s32.totalorder %s16, 1
        %s149 = scalar_select %p148, %s16, 1
        %p150 = scmp.lt.s32.totalorder %s147, 1
        %s151 = scalar_select %p150, %s147, 1
        %s152 = smul.addr %s149, 16
        %s153 = sadd.s32 %s151, %s152
        %s154 = smul.addr %s153, 4
        %s155 = scalar_lea.vmem %s0, %s154
        %s156 = smul.u32 2, %s17
      $region28: #{dattention_forward.4} parent=23 // pred_fallthru
        _
    $region24: #{dattention_forward.4} parent=5 // pred_fallthru
      _
    %p157 = scmp.le.s32.totalorder 1, %s9
    %p158 = scmp.lt.s32.totalorder %s9, 3
    %p159 = pnand %p157, %p158
    %p160 = pneg %p159
    // Predicated region
    $region29: #{dattention_forward.4} parent=5 // pred_check
      _
    $region30: #{dattention_forward.4} parent=5 // pred_check_branch
      %162 = sbr.rel (%p159) target = $region32
    $region31: #{dattention_forward.4} parent=5 // pred_region
      %s163 = ssub.s32 %s9, 1
      %s164 = smul.u32 2, %s19
      %p165 = scmp.lt.s32.totalorder %s18, 1
      %s166 = scalar_select %p165, %s18, 1
      %p167 = scmp.lt.s32.totalorder %s164, 1
      %s168 = scalar_select %p167, %s164, 1
      %s169 = smul.addr %s166, 16
      %s170 = sadd.s32 %s168, %s169
      %s171 = smul.addr %s170, 4
      %s172 = scalar_lea.vmem %s0, %s171
      %p173 = pneg %p49
      %p174 = pneg %p46
      %p175 = pneg %p70
      %p176 = pneg %p67
      %p177 = pneg %p91
      %p178 = pneg %p88
      %p179 = pneg %p119
      %p180 = pneg %p116
      %s181 = smul.u32 2, %s19
      %p182 = scmp.lt.s32.totalorder %s18, 1
      %s183 = scalar_select %p182, %s18, 1
      %p184 = scmp.lt.s32.totalorder %s181, 1
      %s185 = scalar_select %p184, %s181, 1
      %s186 = smul.addr %s183, 16
      %s187 = sadd.s32 %s185, %s186
      %s188 = smul.addr %s187, 4
      %s189 = scalar_lea.vmem %s3, %s188
      %s190 = smul.u32 2, %s19
      %p191 = scmp.lt.s32.totalorder %s18, 1
      %s192 = scalar_select %p191, %s18, 1
      %p193 = scmp.lt.s32.totalorder %s190, 1
      %s194 = scalar_select %p193, %s190, 1
      %s195 = smul.addr %s192, 16
      %s196 = sadd.s32 %s194, %s195
      %s197 = smul.addr %s196, 4
      %s198 = scalar_lea.vmem %s0, %s197
      %s199 = smul.u32 2, %s19
      %s200 = smul.u32 2, %s19
      %p201 = scmp.lt.s32.totalorder %s18, 1
      %s202 = scalar_select %p201, %s18, 1
      %p203 = scmp.lt.s32.totalorder %s200, 1
      %s204 = scalar_select %p203, %s200, 1
      %s205 = smul.addr %s202, 16
      %s206 = sadd.s32 %s204, %s205
      %s207 = smul.addr %s206, 4
      %s208 = scalar_lea.vmem %s3, %s207
      %s209 = smul.u32 2, %s19
      %v211 = vld [vmem:[%s1] sm:$0xf]
      %v212 = vld [vmem:[%s1 + $0x4] sm:$0xf]
      %v213 = vld [vmem:[%s1 + $0x8] sm:$0xf]
      %v214 = vld [vmem:[%s1 + $0xc] sm:$0xf]
      %v215 = vld [vmem:[%s1 + $0x10] sm:$0xf]
      %v216 = vld [vmem:[%s1 + $0x14] sm:$0xf]
      %v217 = vld [vmem:[%s1 + $0x18] sm:$0xf]
      %v218 = vld [vmem:[%s1 + $0x1c] sm:$0xf]
      %v219 = vld [vmem:[%s198] sm:$0xff]
      %v220 = vld [vmem:[%s198 + $0x8] sm:$0xff]
      %v221 = vld [vmem:[%s198 + $0x10] sm:$0xff]
      %v222 = vld [vmem:[%s198 + $0x18] sm:$0xff]
      %v223 = vld [vmem:[%s198 + $0x20] sm:$0xff]
      %v224 = vld [vmem:[%s198 + $0x28] sm:$0xff]
      %v225 = vld [vmem:[%s198 + $0x30] sm:$0xff]
      %v226 = vld [vmem:[%s198 + $0x38] sm:$0xff]
      %v227 = vld [vmem:[%s2] sm:$0xff]
      %v228 = vld [vmem:[%s2 + $0x8] sm:$0xff]
      %v229 = vld [vmem:[%s2 + $0x10] sm:$0xff]
      %v230 = vld [vmem:[%s2 + $0x18] sm:$0xff]
      %v231 = vld [vmem:[%s2 + $0x20] sm:$0xff]
      %v232 = vld [vmem:[%s2 + $0x28] sm:$0xff]
      %v233 = vld [vmem:[%s2 + $0x30] sm:$0xff]
      %v234 = vld [vmem:[%s2 + $0x38] sm:$0xff]
      %236 = vset.pattern.permute.xlu0 0
      %237 = vperm.xlu0 %236, %v227
      %v238 = vpop.permute.xlu0 %237
      %241 = vset.pattern.permute.xlu0 0
      %242 = vperm.xlu0 %241, %v228
      %v243 = vpop.permute.xlu0 %242
      %246 = vset.pattern.permute.xlu0 0
      %247 = vperm.xlu0 %246, %v229
      %v248 = vpop.permute.xlu0 %247
      %251 = vset.pattern.permute.xlu0 0
      %252 = vperm.xlu0 %251, %v230
      %v253 = vpop.permute.xlu0 %252
      %256 = vset.pattern.permute.xlu0 0
      %257 = vperm.xlu0 %256, %v231
      %v258 = vpop.permute.xlu0 %257
      %261 = vset.pattern.permute.xlu0 0
      %262 = vperm.xlu0 %261, %v232
      %v263 = vpop.permute.xlu0 %262
      %266 = vset.pattern.permute.xlu0 0
      %267 = vperm.xlu0 %266, %v233
      %v268 = vpop.permute.xlu0 %267
      %271 = vset.pattern.permute.xlu0 0
      %272 = vperm.xlu0 %271, %v234
      %v273 = vpop.permute.xlu0 %272
      %v283 = vunpack.c.l.b16 %v211
      %v284 = vunpack.c.l.b16 %v212
      %v285 = vunpack.c.l.b16 %v213
      %v286 = vunpack.c.l.b16 %v214
      %v287 = vunpack.c.l.b16 %v215
      %v288 = vunpack.c.l.b16 %v216
      %v289 = vunpack.c.l.b16 %v217
      %v290 = vunpack.c.l.b16 %v218
      %v291 = vpack.c.b16 %v284, %v283
      %v292 = vpack.c.b16 %v286, %v285
      %v293 = vpack.c.b16 %v288, %v287
      %v294 = vpack.c.b16 %v290, %v289
      %v303 = vunpack.c.l.b16 %v219
      %v304 = vunpack.c.h.b16 %v219
      %v305 = vunpack.c.l.b16 %v220
      %v306 = vunpack.c.h.b16 %v220
      %v307 = vunpack.c.l.b16 %v221
      %v308 = vunpack.c.h.b16 %v221
      %v309 = vunpack.c.l.b16 %v222
      %v310 = vunpack.c.h.b16 %v222
      %v311 = vunpack.c.l.b16 %v223
      %v312 = vunpack.c.h.b16 %v223
      %v313 = vunpack.c.l.b16 %v224
      %v314 = vunpack.c.h.b16 %v224
      %v315 = vunpack.c.l.b16 %v225
      %v316 = vunpack.c.h.b16 %v225
      %v317 = vunpack.c.l.b16 %v226
      %v318 = vunpack.c.h.b16 %v226
      %v319 = vpack.c.b16 %v305, %v303
      %v320 = vpack.c.b16 %v306, %v304
      %v321 = vpack.c.b16 %v309, %v307
      %v322 = vpack.c.b16 %v310, %v308
      %v323 = vpack.c.b16 %v313, %v311
      %v324 = vpack.c.b16 %v314, %v312
      %v325 = vpack.c.b16 %v317, %v315
      %v326 = vpack.c.b16 %v318, %v316
      %vm335 = vcmask 523264
      %v337 = vsel %vm335, %v291, 0
      %v340 = vsel %vm335, %v292, 0
      %v343 = vsel %vm335, %v293, 0
      %v346 = vsel %vm335, %v294, 0
      %348 = vmatprep.subr.bf16.mxu0 %v320
      %349 = vmatpush1.bf16.msra.mxu0 %v319
      %350 = vmatprep.subr.bf16.mxu0 %v322
      %351 = vmatpush1.bf16.msra.mxu0 %v321
      %352 = vmatprep.subr.bf16.mxu0 %v324
      %353 = vmatpush1.bf16.msra.mxu0 %v323
      %354 = vmatprep.subr.bf16.mxu0 %v326
      %355 = vmatpush1.bf16.msra.mxu0 %v325
      %356 = vmatprep.subr.bf16.mxu0 0
      %357 = vmatpush1.bf16.msra.mxu0 0
      %358 = vmatprep.subr.bf16.mxu0 0
      %359 = vmatpush1.bf16.msra.mxu0 0
      %360 = vmatprep.subr.bf16.mxu0 0
      %361 = vmatpush1.bf16.msra.mxu0 0
      %362 = vmatprep.subr.bf16.mxu0 0
      %363 = vmatpush1.bf16.msra.mxu0 0
      %364 = vmatprep.subr.bf16.mxu0 0
      %365 = vmatpush1.bf16.msra.mxu0 0
      %366 = vmatprep.subr.bf16.mxu0 0
      %367 = vmatpush1.bf16.msra.mxu0 0
      %368 = vmatprep.subr.bf16.mxu0 0
      %369 = vmatpush1.bf16.msra.mxu0 0
      %370 = vmatprep.subr.bf16.mxu0 0
      %371 = vmatpush1.bf16.msra.mxu0 0
      %372 = vmatprep.subr.bf16.mxu0 0
      %373 = vmatpush1.bf16.msra.mxu0 0
      %374 = vmatprep.subr.bf16.mxu0 0
      %375 = vmatpush1.bf16.msra.mxu0 0
      %376 = vmatprep.subr.bf16.mxu0 0
      %377 = vmatpush1.bf16.msra.mxu0 0
      %378 = vmatprep.subr.bf16.mxu0 0
      %379 = vmatpush1.bf16.msra.mxu0 0
      %380 = vmatprep.mubr.bf16.mxu0 0
      %381 = vmatmul.mubr.bf16.gmra.mrb[0].mxu0 %v337
      %v382 = vpop.f32.mrb[0].mxu0
      %v383 = vadd.f32 %v238, %v382
      %v384 = vpop.f32.mrb[0].mxu0
      %v385 = vadd.f32 %v238, %v384
      %v386 = vpop.f32.mrb[0].mxu0
      %v387 = vadd.f32 %v243, %v386
      %v388 = vpop.f32.mrb[0].mxu0
      %v389 = vadd.f32 %v243, %v388
      %390 = vmatprep.mubr.bf16.mxu0 0
      %391 = vmatmul.mubr.bf16.gmra.mrb[0].mxu0 %v340
      %v392 = vpop.f32.mrb[0].mxu0
      %v393 = vadd.f32 %v248, %v392
      %v394 = vpop.f32.mrb[0].mxu0
      %v395 = vadd.f32 %v248, %v394
      %v396 = vpop.f32.mrb[0].mxu0
      %v397 = vadd.f32 %v253, %v396
      %v398 = vpop.f32.mrb[0].mxu0
      %v399 = vadd.f32 %v253, %v398
      %400 = vmatprep.mubr.bf16.mxu0 0
      %401 = vmatmul.mubr.bf16.gmra.mrb[0].mxu0 %v343
      %v402 = vpop.f32.mrb[0].mxu0
      %v403 = vadd.f32 %v258, %v402
      %v404 = vpop.f32.mrb[0].mxu0
      %v405 = vadd.f32 %v258, %v404
      %v406 = vpop.f32.mrb[0].mxu0
      %v407 = vadd.f32 %v263, %v406
      %v408 = vpop.f32.mrb[0].mxu0
      %v409 = vadd.f32 %v263, %v408
      %410 = vmatprep.mubr.bf16.mxu0 0
      %411 = vmatmul.mubr.bf16.gmra.mrb[0].mxu0 %v346
      %v412 = vpop.f32.mrb[0].mxu0
      %v413 = vadd.f32 %v268, %v412
      %v414 = vpop.f32.mrb[0].mxu0
      %v415 = vadd.f32 %v268, %v414
      %v416 = vpop.f32.mrb[0].mxu0
      %v417 = vadd.f32 %v273, %v416
      %v418 = vpop.f32.mrb[0].mxu0
      %v419 = vadd.f32 %v273, %v418
      %420 = vdwg.mxu0
      %v421 = vpack.c.bf16 %v387, %v383
      %v422 = vpack.c.bf16 %v389, %v385
      %v423 = vpack.c.bf16 %v397, %v393
      %v424 = vpack.c.bf16 %v399, %v395
      %v425 = vpack.c.bf16 %v407, %v403
      %v426 = vpack.c.bf16 %v409, %v405
      %v427 = vpack.c.bf16 %v417, %v413
      %v428 = vpack.c.bf16 %v419, %v415
      %v437 = vunpack.c.l.b16 %v421
      %v438 = vunpack.c.l.b16 %v422
      %v439 = vunpack.c.h.b16 %v421
      %v440 = vunpack.c.h.b16 %v422
      %v441 = vunpack.c.l.b16 %v423
      %v442 = vunpack.c.l.b16 %v424
      %v443 = vunpack.c.h.b16 %v423
      %v444 = vunpack.c.h.b16 %v424
      %v445 = vunpack.c.l.b16 %v425
      %v446 = vunpack.c.l.b16 %v426
      %v447 = vunpack.c.h.b16 %v425
      %v448 = vunpack.c.h.b16 %v426
      %v449 = vunpack.c.l.b16 %v427
      %v450 = vunpack.c.l.b16 %v428
      %v451 = vunpack.c.h.b16 %v427
      %v452 = vunpack.c.h.b16 %v428
      %v453 = vpack.c.b16 %v438, %v437
      %v454 = vpack.c.b16 %v440, %v439
      %v455 = vpack.c.b16 %v442, %v441
      %v456 = vpack.c.b16 %v444, %v443
      %v457 = vpack.c.b16 %v446, %v445
      %v458 = vpack.c.b16 %v448, %v447
      %v459 = vpack.c.b16 %v450, %v449
      %v460 = vpack.c.b16 %v452, %v451
      %469 = vst [vmem:[%s208] sm:$0xff] %v453
      %470 = vst [vmem:[%s208 + $0x8] sm:$0xff] %v454
      %471 = vst [vmem:[%s208 + $0x10] sm:$0xff] %v455
      %472 = vst [vmem:[%s208 + $0x18] sm:$0xff] %v456
      %473 = vst [vmem:[%s208 + $0x20] sm:$0xff] %v457
      %474 = vst [vmem:[%s208 + $0x28] sm:$0xff] %v458
      %475 = vst [vmem:[%s208 + $0x30] sm:$0xff] %v459
      %476 = vst [vmem:[%s208 + $0x38] sm:$0xff] %v460
      %s477 = smul.u32 2, %s19
      %p478 = scmp.lt.s32.totalorder %s18, 1
      %s479 = scalar_select %p478, %s18, 1
      %p480 = scmp.lt.s32.totalorder %s477, 1
      %s481 = scalar_select %p480, %s477, 1
      %s482 = smul.addr %s479, 16
      %s483 = sadd.s32 %s481, %s482
      %s484 = smul.addr %s483, 4
      %s485 = scalar_lea.vmem %s3, %s484
      // Predicated region
      $region33: #{dattention_forward.4} parent=31 // pred_check
        %p486 = pneg %p116
      $region34: #{dattention_forward.4} parent=31 // pred_check_branch
        %488 = sbr.rel (%p486) target = $region36
      $region35: #{dattention_forward.4} parent=31 // pred_region
        %s489 = smul.u32 2, %s19
      $region36: #{dattention_forward.4} parent=31 // pred_fallthru
        _
    $region32: #{dattention_forward.4} parent=5 // pred_fallthru
      _
    %p490 = scmp.le.s32.totalorder 2, %s9
    // Predicated region
    $region37: #{dattention_forward.4} parent=5 // pred_check
      %p491 = pneg %p490
    $region38: #{dattention_forward.4} parent=5 // pred_check_branch
      %493 = sbr.rel (%p491) target = $region40
    $region39: #{dattention_forward.4} parent=5 // pred_region
      %s494 = ssub.s32 %s9, 2
      // Predicated region
      $region41: #{dattention_forward.4} parent=39 // pred_check
        %p495 = pneg %p122
      $region42: #{dattention_forward.4} parent=39 // pred_check_branch
        %497 = sbr.rel (%p495) target = $region44
      $region43: #{dattention_forward.4} parent=39 // pred_region
        %s498 = smul.u32 2, %s21
        %p499 = scmp.lt.s32.totalorder %s20, 1
        %s500 = scalar_select %p499, %s20, 1
        %p501 = scmp.lt.s32.totalorder %s498, 1
        %s502 = scalar_select %p501, %s498, 1
        %s503 = smul.addr %s500, 16
        %s504 = sadd.s32 %s502, %s503
        %s505 = smul.addr %s504, 4
        %s506 = scalar_lea.vmem %s3, %s505
      $region44: #{dattention_forward.4} parent=39 // pred_fallthru
        _
    $region40: #{dattention_forward.4} parent=5 // pred_fallthru
      _
  $region6: #{dattention_forward.4} parent=0 // loop_footer
    %s13 = sadd.s32 1, %s9
  $region7: #{dattention_forward.4} parent=0 // loop_footer_branch
    %8 = sbr.rel target = $region3
  $region8: #{dattention_forward.4} parent=0 // loop_exit
    _

// kernel: dattention_forward.5
$region0: #{dattention_forward.5}
  #allocation0 [shape = 'u32[]', space=smem, size = 0x4, offset = 0x4, fixed_abs, tag = 'smem constant byte address 0x4 - core index']
  #allocation1 [shape = 'u32[144,128]{1,0:T(1,128)}', space=vmem, size = 0x12000, scoped, tag = 'internal scratch']
  %s0 = inlined_call_operand.vmem [shape: bf16[8,256,256], index: 0, kind: input, shape index: {}]
  %s1 = inlined_call_operand.vmem [shape: bf16[8,16,256], index: 1, kind: input, shape index: {}]
  %s2 = inlined_call_operand.vmem [shape: bf16[8,16,256], index: 2, kind: output, shape index: {}]
  %s3 = sld [smem:[#allocation0]]
  $region41: #{dattention_forward.5} parent=0
    _
  %s5 = ssub.s32 1, %s3
  %s6 = scalar_select 0, %s5, %s3
  loop: start=0, step=1, limit=10
  $region2: #{dattention_forward.5} parent=0 // loop_pre_header
    _
  $region3: #{dattention_forward.5} parent=0 // loop_header
    %s8 = sphi 0, %s12
    %p9 = scmp.ge.s32.totalorder %s8, 10
    %s15 = sphi 0, %s27
    %s16 = sphi 0, %s23
    %s17 = sphi 0, %s15
    %s18 = sphi 0, %s16
    %s19 = sphi 0, %s17
    %s20 = sphi 0, %s18
    %s32 = sphi 0, %s34
    %s35 = sphi 0, %s32
    %s36 = sphi 0, %s35
    %s52 = sphi 0, %s36
    %s58 = sphi 0, %s60
    %s61 = sphi 0, %s58
    %s62 = sphi 0, %s61
    %s78 = sphi 0, %s62
    %s86 = sphi 0, %s88
    %s89 = sphi 0, %s86
    %s90 = sphi 0, %s89
    %s106 = sphi 0, %s90
  $region4: #{dattention_forward.5} parent=0 // loop_header_branch
    %11 = sbr.rel (%p9) target = $region8
  $region5: #{dattention_forward.5} parent=0 // loop_body
    %s13 = ssub.s32 %s8, 1
    %s14 = ssub.s32 %s8, 2
    %s21 = sadd.s32 1, %s16
    %p22 = scmp.ge.s32.totalorder %s21, 1
    %s23 = scalar_select %p22, 0, %s21
    %s24 = sadd.s32 1, %s15
    %s25 = scalar_select %p22, %s24, %s15
    %p26 = scmp.ge.s32.totalorder %s25, 8
    %s27 = scalar_select %p26, 0, %s25
    %s28 = ssub.s32 %s15, %s27
    %s29 = ssub.s32 %s16, %s23
    %s30 = sor.u32 %s28, %s29
    %p31 = scmp.eq.s32.totalorder %s30, 0
    %s33 = sadd.s32 %s32, 1
    %s34 = scalar_select %p31, %s32, %s33
    %p37 = pneg %p31
    %p38 = scmp.eq.s32.totalorder %s8, 7
    %p39 = por %p37, %p38
    %p40 = scmp.ne.s32.totalorder %s32, %s35
    %p41 = scmp.eq.s32.totalorder %s8, 0
    %p42 = por %p40, %p41
    %p43 = scmp.ne.s32.totalorder %s32, %s35
    %p44 = scmp.eq.s32.totalorder %s13, 7
    %p45 = por %p43, %p44
    %p46 = scmp.ne.s32.totalorder %s35, %s36
    %p47 = scmp.eq.s32.totalorder %s13, 0
    %p48 = por %p46, %p47
    %p49 = scmp.ne.s32.totalorder %s35, %s36
    %p50 = scmp.eq.s32.totalorder %s14, 7
    %p51 = por %p49, %p50
    %p53 = scmp.ne.s32.totalorder %s36, %s52
    %p54 = scmp.eq.s32.totalorder %s14, 0
    %p55 = por %p53, %p54
    %s56 = ssub.s32 %s15, %s27
    %p57 = scmp.eq.s32.totalorder %s56, 0
    %s59 = sadd.s32 %s58, 1
    %s60 = scalar_select %p57, %s58, %s59
    %p63 = pneg %p57
    %p64 = scmp.eq.s32.totalorder %s8, 7
    %p65 = por %p63, %p64
    %p66 = scmp.ne.s32.totalorder %s58, %s61
    %p67 = scmp.eq.s32.totalorder %s8, 0
    %p68 = por %p66, %p67
    %p69 = scmp.ne.s32.totalorder %s58, %s61
    %p70 = scmp.eq.s32.totalorder %s13, 7
    %p71 = por %p69, %p70
    %p72 = scmp.ne.s32.totalorder %s61, %s62
    %p73 = scmp.eq.s32.totalorder %s13, 0
    %p74 = por %p72, %p73
    %p75 = scmp.ne.s32.totalorder %s61, %s62
    %p76 = scmp.eq.s32.totalorder %s14, 7
    %p77 = por %p75, %p76
    %p79 = scmp.ne.s32.totalorder %s62, %s78
    %p80 = scmp.eq.s32.totalorder %s14, 0
    %p81 = por %p79, %p80
    %s82 = ssub.s32 %s15, %s27
    %s83 = ssub.s32 %s16, %s23
    %s84 = sor.u32 %s82, %s83
    %p85 = scmp.eq.s32.totalorder %s84, 0
    %s87 = sadd.s32 %s86, 1
    %s88 = scalar_select %p85, %s86, %s87
    %p91 = pneg %p85
    %p92 = scmp.eq.s32.totalorder %s8, 7
    %p93 = por %p91, %p92
    %p94 = scmp.ne.s32.totalorder %s86, %s89
    %p95 = scmp.eq.s32.totalorder %s8, 0
    %p96 = por %p94, %p95
    %p97 = scmp.ne.s32.totalorder %s86, %s89
    %p98 = scmp.eq.s32.totalorder %s13, 7
    %p99 = por %p97, %p98
    %p100 = scmp.ne.s32.totalorder %s89, %s90
    %p101 = scmp.eq.s32.totalorder %s13, 0
    %p102 = por %p100, %p101
    %p103 = scmp.ne.s32.totalorder %s89, %s90
    %p104 = scmp.eq.s32.totalorder %s14, 7
    %p105 = por %p103, %p104
    %p107 = scmp.ne.s32.totalorder %s90, %s106
    %p108 = scmp.eq.s32.totalorder %s14, 0
    %p109 = por %p107, %p108
    %p110 = scmp.le.s32.totalorder 1, %s8
    %p111 = scmp.lt.s32.totalorder %s8, 9
    %p112 = pnand %p110, %p111
    %p113 = pneg %p112
    // Predicated region
    $region9: #{dattention_forward.5} parent=5 // pred_check
      _
    $region10: #{dattention_forward.5} parent=5 // pred_check_branch
      %115 = sbr.rel (%p112) target = $region12
    $region11: #{dattention_forward.5} parent=5 // pred_region
      %s116 = ssub.s32 %s8, 1
    $region12: #{dattention_forward.5} parent=5 // pred_fallthru
      _
    %p117 = scmp.lt.s32.totalorder %s8, 8
    // Predicated region
    $region13: #{dattention_forward.5} parent=5 // pred_check
      %p118 = pneg %p117
    $region14: #{dattention_forward.5} parent=5 // pred_check_branch
      %120 = sbr.rel (%p118) target = $region16
    $region15: #{dattention_forward.5} parent=5 // pred_region
      // Predicated region
      $region17: #{dattention_forward.5} parent=15 // pred_check
        %p121 = pneg %p42
      $region18: #{dattention_forward.5} parent=15 // pred_check_branch
        %123 = sbr.rel (%p121) target = $region20
      $region19: #{dattention_forward.5} parent=15 // pred_region
        %s124 = smul.u32 32, %s16
        %p125 = scmp.lt.s32.totalorder %s15, 7
        %s126 = scalar_select %p125, %s15, 7
        %p127 = scmp.lt.s32.totalorder %s124, 31
        %s128 = scalar_select %p127, %s124, 31
        %s129 = smul.addr %s128, 2
        %s130 = smul.addr %s126, 64
        %s131 = sadd.s32 %s129, %s130
        %s132 = smul.addr %s131, 4
        %s133 = scalar_lea.vmem %s0, %s132
        %s134 = smul.u32 32, %s16
      $region20: #{dattention_forward.5} parent=15 // pred_fallthru
        _
      // Predicated region
      $region21: #{dattention_forward.5} parent=15 // pred_check
        %p135 = pneg %p68
      $region22: #{dattention_forward.5} parent=15 // pred_check_branch
        %137 = sbr.rel (%p135) target = $region24
      $region23: #{dattention_forward.5} parent=15 // pred_region
        %p138 = scmp.lt.s32.totalorder %s15, 7
        %s139 = scalar_select %p138, %s15, 7
        %s140 = smul.addr %s139, 4
        %s141 = smul.addr %s140, 4
        %s142 = scalar_lea.vmem %s1, %s141
      $region24: #{dattention_forward.5} parent=15 // pred_fallthru
        _
    $region16: #{dattention_forward.5} parent=5 // pred_fallthru
      _
    %p143 = scmp.le.s32.totalorder 1, %s8
    %p144 = scmp.lt.s32.totalorder %s8, 9
    %p145 = pnand %p143, %p144
    %p146 = pneg %p145
    // Predicated region
    $region25: #{dattention_forward.5} parent=5 // pred_check
      _
    $region26: #{dattention_forward.5} parent=5 // pred_check_branch
      %148 = sbr.rel (%p145) target = $region28
    $region27: #{dattention_forward.5} parent=5 // pred_region
      %s149 = ssub.s32 %s8, 1
      %s150 = smul.u32 32, %s18
      %p151 = scmp.lt.s32.totalorder %s17, 7
      %s152 = scalar_select %p151, %s17, 7
      %p153 = scmp.lt.s32.totalorder %s150, 31
      %s154 = scalar_select %p153, %s150, 31
      %s155 = smul.addr %s154, 2
      %s156 = smul.addr %s152, 64
      %s157 = sadd.s32 %s155, %s156
      %s158 = smul.addr %s157, 4
      %s159 = scalar_lea.vmem %s0, %s158
      %p160 = pneg %p48
      %p161 = pneg %p45
      %p162 = scmp.lt.s32.totalorder %s17, 7
      %s163 = scalar_select %p162, %s17, 7
      %s164 = smul.addr %s163, 4
      %s165 = smul.addr %s164, 4
      %s166 = scalar_lea.vmem %s1, %s165
      %p167 = pneg %p74
      %p168 = pneg %p71
      %p169 = pneg %p102
      %p170 = pneg %p99
      %s171 = smul.u32 2, %s18
      %p172 = scmp.lt.s32.totalorder %s17, 7
      %s173 = scalar_select %p172, %s17, 7
      %p174 = scmp.lt.s32.totalorder %s171, 1
      %s175 = scalar_select %p174, %s171, 1
      %s176 = smul.addr %s173, 4
      %s177 = sadd.s32 %s175, %s176
      %s178 = smul.addr %s177, 4
      %s179 = scalar_lea.vmem %s2, %s178
      %s180 = smul.u32 32, %s18
      %p181 = scmp.lt.s32.totalorder %s17, 7
      %s182 = scalar_select %p181, %s17, 7
      %p183 = scmp.lt.s32.totalorder %s180, 31
      %s184 = scalar_select %p183, %s180, 31
      %s185 = smul.addr %s184, 2
      %s186 = smul.addr %s182, 64
      %s187 = sadd.s32 %s185, %s186
      %s188 = smul.addr %s187, 4
      %s189 = scalar_lea.vmem %s0, %s188
      %s190 = smul.u32 32, %s18
      %p191 = scmp.lt.s32.totalorder %s17, 7
      %s192 = scalar_select %p191, %s17, 7
      %s193 = smul.addr %s192, 4
      %s194 = smul.addr %s193, 4
      %s195 = scalar_lea.vmem %s1, %s194
      %s196 = smul.u32 2, %s18
      %p197 = scmp.lt.s32.totalorder %s17, 7
      %s198 = scalar_select %p197, %s17, 7
      %p199 = scmp.lt.s32.totalorder %s196, 1
      %s200 = scalar_select %p199, %s196, 1
      %s201 = smul.addr %s198, 4
      %s202 = sadd.s32 %s200, %s201
      %s203 = smul.addr %s202, 4
      %s204 = scalar_lea.vmem %s2, %s203
      %s205 = smul.u32 2, %s18
      %v206 = vld [vmem:[%s195] sm:$0xff]
      %v207 = vld [vmem:[%s195 + $0x8] sm:$0xff]
      %v208 = vld [vmem:[%s189] sm:$0xff]
      %v209 = vld [vmem:[%s189 + $0x8] sm:$0xff]
      %v210 = vld [vmem:[%s189 + $0x10] sm:$0xff]
      %v211 = vld [vmem:[%s189 + $0x18] sm:$0xff]
      %v212 = vld [vmem:[%s189 + $0x20] sm:$0xff]
      %v213 = vld [vmem:[%s189 + $0x28] sm:$0xff]
      %v214 = vld [vmem:[%s189 + $0x30] sm:$0xff]
      %v215 = vld [vmem:[%s189 + $0x38] sm:$0xff]
      %v216 = vld [vmem:[%s189 + $0x40] sm:$0xff]
      %v217 = vld [vmem:[%s189 + $0x48] sm:$0xff]
      %v218 = vld [vmem:[%s189 + $0x50] sm:$0xff]
      %v219 = vld [vmem:[%s189 + $0x58] sm:$0xff]
      %v220 = vld [vmem:[%s189 + $0x60] sm:$0xff]
      %v221 = vld [vmem:[%s189 + $0x68] sm:$0xff]
      %v222 = vld [vmem:[%s189 + $0x70] sm:$0xff]
      %v223 = vld [vmem:[%s189 + $0x78] sm:$0xff]
      %v224 = vld [vmem:[%s189 + $0x80] sm:$0xff]
      %v225 = vld [vmem:[%s189 + $0x88] sm:$0xff]
      %v226 = vld [vmem:[%s189 + $0x90] sm:$0xff]
      %v227 = vld [vmem:[%s189 + $0x98] sm:$0xff]
      %v228 = vld [vmem:[%s189 + $0xa0] sm:$0xff]
      %v229 = vld [vmem:[%s189 + $0xa8] sm:$0xff]
      %v230 = vld [vmem:[%s189 + $0xb0] sm:$0xff]
      %v231 = vld [vmem:[%s189 + $0xb8] sm:$0xff]
      %v232 = vld [vmem:[%s189 + $0xc0] sm:$0xff]
      %v233 = vld [vmem:[%s189 + $0xc8] sm:$0xff]
      %v234 = vld [vmem:[%s189 + $0xd0] sm:$0xff]
      %v235 = vld [vmem:[%s189 + $0xd8] sm:$0xff]
      %v236 = vld [vmem:[%s189 + $0xe0] sm:$0xff]
      %v237 = vld [vmem:[%s189 + $0xe8] sm:$0xff]
      %v238 = vld [vmem:[%s189 + $0xf0] sm:$0xff]
      %v239 = vld [vmem:[%s189 + $0xf8] sm:$0xff]
      %v242 = vunpack.c.l.b16 %v206
      %v243 = vunpack.c.h.b16 %v206
      %v244 = vunpack.c.l.b16 %v207
      %v245 = vunpack.c.h.b16 %v207
      %v246 = vpack.c.b16 %v244, %v242
      %v247 = vpack.c.b16 %v245, %v243
      %v282 = vunpack.c.l.b16 %v208
      %v283 = vunpack.c.h.b16 %v208
      %v284 = vunpack.c.l.b16 %v209
      %v285 = vunpack.c.h.b16 %v209
      %v286 = vunpack.c.l.b16 %v210
      %v287 = vunpack.c.h.b16 %v210
      %v288 = vunpack.c.l.b16 %v211
      %v289 = vunpack.c.h.b16 %v211
      %v290 = vunpack.c.l.b16 %v212
      %v291 = vunpack.c.h.b16 %v212
      %v292 = vunpack.c.l.b16 %v213
      %v293 = vunpack.c.h.b16 %v213
      %v294 = vunpack.c.l.b16 %v214
      %v295 = vunpack.c.h.b16 %v214
      %v296 = vunpack.c.l.b16 %v215
      %v297 = vunpack.c.h.b16 %v215
      %v298 = vunpack.c.l.b16 %v216
      %v299 = vunpack.c.h.b16 %v216
      %v300 = vunpack.c.l.b16 %v217
      %v301 = vunpack.c.h.b16 %v217
      %v302 = vunpack.c.l.b16 %v218
      %v303 = vunpack.c.h.b16 %v218
      %v304 = vunpack.c.l.b16 %v219
      %v305 = vunpack.c.h.b16 %v219
      %v306 = vunpack.c.l.b16 %v220
      %v307 = vunpack.c.h.b16 %v220
      %v308 = vunpack.c.l.b16 %v221
      %v309 = vunpack.c.h.b16 %v221
      %v310 = vunpack.c.l.b16 %v222
      %v311 = vunpack.c.h.b16 %v222
      %v312 = vunpack.c.l.b16 %v223
      %v313 = vunpack.c.h.b16 %v223
      %v314 = vunpack.c.l.b16 %v224
      %v315 = vunpack.c.h.b16 %v224
      %v316 = vunpack.c.l.b16 %v225
      %v317 = vunpack.c.h.b16 %v225
      %v318 = vunpack.c.l.b16 %v226
      %v319 = vunpack.c.h.b16 %v226
      %v320 = vunpack.c.l.b16 %v227
      %v321 = vunpack.c.h.b16 %v227
      %v322 = vunpack.c.l.b16 %v228
      %v323 = vunpack.c.h.b16 %v228
      %v324 = vunpack.c.l.b16 %v229
      %v325 = vunpack.c.h.b16 %v229
      %v326 = vunpack.c.l.b16 %v230
      %v327 = vunpack.c.h.b16 %v230
      %v328 = vunpack.c.l.b16 %v231
      %v329 = vunpack.c.h.b16 %v231
      %v330 = vunpack.c.l.b16 %v232
      %v331 = vunpack.c.h.b16 %v232
      %v332 = vunpack.c.l.b16 %v233
      %v333 = vunpack.c.h.b16 %v233
      %v334 = vunpack.c.l.b16 %v234
      %v335 = vunpack.c.h.b16 %v234
      %v336 = vunpack.c.l.b16 %v235
      %v337 = vunpack.c.h.b16 %v235
      %v338 = vunpack.c.l.b16 %v236
      %v339 = vunpack.c.h.b16 %v236
      %v340 = vunpack.c.l.b16 %v237
      %v341 = vunpack.c.h.b16 %v237
      %v342 = vunpack.c.l.b16 %v238
      %v343 = vunpack.c.h.b16 %v238
      %v344 = vunpack.c.l.b16 %v239
      %v345 = vunpack.c.h.b16 %v239
      %v346 = vpack.c.b16 %v284, %v282
      %v347 = vpack.c.b16 %v285, %v283
      %v348 = vpack.c.b16 %v288, %v286
      %v349 = vpack.c.b16 %v289, %v287
      %v350 = vpack.c.b16 %v292, %v290
      %v351 = vpack.c.b16 %v293, %v291
      %v352 = vpack.c.b16 %v296, %v294
      %v353 = vpack.c.b16 %v297, %v295
      %v354 = vpack.c.b16 %v300, %v298
      %v355 = vpack.c.b16 %v301, %v299
      %v356 = vpack.c.b16 %v304, %v302
      %v357 = vpack.c.b16 %v305, %v303
      %v358 = vpack.c.b16 %v308, %v306
      %v359 = vpack.c.b16 %v309, %v307
      %v360 = vpack.c.b16 %v312, %v310
      %v361 = vpack.c.b16 %v313, %v311
      %v362 = vpack.c.b16 %v316, %v314
      %v363 = vpack.c.b16 %v317, %v315
      %v364 = vpack.c.b16 %v320, %v318
      %v365 = vpack.c.b16 %v321, %v319
      %v366 = vpack.c.b16 %v324, %v322
      %v367 = vpack.c.b16 %v325, %v323
      %v368 = vpack.c.b16 %v328, %v326
      %v369 = vpack.c.b16 %v329, %v327
      %v370 = vpack.c.b16 %v332, %v330
      %v371 = vpack.c.b16 %v333, %v331
      %v372 = vpack.c.b16 %v336, %v334
      %v373 = vpack.c.b16 %v337, %v335
      %v374 = vpack.c.b16 %v340, %v338
      %v375 = vpack.c.b16 %v341, %v339
      %v376 = vpack.c.b16 %v344, %v342
      %v377 = vpack.c.b16 %v345, %v343
      %410 = vmatprep.subr.bf16.mxu0 %v347
      %411 = vmatpush1.bf16.xpose.msra.mxu0 %v346
      %412 = vmatprep.subr.bf16.mxu0 %v349
      %413 = vmatpush1.bf16.xpose.msra.mxu0 %v348
      %414 = vmatprep.subr.bf16.mxu0 %v351
      %415 = vmatpush1.bf16.xpose.msra.mxu0 %v350
      %416 = vmatprep.subr.bf16.mxu0 %v353
      %417 = vmatpush1.bf16.xpose.msra.mxu0 %v352
      %418 = vmatprep.subr.bf16.mxu0 %v355
      %419 = vmatpush1.bf16.xpose.msra.mxu0 %v354
      %420 = vmatprep.subr.bf16.mxu0 %v357
      %421 = vmatpush1.bf16.xpose.msra.mxu0 %v356
      %422 = vmatprep.subr.bf16.mxu0 %v359
      %423 = vmatpush1.bf16.xpose.msra.mxu0 %v358
      %424 = vmatprep.subr.bf16.mxu0 %v361
      %425 = vmatpush1.bf16.xpose.msra.mxu0 %v360
      %426 = vmatprep.subr.bf16.mxu0 %v363
      %427 = vmatpush1.bf16.xpose.msra.mxu0 %v362
      %428 = vmatprep.subr.bf16.mxu0 %v365
      %429 = vmatpush1.bf16.xpose.msra.mxu0 %v364
      %430 = vmatprep.subr.bf16.mxu0 %v367
      %431 = vmatpush1.bf16.xpose.msra.mxu0 %v366
      %432 = vmatprep.subr.bf16.mxu0 %v369
      %433 = vmatpush1.bf16.xpose.msra.mxu0 %v368
      %434 = vmatprep.subr.bf16.mxu0 %v371
      %435 = vmatpush1.bf16.xpose.msra.mxu0 %v370
      %436 = vmatprep.subr.bf16.mxu0 %v373
      %437 = vmatpush1.bf16.xpose.msra.mxu0 %v372
      %438 = vmatprep.subr.bf16.mxu0 %v375
      %439 = vmatpush1.bf16.xpose.msra.mxu0 %v374
      %440 = vmatprep.subr.bf16.mxu0 %v377
      %441 = vmatpush1.bf16.xpose.msra.mxu0 %v376
      %442 = vmatprep.mubr.bf16.mxu0 %v247
      %443 = vmatmul.mubr.bf16.gmra.mrb[0].mxu0 %v246
      %v444 = vpop.f32.mrb[0].mxu0
      %v445 = vadd.f32 0.0, %v444
      %v446 = vpop.f32.mrb[0].mxu0
      %v447 = vadd.f32 0.0, %v446
      %v448 = vpop.f32.mrb[0].mxu0
      %v449 = vadd.f32 0.0, %v448
      %v450 = vpop.f32.mrb[0].mxu0
      %v451 = vadd.f32 0.0, %v450
      %452 = vdwg.mxu0
      %v453 = vpack.c.bf16 %v449, %v445
      %v454 = vpack.c.bf16 %v451, %v447
      %v457 = vunpack.c.l.b16 %v453
      %v458 = vunpack.c.l.b16 %v454
      %v459 = vunpack.c.h.b16 %v453
      %v460 = vunpack.c.h.b16 %v454
      %v461 = vpack.c.b16 %v458, %v457
      %v462 = vpack.c.b16 %v460, %v459
      %465 = vst [vmem:[%s204] sm:$0xff] %v461
      %466 = vst [vmem:[%s204 + $0x8] sm:$0xff] %v462
      %s467 = smul.u32 2, %s18
      %p468 = scmp.lt.s32.totalorder %s17, 7
      %s469 = scalar_select %p468, %s17, 7
      %p470 = scmp.lt.s32.totalorder %s467, 1
      %s471 = scalar_select %p470, %s467, 1
      %s472 = smul.addr %s469, 4
      %s473 = sadd.s32 %s471, %s472
      %s474 = smul.addr %s473, 4
      %s475 = scalar_lea.vmem %s2, %s474
      // Predicated region
      $region29: #{dattention_forward.5} parent=27 // pred_check
        %p476 = pneg %p99
      $region30: #{dattention_forward.5} parent=27 // pred_check_branch
        %478 = sbr.rel (%p476) target = $region32
      $region31: #{dattention_forward.5} parent=27 // pred_region
        %s479 = smul.u32 2, %s18
      $region32: #{dattention_forward.5} parent=27 // pred_fallthru
        _
    $region28: #{dattention_forward.5} parent=5 // pred_fallthru
      _
    %p480 = scmp.le.s32.totalorder 2, %s8
    // Predicated region
    $region33: #{dattention_forward.5} parent=5 // pred_check
      %p481 = pneg %p480
    $region34: #{dattention_forward.5} parent=5 // pred_check_branch
      %483 = sbr.rel (%p481) target = $region36
    $region35: #{dattention_forward.5} parent=5 // pred_region
      %s484 = ssub.s32 %s8, 2
      // Predicated region
      $region37: #{dattention_forward.5} parent=35 // pred_check
        %p485 = pneg %p105
      $region38: #{dattention_forward.5} parent=35 // pred_check_branch
        %487 = sbr.rel (%p485) target = $region40
      $region39: #{dattention_forward.5} parent=35 // pred_region
        %s488 = smul.u32 2, %s20
        %p489 = scmp.lt.s32.totalorder %s19, 7
        %s490 = scalar_select %p489, %s19, 7
        %p491 = scmp.lt.s32.totalorder %s488, 1
        %s492 = scalar_select %p491, %s488, 1
        %s493 = smul.addr %s490, 4
        %s494 = sadd.s32 %s492, %s493
        %s495 = smul.addr %s494, 4
        %s496 = scalar_lea.vmem %s2, %s495
      $region40: #{dattention_forward.5} parent=35 // pred_fallthru
        _
    $region36: #{dattention_forward.5} parent=5 // pred_fallthru
      _
  $region6: #{dattention_forward.5} parent=0 // loop_footer
    %s12 = sadd.s32 1, %s8
  $region7: #{dattention_forward.5} parent=0 // loop_footer_branch
    %7 = sbr.rel target = $region3
  $region8: #{dattention_forward.5} parent=0 // loop_exit
    _

// kernel: dattention_forward.6
$region0: #{dattention_forward.6}
  #allocation0 [shape = 'u32[]', space=smem, size = 0x4, offset = 0x4, fixed_abs, tag = 'smem constant byte address 0x4 - core index']
  #allocation1 [shape = 'u32[144,128]{1,0:T(1,128)}', space=vmem, size = 0x12000, scoped, tag = 'internal scratch']
  %s0 = inlined_call_operand.vmem [shape: bf16[2,64,256], index: 0, kind: input, shape index: {}]
  %s1 = inlined_call_operand.vmem [shape: bf16[128,64], index: 1, kind: input, shape index: {}]
  %s2 = inlined_call_operand.vmem [shape: f32[128,1], index: 2, kind: input, shape index: {}]
  %s3 = inlined_call_operand.vmem [shape: bf16[2,128,256], index: 3, kind: output, shape index: {}]
  %s4 = sld [smem:[#allocation0]]
  $region45: #{dattention_forward.6} parent=0
    _
  %s6 = ssub.s32 1, %s4
  %s7 = scalar_select 0, %s6, %s4
  loop: start=0, step=1, limit=4
  $region2: #{dattention_forward.6} parent=0 // loop_pre_header
    _
  $region3: #{dattention_forward.6} parent=0 // loop_header
    %s9 = sphi 0, %s13
    %p10 = scmp.ge.s32.totalorder %s9, 4
    %s16 = sphi 0, %s28
    %s17 = sphi 0, %s24
    %s18 = sphi 0, %s16
    %s19 = sphi 0, %s17
    %s20 = sphi 0, %s18
    %s21 = sphi 0, %s19
    %s33 = sphi 0, %s35
    %s36 = sphi 0, %s33
    %s37 = sphi 0, %s36
    %s53 = sphi 0, %s37
    %s57 = sphi 0, %s57
    %s59 = sphi 0, %s57
    %s60 = sphi 0, %s59
    %s74 = sphi 0, %s60
    %s78 = sphi 0, %s78
    %s80 = sphi 0, %s78
    %s81 = sphi 0, %s80
    %s95 = sphi 0, %s81
    %s103 = sphi 0, %s105
    %s106 = sphi 0, %s103
    %s107 = sphi 0, %s106
    %s123 = sphi 0, %s107
  $region4: #{dattention_forward.6} parent=0 // loop_header_branch
    %12 = sbr.rel (%p10) target = $region8
  $region5: #{dattention_forward.6} parent=0 // loop_body
    %s14 = ssub.s32 %s9, 1
    %s15 = ssub.s32 %s9, 2
    %s22 = sadd.s32 1, %s17
    %p23 = scmp.ge.s32.totalorder %s22, 1
    %s24 = scalar_select %p23, 0, %s22
    %s25 = sadd.s32 1, %s16
    %s26 = scalar_select %p23, %s25, %s16
    %p27 = scmp.ge.s32.totalorder %s26, 2
    %s28 = scalar_select %p27, 0, %s26
    %s29 = ssub.s32 %s16, %s28
    %s30 = ssub.s32 %s17, %s24
    %s31 = sor.u32 %s29, %s30
    %p32 = scmp.eq.s32.totalorder %s31, 0
    %s34 = sadd.s32 %s33, 1
    %s35 = scalar_select %p32, %s33, %s34
    %p38 = pneg %p32
    %p39 = scmp.eq.s32.totalorder %s9, 1
    %p40 = por %p38, %p39
    %p41 = scmp.ne.s32.totalorder %s33, %s36
    %p42 = scmp.eq.s32.totalorder %s9, 0
    %p43 = por %p41, %p42
    %p44 = scmp.ne.s32.totalorder %s33, %s36
    %p45 = scmp.eq.s32.totalorder %s14, 1
    %p46 = por %p44, %p45
    %p47 = scmp.ne.s32.totalorder %s36, %s37
    %p48 = scmp.eq.s32.totalorder %s14, 0
    %p49 = por %p47, %p48
    %p50 = scmp.ne.s32.totalorder %s36, %s37
    %p51 = scmp.eq.s32.totalorder %s15, 1
    %p52 = por %p50, %p51
    %p54 = scmp.ne.s32.totalorder %s37, %s53
    %p55 = scmp.eq.s32.totalorder %s15, 0
    %p56 = por %p54, %p55
    %s58 = sadd.s32 %s57, 1
    %p61 = scmp.eq.s32.totalorder %s9, 1
    %p62 = scmp.ne.s32.totalorder %s57, %s59
    %p63 = scmp.eq.s32.totalorder %s9, 0
    %p64 = por %p62, %p63
    %p65 = scmp.ne.s32.totalorder %s57, %s59
    %p66 = scmp.eq.s32.totalorder %s14, 1
    %p67 = por %p65, %p66
    %p68 = scmp.ne.s32.totalorder %s59, %s60
    %p69 = scmp.eq.s32.totalorder %s14, 0
    %p70 = por %p68, %p69
    %p71 = scmp.ne.s32.totalorder %s59, %s60
    %p72 = scmp.eq.s32.totalorder %s15, 1
    %p73 = por %p71, %p72
    %p75 = scmp.ne.s32.totalorder %s60, %s74
    %p76 = scmp.eq.s32.totalorder %s15, 0
    %p77 = por %p75, %p76
    %s79 = sadd.s32 %s78, 1
    %p82 = scmp.eq.s32.totalorder %s9, 1
    %p83 = scmp.ne.s32.totalorder %s78, %s80
    %p84 = scmp.eq.s32.totalorder %s9, 0
    %p85 = por %p83, %p84
    %p86 = scmp.ne.s32.totalorder %s78, %s80
    %p87 = scmp.eq.s32.totalorder %s14, 1
    %p88 = por %p86, %p87
    %p89 = scmp.ne.s32.totalorder %s80, %s81
    %p90 = scmp.eq.s32.totalorder %s14, 0
    %p91 = por %p89, %p90
    %p92 = scmp.ne.s32.totalorder %s80, %s81
    %p93 = scmp.eq.s32.totalorder %s15, 1
    %p94 = por %p92, %p93
    %p96 = scmp.ne.s32.totalorder %s81, %s95
    %p97 = scmp.eq.s32.totalorder %s15, 0
    %p98 = por %p96, %p97
    %s99 = ssub.s32 %s16, %s28
    %s100 = ssub.s32 %s17, %s24
    %s101 = sor.u32 %s99, %s100
    %p102 = scmp.eq.s32.totalorder %s101, 0
    %s104 = sadd.s32 %s103, 1
    %s105 = scalar_select %p102, %s103, %s104
    %p108 = pneg %p102
    %p109 = scmp.eq.s32.totalorder %s9, 1
    %p110 = por %p108, %p109
    %p111 = scmp.ne.s32.totalorder %s103, %s106
    %p112 = scmp.eq.s32.totalorder %s9, 0
    %p113 = por %p111, %p112
    %p114 = scmp.ne.s32.totalorder %s103, %s106
    %p115 = scmp.eq.s32.totalorder %s14, 1
    %p116 = por %p114, %p115
    %p117 = scmp.ne.s32.totalorder %s106, %s107
    %p118 = scmp.eq.s32.totalorder %s14, 0
    %p119 = por %p117, %p118
    %p120 = scmp.ne.s32.totalorder %s106, %s107
    %p121 = scmp.eq.s32.totalorder %s15, 1
    %p122 = por %p120, %p121
    %p124 = scmp.ne.s32.totalorder %s107, %s123
    %p125 = scmp.eq.s32.totalorder %s15, 0
    %p126 = por %p124, %p125
    %p127 = scmp.le.s32.totalorder 1, %s9
    %p128 = scmp.lt.s32.totalorder %s9, 3
    %p129 = pnand %p127, %p128
    %p130 = pneg %p129
    // Predicated region
    $region9: #{dattention_forward.6} parent=5 // pred_check
      _
    $region10: #{dattention_forward.6} parent=5 // pred_check_branch
      %132 = sbr.rel (%p129) target = $region12
    $region11: #{dattention_forward.6} parent=5 // pred_region
      %s133 = ssub.s32 %s9, 1
      // Predicated region
      $region13: #{dattention_forward.6} parent=11 // pred_check
        %p134 = pneg %p70
      $region14: #{dattention_forward.6} parent=11 // pred_check_branch
        %136 = sbr.rel (%p134) target = $region16
      $region15: #{dattention_forward.6} parent=11 // pred_region
        _
      $region16: #{dattention_forward.6} parent=11 // pred_fallthru
        _
      // Predicated region
      $region17: #{dattention_forward.6} parent=11 // pred_check
        %p137 = pneg %p91
      $region18: #{dattention_forward.6} parent=11 // pred_check_branch
        %139 = sbr.rel (%p137) target = $region20
      $region19: #{dattention_forward.6} parent=11 // pred_region
        _
      $region20: #{dattention_forward.6} parent=11 // pred_fallthru
        _
    $region12: #{dattention_forward.6} parent=5 // pred_fallthru
      _
    %p140 = scmp.lt.s32.totalorder %s9, 2
    // Predicated region
    $region21: #{dattention_forward.6} parent=5 // pred_check
      %p141 = pneg %p140
    $region22: #{dattention_forward.6} parent=5 // pred_check_branch
      %143 = sbr.rel (%p141) target = $region24
    $region23: #{dattention_forward.6} parent=5 // pred_region
      // Predicated region
      $region25: #{dattention_forward.6} parent=23 // pred_check
        %p144 = pneg %p43
      $region26: #{dattention_forward.6} parent=23 // pred_check_branch
        %146 = sbr.rel (%p144) target = $region28
      $region27: #{dattention_forward.6} parent=23 // pred_region
        %s147 = smul.u32 2, %s17
        %p148 = scmp.lt.s32.totalorder %s16, 1
        %s149 = scalar_select %p148, %s16, 1
        %p150 = scmp.lt.s32.totalorder %s147, 1
        %s151 = scalar_select %p150, %s147, 1
        %s152 = smul.addr %s149, 16
        %s153 = sadd.s32 %s151, %s152
        %s154 = smul.addr %s153, 4
        %s155 = scalar_lea.vmem %s0, %s154
        %s156 = smul.u32 2, %s17
      $region28: #{dattention_forward.6} parent=23 // pred_fallthru
        _
    $region24: #{dattention_forward.6} parent=5 // pred_fallthru
      _
    %p157 = scmp.le.s32.totalorder 1, %s9
    %p158 = scmp.lt.s32.totalorder %s9, 3
    %p159 = pnand %p157, %p158
    %p160 = pneg %p159
    // Predicated region
    $region29: #{dattention_forward.6} parent=5 // pred_check
      _
    $region30: #{dattention_forward.6} parent=5 // pred_check_branch
      %162 = sbr.rel (%p159) target = $region32
    $region31: #{dattention_forward.6} parent=5 // pred_region
      %s163 = ssub.s32 %s9, 1
      %s164 = smul.u32 2, %s19
      %p165 = scmp.lt.s32.totalorder %s18, 1
      %s166 = scalar_select %p165, %s18, 1
      %p167 = scmp.lt.s32.totalorder %s164, 1
      %s168 = scalar_select %p167, %s164, 1
      %s169 = smul.addr %s166, 16
      %s170 = sadd.s32 %s168, %s169
      %s171 = smul.addr %s170, 4
      %s172 = scalar_lea.vmem %s0, %s171
      %p173 = pneg %p49
      %p174 = pneg %p46
      %p175 = pneg %p70
      %p176 = pneg %p67
      %p177 = pneg %p91
      %p178 = pneg %p88
      %p179 = pneg %p119
      %p180 = pneg %p116
      %s181 = smul.u32 2, %s19
      %p182 = scmp.lt.s32.totalorder %s18, 1
      %s183 = scalar_select %p182, %s18, 1
      %p184 = scmp.lt.s32.totalorder %s181, 1
      %s185 = scalar_select %p184, %s181, 1
      %s186 = smul.addr %s183, 32
      %s187 = sadd.s32 %s185, %s186
      %s188 = smul.addr %s187, 4
      %s189 = scalar_lea.vmem %s3, %s188
      %s190 = smul.u32 2, %s19
      %p191 = scmp.lt.s32.totalorder %s18, 1
      %s192 = scalar_select %p191, %s18, 1
      %p193 = scmp.lt.s32.totalorder %s190, 1
      %s194 = scalar_select %p193, %s190, 1
      %s195 = smul.addr %s192, 16
      %s196 = sadd.s32 %s194, %s195
      %s197 = smul.addr %s196, 4
      %s198 = scalar_lea.vmem %s0, %s197
      %s199 = smul.u32 2, %s19
      %s200 = smul.u32 2, %s19
      %p201 = scmp.lt.s32.totalorder %s18, 1
      %s202 = scalar_select %p201, %s18, 1
      %p203 = scmp.lt.s32.totalorder %s200, 1
      %s204 = scalar_select %p203, %s200, 1
      %s205 = smul.addr %s202, 32
      %s206 = sadd.s32 %s204, %s205
      %s207 = smul.addr %s206, 4
      %s208 = scalar_lea.vmem %s3, %s207
      %s209 = smul.u32 2, %s19
      %v211 = vld [vmem:[%s1] sm:$0xf]
      %v212 = vld [vmem:[%s1 + $0x4] sm:$0xf]
      %v213 = vld [vmem:[%s1 + $0x8] sm:$0xf]
      %v214 = vld [vmem:[%s1 + $0xc] sm:$0xf]
      %v215 = vld [vmem:[%s1 + $0x10] sm:$0xf]
      %v216 = vld [vmem:[%s1 + $0x14] sm:$0xf]
      %v217 = vld [vmem:[%s1 + $0x18] sm:$0xf]
      %v218 = vld [vmem:[%s1 + $0x1c] sm:$0xf]
      %v219 = vld [vmem:[%s1 + $0x20] sm:$0xf]
      %v220 = vld [vmem:[%s1 + $0x24] sm:$0xf]
      %v221 = vld [vmem:[%s1 + $0x28] sm:$0xf]
      %v222 = vld [vmem:[%s1 + $0x2c] sm:$0xf]
      %v223 = vld [vmem:[%s1 + $0x30] sm:$0xf]
      %v224 = vld [vmem:[%s1 + $0x34] sm:$0xf]
      %v225 = vld [vmem:[%s1 + $0x38] sm:$0xf]
      %v226 = vld [vmem:[%s1 + $0x3c] sm:$0xf]
      %v227 = vld [vmem:[%s198] sm:$0xff]
      %v228 = vld [vmem:[%s198 + $0x8] sm:$0xff]
      %v229 = vld [vmem:[%s198 + $0x10] sm:$0xff]
      %v230 = vld [vmem:[%s198 + $0x18] sm:$0xff]
      %v231 = vld [vmem:[%s198 + $0x20] sm:$0xff]
      %v232 = vld [vmem:[%s198 + $0x28] sm:$0xff]
      %v233 = vld [vmem:[%s198 + $0x30] sm:$0xff]
      %v234 = vld [vmem:[%s198 + $0x38] sm:$0xff]
      %v235 = vld [vmem:[%s2] sm:$0xff]
      %v236 = vld [vmem:[%s2 + $0x8] sm:$0xff]
      %v237 = vld [vmem:[%s2 + $0x10] sm:$0xff]
      %v238 = vld [vmem:[%s2 + $0x18] sm:$0xff]
      %v239 = vld [vmem:[%s2 + $0x20] sm:$0xff]
      %v240 = vld [vmem:[%s2 + $0x28] sm:$0xff]
      %v241 = vld [vmem:[%s2 + $0x30] sm:$0xff]
      %v242 = vld [vmem:[%s2 + $0x38] sm:$0xff]
      %v243 = vld [vmem:[%s2 + $0x40] sm:$0xff]
      %v244 = vld [vmem:[%s2 + $0x48] sm:$0xff]
      %v245 = vld [vmem:[%s2 + $0x50] sm:$0xff]
      %v246 = vld [vmem:[%s2 + $0x58] sm:$0xff]
      %v247 = vld [vmem:[%s2 + $0x60] sm:$0xff]
      %v248 = vld [vmem:[%s2 + $0x68] sm:$0xff]
      %v249 = vld [vmem:[%s2 + $0x70] sm:$0xff]
      %v250 = vld [vmem:[%s2 + $0x78] sm:$0xff]
      %252 = vset.pattern.permute.xlu0 0
      %253 = vperm.xlu0 %252, %v235
      %v254 = vpop.permute.xlu0 %253
      %257 = vset.pattern.permute.xlu0 0
      %258 = vperm.xlu0 %257, %v236
      %v259 = vpop.permute.xlu0 %258
      %262 = vset.pattern.permute.xlu0 0
      %263 = vperm.xlu0 %262, %v237
      %v264 = vpop.permute.xlu0 %263
      %267 = vset.pattern.permute.xlu0 0
      %268 = vperm.xlu0 %267, %v238
      %v269 = vpop.permute.xlu0 %268
      %272 = vset.pattern.permute.xlu0 0
      %273 = vperm.xlu0 %272, %v239
      %v274 = vpop.permute.xlu0 %273
      %277 = vset.pattern.permute.xlu0 0
      %278 = vperm.xlu0 %277, %v240
      %v279 = vpop.permute.xlu0 %278
      %282 = vset.pattern.permute.xlu0 0
      %283 = vperm.xlu0 %282, %v241
      %v284 = vpop.permute.xlu0 %283
      %287 = vset.pattern.permute.xlu0 0
      %288 = vperm.xlu0 %287, %v242
      %v289 = vpop.permute.xlu0 %288
      %292 = vset.pattern.permute.xlu0 0
      %293 = vperm.xlu0 %292, %v243
      %v294 = vpop.permute.xlu0 %293
      %297 = vset.pattern.permute.xlu0 0
      %298 = vperm.xlu0 %297, %v244
      %v299 = vpop.permute.xlu0 %298
      %302 = vset.pattern.permute.xlu0 0
      %303 = vperm.xlu0 %302, %v245
      %v304 = vpop.permute.xlu0 %303
      %307 = vset.pattern.permute.xlu0 0
      %308 = vperm.xlu0 %307, %v246
      %v309 = vpop.permute.xlu0 %308
      %312 = vset.pattern.permute.xlu0 0
      %313 = vperm.xlu0 %312, %v247
      %v314 = vpop.permute.xlu0 %313
      %317 = vset.pattern.permute.xlu0 0
      %318 = vperm.xlu0 %317, %v248
      %v319 = vpop.permute.xlu0 %318
      %322 = vset.pattern.permute.xlu0 0
      %323 = vperm.xlu0 %322, %v249
      %v324 = vpop.permute.xlu0 %323
      %327 = vset.pattern.permute.xlu0 0
      %328 = vperm.xlu0 %327, %v250
      %v329 = vpop.permute.xlu0 %328
      %v347 = vunpack.c.l.b16 %v211
      %v348 = vunpack.c.l.b16 %v212
      %v349 = vunpack.c.l.b16 %v213
      %v350 = vunpack.c.l.b16 %v214
      %v351 = vunpack.c.l.b16 %v215
      %v352 = vunpack.c.l.b16 %v216
      %v353 = vunpack.c.l.b16 %v217
      %v354 = vunpack.c.l.b16 %v218
      %v355 = vunpack.c.l.b16 %v219
      %v356 = vunpack.c.l.b16 %v220
      %v357 = vunpack.c.l.b16 %v221
      %v358 = vunpack.c.l.b16 %v222
      %v359 = vunpack.c.l.b16 %v223
      %v360 = vunpack.c.l.b16 %v224
      %v361 = vunpack.c.l.b16 %v225
      %v362 = vunpack.c.l.b16 %v226
      %v363 = vpack.c.b16 %v348, %v347
      %v364 = vpack.c.b16 %v350, %v349
      %v365 = vpack.c.b16 %v352, %v351
      %v366 = vpack.c.b16 %v354, %v353
      %v367 = vpack.c.b16 %v356, %v355
      %v368 = vpack.c.b16 %v358, %v357
      %v369 = vpack.c.b16 %v360, %v359
      %v370 = vpack.c.b16 %v362, %v361
      %v379 = vunpack.c.l.b16 %v227
      %v380 = vunpack.c.h.b16 %v227
      %v381 = vunpack.c.l.b16 %v228
      %v382 = vunpack.c.h.b16 %v228
      %v383 = vunpack.c.l.b16 %v229
      %v384 = vunpack.c.h.b16 %v229
      %v385 = vunpack.c.l.b16 %v230
      %v386 = vunpack.c.h.b16 %v230
      %v387 = vunpack.c.l.b16 %v231
      %v388 = vunpack.c.h.b16 %v231
      %v389 = vunpack.c.l.b16 %v232
      %v390 = vunpack.c.h.b16 %v232
      %v391 = vunpack.c.l.b16 %v233
      %v392 = vunpack.c.h.b16 %v233
      %v393 = vunpack.c.l.b16 %v234
      %v394 = vunpack.c.h.b16 %v234
      %v395 = vpack.c.b16 %v381, %v379
      %v396 = vpack.c.b16 %v382, %v380
      %v397 = vpack.c.b16 %v385, %v383
      %v398 = vpack.c.b16 %v386, %v384
      %v399 = vpack.c.b16 %v389, %v387
      %v400 = vpack.c.b16 %v390, %v388
      %v401 = vpack.c.b16 %v393, %v391
      %v402 = vpack.c.b16 %v394, %v392
      %vm411 = vcmask 523264
      %v413 = vsel %vm411, %v363, 0
      %v416 = vsel %vm411, %v364, 0
      %v419 = vsel %vm411, %v365, 0
      %v422 = vsel %vm411, %v366, 0
      %v425 = vsel %vm411, %v367, 0
      %v428 = vsel %vm411, %v368, 0
      %v431 = vsel %vm411, %v369, 0
      %v434 = vsel %vm411, %v370, 0
      %436 = vmatprep.subr.bf16.mxu0 %v396
      %437 = vmatpush1.bf16.msra.mxu0 %v395
      %438 = vmatprep.subr.bf16.mxu0 %v398
      %439 = vmatpush1.bf16.msra.mxu0 %v397
      %440 = vmatprep.subr.bf16.mxu0 %v400
      %441 = vmatpush1.bf16.msra.mxu0 %v399
      %442 = vmatprep.subr.bf16.mxu0 %v402
      %443 = vmatpush1.bf16.msra.mxu0 %v401
      %444 = vmatprep.subr.bf16.mxu0 0
      %445 = vmatpush1.bf16.msra.mxu0 0
      %446 = vmatprep.subr.bf16.mxu0 0
      %447 = vmatpush1.bf16.msra.mxu0 0
      %448 = vmatprep.subr.bf16.mxu0 0
      %449 = vmatpush1.bf16.msra.mxu0 0
      %450 = vmatprep.subr.bf16.mxu0 0
      %451 = vmatpush1.bf16.msra.mxu0 0
      %452 = vmatprep.subr.bf16.mxu0 0
      %453 = vmatpush1.bf16.msra.mxu0 0
      %454 = vmatprep.subr.bf16.mxu0 0
      %455 = vmatpush1.bf16.msra.mxu0 0
      %456 = vmatprep.subr.bf16.mxu0 0
      %457 = vmatpush1.bf16.msra.mxu0 0
      %458 = vmatprep.subr.bf16.mxu0 0
      %459 = vmatpush1.bf16.msra.mxu0 0
      %460 = vmatprep.subr.bf16.mxu0 0
      %461 = vmatpush1.bf16.msra.mxu0 0
      %462 = vmatprep.subr.bf16.mxu0 0
      %463 = vmatpush1.bf16.msra.mxu0 0
      %464 = vmatprep.subr.bf16.mxu0 0
      %465 = vmatpush1.bf16.msra.mxu0 0
      %466 = vmatprep.subr.bf16.mxu0 0
      %467 = vmatpush1.bf16.msra.mxu0 0
      %468 = vmatprep.mubr.bf16.mxu0 0
      %469 = vmatmul.mubr.bf16.gmra.mrb[0].mxu0 %v413
      %v470 = vpop.f32.mrb[0].mxu0
      %v471 = vadd.f32 %v254, %v470
      %v472 = vpop.f32.mrb[0].mxu0
      %v473 = vadd.f32 %v254, %v472
      %v474 = vpop.f32.mrb[0].mxu0
      %v475 = vadd.f32 %v259, %v474
      %v476 = vpop.f32.mrb[0].mxu0
      %v477 = vadd.f32 %v259, %v476
      %478 = vmatprep.mubr.bf16.mxu0 0
      %479 = vmatmul.mubr.bf16.gmra.mrb[0].mxu0 %v416
      %v480 = vpop.f32.mrb[0].mxu0
      %v481 = vadd.f32 %v264, %v480
      %v482 = vpop.f32.mrb[0].mxu0
      %v483 = vadd.f32 %v264, %v482
      %v484 = vpop.f32.mrb[0].mxu0
      %v485 = vadd.f32 %v269, %v484
      %v486 = vpop.f32.mrb[0].mxu0
      %v487 = vadd.f32 %v269, %v486
      %488 = vmatprep.mubr.bf16.mxu0 0
      %489 = vmatmul.mubr.bf16.gmra.mrb[0].mxu0 %v419
      %v490 = vpop.f32.mrb[0].mxu0
      %v491 = vadd.f32 %v274, %v490
      %v492 = vpop.f32.mrb[0].mxu0
      %v493 = vadd.f32 %v274, %v492
      %v494 = vpop.f32.mrb[0].mxu0
      %v495 = vadd.f32 %v279, %v494
      %v496 = vpop.f32.mrb[0].mxu0
      %v497 = vadd.f32 %v279, %v496
      %498 = vmatprep.mubr.bf16.mxu0 0
      %499 = vmatmul.mubr.bf16.gmra.mrb[0].mxu0 %v422
      %v500 = vpop.f32.mrb[0].mxu0
      %v501 = vadd.f32 %v284, %v500
      %v502 = vpop.f32.mrb[0].mxu0
      %v503 = vadd.f32 %v284, %v502
      %v504 = vpop.f32.mrb[0].mxu0
      %v505 = vadd.f32 %v289, %v504
      %v506 = vpop.f32.mrb[0].mxu0
      %v507 = vadd.f32 %v289, %v506
      %508 = vmatprep.mubr.bf16.mxu0 0
      %509 = vmatmul.mubr.bf16.gmra.mrb[0].mxu0 %v425
      %v510 = vpop.f32.mrb[0].mxu0
      %v511 = vadd.f32 %v294, %v510
      %v512 = vpop.f32.mrb[0].mxu0
      %v513 = vadd.f32 %v294, %v512
      %v514 = vpop.f32.mrb[0].mxu0
      %v515 = vadd.f32 %v299, %v514
      %v516 = vpop.f32.mrb[0].mxu0
      %v517 = vadd.f32 %v299, %v516
      %518 = vmatprep.mubr.bf16.mxu0 0
      %519 = vmatmul.mubr.bf16.gmra.mrb[0].mxu0 %v428
      %v520 = vpop.f32.mrb[0].mxu0
      %v521 = vadd.f32 %v304, %v520
      %v522 = vpop.f32.mrb[0].mxu0
      %v523 = vadd.f32 %v304, %v522
      %v524 = vpop.f32.mrb[0].mxu0
      %v525 = vadd.f32 %v309, %v524
      %v526 = vpop.f32.mrb[0].mxu0
      %v527 = vadd.f32 %v309, %v526
      %528 = vmatprep.mubr.bf16.mxu0 0
      %529 = vmatmul.mubr.bf16.gmra.mrb[0].mxu0 %v431
      %v530 = vpop.f32.mrb[0].mxu0
      %v531 = vadd.f32 %v314, %v530
      %v532 = vpop.f32.mrb[0].mxu0
      %v533 = vadd.f32 %v314, %v532
      %v534 = vpop.f32.mrb[0].mxu0
      %v535 = vadd.f32 %v319, %v534
      %v536 = vpop.f32.mrb[0].mxu0
      %v537 = vadd.f32 %v319, %v536
      %538 = vmatprep.mubr.bf16.mxu0 0
      %539 = vmatmul.mubr.bf16.gmra.mrb[0].mxu0 %v434
      %v540 = vpop.f32.mrb[0].mxu0
      %v541 = vadd.f32 %v324, %v540
      %v542 = vpop.f32.mrb[0].mxu0
      %v543 = vadd.f32 %v324, %v542
      %v544 = vpop.f32.mrb[0].mxu0
      %v545 = vadd.f32 %v329, %v544
      %v546 = vpop.f32.mrb[0].mxu0
      %v547 = vadd.f32 %v329, %v546
      %548 = vdwg.mxu0
      %v549 = vpack.c.bf16 %v475, %v471
      %v550 = vpack.c.bf16 %v477, %v473
      %v551 = vpack.c.bf16 %v485, %v481
      %v552 = vpack.c.bf16 %v487, %v483
      %v553 = vpack.c.bf16 %v495, %v491
      %v554 = vpack.c.bf16 %v497, %v493
      %v555 = vpack.c.bf16 %v505, %v501
      %v556 = vpack.c.bf16 %v507, %v503
      %v557 = vpack.c.bf16 %v515, %v511
      %v558 = vpack.c.bf16 %v517, %v513
      %v559 = vpack.c.bf16 %v525, %v521
      %v560 = vpack.c.bf16 %v527, %v523
      %v561 = vpack.c.bf16 %v535, %v531
      %v562 = vpack.c.bf16 %v537, %v533
      %v563 = vpack.c.bf16 %v545, %v541
      %v564 = vpack.c.bf16 %v547, %v543
      %v581 = vunpack.c.l.b16 %v549
      %v582 = vunpack.c.l.b16 %v550
      %v583 = vunpack.c.h.b16 %v549
      %v584 = vunpack.c.h.b16 %v550
      %v585 = vunpack.c.l.b16 %v551
      %v586 = vunpack.c.l.b16 %v552
      %v587 = vunpack.c.h.b16 %v551
      %v588 = vunpack.c.h.b16 %v552
      %v589 = vunpack.c.l.b16 %v553
      %v590 = vunpack.c.l.b16 %v554
      %v591 = vunpack.c.h.b16 %v553
      %v592 = vunpack.c.h.b16 %v554
      %v593 = vunpack.c.l.b16 %v555
      %v594 = vunpack.c.l.b16 %v556
      %v595 = vunpack.c.h.b16 %v555
      %v596 = vunpack.c.h.b16 %v556
      %v597 = vunpack.c.l.b16 %v557
      %v598 = vunpack.c.l.b16 %v558
      %v599 = vunpack.c.h.b16 %v557
      %v600 = vunpack.c.h.b16 %v558
      %v601 = vunpack.c.l.b16 %v559
      %v602 = vunpack.c.l.b16 %v560
      %v603 = vunpack.c.h.b16 %v559
      %v604 = vunpack.c.h.b16 %v560
      %v605 = vunpack.c.l.b16 %v561
      %v606 = vunpack.c.l.b16 %v562
      %v607 = vunpack.c.h.b16 %v561
      %v608 = vunpack.c.h.b16 %v562
      %v609 = vunpack.c.l.b16 %v563
      %v610 = vunpack.c.l.b16 %v564
      %v611 = vunpack.c.h.b16 %v563
      %v612 = vunpack.c.h.b16 %v564
      %v613 = vpack.c.b16 %v582, %v581
      %v614 = vpack.c.b16 %v584, %v583
      %v615 = vpack.c.b16 %v586, %v585
      %v616 = vpack.c.b16 %v588, %v587
      %v617 = vpack.c.b16 %v590, %v589
      %v618 = vpack.c.b16 %v592, %v591
      %v619 = vpack.c.b16 %v594, %v593
      %v620 = vpack.c.b16 %v596, %v595
      %v621 = vpack.c.b16 %v598, %v597
      %v622 = vpack.c.b16 %v600, %v599
      %v623 = vpack.c.b16 %v602, %v601
      %v624 = vpack.c.b16 %v604, %v603
      %v625 = vpack.c.b16 %v606, %v605
      %v626 = vpack.c.b16 %v608, %v607
      %v627 = vpack.c.b16 %v610, %v609
      %v628 = vpack.c.b16 %v612, %v611
      %645 = vst [vmem:[%s208] sm:$0xff] %v613
      %646 = vst [vmem:[%s208 + $0x8] sm:$0xff] %v614
      %647 = vst [vmem:[%s208 + $0x10] sm:$0xff] %v615
      %648 = vst [vmem:[%s208 + $0x18] sm:$0xff] %v616
      %649 = vst [vmem:[%s208 + $0x20] sm:$0xff] %v617
      %650 = vst [vmem:[%s208 + $0x28] sm:$0xff] %v618
      %651 = vst [vmem:[%s208 + $0x30] sm:$0xff] %v619
      %652 = vst [vmem:[%s208 + $0x38] sm:$0xff] %v620
      %653 = vst [vmem:[%s208 + $0x40] sm:$0xff] %v621
      %654 = vst [vmem:[%s208 + $0x48] sm:$0xff] %v622
      %655 = vst [vmem:[%s208 + $0x50] sm:$0xff] %v623
      %656 = vst [vmem:[%s208 + $0x58] sm:$0xff] %v624
      %657 = vst [vmem:[%s208 + $0x60] sm:$0xff] %v625
      %658 = vst [vmem:[%s208 + $0x68] sm:$0xff] %v626
      %659 = vst [vmem:[%s208 + $0x70] sm:$0xff] %v627
      %660 = vst [vmem:[%s208 + $0x78] sm:$0xff] %v628
      %s661 = smul.u32 2, %s19
      %p662 = scmp.lt.s32.totalorder %s18, 1
      %s663 = scalar_select %p662, %s18, 1
      %p664 = scmp.lt.s32.totalorder %s661, 1
      %s665 = scalar_select %p664, %s661, 1
      %s666 = smul.addr %s663, 32
      %s667 = sadd.s32 %s665, %s666
      %s668 = smul.addr %s667, 4
      %s669 = scalar_lea.vmem %s3, %s668
      // Predicated region
      $region33: #{dattention_forward.6} parent=31 // pred_check
        %p670 = pneg %p116
      $region34: #{dattention_forward.6} parent=31 // pred_check_branch
        %672 = sbr.rel (%p670) target = $region36
      $region35: #{dattention_forward.6} parent=31 // pred_region
        %s673 = smul.u32 2, %s19
      $region36: #{dattention_forward.6} parent=31 // pred_fallthru
        _
    $region32: #{dattention_forward.6} parent=5 // pred_fallthru
      _
    %p674 = scmp.le.s32.totalorder 2, %s9
    // Predicated region
    $region37: #{dattention_forward.6} parent=5 // pred_check
      %p675 = pneg %p674
    $region38: #{dattention_forward.6} parent=5 // pred_check_branch
      %677 = sbr.rel (%p675) target = $region40
    $region39: #{dattention_forward.6} parent=5 // pred_region
      %s678 = ssub.s32 %s9, 2
      // Predicated region
      $region41: #{dattention_forward.6} parent=39 // pred_check
        %p679 = pneg %p122
      $region42: #{dattention_forward.6} parent=39 // pred_check_branch
        %681 = sbr.rel (%p679) target = $region44
      $region43: #{dattention_forward.6} parent=39 // pred_region
        %s682 = smul.u32 2, %s21
        %p683 = scmp.lt.s32.totalorder %s20, 1
        %s684 = scalar_select %p683, %s20, 1
        %p685 = scmp.lt.s32.totalorder %s682, 1
        %s686 = scalar_select %p685, %s682, 1
        %s687 = smul.addr %s684, 32
        %s688 = sadd.s32 %s686, %s687
        %s689 = smul.addr %s688, 4
        %s690 = scalar_lea.vmem %s3, %s689
      $region44: #{dattention_forward.6} parent=39 // pred_fallthru
        _
    $region40: #{dattention_forward.6} parent=5 // pred_fallthru
      _
  $region6: #{dattention_forward.6} parent=0 // loop_footer
    %s13 = sadd.s32 1, %s9
  $region7: #{dattention_forward.6} parent=0 // loop_footer_branch
    %8 = sbr.rel target = $region3
  $region8: #{dattention_forward.6} parent=0 // loop_exit
    _

// kernel: dattention_forward.7
$region0: #{dattention_forward.7}
  #allocation0 [shape = 'u32[]', space=smem, size = 0x4, offset = 0x4, fixed_abs, tag = 'smem constant byte address 0x4 - core index']
  #allocation1 [shape = 'u32[144,128]{1,0:T(1,128)}', space=vmem, size = 0x12000, scoped, tag = 'internal scratch']
  %s0 = inlined_call_operand.vmem [shape: bf16[2,8,8,256], index: 0, kind: input, shape index: {}]
  %s1 = inlined_call_operand.vmem [shape: bf16[2,2,8,8,256], index: 1, kind: input, shape index: {}]
  %s2 = inlined_call_operand.vmem [shape: bf16[2,8,8,256], index: 2, kind: input, shape index: {}]
  %s3 = inlined_call_operand.vmem [shape: bf16[64,64], index: 3, kind: input, shape index: {}]
  %s4 = inlined_call_operand.vmem [shape: f32[64,1], index: 4, kind: input, shape index: {}]
  %s5 = inlined_call_operand.vmem [shape: f32[2,64,256], index: 5, kind: output, shape index: {}]
  %s6 = sld [smem:[#allocation0]]
  $region169: #{dattention_forward.7} parent=0
    _
  %s8 = ssub.s32 1, %s6
  %s9 = scalar_select 0, %s8, %s6
  $region1: #{dattention_forward.7} parent=0
    #allocation2 [shape = 'u8[32768]{0}', space=vmem, size = 0x8000, scoped, tag = 'input window, operand 0']
    #allocation3 [shape = 'u8[32768]{0}', space=vmem, size = 0x8000, scoped, tag = 'input window, operand 2']
    #allocation4 [shape = 'u8[65536]{0}', space=vmem, size = 0x10000, scoped, tag = 'output window, operand 0']
    loop: start=0, step=1, limit=6
    $region2: #{dattention_forward.7} parent=1 // loop_pre_header
      _
    $region3: #{dattention_forward.7} parent=1 // loop_header
      %s11 = sphi 0, %s15
      %p12 = scmp.ge.s32.totalorder %s11, 6
      %s18 = sphi 0, %s30
      %s19 = sphi 0, %s26
      %s20 = sphi 0, %s18
      %s21 = sphi 0, %s19
      %s22 = sphi 0, %s20
      %s23 = sphi 0, %s21
      %s35 = sphi 0, %s37
      %s38 = sphi 0, %s35
      %s39 = sphi 0, %s38
      %s55 = sphi 0, %s39
      %s61 = sphi 0, %s63
      %s64 = sphi 0, %s61
      %s65 = sphi 0, %s64
      %s81 = sphi 0, %s65
      %s89 = sphi 0, %s91
      %s92 = sphi 0, %s89
      %s93 = sphi 0, %s92
      %s109 = sphi 0, %s93
      %s113 = sphi 0, %s113
      %s115 = sphi 0, %s113
      %s116 = sphi 0, %s115
      %s130 = sphi 0, %s116
      %s134 = sphi 0, %s134
      %s136 = sphi 0, %s134
      %s137 = sphi 0, %s136
      %s151 = sphi 0, %s137
      %s159 = sphi 0, %s161
      %s162 = sphi 0, %s159
      %s163 = sphi 0, %s162
      %s179 = sphi 0, %s163
    $region4: #{dattention_forward.7} parent=1 // loop_header_branch
      %14 = sbr.rel (%p12) target = $region8
    $region5: #{dattention_forward.7} parent=1 // loop_body
      %s16 = ssub.s32 %s11, 1
      %s17 = ssub.s32 %s11, 2
      %s24 = sadd.s32 1, %s19
      %p25 = scmp.ge.s32.totalorder %s24, 2
      %s26 = scalar_select %p25, 0, %s24
      %s27 = sadd.s32 1, %s18
      %s28 = scalar_select %p25, %s27, %s18
      %p29 = scmp.ge.s32.totalorder %s28, 2
      %s30 = scalar_select %p29, 0, %s28
      %s31 = ssub.s32 %s18, %s30
      %s32 = ssub.s32 %s19, %s26
      %s33 = sor.u32 %s31, %s32
      %p34 = scmp.eq.s32.totalorder %s33, 0
      %s36 = sadd.s32 %s35, 1
      %s37 = scalar_select %p34, %s35, %s36
      %p40 = pneg %p34
      %p41 = scmp.eq.s32.totalorder %s11, 3
      %p42 = por %p40, %p41
      %p43 = scmp.ne.s32.totalorder %s35, %s38
      %p44 = scmp.eq.s32.totalorder %s11, 0
      %p45 = por %p43, %p44
      %p46 = scmp.ne.s32.totalorder %s35, %s38
      %p47 = scmp.eq.s32.totalorder %s16, 3
      %p48 = por %p46, %p47
      %p49 = scmp.ne.s32.totalorder %s38, %s39
      %p50 = scmp.eq.s32.totalorder %s16, 0
      %p51 = por %p49, %p50
      %p52 = scmp.ne.s32.totalorder %s38, %s39
      %p53 = scmp.eq.s32.totalorder %s17, 3
      %p54 = por %p52, %p53
      %p56 = scmp.ne.s32.totalorder %s39, %s55
      %p57 = scmp.eq.s32.totalorder %s17, 0
      %p58 = por %p56, %p57
      %s59 = ssub.s32 %s18, %s30
      %p60 = scmp.eq.s32.totalorder %s59, 0
      %s62 = sadd.s32 %s61, 1
      %s63 = scalar_select %p60, %s61, %s62
      %p66 = pneg %p60
      %p67 = scmp.eq.s32.totalorder %s11, 3
      %p68 = por %p66, %p67
      %p69 = scmp.ne.s32.totalorder %s61, %s64
      %p70 = scmp.eq.s32.totalorder %s11, 0
      %p71 = por %p69, %p70
      %p72 = scmp.ne.s32.totalorder %s61, %s64
      %p73 = scmp.eq.s32.totalorder %s16, 3
      %p74 = por %p72, %p73
      %p75 = scmp.ne.s32.totalorder %s64, %s65
      %p76 = scmp.eq.s32.totalorder %s16, 0
      %p77 = por %p75, %p76
      %p78 = scmp.ne.s32.totalorder %s64, %s65
      %p79 = scmp.eq.s32.totalorder %s17, 3
      %p80 = por %p78, %p79
      %p82 = scmp.ne.s32.totalorder %s65, %s81
      %p83 = scmp.eq.s32.totalorder %s17, 0
      %p84 = por %p82, %p83
      %s85 = ssub.s32 %s18, %s30
      %s86 = ssub.s32 %s19, %s26
      %s87 = sor.u32 %s85, %s86
      %p88 = scmp.eq.s32.totalorder %s87, 0
      %s90 = sadd.s32 %s89, 1
      %s91 = scalar_select %p88, %s89, %s90
      %p94 = pneg %p88
      %p95 = scmp.eq.s32.totalorder %s11, 3
      %p96 = por %p94, %p95
      %p97 = scmp.ne.s32.totalorder %s89, %s92
      %p98 = scmp.eq.s32.totalorder %s11, 0
      %p99 = por %p97, %p98
      %p100 = scmp.ne.s32.totalorder %s89, %s92
      %p101 = scmp.eq.s32.totalorder %s16, 3
      %p102 = por %p100, %p101
      %p103 = scmp.ne.s32.totalorder %s92, %s93
      %p104 = scmp.eq.s32.totalorder %s16, 0
      %p105 = por %p103, %p104
      %p106 = scmp.ne.s32.totalorder %s92, %s93
      %p107 = scmp.eq.s32.totalorder %s17, 3
      %p108 = por %p106, %p107
      %p110 = scmp.ne.s32.totalorder %s93, %s109
      %p111 = scmp.eq.s32.totalorder %s17, 0
      %p112 = por %p110, %p111
      %s114 = sadd.s32 %s113, 1
      %p117 = scmp.eq.s32.totalorder %s11, 3
      %p118 = scmp.ne.s32.totalorder %s113, %s115
      %p119 = scmp.eq.s32.totalorder %s11, 0
      %p120 = por %p118, %p119
      %p121 = scmp.ne.s32.totalorder %s113, %s115
      %p122 = scmp.eq.s32.totalorder %s16, 3
      %p123 = por %p121, %p122
      %p124 = scmp.ne.s32.totalorder %s115, %s116
      %p125 = scmp.eq.s32.totalorder %s16, 0
      %p126 = por %p124, %p125
      %p127 = scmp.ne.s32.totalorder %s115, %s116
      %p128 = scmp.eq.s32.totalorder %s17, 3
      %p129 = por %p127, %p128
      %p131 = scmp.ne.s32.totalorder %s116, %s130
      %p132 = scmp.eq.s32.totalorder %s17, 0
      %p133 = por %p131, %p132
      %s135 = sadd.s32 %s134, 1
      %p138 = scmp.eq.s32.totalorder %s11, 3
      %p139 = scmp.ne.s32.totalorder %s134, %s136
      %p140 = scmp.eq.s32.totalorder %s11, 0
      %p141 = por %p139, %p140
      %p142 = scmp.ne.s32.totalorder %s134, %s136
      %p143 = scmp.eq.s32.totalorder %s16, 3
      %p144 = por %p142, %p143
      %p145 = scmp.ne.s32.totalorder %s136, %s137
      %p146 = scmp.eq.s32.totalorder %s16, 0
      %p147 = por %p145, %p146
      %p148 = scmp.ne.s32.totalorder %s136, %s137
      %p149 = scmp.eq.s32.totalorder %s17, 3
      %p150 = por %p148, %p149
      %p152 = scmp.ne.s32.totalorder %s137, %s151
      %p153 = scmp.eq.s32.totalorder %s17, 0
      %p154 = por %p152, %p153
      %s155 = ssub.s32 %s18, %s30
      %s156 = ssub.s32 %s19, %s26
      %s157 = sor.u32 %s155, %s156
      %p158 = scmp.eq.s32.totalorder %s157, 0
      %s160 = sadd.s32 %s159, 1
      %s161 = scalar_select %p158, %s159, %s160
      %p164 = pneg %p158
      %p165 = scmp.eq.s32.totalorder %s11, 3
      %p166 = por %p164, %p165
      %p167 = scmp.ne.s32.totalorder %s159, %s162
      %p168 = scmp.eq.s32.totalorder %s11, 0
      %p169 = por %p167, %p168
      %p170 = scmp.ne.s32.totalorder %s159, %s162
      %p171 = scmp.eq.s32.totalorder %s16, 3
      %p172 = por %p170, %p171
      %p173 = scmp.ne.s32.totalorder %s162, %s163
      %p174 = scmp.eq.s32.totalorder %s16, 0
      %p175 = por %p173, %p174
      %p176 = scmp.ne.s32.totalorder %s162, %s163
      %p177 = scmp.eq.s32.totalorder %s17, 3
      %p178 = por %p176, %p177
      %p180 = scmp.ne.s32.totalorder %s163, %s179
      %p181 = scmp.eq.s32.totalorder %s17, 0
      %p182 = por %p180, %p181
      %p183 = scmp.le.s32.totalorder 1, %s11
      %p184 = scmp.lt.s32.totalorder %s11, 5
      %p185 = pnand %p183, %p184
      %p186 = pneg %p185
      // Predicated region
      $region9: #{dattention_forward.7} parent=5 // pred_check
        _
      $region10: #{dattention_forward.7} parent=5 // pred_check_branch
        %188 = sbr.rel (%p185) target = $region12
      $region11: #{dattention_forward.7} parent=5 // pred_region
        %s189 = ssub.s32 %s11, 1
        // Predicated region
        $region13: #{dattention_forward.7} parent=11 // pred_check
          %p190 = pneg %p126
        $region14: #{dattention_forward.7} parent=11 // pred_check_branch
          %192 = sbr.rel (%p190) target = $region16
        $region15: #{dattention_forward.7} parent=11 // pred_region
          _
        $region16: #{dattention_forward.7} parent=11 // pred_fallthru
          _
        // Predicated region
        $region17: #{dattention_forward.7} parent=11 // pred_check
          %p193 = pneg %p147
        $region18: #{dattention_forward.7} parent=11 // pred_check_branch
          %195 = sbr.rel (%p193) target = $region20
        $region19: #{dattention_forward.7} parent=11 // pred_region
          _
        $region20: #{dattention_forward.7} parent=11 // pred_fallthru
          _
      $region12: #{dattention_forward.7} parent=5 // pred_fallthru
        _
      %p196 = scmp.lt.s32.totalorder %s11, 4
      // Predicated region
      $region21: #{dattention_forward.7} parent=5 // pred_check
        %p197 = pneg %p196
      $region22: #{dattention_forward.7} parent=5 // pred_check_branch
        %199 = sbr.rel (%p197) target = $region24
      $region23: #{dattention_forward.7} parent=5 // pred_region
        // Predicated region
        $region25: #{dattention_forward.7} parent=23 // pred_check
          %p200 = pneg %p45
        $region26: #{dattention_forward.7} parent=23 // pred_check_branch
          %202 = sbr.rel (%p200) target = $region28
        $region27: #{dattention_forward.7} parent=23 // pred_region
          %s203 = sand.u32 %s35, 1
          %s204 = sand.u32 %s35, 1
          %s205 = smul.addr %s204, 32
          %s206 = scalar_lea.vmem [#allocation2], %s205
          %s207 = smul.addr %s18, 16
          %s208 = sadd.s32 %s19, %s207
          %s209 = smul.addr %s208, 4
          %s210 = scalar_lea.vmem %s0, %s209
          // Predicated region
          $region29: #{dattention_forward.7} parent=27 // pred_check
            _
          $region30: #{dattention_forward.7} parent=27 // pred_check_branch
            %212 = sbr.rel (0) target = $region32
          $region31: #{dattention_forward.7} parent=27 // pred_region
            // Predicated region
            $region33: #{dattention_forward.7} parent=31 // pred_check
              _
            $region34: #{dattention_forward.7} parent=31 // pred_check_branch
              %214 = sbr.rel target = $region36
            $region35: #{dattention_forward.7} parent=31 // pred_region
              // Predicated region
              $region48: #{dattention_forward.7} parent=35 // pred_check
                _
              $region49: #{dattention_forward.7} parent=35 // pred_check_branch
                %243 = sbr.rel (0) target = $region51
              $region50: #{dattention_forward.7} parent=35 // pred_region
                loop: start=0, step=1, limit=1
                $region52: #{dattention_forward.7} parent=50 // loop_pre_header
                  _
                $region53: #{dattention_forward.7} parent=50 // loop_header
                  %s245 = sphi 0, %s249
                  %p246 = scmp.ge.s32.totalorder %s245, 1
                  %s250 = sphi %s210, %s210
                  %s251 = sphi %s206, %s206
                $region54: #{dattention_forward.7} parent=50 // loop_header_branch
                  %248 = sbr.rel (%p246) target = $region58
                $region55: #{dattention_forward.7} parent=50 // loop_body
                  _
                $region56: #{dattention_forward.7} parent=50 // loop_footer
                  %s249 = sadd.s32 1, %s245
                $region57: #{dattention_forward.7} parent=50 // loop_footer_branch
                  %244 = sbr.rel target = $region53
                $region58: #{dattention_forward.7} parent=50 // loop_exit
                  _
                loop: start=0, step=1, limit=1
                $region59: #{dattention_forward.7} parent=50 // loop_pre_header
                  _
                $region60: #{dattention_forward.7} parent=50 // loop_header
                  %s254 = sphi 0, %s258
                  %p255 = scmp.ge.s32.totalorder %s254, 1
                  %s259 = sphi %s210, %s210
                  %s260 = sphi %s206, %s206
                $region61: #{dattention_forward.7} parent=50 // loop_header_branch
                  %257 = sbr.rel (%p255) target = $region65
                $region62: #{dattention_forward.7} parent=50 // loop_body
                  %v261 = vld [vmem:[%s259] sm:$0xf]
                  %262 = vst [vmem:[%s260] sm:$0xf] %v261
                  %v263 = vld [vmem:[%s259 + $0x8] sm:$0xf]
                  %264 = vst [vmem:[%s260 + $0x4] sm:$0xf] %v263
                  %v265 = vld [vmem:[%s259 + $0x10] sm:$0xf]
                  %266 = vst [vmem:[%s260 + $0x8] sm:$0xf] %v265
                  %v267 = vld [vmem:[%s259 + $0x18] sm:$0xf]
                  %268 = vst [vmem:[%s260 + $0xc] sm:$0xf] %v267
                  %v269 = vld [vmem:[%s259 + $0x20] sm:$0xf]
                  %270 = vst [vmem:[%s260 + $0x10] sm:$0xf] %v269
                  %v271 = vld [vmem:[%s259 + $0x28] sm:$0xf]
                  %272 = vst [vmem:[%s260 + $0x14] sm:$0xf] %v271
                  %v273 = vld [vmem:[%s259 + $0x30] sm:$0xf]
                  %274 = vst [vmem:[%s260 + $0x18] sm:$0xf] %v273
                  %v275 = vld [vmem:[%s259 + $0x38] sm:$0xf]
                  %276 = vst [vmem:[%s260 + $0x1c] sm:$0xf] %v275
                $region63: #{dattention_forward.7} parent=50 // loop_footer
                  %s258 = sadd.s32 1, %s254
                $region64: #{dattention_forward.7} parent=50 // loop_footer_branch
                  %253 = sbr.rel target = $region60
                $region65: #{dattention_forward.7} parent=50 // loop_exit
                  _
              $region51: #{dattention_forward.7} parent=35 // pred_fallthru
                _
            $region36: #{dattention_forward.7} parent=31 // pred_fallthru
              _
            // Predicated region
            $region37: #{dattention_forward.7} parent=31 // pred_check
              _
            $region38: #{dattention_forward.7} parent=31 // pred_check_branch
              %216 = sbr.rel (0) target = $region40
            $region39: #{dattention_forward.7} parent=31 // pred_region
              loop: start=0, step=1, limit=1
              $region41: #{dattention_forward.7} parent=39 // loop_pre_header
                _
              $region42: #{dattention_forward.7} parent=39 // loop_header
                %s219 = sphi 0, %s223
                %p220 = scmp.ge.s32.totalorder %s219, 1
                %s224 = sphi %s210, %s210
                %s225 = sphi %s206, %s206
              $region43: #{dattention_forward.7} parent=39 // loop_header_branch
                %222 = sbr.rel (%p220) target = $region47
              $region44: #{dattention_forward.7} parent=39 // loop_body
                %v226 = vld [vmem:[%s224] sm:$0xf]
                %227 = vst [vmem:[%s225] sm:$0xf] %v226
                %v228 = vld [vmem:[%s224 + $0x8] sm:$0xf]
                %229 = vst [vmem:[%s225 + $0x4] sm:$0xf] %v228
                %v230 = vld [vmem:[%s224 + $0x10] sm:$0xf]
                %231 = vst [vmem:[%s225 + $0x8] sm:$0xf] %v230
                %v232 = vld [vmem:[%s224 + $0x18] sm:$0xf]
                %233 = vst [vmem:[%s225 + $0xc] sm:$0xf] %v232
                %v234 = vld [vmem:[%s224 + $0x20] sm:$0xf]
                %235 = vst [vmem:[%s225 + $0x10] sm:$0xf] %v234
                %v236 = vld [vmem:[%s224 + $0x28] sm:$0xf]
                %237 = vst [vmem:[%s225 + $0x14] sm:$0xf] %v236
                %v238 = vld [vmem:[%s224 + $0x30] sm:$0xf]
                %239 = vst [vmem:[%s225 + $0x18] sm:$0xf] %v238
                %v240 = vld [vmem:[%s224 + $0x38] sm:$0xf]
                %241 = vst [vmem:[%s225 + $0x1c] sm:$0xf] %v240
              $region45: #{dattention_forward.7} parent=39 // loop_footer
                %s223 = sadd.s32 1, %s219
              $region46: #{dattention_forward.7} parent=39 // loop_footer_branch
                %218 = sbr.rel target = $region42
              $region47: #{dattention_forward.7} parent=39 // loop_exit
                _
            $region40: #{dattention_forward.7} parent=31 // pred_fallthru
              _
          $region32: #{dattention_forward.7} parent=27 // pred_fallthru
            _
          %277 = vnop
        $region28: #{dattention_forward.7} parent=23 // pred_fallthru
          _
        // Predicated region
        $region66: #{dattention_forward.7} parent=23 // pred_check
          %p278 = pneg %p71
        $region67: #{dattention_forward.7} parent=23 // pred_check_branch
          %280 = sbr.rel (%p278) target = $region69
        $region68: #{dattention_forward.7} parent=23 // pred_region
          %p281 = scmp.lt.s32.totalorder %s18, 1
          %s282 = scalar_select %p281, %s18, 1
          %s283 = smul.addr %s282, 32
          %s284 = smul.addr %s283, 4
          %s285 = scalar_lea.vmem %s1, %s284
        $region69: #{dattention_forward.7} parent=23 // pred_fallthru
          _
        // Predicated region
        $region70: #{dattention_forward.7} parent=23 // pred_check
          %p286 = pneg %p99
        $region71: #{dattention_forward.7} parent=23 // pred_check_branch
          %288 = sbr.rel (%p286) target = $region73
        $region72: #{dattention_forward.7} parent=23 // pred_region
          %s289 = sand.u32 %s89, 1
          %s290 = sand.u32 %s89, 1
          %s291 = smul.addr %s290, 32
          %s292 = scalar_lea.vmem [#allocation3], %s291
          %s293 = smul.addr %s18, 16
          %s294 = sadd.s32 %s19, %s293
          %s295 = smul.addr %s294, 4
          %s296 = scalar_lea.vmem %s2, %s295
          // Predicated region
          $region74: #{dattention_forward.7} parent=72 // pred_check
            _
          $region75: #{dattention_forward.7} parent=72 // pred_check_branch
            %298 = sbr.rel (0) target = $region77
          $region76: #{dattention_forward.7} parent=72 // pred_region
            // Predicated region
            $region78: #{dattention_forward.7} parent=76 // pred_check
              _
            $region79: #{dattention_forward.7} parent=76 // pred_check_branch
              %300 = sbr.rel target = $region81
            $region80: #{dattention_forward.7} parent=76 // pred_region
              // Predicated region
              $region93: #{dattention_forward.7} parent=80 // pred_check
                _
              $region94: #{dattention_forward.7} parent=80 // pred_check_branch
                %329 = sbr.rel (0) target = $region96
              $region95: #{dattention_forward.7} parent=80 // pred_region
                loop: start=0, step=1, limit=1
                $region97: #{dattention_forward.7} parent=95 // loop_pre_header
                  _
                $region98: #{dattention_forward.7} parent=95 // loop_header
                  %s331 = sphi 0, %s335
                  %p332 = scmp.ge.s32.totalorder %s331, 1
                  %s336 = sphi %s296, %s296
                  %s337 = sphi %s292, %s292
                $region99: #{dattention_forward.7} parent=95 // loop_header_branch
                  %334 = sbr.rel (%p332) target = $region103
                $region100: #{dattention_forward.7} parent=95 // loop_body
                  _
                $region101: #{dattention_forward.7} parent=95 // loop_footer
                  %s335 = sadd.s32 1, %s331
                $region102: #{dattention_forward.7} parent=95 // loop_footer_branch
                  %330 = sbr.rel target = $region98
                $region103: #{dattention_forward.7} parent=95 // loop_exit
                  _
                loop: start=0, step=1, limit=1
                $region104: #{dattention_forward.7} parent=95 // loop_pre_header
                  _
                $region105: #{dattention_forward.7} parent=95 // loop_header
                  %s340 = sphi 0, %s344
                  %p341 = scmp.ge.s32.totalorder %s340, 1
                  %s345 = sphi %s296, %s296
                  %s346 = sphi %s292, %s292
                $region106: #{dattention_forward.7} parent=95 // loop_header_branch
                  %343 = sbr.rel (%p341) target = $region110
                $region107: #{dattention_forward.7} parent=95 // loop_body
                  %v347 = vld [vmem:[%s345] sm:$0xf]
                  %348 = vst [vmem:[%s346] sm:$0xf] %v347
                  %v349 = vld [vmem:[%s345 + $0x8] sm:$0xf]
                  %350 = vst [vmem:[%s346 + $0x4] sm:$0xf] %v349
                  %v351 = vld [vmem:[%s345 + $0x10] sm:$0xf]
                  %352 = vst [vmem:[%s346 + $0x8] sm:$0xf] %v351
                  %v353 = vld [vmem:[%s345 + $0x18] sm:$0xf]
                  %354 = vst [vmem:[%s346 + $0xc] sm:$0xf] %v353
                  %v355 = vld [vmem:[%s345 + $0x20] sm:$0xf]
                  %356 = vst [vmem:[%s346 + $0x10] sm:$0xf] %v355
                  %v357 = vld [vmem:[%s345 + $0x28] sm:$0xf]
                  %358 = vst [vmem:[%s346 + $0x14] sm:$0xf] %v357
                  %v359 = vld [vmem:[%s345 + $0x30] sm:$0xf]
                  %360 = vst [vmem:[%s346 + $0x18] sm:$0xf] %v359
                  %v361 = vld [vmem:[%s345 + $0x38] sm:$0xf]
                  %362 = vst [vmem:[%s346 + $0x1c] sm:$0xf] %v361
                $region108: #{dattention_forward.7} parent=95 // loop_footer
                  %s344 = sadd.s32 1, %s340
                $region109: #{dattention_forward.7} parent=95 // loop_footer_branch
                  %339 = sbr.rel target = $region105
                $region110: #{dattention_forward.7} parent=95 // loop_exit
                  _
              $region96: #{dattention_forward.7} parent=80 // pred_fallthru
                _
            $region81: #{dattention_forward.7} parent=76 // pred_fallthru
              _
            // Predicated region
            $region82: #{dattention_forward.7} parent=76 // pred_check
              _
            $region83: #{dattention_forward.7} parent=76 // pred_check_branch
              %302 = sbr.rel (0) target = $region85
            $region84: #{dattention_forward.7} parent=76 // pred_region
              loop: start=0, step=1, limit=1
              $region86: #{dattention_forward.7} parent=84 // loop_pre_header
                _
              $region87: #{dattention_forward.7} parent=84 // loop_header
                %s305 = sphi 0, %s309
                %p306 = scmp.ge.s32.totalorder %s305, 1
                %s310 = sphi %s296, %s296
                %s311 = sphi %s292, %s292
              $region88: #{dattention_forward.7} parent=84 // loop_header_branch
                %308 = sbr.rel (%p306) target = $region92
              $region89: #{dattention_forward.7} parent=84 // loop_body
                %v312 = vld [vmem:[%s310] sm:$0xf]
                %313 = vst [vmem:[%s311] sm:$0xf] %v312
                %v314 = vld [vmem:[%s310 + $0x8] sm:$0xf]
                %315 = vst [vmem:[%s311 + $0x4] sm:$0xf] %v314
                %v316 = vld [vmem:[%s310 + $0x10] sm:$0xf]
                %317 = vst [vmem:[%s311 + $0x8] sm:$0xf] %v316
                %v318 = vld [vmem:[%s310 + $0x18] sm:$0xf]
                %319 = vst [vmem:[%s311 + $0xc] sm:$0xf] %v318
                %v320 = vld [vmem:[%s310 + $0x20] sm:$0xf]
                %321 = vst [vmem:[%s311 + $0x10] sm:$0xf] %v320
                %v322 = vld [vmem:[%s310 + $0x28] sm:$0xf]
                %323 = vst [vmem:[%s311 + $0x14] sm:$0xf] %v322
                %v324 = vld [vmem:[%s310 + $0x30] sm:$0xf]
                %325 = vst [vmem:[%s311 + $0x18] sm:$0xf] %v324
                %v326 = vld [vmem:[%s310 + $0x38] sm:$0xf]
                %327 = vst [vmem:[%s311 + $0x1c] sm:$0xf] %v326
              $region90: #{dattention_forward.7} parent=84 // loop_footer
                %s309 = sadd.s32 1, %s305
              $region91: #{dattention_forward.7} parent=84 // loop_footer_branch
                %304 = sbr.rel target = $region87
              $region92: #{dattention_forward.7} parent=84 // loop_exit
                _
            $region85: #{dattention_forward.7} parent=76 // pred_fallthru
              _
          $region77: #{dattention_forward.7} parent=72 // pred_fallthru
            _
          %363 = vnop
        $region73: #{dattention_forward.7} parent=23 // pred_fallthru
          _
      $region24: #{dattention_forward.7} parent=5 // pred_fallthru
        _
      %p364 = scmp.le.s32.totalorder 1, %s11
      %p365 = scmp.lt.s32.totalorder %s11, 5
      %p366 = pnand %p364, %p365
      %p367 = pneg %p366
      // Predicated region
      $region111: #{dattention_forward.7} parent=5 // pred_check
        _
      $region112: #{dattention_forward.7} parent=5 // pred_check_branch
        %369 = sbr.rel (%p366) target = $region114
      $region113: #{dattention_forward.7} parent=5 // pred_region
        %s370 = ssub.s32 %s11, 1
        %s371 = sand.u32 %s38, 1
        %s372 = sand.u32 %s38, 1
        %s373 = smul.addr %s372, 32
        %s374 = scalar_lea.vmem [#allocation2], %s373
        // Predicated region
        $region115: #{dattention_forward.7} parent=113 // pred_check
          %p375 = pneg %p51
        $region116: #{dattention_forward.7} parent=113 // pred_check_branch
          %377 = sbr.rel (%p375) target = $region118
        $region117: #{dattention_forward.7} parent=113 // pred_region
          _
        $region118: #{dattention_forward.7} parent=113 // pred_fallthru
          _
        %s378 = sand.u32 %s92, 1
        %s379 = sand.u32 %s92, 1
        %s380 = smul.addr %s379, 32
        %s381 = scalar_lea.vmem [#allocation3], %s380
        // Predicated region
        $region119: #{dattention_forward.7} parent=113 // pred_check
          %p382 = pneg %p105
        $region120: #{dattention_forward.7} parent=113 // pred_check_branch
          %384 = sbr.rel (%p382) target = $region122
        $region121: #{dattention_forward.7} parent=113 // pred_region
          _
        $region122: #{dattention_forward.7} parent=113 // pred_fallthru
          _
        %s385 = sand.u32 %s38, 1
        %s386 = sand.u32 %s38, 1
        %s387 = smul.addr %s386, 32
        %s388 = scalar_lea.vmem [#allocation2], %s387
        %p389 = pneg %p51
        %p390 = pneg %p48
        %p391 = scmp.lt.s32.totalorder %s20, 1
        %s392 = scalar_select %p391, %s20, 1
        %s393 = smul.addr %s392, 32
        %s394 = smul.addr %s393, 4
        %s395 = scalar_lea.vmem %s1, %s394
        %p396 = pneg %p77
        %p397 = pneg %p74
        %s398 = sand.u32 %s92, 1
        %s399 = sand.u32 %s92, 1
        %s400 = smul.addr %s399, 32
        %s401 = scalar_lea.vmem [#allocation3], %s400
        %p402 = pneg %p105
        %p403 = pneg %p102
        %p404 = pneg %p126
        %p405 = pneg %p123
        %p406 = pneg %p147
        %p407 = pneg %p144
        %p408 = pneg %p175
        %p409 = pneg %p172
        %s410 = sand.u32 %s162, 1
        %s411 = sand.u32 %s162, 1
        %s412 = smul.addr %s411, 64
        %s413 = scalar_lea.vmem [#allocation4], %s412
        %p414 = scmp.lt.s32.totalorder %s20, 1
        %s415 = scalar_select %p414, %s20, 1
        %s416 = smul.addr %s415, 32
        %s417 = smul.addr %s416, 4
        %s418 = scalar_lea.vmem %s1, %s417
        %v420 = vld [vmem:[%s374] sm:$0xf]
        %v421 = vld [vmem:[%s374 + $0x4] sm:$0xf]
        %v422 = vld [vmem:[%s374 + $0x8] sm:$0xf]
        %v423 = vld [vmem:[%s374 + $0xc] sm:$0xf]
        %v424 = vld [vmem:[%s374 + $0x10] sm:$0xf]
        %v425 = vld [vmem:[%s374 + $0x14] sm:$0xf]
        %v426 = vld [vmem:[%s374 + $0x18] sm:$0xf]
        %v427 = vld [vmem:[%s374 + $0x1c] sm:$0xf]
        %v428 = vld [vmem:[%s418] sm:$0xff]
        %v429 = vld [vmem:[%s418 + $0x8] sm:$0xff]
        %v430 = vld [vmem:[%s418 + $0x10] sm:$0xff]
        %v431 = vld [vmem:[%s418 + $0x18] sm:$0xff]
        %v432 = vld [vmem:[%s418 + $0x20] sm:$0xff]
        %v433 = vld [vmem:[%s418 + $0x28] sm:$0xff]
        %v434 = vld [vmem:[%s418 + $0x30] sm:$0xff]
        %v435 = vld [vmem:[%s418 + $0x38] sm:$0xff]
        %s436 = scalar_lea.vmem %s418, 64
        %v437 = vld [vmem:[%s436] sm:$0xff]
        %v438 = vld [vmem:[%s436 + $0x8] sm:$0xff]
        %v439 = vld [vmem:[%s436 + $0x10] sm:$0xff]
        %v440 = vld [vmem:[%s436 + $0x18] sm:$0xff]
        %v441 = vld [vmem:[%s436 + $0x20] sm:$0xff]
        %v442 = vld [vmem:[%s436 + $0x28] sm:$0xff]
        %v443 = vld [vmem:[%s436 + $0x30] sm:$0xff]
        %v444 = vld [vmem:[%s436 + $0x38] sm:$0xff]
        %445 = vxpose.xlu0.c.b16.start [1/8] %v420, 128
        %446 = vxpose.xlu0.c.b16.cont [2/8] 0, 128
        %447 = vxpose.xlu0.c.b16.cont [3/8] 0, 128
        %448 = vxpose.xlu0.c.b16.cont [4/8] 0, 128
        %449 = vxpose.xlu0.c.b16.cont [5/8] 0, 128
        %450 = vxpose.xlu0.c.b16.cont [6/8] 0, 128
        %451 = vxpose.xlu0.c.b16.cont [7/8] 0, 128
        %452 = vxpose.xlu0.c.b16.end [8/8] 0, 128
        %v453 = vpop.trf.xlu0
        %v454 = vpop.trf.xlu0
        %v455 = vpop.trf.xlu0
        %v456 = vpop.trf.xlu0
        %v457 = vpop.trf.xlu0
        %v458 = vpop.trf.xlu0
        %v459 = vpop.trf.xlu0
        %v460 = vpop.trf.xlu0
        %v462 = vunpack.c.l.b16 %v428
        %v463 = vunpack.c.h.b16 %v428
        %v464 = vpack.c.b16 %v462, %v462
        %v465 = vpack.c.b16 %v463, %v463
        %vm466 = vcmask 64512
        %v468 = vsel %vm466, %v453, 0
        %v471 = vsel %vm466, %v454, 0
        %v474 = vsel %vm466, %v455, 0
        %v477 = vsel %vm466, %v456, 0
        %v480 = vsel %vm466, %v457, 0
        %v483 = vsel %vm466, %v458, 0
        %v486 = vsel %vm466, %v459, 0
        %v489 = vsel %vm466, %v460, 0
        %vm491 = vcmask 1043456
        %v493 = vsel %vm491, %v464, 0
        %v496 = vsel %vm491, %v465, 0
        %498 = vmatprep.subr.bf16.mxu0 %v496
        %499 = vmatpush1.bf16.msra.mxu0 %v493
        %500 = vmatprep.subr.bf16.mxu0 0
        %501 = vmatpush1.bf16.msra.mxu0 0
        %502 = vmatprep.subr.bf16.mxu0 0
        %503 = vmatpush1.bf16.msra.mxu0 0
        %504 = vmatprep.subr.bf16.mxu0 0
        %505 = vmatpush1.bf16.msra.mxu0 0
        %506 = vmatprep.subr.bf16.mxu0 0
        %507 = vmatpush1.bf16.msra.mxu0 0
        %508 = vmatprep.subr.bf16.mxu0 0
        %509 = vmatpush1.bf16.msra.mxu0 0
        %510 = vmatprep.subr.bf16.mxu0 0
        %511 = vmatpush1.bf16.msra.mxu0 0
        %512 = vmatprep.subr.bf16.mxu0 0
        %513 = vmatpush1.bf16.msra.mxu0 0
        %514 = vmatprep.subr.bf16.mxu0 0
        %515 = vmatpush1.bf16.msra.mxu0 0
        %516 = vmatprep.subr.bf16.mxu0 0
        %517 = vmatpush1.bf16.msra.mxu0 0
        %518 = vmatprep.subr.bf16.mxu0 0
        %519 = vmatpush1.bf16.msra.mxu0 0
        %520 = vmatprep.subr.bf16.mxu0 0
        %521 = vmatpush1.bf16.msra.mxu0 0
        %522 = vmatprep.subr.bf16.mxu0 0
        %523 = vmatpush1.bf16.msra.mxu0 0
        %524 = vmatprep.subr.bf16.mxu0 0
        %525 = vmatpush1.bf16.msra.mxu0 0
        %526 = vmatprep.subr.bf16.mxu0 0
        %527 = vmatpush1.bf16.msra.mxu0 0
        %528 = vmatprep.subr.bf16.mxu0 0
        %529 = vmatpush1.bf16.msra.mxu0 0
        %530 = vmatprep.mubr.bf16.mxu0 0
        %531 = vmatmul.mubr.bf16.gmra.mrb[0].mxu0 %v468
        %v532 = vpop.f32.mrb[0].mxu0
        %v533 = vadd.f32 0.0, %v532
        %v534 = vpop.f32.mrb[0].mxu0
        %v535 = vadd.f32 0.0, %v534
        %v536 = vpop.f32.mrb[0].mxu0
        %v537 = vadd.f32 0.0, %v536
        %v538 = vpop.f32.mrb[0].mxu0
        %v539 = vadd.f32 0.0, %v538
        %540 = vmatprep.mubr.bf16.mxu0 0
        %541 = vmatmul.mubr.bf16.gmra.mrb[0].mxu0 %v471
        %v542 = vpop.f32.mrb[0].mxu0
        %v543 = vadd.f32 0.0, %v542
        %v544 = vpop.f32.mrb[0].mxu0
        %v545 = vadd.f32 0.0, %v544
        %v546 = vpop.f32.mrb[0].mxu0
        %v547 = vadd.f32 0.0, %v546
        %v548 = vpop.f32.mrb[0].mxu0
        %v549 = vadd.f32 0.0, %v548
        %550 = vmatprep.mubr.bf16.mxu0 0
        %551 = vmatmul.mubr.bf16.gmra.mrb[0].mxu0 %v474
        %v552 = vpop.f32.mrb[0].mxu0
        %v553 = vadd.f32 0.0, %v552
        %v554 = vpop.f32.mrb[0].mxu0
        %v555 = vadd.f32 0.0, %v554
        %v556 = vpop.f32.mrb[0].mxu0
        %v557 = vadd.f32 0.0, %v556
        %v558 = vpop.f32.mrb[0].mxu0
        %v559 = vadd.f32 0.0, %v558
        %560 = vmatprep.mubr.bf16.mxu0 0
        %561 = vmatmul.mubr.bf16.gmra.mrb[0].mxu0 %v477
        %v562 = vpop.f32.mrb[0].mxu0
        %v563 = vadd.f32 0.0, %v562
        %v564 = vpop.f32.mrb[0].mxu0
        %v565 = vadd.f32 0.0, %v564
        %v566 = vpop.f32.mrb[0].mxu0
        %v567 = vadd.f32 0.0, %v566
        %v568 = vpop.f32.mrb[0].mxu0
        %v569 = vadd.f32 0.0, %v568
        %570 = vmatprep.mubr.bf16.mxu0 0
        %571 = vmatmul.mubr.bf16.gmra.mrb[0].mxu0 %v480
        %v572 = vpop.f32.mrb[0].mxu0
        %v573 = vadd.f32 0.0, %v572
        %v574 = vpop.f32.mrb[0].mxu0
        %v575 = vadd.f32 0.0, %v574
        %v576 = vpop.f32.mrb[0].mxu0
        %v577 = vadd.f32 0.0, %v576
        %v578 = vpop.f32.mrb[0].mxu0
        %v579 = vadd.f32 0.0, %v578
        %580 = vmatprep.mubr.bf16.mxu0 0
        %581 = vmatmul.mubr.bf16.gmra.mrb[0].mxu0 %v483
        %v582 = vpop.f32.mrb[0].mxu0
        %v583 = vadd.f32 0.0, %v582
        %v584 = vpop.f32.mrb[0].mxu0
        %v585 = vadd.f32 0.0, %v584
        %v586 = vpop.f32.mrb[0].mxu0
        %v587 = vadd.f32 0.0, %v586
        %v588 = vpop.f32.mrb[0].mxu0
        %v589 = vadd.f32 0.0, %v588
        %590 = vmatprep.mubr.bf16.mxu0 0
        %591 = vmatmul.mubr.bf16.gmra.mrb[0].mxu0 %v486
        %v592 = vpop.f32.mrb[0].mxu0
        %v593 = vadd.f32 0.0, %v592
        %v594 = vpop.f32.mrb[0].mxu0
        %v595 = vadd.f32 0.0, %v594
        %v596 = vpop.f32.mrb[0].mxu0
        %v597 = vadd.f32 0.0, %v596
        %v598 = vpop.f32.mrb[0].mxu0
        %v599 = vadd.f32 0.0, %v598
        %600 = vmatprep.mubr.bf16.mxu0 0
        %601 = vmatmul.mubr.bf16.gmra.mrb[0].mxu0 %v489
        %v602 = vpop.f32.mrb[0].mxu0
        %v603 = vadd.f32 0.0, %v602
        %v604 = vpop.f32.mrb[0].mxu0
        %v605 = vadd.f32 0.0, %v604
        %v606 = vpop.f32.mrb[0].mxu0
        %v607 = vadd.f32 0.0, %v606
        %v608 = vpop.f32.mrb[0].mxu0
        %v609 = vadd.f32 0.0, %v608
        %610 = vdwg.mxu0
        %611 = vxpose.xlu0.c.b16.start [1/8] %v421, 128
        %612 = vxpose.xlu0.c.b16.cont [2/8] 0, 128
        %613 = vxpose.xlu0.c.b16.cont [3/8] 0, 128
        %614 = vxpose.xlu0.c.b16.cont [4/8] 0, 128
        %615 = vxpose.xlu0.c.b16.cont [5/8] 0, 128
        %616 = vxpose.xlu0.c.b16.cont [6/8] 0, 128
        %617 = vxpose.xlu0.c.b16.cont [7/8] 0, 128
        %618 = vxpose.xlu0.c.b16.end [8/8] 0, 128
        %v619 = vpop.trf.xlu0
        %v620 = vpop.trf.xlu0
        %v621 = vpop.trf.xlu0
        %v622 = vpop.trf.xlu0
        %v623 = vpop.trf.xlu0
        %v624 = vpop.trf.xlu0
        %v625 = vpop.trf.xlu0
        %v626 = vpop.trf.xlu0
        %v628 = vunpack.c.l.b16 %v429
        %v629 = vunpack.c.h.b16 %v429
        %v630 = vpack.c.b16 %v628, %v628
        %v631 = vpack.c.b16 %v629, %v629
        %v633 = vsel %vm466, %v619, 0
        %v636 = vsel %vm466, %v620, 0
        %v639 = vsel %vm466, %v621, 0
        %v642 = vsel %vm466, %v622, 0
        %v645 = vsel %vm466, %v623, 0
        %v648 = vsel %vm466, %v624, 0
        %v651 = vsel %vm466, %v625, 0
        %v654 = vsel %vm466, %v626, 0
        %v657 = vsel %vm491, %v630, 0
        %v660 = vsel %vm491, %v631, 0
        %662 = vmatprep.subr.bf16.mxu0 %v660
        %663 = vmatpush1.bf16.msra.mxu0 %v657
        %664 = vmatprep.subr.bf16.mxu0 0
        %665 = vmatpush1.bf16.msra.mxu0 0
        %666 = vmatprep.subr.bf16.mxu0 0
        %667 = vmatpush1.bf16.msra.mxu0 0
        %668 = vmatprep.subr.bf16.mxu0 0
        %669 = vmatpush1.bf16.msra.mxu0 0
        %670 = vmatprep.subr.bf16.mxu0 0
        %671 = vmatpush1.bf16.msra.mxu0 0
        %672 = vmatprep.subr.bf16.mxu0 0
        %673 = vmatpush1.bf16.msra.mxu0 0
        %674 = vmatprep.subr.bf16.mxu0 0
        %675 = vmatpush1.bf16.msra.mxu0 0
        %676 = vmatprep.subr.bf16.mxu0 0
        %677 = vmatpush1.bf16.msra.mxu0 0
        %678 = vmatprep.subr.bf16.mxu0 0
        %679 = vmatpush1.bf16.msra.mxu0 0
        %680 = vmatprep.subr.bf16.mxu0 0
        %681 = vmatpush1.bf16.msra.mxu0 0
        %682 = vmatprep.subr.bf16.mxu0 0
        %683 = vmatpush1.bf16.msra.mxu0 0
        %684 = vmatprep.subr.bf16.mxu0 0
        %685 = vmatpush1.bf16.msra.mxu0 0
        %686 = vmatprep.subr.bf16.mxu0 0
        %687 = vmatpush1.bf16.msra.mxu0 0
        %688 = vmatprep.subr.bf16.mxu0 0
        %689 = vmatpush1.bf16.msra.mxu0 0
        %690 = vmatprep.subr.bf16.mxu0 0
        %691 = vmatpush1.bf16.msra.mxu0 0
        %692 = vmatprep.subr.bf16.mxu0 0
        %693 = vmatpush1.bf16.msra.mxu0 0
        %694 = vmatprep.mubr.bf16.mxu0 0
        %695 = vmatmul.mubr.bf16.gmra.mrb[0].mxu0 %v633
        %v696 = vpop.f32.mrb[0].mxu0
        %v697 = vadd.f32 0.0, %v696
        %v698 = vpop.f32.mrb[0].mxu0
        %v699 = vadd.f32 0.0, %v698
        %v700 = vpop.f32.mrb[0].mxu0
        %v701 = vadd.f32 0.0, %v700
        %v702 = vpop.f32.mrb[0].mxu0
        %v703 = vadd.f32 0.0, %v702
        %704 = vmatprep.mubr.bf16.mxu0 0
        %705 = vmatmul.mubr.bf16.gmra.mrb[0].mxu0 %v636
        %v706 = vpop.f32.mrb[0].mxu0
        %v707 = vadd.f32 0.0, %v706
        %v708 = vpop.f32.mrb[0].mxu0
        %v709 = vadd.f32 0.0, %v708
        %v710 = vpop.f32.mrb[0].mxu0
        %v711 = vadd.f32 0.0, %v710
        %v712 = vpop.f32.mrb[0].mxu0
        %v713 = vadd.f32 0.0, %v712
        %714 = vmatprep.mubr.bf16.mxu0 0
        %715 = vmatmul.mubr.bf16.gmra.mrb[0].mxu0 %v639
        %v716 = vpop.f32.mrb[0].mxu0
        %v717 = vadd.f32 0.0, %v716
        %v718 = vpop.f32.mrb[0].mxu0
        %v719 = vadd.f32 0.0, %v718
        %v720 = vpop.f32.mrb[0].mxu0
        %v721 = vadd.f32 0.0, %v720
        %v722 = vpop.f32.mrb[0].mxu0
        %v723 = vadd.f32 0.0, %v722
        %724 = vmatprep.mubr.bf16.mxu0 0
        %725 = vmatmul.mubr.bf16.gmra.mrb[0].mxu0 %v642
        %v726 = vpop.f32.mrb[0].mxu0
        %v727 = vadd.f32 0.0, %v726
        %v728 = vpop.f32.mrb[0].mxu0
        %v729 = vadd.f32 0.0, %v728
        %v730 = vpop.f32.mrb[0].mxu0
        %v731 = vadd.f32 0.0, %v730
        %v732 = vpop.f32.mrb[0].mxu0
        %v733 = vadd.f32 0.0, %v732
        %734 = vmatprep.mubr.bf16.mxu0 0
        %735 = vmatmul.mubr.bf16.gmra.mrb[0].mxu0 %v645
        %v736 = vpop.f32.mrb[0].mxu0
        %v737 = vadd.f32 0.0, %v736
        %v738 = vpop.f32.mrb[0].mxu0
        %v739 = vadd.f32 0.0, %v738
        %v740 = vpop.f32.mrb[0].mxu0
        %v741 = vadd.f32 0.0, %v740
        %v742 = vpop.f32.mrb[0].mxu0
        %v743 = vadd.f32 0.0, %v742
        %744 = vmatprep.mubr.bf16.mxu0 0
        %745 = vmatmul.mubr.bf16.gmra.mrb[0].mxu0 %v648
        %v746 = vpop.f32.mrb[0].mxu0
        %v747 = vadd.f32 0.0, %v746
        %v748 = vpop.f32.mrb[0].mxu0
        %v749 = vadd.f32 0.0, %v748
        %v750 = vpop.f32.mrb[0].mxu0
        %v751 = vadd.f32 0.0, %v750
        %v752 = vpop.f32.mrb[0].mxu0
        %v753 = vadd.f32 0.0, %v752
        %754 = vmatprep.mubr.bf16.mxu0 0
        %755 = vmatmul.mubr.bf16.gmra.mrb[0].mxu0 %v651
        %v756 = vpop.f32.mrb[0].mxu0
        %v757 = vadd.f32 0.0, %v756
        %v758 = vpop.f32.mrb[0].mxu0
        %v759 = vadd.f32 0.0, %v758
        %v760 = vpop.f32.mrb[0].mxu0
        %v761 = vadd.f32 0.0, %v760
        %v762 = vpop.f32.mrb[0].mxu0
        %v763 = vadd.f32 0.0, %v762
        %764 = vmatprep.mubr.bf16.mxu0 0
        %765 = vmatmul.mubr.bf16.gmra.mrb[0].mxu0 %v654
        %v766 = vpop.f32.mrb[0].mxu0
        %v767 = vadd.f32 0.0, %v766
        %v768 = vpop.f32.mrb[0].mxu0
        %v769 = vadd.f32 0.0, %v768
        %v770 = vpop.f32.mrb[0].mxu0
        %v771 = vadd.f32 0.0, %v770
        %v772 = vpop.f32.mrb[0].mxu0
        %v773 = vadd.f32 0.0, %v772
        %774 = vdwg.mxu0
        %775 = vxpose.xlu0.c.b16.start [1/8] %v422, 128
        %776 = vxpose.xlu0.c.b16.cont [2/8] 0, 128
        %777 = vxpose.xlu0.c.b16.cont [3/8] 0, 128
        %778 = vxpose.xlu0.c.b16.cont [4/8] 0, 128
        %779 = vxpose.xlu0.c.b16.cont [5/8] 0, 128
        %780 = vxpose.xlu0.c.b16.cont [6/8] 0, 128
        %781 = vxpose.xlu0.c.b16.cont [7/8] 0, 128
        %782 = vxpose.xlu0.c.b16.end [8/8] 0, 128
        %v783 = vpop.trf.xlu0
        %v784 = vpop.trf.xlu0
        %v785 = vpop.trf.xlu0
        %v786 = vpop.trf.xlu0
        %v787 = vpop.trf.xlu0
        %v788 = vpop.trf.xlu0
        %v789 = vpop.trf.xlu0
        %v790 = vpop.trf.xlu0
        %v792 = vunpack.c.l.b16 %v430
        %v793 = vunpack.c.h.b16 %v430
        %v794 = vpack.c.b16 %v792, %v792
        %v795 = vpack.c.b16 %v793, %v793
        %v797 = vsel %vm466, %v783, 0
        %v800 = vsel %vm466, %v784, 0
        %v803 = vsel %vm466, %v785, 0
        %v806 = vsel %vm466, %v786, 0
        %v809 = vsel %vm466, %v787, 0
        %v812 = vsel %vm466, %v788, 0
        %v815 = vsel %vm466, %v789, 0
        %v818 = vsel %vm466, %v790, 0
        %v821 = vsel %vm491, %v794, 0
        %v824 = vsel %vm491, %v795, 0
        %826 = vmatprep.subr.bf16.mxu0 %v824
        %827 = vmatpush1.bf16.msra.mxu0 %v821
        %828 = vmatprep.subr.bf16.mxu0 0
        %829 = vmatpush1.bf16.msra.mxu0 0
        %830 = vmatprep.subr.bf16.mxu0 0
        %831 = vmatpush1.bf16.msra.mxu0 0
        %832 = vmatprep.subr.bf16.mxu0 0
        %833 = vmatpush1.bf16.msra.mxu0 0
        %834 = vmatprep.subr.bf16.mxu0 0
        %835 = vmatpush1.bf16.msra.mxu0 0
        %836 = vmatprep.subr.bf16.mxu0 0
        %837 = vmatpush1.bf16.msra.mxu0 0
        %838 = vmatprep.subr.bf16.mxu0 0
        %839 = vmatpush1.bf16.msra.mxu0 0
        %840 = vmatprep.subr.bf16.mxu0 0
        %841 = vmatpush1.bf16.msra.mxu0 0
        %842 = vmatprep.subr.bf16.mxu0 0
        %843 = vmatpush1.bf16.msra.mxu0 0
        %844 = vmatprep.subr.bf16.mxu0 0
        %845 = vmatpush1.bf16.msra.mxu0 0
        %846 = vmatprep.subr.bf16.mxu0 0
        %847 = vmatpush1.bf16.msra.mxu0 0
        %848 = vmatprep.subr.bf16.mxu0 0
        %849 = vmatpush1.bf16.msra.mxu0 0
        %850 = vmatprep.subr.bf16.mxu0 0
        %851 = vmatpush1.bf16.msra.mxu0 0
        %852 = vmatprep.subr.bf16.mxu0 0
        %853 = vmatpush1.bf16.msra.mxu0 0
        %854 = vmatprep.subr.bf16.mxu0 0
        %855 = vmatpush1.bf16.msra.mxu0 0
        %856 = vmatprep.subr.bf16.mxu0 0
        %857 = vmatpush1.bf16.msra.mxu0 0
        %858 = vmatprep.mubr.bf16.mxu0 0
        %859 = vmatmul.mubr.bf16.gmra.mrb[0].mxu0 %v797
        %v860 = vpop.f32.mrb[0].mxu0
        %v861 = vadd.f32 0.0, %v860
        %v862 = vpop.f32.mrb[0].mxu0
        %v863 = vadd.f32 0.0, %v862
        %v864 = vpop.f32.mrb[0].mxu0
        %v865 = vadd.f32 0.0, %v864
        %v866 = vpop.f32.mrb[0].mxu0
        %v867 = vadd.f32 0.0, %v866
        %868 = vmatprep.mubr.bf16.mxu0 0
        %869 = vmatmul.mubr.bf16.gmra.mrb[0].mxu0 %v800
        %v870 = vpop.f32.mrb[0].mxu0
        %v871 = vadd.f32 0.0, %v870
        %v872 = vpop.f32.mrb[0].mxu0
        %v873 = vadd.f32 0.0, %v872
        %v874 = vpop.f32.mrb[0].mxu0
        %v875 = vadd.f32 0.0, %v874
        %v876 = vpop.f32.mrb[0].mxu0
        %v877 = vadd.f32 0.0, %v876
        %878 = vmatprep.mubr.bf16.mxu0 0
        %879 = vmatmul.mubr.bf16.gmra.mrb[0].mxu0 %v803
        %v880 = vpop.f32.mrb[0].mxu0
        %v881 = vadd.f32 0.0, %v880
        %v882 = vpop.f32.mrb[0].mxu0
        %v883 = vadd.f32 0.0, %v882
        %v884 = vpop.f32.mrb[0].mxu0
        %v885 = vadd.f32 0.0, %v884
        %v886 = vpop.f32.mrb[0].mxu0
        %v887 = vadd.f32 0.0, %v886
        %888 = vmatprep.mubr.bf16.mxu0 0
        %889 = vmatmul.mubr.bf16.gmra.mrb[0].mxu0 %v806
        %v890 = vpop.f32.mrb[0].mxu0
        %v891 = vadd.f32 0.0, %v890
        %v892 = vpop.f32.mrb[0].mxu0
        %v893 = vadd.f32 0.0, %v892
        %v894 = vpop.f32.mrb[0].mxu0
        %v895 = vadd.f32 0.0, %v894
        %v896 = vpop.f32.mrb[0].mxu0
        %v897 = vadd.f32 0.0, %v896
        %898 = vmatprep.mubr.bf16.mxu0 0
        %899 = vmatmul.mubr.bf16.gmra.mrb[0].mxu0 %v809
        %v900 = vpop.f32.mrb[0].mxu0
        %v901 = vadd.f32 0.0, %v900
        %v902 = vpop.f32.mrb[0].mxu0
        %v903 = vadd.f32 0.0, %v902
        %v904 = vpop.f32.mrb[0].mxu0
        %v905 = vadd.f32 0.0, %v904
        %v906 = vpop.f32.mrb[0].mxu0
        %v907 = vadd.f32 0.0, %v906
        %908 = vmatprep.mubr.bf16.mxu0 0
        %909 = vmatmul.mubr.bf16.gmra.mrb[0].mxu0 %v812
        %v910 = vpop.f32.mrb[0].mxu0
        %v911 = vadd.f32 0.0, %v910
        %v912 = vpop.f32.mrb[0].mxu0
        %v913 = vadd.f32 0.0, %v912
        %v914 = vpop.f32.mrb[0].mxu0
        %v915 = vadd.f32 0.0, %v914
        %v916 = vpop.f32.mrb[0].mxu0
        %v917 = vadd.f32 0.0, %v916
        %918 = vmatprep.mubr.bf16.mxu0 0
        %919 = vmatmul.mubr.bf16.gmra.mrb[0].mxu0 %v815
        %v920 = vpop.f32.mrb[0].mxu0
        %v921 = vadd.f32 0.0, %v920
        %v922 = vpop.f32.mrb[0].mxu0
        %v923 = vadd.f32 0.0, %v922
        %v924 = vpop.f32.mrb[0].mxu0
        %v925 = vadd.f32 0.0, %v924
        %v926 = vpop.f32.mrb[0].mxu0
        %v927 = vadd.f32 0.0, %v926
        %928 = vmatprep.mubr.bf16.mxu0 0
        %929 = vmatmul.mubr.bf16.gmra.mrb[0].mxu0 %v818
        %v930 = vpop.f32.mrb[0].mxu0
        %v931 = vadd.f32 0.0, %v930
        %v932 = vpop.f32.mrb[0].mxu0
        %v933 = vadd.f32 0.0, %v932
        %v934 = vpop.f32.mrb[0].mxu0
        %v935 = vadd.f32 0.0, %v934
        %v936 = vpop.f32.mrb[0].mxu0
        %v937 = vadd.f32 0.0, %v936
        %938 = vdwg.mxu0
        %939 = vxpose.xlu0.c.b16.start [1/8] %v423, 128
        %940 = vxpose.xlu0.c.b16.cont [2/8] 0, 128
        %941 = vxpose.xlu0.c.b16.cont [3/8] 0, 128
        %942 = vxpose.xlu0.c.b16.cont [4/8] 0, 128
        %943 = vxpose.xlu0.c.b16.cont [5/8] 0, 128
        %944 = vxpose.xlu0.c.b16.cont [6/8] 0, 128
        %945 = vxpose.xlu0.c.b16.cont [7/8] 0, 128
        %946 = vxpose.xlu0.c.b16.end [8/8] 0, 128
        %v947 = vpop.trf.xlu0
        %v948 = vpop.trf.xlu0
        %v949 = vpop.trf.xlu0
        %v950 = vpop.trf.xlu0
        %v951 = vpop.trf.xlu0
        %v952 = vpop.trf.xlu0
        %v953 = vpop.trf.xlu0
        %v954 = vpop.trf.xlu0
        %v956 = vunpack.c.l.b16 %v431
        %v957 = vunpack.c.h.b16 %v431
        %v958 = vpack.c.b16 %v956, %v956
        %v959 = vpack.c.b16 %v957, %v957
        %v961 = vsel %vm466, %v947, 0
        %v964 = vsel %vm466, %v948, 0
        %v967 = vsel %vm466, %v949, 0
        %v970 = vsel %vm466, %v950, 0
        %v973 = vsel %vm466, %v951, 0
        %v976 = vsel %vm466, %v952, 0
        %v979 = vsel %vm466, %v953, 0
        %v982 = vsel %vm466, %v954, 0
        %v985 = vsel %vm491, %v958, 0
        %v988 = vsel %vm491, %v959, 0
        %990 = vmatprep.subr.bf16.mxu0 %v988
        %991 = vmatpush1.bf16.msra.mxu0 %v985
        %992 = vmatprep.subr.bf16.mxu0 0
        %993 = vmatpush1.bf16.msra.mxu0 0
        %994 = vmatprep.subr.bf16.mxu0 0
        %995 = vmatpush1.bf16.msra.mxu0 0
        %996 = vmatprep.subr.bf16.mxu0 0
        %997 = vmatpush1.bf16.msra.mxu0 0
        %998 = vmatprep.subr.bf16.mxu0 0
        %999 = vmatpush1.bf16.msra.mxu0 0
        %1000 = vmatprep.subr.bf16.mxu0 0
        %1001 = vmatpush1.bf16.msra.mxu0 0
        %1002 = vmatprep.subr.bf16.mxu0 0
        %1003 = vmatpush1.bf16.msra.mxu0 0
        %1004 = vmatprep.subr.bf16.mxu0 0
        %1005 = vmatpush1.bf16.msra.mxu0 0
        %1006 = vmatprep.subr.bf16.mxu0 0
        %1007 = vmatpush1.bf16.msra.mxu0 0
        %1008 = vmatprep.subr.bf16.mxu0 0
        %1009 = vmatpush1.bf16.msra.mxu0 0
        %1010 = vmatprep.subr.bf16.mxu0 0
        %1011 = vmatpush1.bf16.msra.mxu0 0
        %1012 = vmatprep.subr.bf16.mxu0 0
        %1013 = vmatpush1.bf16.msra.mxu0 0
        %1014 = vmatprep.subr.bf16.mxu0 0
        %1015 = vmatpush1.bf16.msra.mxu0 0
        %1016 = vmatprep.subr.bf16.mxu0 0
        %1017 = vmatpush1.bf16.msra.mxu0 0
        %1018 = vmatprep.subr.bf16.mxu0 0
        %1019 = vmatpush1.bf16.msra.mxu0 0
        %1020 = vmatprep.subr.bf16.mxu0 0
        %1021 = vmatpush1.bf16.msra.mxu0 0
        %1022 = vmatprep.mubr.bf16.mxu0 0
        %1023 = vmatmul.mubr.bf16.gmra.mrb[0].mxu0 %v961
        %v1024 = vpop.f32.mrb[0].mxu0
        %v1025 = vadd.f32 0.0, %v1024
        %v1026 = vpop.f32.mrb[0].mxu0
        %v1027 = vadd.f32 0.0, %v1026
        %v1028 = vpop.f32.mrb[0].mxu0
        %v1029 = vadd.f32 0.0, %v1028
        %v1030 = vpop.f32.mrb[0].mxu0
        %v1031 = vadd.f32 0.0, %v1030
        %1032 = vmatprep.mubr.bf16.mxu0 0
        %1033 = vmatmul.mubr.bf16.gmra.mrb[0].mxu0 %v964
        %v1034 = vpop.f32.mrb[0].mxu0
        %v1035 = vadd.f32 0.0, %v1034
        %v1036 = vpop.f32.mrb[0].mxu0
        %v1037 = vadd.f32 0.0, %v1036
        %v1038 = vpop.f32.mrb[0].mxu0
        %v1039 = vadd.f32 0.0, %v1038
        %v1040 = vpop.f32.mrb[0].mxu0
        %v1041 = vadd.f32 0.0, %v1040
        %1042 = vmatprep.mubr.bf16.mxu0 0
        %1043 = vmatmul.mubr.bf16.gmra.mrb[0].mxu0 %v967
        %v1044 = vpop.f32.mrb[0].mxu0
        %v1045 = vadd.f32 0.0, %v1044
        %v1046 = vpop.f32.mrb[0].mxu0
        %v1047 = vadd.f32 0.0, %v1046
        %v1048 = vpop.f32.mrb[0].mxu0
        %v1049 = vadd.f32 0.0, %v1048
        %v1050 = vpop.f32.mrb[0].mxu0
        %v1051 = vadd.f32 0.0, %v1050
        %1052 = vmatprep.mubr.bf16.mxu0 0
        %1053 = vmatmul.mubr.bf16.gmra.mrb[0].mxu0 %v970
        %v1054 = vpop.f32.mrb[0].mxu0
        %v1055 = vadd.f32 0.0, %v1054
        %v1056 = vpop.f32.mrb[0].mxu0
        %v1057 = vadd.f32 0.0, %v1056
        %v1058 = vpop.f32.mrb[0].mxu0
        %v1059 = vadd.f32 0.0, %v1058
        %v1060 = vpop.f32.mrb[0].mxu0
        %v1061 = vadd.f32 0.0, %v1060
        %1062 = vmatprep.mubr.bf16.mxu0 0
        %1063 = vmatmul.mubr.bf16.gmra.mrb[0].mxu0 %v973
        %v1064 = vpop.f32.mrb[0].mxu0
        %v1065 = vadd.f32 0.0, %v1064
        %v1066 = vpop.f32.mrb[0].mxu0
        %v1067 = vadd.f32 0.0, %v1066
        %v1068 = vpop.f32.mrb[0].mxu0
        %v1069 = vadd.f32 0.0, %v1068
        %v1070 = vpop.f32.mrb[0].mxu0
        %v1071 = vadd.f32 0.0, %v1070
        %1072 = vmatprep.mubr.bf16.mxu0 0
        %1073 = vmatmul.mubr.bf16.gmra.mrb[0].mxu0 %v976
        %v1074 = vpop.f32.mrb[0].mxu0
        %v1075 = vadd.f32 0.0, %v1074
        %v1076 = vpop.f32.mrb[0].mxu0
        %v1077 = vadd.f32 0.0, %v1076
        %v1078 = vpop.f32.mrb[0].mxu0
        %v1079 = vadd.f32 0.0, %v1078
        %v1080 = vpop.f32.mrb[0].mxu0
        %v1081 = vadd.f32 0.0, %v1080
        %1082 = vmatprep.mubr.bf16.mxu0 0
        %1083 = vmatmul.mubr.bf16.gmra.mrb[0].mxu0 %v979
        %v1084 = vpop.f32.mrb[0].mxu0
        %v1085 = vadd.f32 0.0, %v1084
        %v1086 = vpop.f32.mrb[0].mxu0
        %v1087 = vadd.f32 0.0, %v1086
        %v1088 = vpop.f32.mrb[0].mxu0
        %v1089 = vadd.f32 0.0, %v1088
        %v1090 = vpop.f32.mrb[0].mxu0
        %v1091 = vadd.f32 0.0, %v1090
        %1092 = vmatprep.mubr.bf16.mxu0 0
        %1093 = vmatmul.mubr.bf16.gmra.mrb[0].mxu0 %v982
        %v1094 = vpop.f32.mrb[0].mxu0
        %v1095 = vadd.f32 0.0, %v1094
        %v1096 = vpop.f32.mrb[0].mxu0
        %v1097 = vadd.f32 0.0, %v1096
        %v1098 = vpop.f32.mrb[0].mxu0
        %v1099 = vadd.f32 0.0, %v1098
        %v1100 = vpop.f32.mrb[0].mxu0
        %v1101 = vadd.f32 0.0, %v1100
        %1102 = vdwg.mxu0
        %1103 = vxpose.xlu0.c.b16.start [1/8] %v424, 128
        %1104 = vxpose.xlu0.c.b16.cont [2/8] 0, 128
        %1105 = vxpose.xlu0.c.b16.cont [3/8] 0, 128
        %1106 = vxpose.xlu0.c.b16.cont [4/8] 0, 128
        %1107 = vxpose.xlu0.c.b16.cont [5/8] 0, 128
        %1108 = vxpose.xlu0.c.b16.cont [6/8] 0, 128
        %1109 = vxpose.xlu0.c.b16.cont [7/8] 0, 128
        %1110 = vxpose.xlu0.c.b16.end [8/8] 0, 128
        %v1111 = vpop.trf.xlu0
        %v1112 = vpop.trf.xlu0
        %v1113 = vpop.trf.xlu0
        %v1114 = vpop.trf.xlu0
        %v1115 = vpop.trf.xlu0
        %v1116 = vpop.trf.xlu0
        %v1117 = vpop.trf.xlu0
        %v1118 = vpop.trf.xlu0
        %v1120 = vunpack.c.l.b16 %v432
        %v1121 = vunpack.c.h.b16 %v432
        %v1122 = vpack.c.b16 %v1120, %v1120
        %v1123 = vpack.c.b16 %v1121, %v1121
        %v1125 = vsel %vm466, %v1111, 0
        %v1128 = vsel %vm466, %v1112, 0
        %v1131 = vsel %vm466, %v1113, 0
        %v1134 = vsel %vm466, %v1114, 0
        %v1137 = vsel %vm466, %v1115, 0
        %v1140 = vsel %vm466, %v1116, 0
        %v1143 = vsel %vm466, %v1117, 0
        %v1146 = vsel %vm466, %v1118, 0
        %v1149 = vsel %vm491, %v1122, 0
        %v1152 = vsel %vm491, %v1123, 0
        %1154 = vmatprep.subr.bf16.mxu0 %v1152
        %1155 = vmatpush1.bf16.msra.mxu0 %v1149
        %1156 = vmatprep.subr.bf16.mxu0 0
        %1157 = vmatpush1.bf16.msra.mxu0 0
        %1158 = vmatprep.subr.bf16.mxu0 0
        %1159 = vmatpush1.bf16.msra.mxu0 0
        %1160 = vmatprep.subr.bf16.mxu0 0
        %1161 = vmatpush1.bf16.msra.mxu0 0
        %1162 = vmatprep.subr.bf16.mxu0 0
        %1163 = vmatpush1.bf16.msra.mxu0 0
        %1164 = vmatprep.subr.bf16.mxu0 0
        %1165 = vmatpush1.bf16.msra.mxu0 0
        %1166 = vmatprep.subr.bf16.mxu0 0
        %1167 = vmatpush1.bf16.msra.mxu0 0
        %1168 = vmatprep.subr.bf16.mxu0 0
        %1169 = vmatpush1.bf16.msra.mxu0 0
        %1170 = vmatprep.subr.bf16.mxu0 0
        %1171 = vmatpush1.bf16.msra.mxu0 0
        %1172 = vmatprep.subr.bf16.mxu0 0
        %1173 = vmatpush1.bf16.msra.mxu0 0
        %1174 = vmatprep.subr.bf16.mxu0 0
        %1175 = vmatpush1.bf16.msra.mxu0 0
        %1176 = vmatprep.subr.bf16.mxu0 0
        %1177 = vmatpush1.bf16.msra.mxu0 0
        %1178 = vmatprep.subr.bf16.mxu0 0
        %1179 = vmatpush1.bf16.msra.mxu0 0
        %1180 = vmatprep.subr.bf16.mxu0 0
        %1181 = vmatpush1.bf16.msra.mxu0 0
        %1182 = vmatprep.subr.bf16.mxu0 0
        %1183 = vmatpush1.bf16.msra.mxu0 0
        %1184 = vmatprep.subr.bf16.mxu0 0
        %1185 = vmatpush1.bf16.msra.mxu0 0
        %1186 = vmatprep.mubr.bf16.mxu0 0
        %1187 = vmatmul.mubr.bf16.gmra.mrb[0].mxu0 %v1125
        %v1188 = vpop.f32.mrb[0].mxu0
        %v1189 = vadd.f32 0.0, %v1188
        %v1190 = vpop.f32.mrb[0].mxu0
        %v1191 = vadd.f32 0.0, %v1190
        %v1192 = vpop.f32.mrb[0].mxu0
        %v1193 = vadd.f32 0.0, %v1192
        %v1194 = vpop.f32.mrb[0].mxu0
        %v1195 = vadd.f32 0.0, %v1194
        %1196 = vmatprep.mubr.bf16.mxu0 0
        %1197 = vmatmul.mubr.bf16.gmra.mrb[0].mxu0 %v1128
        %v1198 = vpop.f32.mrb[0].mxu0
        %v1199 = vadd.f32 0.0, %v1198
        %v1200 = vpop.f32.mrb[0].mxu0
        %v1201 = vadd.f32 0.0, %v1200
        %v1202 = vpop.f32.mrb[0].mxu0
        %v1203 = vadd.f32 0.0, %v1202
        %v1204 = vpop.f32.mrb[0].mxu0
        %v1205 = vadd.f32 0.0, %v1204
        %1206 = vmatprep.mubr.bf16.mxu0 0
        %1207 = vmatmul.mubr.bf16.gmra.mrb[0].mxu0 %v1131
        %v1208 = vpop.f32.mrb[0].mxu0
        %v1209 = vadd.f32 0.0, %v1208
        %v1210 = vpop.f32.mrb[0].mxu0
        %v1211 = vadd.f32 0.0, %v1210
        %v1212 = vpop.f32.mrb[0].mxu0
        %v1213 = vadd.f32 0.0, %v1212
        %v1214 = vpop.f32.mrb[0].mxu0
        %v1215 = vadd.f32 0.0, %v1214
        %1216 = vmatprep.mubr.bf16.mxu0 0
        %1217 = vmatmul.mubr.bf16.gmra.mrb[0].mxu0 %v1134
        %v1218 = vpop.f32.mrb[0].mxu0
        %v1219 = vadd.f32 0.0, %v1218
        %v1220 = vpop.f32.mrb[0].mxu0
        %v1221 = vadd.f32 0.0, %v1220
        %v1222 = vpop.f32.mrb[0].mxu0
        %v1223 = vadd.f32 0.0, %v1222
        %v1224 = vpop.f32.mrb[0].mxu0
        %v1225 = vadd.f32 0.0, %v1224
        %1226 = vmatprep.mubr.bf16.mxu0 0
        %1227 = vmatmul.mubr.bf16.gmra.mrb[0].mxu0 %v1137
        %v1228 = vpop.f32.mrb[0].mxu0
        %v1229 = vadd.f32 0.0, %v1228
        %v1230 = vpop.f32.mrb[0].mxu0
        %v1231 = vadd.f32 0.0, %v1230
        %v1232 = vpop.f32.mrb[0].mxu0
        %v1233 = vadd.f32 0.0, %v1232
        %v1234 = vpop.f32.mrb[0].mxu0
        %v1235 = vadd.f32 0.0, %v1234
        %1236 = vmatprep.mubr.bf16.mxu0 0
        %1237 = vmatmul.mubr.bf16.gmra.mrb[0].mxu0 %v1140
        %v1238 = vpop.f32.mrb[0].mxu0
        %v1239 = vadd.f32 0.0, %v1238
        %v1240 = vpop.f32.mrb[0].mxu0
        %v1241 = vadd.f32 0.0, %v1240
        %v1242 = vpop.f32.mrb[0].mxu0
        %v1243 = vadd.f32 0.0, %v1242
        %v1244 = vpop.f32.mrb[0].mxu0
        %v1245 = vadd.f32 0.0, %v1244
        %1246 = vmatprep.mubr.bf16.mxu0 0
        %1247 = vmatmul.mubr.bf16.gmra.mrb[0].mxu0 %v1143
        %v1248 = vpop.f32.mrb[0].mxu0
        %v1249 = vadd.f32 0.0, %v1248
        %v1250 = vpop.f32.mrb[0].mxu0
        %v1251 = vadd.f32 0.0, %v1250
        %v1252 = vpop.f32.mrb[0].mxu0
        %v1253 = vadd.f32 0.0, %v1252
        %v1254 = vpop.f32.mrb[0].mxu0
        %v1255 = vadd.f32 0.0, %v1254
        %1256 = vmatprep.mubr.bf16.mxu0 0
        %1257 = vmatmul.mubr.bf16.gmra.mrb[0].mxu0 %v1146
        %v1258 = vpop.f32.mrb[0].mxu0
        %v1259 = vadd.f32 0.0, %v1258
        %v1260 = vpop.f32.mrb[0].mxu0
        %v1261 = vadd.f32 0.0, %v1260
        %v1262 = vpop.f32.mrb[0].mxu0
        %v1263 = vadd.f32 0.0, %v1262
        %v1264 = vpop.f32.mrb[0].mxu0
        %v1265 = vadd.f32 0.0, %v1264
        %1266 = vdwg.mxu0
        %1267 = vxpose.xlu0.c.b16.start [1/8] %v425, 128
        %1268 = vxpose.xlu0.c.b16.cont [2/8] 0, 128
        %1269 = vxpose.xlu0.c.b16.cont [3/8] 0, 128
        %1270 = vxpose.xlu0.c.b16.cont [4/8] 0, 128
        %1271 = vxpose.xlu0.c.b16.cont [5/8] 0, 128
        %1272 = vxpose.xlu0.c.b16.cont [6/8] 0, 128
        %1273 = vxpose.xlu0.c.b16.cont [7/8] 0, 128
        %1274 = vxpose.xlu0.c.b16.end [8/8] 0, 128
        %v1275 = vpop.trf.xlu0
        %v1276 = vpop.trf.xlu0
        %v1277 = vpop.trf.xlu0
        %v1278 = vpop.trf.xlu0
        %v1279 = vpop.trf.xlu0
        %v1280 = vpop.trf.xlu0
        %v1281 = vpop.trf.xlu0
        %v1282 = vpop.trf.xlu0
        %v1284 = vunpack.c.l.b16 %v433
        %v1285 = vunpack.c.h.b16 %v433
        %v1286 = vpack.c.b16 %v1284, %v1284
        %v1287 = vpack.c.b16 %v1285, %v1285
        %v1289 = vsel %vm466, %v1275, 0
        %v1292 = vsel %vm466, %v1276, 0
        %v1295 = vsel %vm466, %v1277, 0
        %v1298 = vsel %vm466, %v1278, 0
        %v1301 = vsel %vm466, %v1279, 0
        %v1304 = vsel %vm466, %v1280, 0
        %v1307 = vsel %vm466, %v1281, 0
        %v1310 = vsel %vm466, %v1282, 0
        %v1313 = vsel %vm491, %v1286, 0
        %v1316 = vsel %vm491, %v1287, 0
        %1318 = vmatprep.subr.bf16.mxu0 %v1316
        %1319 = vmatpush1.bf16.msra.mxu0 %v1313
        %1320 = vmatprep.subr.bf16.mxu0 0
        %1321 = vmatpush1.bf16.msra.mxu0 0
        %1322 = vmatprep.subr.bf16.mxu0 0
        %1323 = vmatpush1.bf16.msra.mxu0 0
        %1324 = vmatprep.subr.bf16.mxu0 0
        %1325 = vmatpush1.bf16.msra.mxu0 0
        %1326 = vmatprep.subr.bf16.mxu0 0
        %1327 = vmatpush1.bf16.msra.mxu0 0
        %1328 = vmatprep.subr.bf16.mxu0 0
        %1329 = vmatpush1.bf16.msra.mxu0 0
        %1330 = vmatprep.subr.bf16.mxu0 0
        %1331 = vmatpush1.bf16.msra.mxu0 0
        %1332 = vmatprep.subr.bf16.mxu0 0
        %1333 = vmatpush1.bf16.msra.mxu0 0
        %1334 = vmatprep.subr.bf16.mxu0 0
        %1335 = vmatpush1.bf16.msra.mxu0 0
        %1336 = vmatprep.subr.bf16.mxu0 0
        %1337 = vmatpush1.bf16.msra.mxu0 0
        %1338 = vmatprep.subr.bf16.mxu0 0
        %1339 = vmatpush1.bf16.msra.mxu0 0
        %1340 = vmatprep.subr.bf16.mxu0 0
        %1341 = vmatpush1.bf16.msra.mxu0 0
        %1342 = vmatprep.subr.bf16.mxu0 0
        %1343 = vmatpush1.bf16.msra.mxu0 0
        %1344 = vmatprep.subr.bf16.mxu0 0
        %1345 = vmatpush1.bf16.msra.mxu0 0
        %1346 = vmatprep.subr.bf16.mxu0 0
        %1347 = vmatpush1.bf16.msra.mxu0 0
        %1348 = vmatprep.subr.bf16.mxu0 0
        %1349 = vmatpush1.bf16.msra.mxu0 0
        %1350 = vmatprep.mubr.bf16.mxu0 0
        %1351 = vmatmul.mubr.bf16.gmra.mrb[0].mxu0 %v1289
        %v1352 = vpop.f32.mrb[0].mxu0
        %v1353 = vadd.f32 0.0, %v1352
        %v1354 = vpop.f32.mrb[0].mxu0
        %v1355 = vadd.f32 0.0, %v1354
        %v1356 = vpop.f32.mrb[0].mxu0
        %v1357 = vadd.f32 0.0, %v1356
        %v1358 = vpop.f32.mrb[0].mxu0
        %v1359 = vadd.f32 0.0, %v1358
        %1360 = vmatprep.mubr.bf16.mxu0 0
        %1361 = vmatmul.mubr.bf16.gmra.mrb[0].mxu0 %v1292
        %v1362 = vpop.f32.mrb[0].mxu0
        %v1363 = vadd.f32 0.0, %v1362
        %v1364 = vpop.f32.mrb[0].mxu0
        %v1365 = vadd.f32 0.0, %v1364
        %v1366 = vpop.f32.mrb[0].mxu0
        %v1367 = vadd.f32 0.0, %v1366
        %v1368 = vpop.f32.mrb[0].mxu0
        %v1369 = vadd.f32 0.0, %v1368
        %1370 = vmatprep.mubr.bf16.mxu0 0
        %1371 = vmatmul.mubr.bf16.gmra.mrb[0].mxu0 %v1295
        %v1372 = vpop.f32.mrb[0].mxu0
        %v1373 = vadd.f32 0.0, %v1372
        %v1374 = vpop.f32.mrb[0].mxu0
        %v1375 = vadd.f32 0.0, %v1374
        %v1376 = vpop.f32.mrb[0].mxu0
        %v1377 = vadd.f32 0.0, %v1376
        %v1378 = vpop.f32.mrb[0].mxu0
        %v1379 = vadd.f32 0.0, %v1378
        %1380 = vmatprep.mubr.bf16.mxu0 0
        %1381 = vmatmul.mubr.bf16.gmra.mrb[0].mxu0 %v1298
        %v1382 = vpop.f32.mrb[0].mxu0
        %v1383 = vadd.f32 0.0, %v1382
        %v1384 = vpop.f32.mrb[0].mxu0
        %v1385 = vadd.f32 0.0, %v1384
        %v1386 = vpop.f32.mrb[0].mxu0
        %v1387 = vadd.f32 0.0, %v1386
        %v1388 = vpop.f32.mrb[0].mxu0
        %v1389 = vadd.f32 0.0, %v1388
        %1390 = vmatprep.mubr.bf16.mxu0 0
        %1391 = vmatmul.mubr.bf16.gmra.mrb[0].mxu0 %v1301
        %v1392 = vpop.f32.mrb[0].mxu0
        %v1393 = vadd.f32 0.0, %v1392
        %v1394 = vpop.f32.mrb[0].mxu0
        %v1395 = vadd.f32 0.0, %v1394
        %v1396 = vpop.f32.mrb[0].mxu0
        %v1397 = vadd.f32 0.0, %v1396
        %v1398 = vpop.f32.mrb[0].mxu0
        %v1399 = vadd.f32 0.0, %v1398
        %1400 = vmatprep.mubr.bf16.mxu0 0
        %1401 = vmatmul.mubr.bf16.gmra.mrb[0].mxu0 %v1304
        %v1402 = vpop.f32.mrb[0].mxu0
        %v1403 = vadd.f32 0.0, %v1402
        %v1404 = vpop.f32.mrb[0].mxu0
        %v1405 = vadd.f32 0.0, %v1404
        %v1406 = vpop.f32.mrb[0].mxu0
        %v1407 = vadd.f32 0.0, %v1406
        %v1408 = vpop.f32.mrb[0].mxu0
        %v1409 = vadd.f32 0.0, %v1408
        %1410 = vmatprep.mubr.bf16.mxu0 0
        %1411 = vmatmul.mubr.bf16.gmra.mrb[0].mxu0 %v1307
        %v1412 = vpop.f32.mrb[0].mxu0
        %v1413 = vadd.f32 0.0, %v1412
        %v1414 = vpop.f32.mrb[0].mxu0
        %v1415 = vadd.f32 0.0, %v1414
        %v1416 = vpop.f32.mrb[0].mxu0
        %v1417 = vadd.f32 0.0, %v1416
        %v1418 = vpop.f32.mrb[0].mxu0
        %v1419 = vadd.f32 0.0, %v1418
        %1420 = vmatprep.mubr.bf16.mxu0 0
        %1421 = vmatmul.mubr.bf16.gmra.mrb[0].mxu0 %v1310
        %v1422 = vpop.f32.mrb[0].mxu0
        %v1423 = vadd.f32 0.0, %v1422
        %v1424 = vpop.f32.mrb[0].mxu0
        %v1425 = vadd.f32 0.0, %v1424
        %v1426 = vpop.f32.mrb[0].mxu0
        %v1427 = vadd.f32 0.0, %v1426
        %v1428 = vpop.f32.mrb[0].mxu0
        %v1429 = vadd.f32 0.0, %v1428
        %1430 = vdwg.mxu0
        %1431 = vxpose.xlu0.c.b16.start [1/8] %v426, 128
        %1432 = vxpose.xlu0.c.b16.cont [2/8] 0, 128
        %1433 = vxpose.xlu0.c.b16.cont [3/8] 0, 128
        %1434 = vxpose.xlu0.c.b16.cont [4/8] 0, 128
        %1435 = vxpose.xlu0.c.b16.cont [5/8] 0, 128
        %1436 = vxpose.xlu0.c.b16.cont [6/8] 0, 128
        %1437 = vxpose.xlu0.c.b16.cont [7/8] 0, 128
        %1438 = vxpose.xlu0.c.b16.end [8/8] 0, 128
        %v1439 = vpop.trf.xlu0
        %v1440 = vpop.trf.xlu0
        %v1441 = vpop.trf.xlu0
        %v1442 = vpop.trf.xlu0
        %v1443 = vpop.trf.xlu0
        %v1444 = vpop.trf.xlu0
        %v1445 = vpop.trf.xlu0
        %v1446 = vpop.trf.xlu0
        %v1448 = vunpack.c.l.b16 %v434
        %v1449 = vunpack.c.h.b16 %v434
        %v1450 = vpack.c.b16 %v1448, %v1448
        %v1451 = vpack.c.b16 %v1449, %v1449
        %v1453 = vsel %vm466, %v1439, 0
        %v1456 = vsel %vm466, %v1440, 0
        %v1459 = vsel %vm466, %v1441, 0
        %v1462 = vsel %vm466, %v1442, 0
        %v1465 = vsel %vm466, %v1443, 0
        %v1468 = vsel %vm466, %v1444, 0
        %v1471 = vsel %vm466, %v1445, 0
        %v1474 = vsel %vm466, %v1446, 0
        %v1477 = vsel %vm491, %v1450, 0
        %v1480 = vsel %vm491, %v1451, 0
        %1482 = vmatprep.subr.bf16.mxu0 %v1480
        %1483 = vmatpush1.bf16.msra.mxu0 %v1477
        %1484 = vmatprep.subr.bf16.mxu0 0
        %1485 = vmatpush1.bf16.msra.mxu0 0
        %1486 = vmatprep.subr.bf16.mxu0 0
        %1487 = vmatpush1.bf16.msra.mxu0 0
        %1488 = vmatprep.subr.bf16.mxu0 0
        %1489 = vmatpush1.bf16.msra.mxu0 0
        %1490 = vmatprep.subr.bf16.mxu0 0
        %1491 = vmatpush1.bf16.msra.mxu0 0
        %1492 = vmatprep.subr.bf16.mxu0 0
        %1493 = vmatpush1.bf16.msra.mxu0 0
        %1494 = vmatprep.subr.bf16.mxu0 0
        %1495 = vmatpush1.bf16.msra.mxu0 0
        %1496 = vmatprep.subr.bf16.mxu0 0
        %1497 = vmatpush1.bf16.msra.mxu0 0
        %1498 = vmatprep.subr.bf16.mxu0 0
        %1499 = vmatpush1.bf16.msra.mxu0 0
        %1500 = vmatprep.subr.bf16.mxu0 0
        %1501 = vmatpush1.bf16.msra.mxu0 0
        %1502 = vmatprep.subr.bf16.mxu0 0
        %1503 = vmatpush1.bf16.msra.mxu0 0
        %1504 = vmatprep.subr.bf16.mxu0 0
        %1505 = vmatpush1.bf16.msra.mxu0 0
        %1506 = vmatprep.subr.bf16.mxu0 0
        %1507 = vmatpush1.bf16.msra.mxu0 0
        %1508 = vmatprep.subr.bf16.mxu0 0
        %1509 = vmatpush1.bf16.msra.mxu0 0
        %1510 = vmatprep.subr.bf16.mxu0 0
        %1511 = vmatpush1.bf16.msra.mxu0 0
        %1512 = vmatprep.subr.bf16.mxu0 0
        %1513 = vmatpush1.bf16.msra.mxu0 0
        %1514 = vmatprep.mubr.bf16.mxu0 0
        %1515 = vmatmul.mubr.bf16.gmra.mrb[0].mxu0 %v1453
        %v1516 = vpop.f32.mrb[0].mxu0
        %v1517 = vadd.f32 0.0, %v1516
        %v1518 = vpop.f32.mrb[0].mxu0
        %v1519 = vadd.f32 0.0, %v1518
        %v1520 = vpop.f32.mrb[0].mxu0
        %v1521 = vadd.f32 0.0, %v1520
        %v1522 = vpop.f32.mrb[0].mxu0
        %v1523 = vadd.f32 0.0, %v1522
        %1524 = vmatprep.mubr.bf16.mxu0 0
        %1525 = vmatmul.mubr.bf16.gmra.mrb[0].mxu0 %v1456
        %v1526 = vpop.f32.mrb[0].mxu0
        %v1527 = vadd.f32 0.0, %v1526
        %v1528 = vpop.f32.mrb[0].mxu0
        %v1529 = vadd.f32 0.0, %v1528
        %v1530 = vpop.f32.mrb[0].mxu0
        %v1531 = vadd.f32 0.0, %v1530
        %v1532 = vpop.f32.mrb[0].mxu0
        %v1533 = vadd.f32 0.0, %v1532
        %1534 = vmatprep.mubr.bf16.mxu0 0
        %1535 = vmatmul.mubr.bf16.gmra.mrb[0].mxu0 %v1459
        %v1536 = vpop.f32.mrb[0].mxu0
        %v1537 = vadd.f32 0.0, %v1536
        %v1538 = vpop.f32.mrb[0].mxu0
        %v1539 = vadd.f32 0.0, %v1538
        %v1540 = vpop.f32.mrb[0].mxu0
        %v1541 = vadd.f32 0.0, %v1540
        %v1542 = vpop.f32.mrb[0].mxu0
        %v1543 = vadd.f32 0.0, %v1542
        %1544 = vmatprep.mubr.bf16.mxu0 0
        %1545 = vmatmul.mubr.bf16.gmra.mrb[0].mxu0 %v1462
        %v1546 = vpop.f32.mrb[0].mxu0
        %v1547 = vadd.f32 0.0, %v1546
        %v1548 = vpop.f32.mrb[0].mxu0
        %v1549 = vadd.f32 0.0, %v1548
        %v1550 = vpop.f32.mrb[0].mxu0
        %v1551 = vadd.f32 0.0, %v1550
        %v1552 = vpop.f32.mrb[0].mxu0
        %v1553 = vadd.f32 0.0, %v1552
        %1554 = vmatprep.mubr.bf16.mxu0 0
        %1555 = vmatmul.mubr.bf16.gmra.mrb[0].mxu0 %v1465
        %v1556 = vpop.f32.mrb[0].mxu0
        %v1557 = vadd.f32 0.0, %v1556
        %v1558 = vpop.f32.mrb[0].mxu0
        %v1559 = vadd.f32 0.0, %v1558
        %v1560 = vpop.f32.mrb[0].mxu0
        %v1561 = vadd.f32 0.0, %v1560
        %v1562 = vpop.f32.mrb[0].mxu0
        %v1563 = vadd.f32 0.0, %v1562
        %1564 = vmatprep.mubr.bf16.mxu0 0
        %1565 = vmatmul.mubr.bf16.gmra.mrb[0].mxu0 %v1468
        %v1566 = vpop.f32.mrb[0].mxu0
        %v1567 = vadd.f32 0.0, %v1566
        %v1568 = vpop.f32.mrb[0].mxu0
        %v1569 = vadd.f32 0.0, %v1568
        %v1570 = vpop.f32.mrb[0].mxu0
        %v1571 = vadd.f32 0.0, %v1570
        %v1572 = vpop.f32.mrb[0].mxu0
        %v1573 = vadd.f32 0.0, %v1572
        %1574 = vmatprep.mubr.bf16.mxu0 0
        %1575 = vmatmul.mubr.bf16.gmra.mrb[0].mxu0 %v1471
        %v1576 = vpop.f32.mrb[0].mxu0
        %v1577 = vadd.f32 0.0, %v1576
        %v1578 = vpop.f32.mrb[0].mxu0
        %v1579 = vadd.f32 0.0, %v1578
        %v1580 = vpop.f32.mrb[0].mxu0
        %v1581 = vadd.f32 0.0, %v1580
        %v1582 = vpop.f32.mrb[0].mxu0
        %v1583 = vadd.f32 0.0, %v1582
        %1584 = vmatprep.mubr.bf16.mxu0 0
        %1585 = vmatmul.mubr.bf16.gmra.mrb[0].mxu0 %v1474
        %v1586 = vpop.f32.mrb[0].mxu0
        %v1587 = vadd.f32 0.0, %v1586
        %v1588 = vpop.f32.mrb[0].mxu0
        %v1589 = vadd.f32 0.0, %v1588
        %v1590 = vpop.f32.mrb[0].mxu0
        %v1591 = vadd.f32 0.0, %v1590
        %v1592 = vpop.f32.mrb[0].mxu0
        %v1593 = vadd.f32 0.0, %v1592
        %1594 = vdwg.mxu0
        %1595 = vxpose.xlu0.c.b16.start [1/8] %v427, 128
        %1596 = vxpose.xlu0.c.b16.cont [2/8] 0, 128
        %1597 = vxpose.xlu0.c.b16.cont [3/8] 0, 128
        %1598 = vxpose.xlu0.c.b16.cont [4/8] 0, 128
        %1599 = vxpose.xlu0.c.b16.cont [5/8] 0, 128
        %1600 = vxpose.xlu0.c.b16.cont [6/8] 0, 128
        %1601 = vxpose.xlu0.c.b16.cont [7/8] 0, 128
        %1602 = vxpose.xlu0.c.b16.end [8/8] 0, 128
        %v1603 = vpop.trf.xlu0
        %v1604 = vpop.trf.xlu0
        %v1605 = vpop.trf.xlu0
        %v1606 = vpop.trf.xlu0
        %v1607 = vpop.trf.xlu0
        %v1608 = vpop.trf.xlu0
        %v1609 = vpop.trf.xlu0
        %v1610 = vpop.trf.xlu0
        %v1612 = vunpack.c.l.b16 %v435
        %v1613 = vunpack.c.h.b16 %v435
        %v1614 = vpack.c.b16 %v1612, %v1612
        %v1615 = vpack.c.b16 %v1613, %v1613
        %v1617 = vsel %vm466, %v1603, 0
        %v1620 = vsel %vm466, %v1604, 0
        %v1623 = vsel %vm466, %v1605, 0
        %v1626 = vsel %vm466, %v1606, 0
        %v1629 = vsel %vm466, %v1607, 0
        %v1632 = vsel %vm466, %v1608, 0
        %v1635 = vsel %vm466, %v1609, 0
        %v1638 = vsel %vm466, %v1610, 0
        %v1641 = vsel %vm491, %v1614, 0
        %v1644 = vsel %vm491, %v1615, 0
        %1646 = vmatprep.subr.bf16.mxu0 %v1644
        %1647 = vmatpush1.bf16.msra.mxu0 %v1641
        %1648 = vmatprep.subr.bf16.mxu0 0
        %1649 = vmatpush1.bf16.msra.mxu0 0
        %1650 = vmatprep.subr.bf16.mxu0 0
        %1651 = vmatpush1.bf16.msra.mxu0 0
        %1652 = vmatprep.subr.bf16.mxu0 0
        %1653 = vmatpush1.bf16.msra.mxu0 0
        %1654 = vmatprep.subr.bf16.mxu0 0
        %1655 = vmatpush1.bf16.msra.mxu0 0
        %1656 = vmatprep.subr.bf16.mxu0 0
        %1657 = vmatpush1.bf16.msra.mxu0 0
        %1658 = vmatprep.subr.bf16.mxu0 0
        %1659 = vmatpush1.bf16.msra.mxu0 0
        %1660 = vmatprep.subr.bf16.mxu0 0
        %1661 = vmatpush1.bf16.msra.mxu0 0
        %1662 = vmatprep.subr.bf16.mxu0 0
        %1663 = vmatpush1.bf16.msra.mxu0 0
        %1664 = vmatprep.subr.bf16.mxu0 0
        %1665 = vmatpush1.bf16.msra.mxu0 0
        %1666 = vmatprep.subr.bf16.mxu0 0
        %1667 = vmatpush1.bf16.msra.mxu0 0
        %1668 = vmatprep.subr.bf16.mxu0 0
        %1669 = vmatpush1.bf16.msra.mxu0 0
        %1670 = vmatprep.subr.bf16.mxu0 0
        %1671 = vmatpush1.bf16.msra.mxu0 0
        %1672 = vmatprep.subr.bf16.mxu0 0
        %1673 = vmatpush1.bf16.msra.mxu0 0
        %1674 = vmatprep.subr.bf16.mxu0 0
        %1675 = vmatpush1.bf16.msra.mxu0 0
        %1676 = vmatprep.subr.bf16.mxu0 0
        %1677 = vmatpush1.bf16.msra.mxu0 0
        %1678 = vmatprep.mubr.bf16.mxu0 0
        %1679 = vmatmul.mubr.bf16.gmra.mrb[0].mxu0 %v1617
        %v1680 = vpop.f32.mrb[0].mxu0
        %v1681 = vadd.f32 0.0, %v1680
        %v1682 = vpop.f32.mrb[0].mxu0
        %v1683 = vadd.f32 0.0, %v1682
        %v1684 = vpop.f32.mrb[0].mxu0
        %v1685 = vadd.f32 0.0, %v1684
        %v1686 = vpop.f32.mrb[0].mxu0
        %v1687 = vadd.f32 0.0, %v1686
        %1688 = vmatprep.mubr.bf16.mxu0 0
        %1689 = vmatmul.mubr.bf16.gmra.mrb[0].mxu0 %v1620
        %v1690 = vpop.f32.mrb[0].mxu0
        %v1691 = vadd.f32 0.0, %v1690
        %v1692 = vpop.f32.mrb[0].mxu0
        %v1693 = vadd.f32 0.0, %v1692
        %v1694 = vpop.f32.mrb[0].mxu0
        %v1695 = vadd.f32 0.0, %v1694
        %v1696 = vpop.f32.mrb[0].mxu0
        %v1697 = vadd.f32 0.0, %v1696
        %1698 = vmatprep.mubr.bf16.mxu0 0
        %1699 = vmatmul.mubr.bf16.gmra.mrb[0].mxu0 %v1623
        %v1700 = vpop.f32.mrb[0].mxu0
        %v1701 = vadd.f32 0.0, %v1700
        %v1702 = vpop.f32.mrb[0].mxu0
        %v1703 = vadd.f32 0.0, %v1702
        %v1704 = vpop.f32.mrb[0].mxu0
        %v1705 = vadd.f32 0.0, %v1704
        %v1706 = vpop.f32.mrb[0].mxu0
        %v1707 = vadd.f32 0.0, %v1706
        %1708 = vmatprep.mubr.bf16.mxu0 0
        %1709 = vmatmul.mubr.bf16.gmra.mrb[0].mxu0 %v1626
        %v1710 = vpop.f32.mrb[0].mxu0
        %v1711 = vadd.f32 0.0, %v1710
        %v1712 = vpop.f32.mrb[0].mxu0
        %v1713 = vadd.f32 0.0, %v1712
        %v1714 = vpop.f32.mrb[0].mxu0
        %v1715 = vadd.f32 0.0, %v1714
        %v1716 = vpop.f32.mrb[0].mxu0
        %v1717 = vadd.f32 0.0, %v1716
        %1718 = vmatprep.mubr.bf16.mxu0 0
        %1719 = vmatmul.mubr.bf16.gmra.mrb[0].mxu0 %v1629
        %v1720 = vpop.f32.mrb[0].mxu0
        %v1721 = vadd.f32 0.0, %v1720
        %v1722 = vpop.f32.mrb[0].mxu0
        %v1723 = vadd.f32 0.0, %v1722
        %v1724 = vpop.f32.mrb[0].mxu0
        %v1725 = vadd.f32 0.0, %v1724
        %v1726 = vpop.f32.mrb[0].mxu0
        %v1727 = vadd.f32 0.0, %v1726
        %1728 = vmatprep.mubr.bf16.mxu0 0
        %1729 = vmatmul.mubr.bf16.gmra.mrb[0].mxu0 %v1632
        %v1730 = vpop.f32.mrb[0].mxu0
        %v1731 = vadd.f32 0.0, %v1730
        %v1732 = vpop.f32.mrb[0].mxu0
        %v1733 = vadd.f32 0.0, %v1732
        %v1734 = vpop.f32.mrb[0].mxu0
        %v1735 = vadd.f32 0.0, %v1734
        %v1736 = vpop.f32.mrb[0].mxu0
        %v1737 = vadd.f32 0.0, %v1736
        %1738 = vmatprep.mubr.bf16.mxu0 0
        %1739 = vmatmul.mubr.bf16.gmra.mrb[0].mxu0 %v1635
        %v1740 = vpop.f32.mrb[0].mxu0
        %v1741 = vadd.f32 0.0, %v1740
        %v1742 = vpop.f32.mrb[0].mxu0
        %v1743 = vadd.f32 0.0, %v1742
        %v1744 = vpop.f32.mrb[0].mxu0
        %v1745 = vadd.f32 0.0, %v1744
        %v1746 = vpop.f32.mrb[0].mxu0
        %v1747 = vadd.f32 0.0, %v1746
        %1748 = vmatprep.mubr.bf16.mxu0 0
        %1749 = vmatmul.mubr.bf16.gmra.mrb[0].mxu0 %v1638
        %v1750 = vpop.f32.mrb[0].mxu0
        %v1751 = vadd.f32 0.0, %v1750
        %v1752 = vpop.f32.mrb[0].mxu0
        %v1753 = vadd.f32 0.0, %v1752
        %v1754 = vpop.f32.mrb[0].mxu0
        %v1755 = vadd.f32 0.0, %v1754
        %v1756 = vpop.f32.mrb[0].mxu0
        %v1757 = vadd.f32 0.0, %v1756
        %1758 = vdwg.mxu0
        %v1759 = vmax.f32 %v533, %v535
        %1760 = vmax.xlane.f32.xlu0 %v1759
        %v1761 = vpop.xlane.xlu0 %1760
        %v1762 = vmax.f32 %v537, %v539
        %1763 = vmax.xlane.f32.xlu0 %v1762
        %v1764 = vpop.xlane.xlu0 %1763
        %v1765 = vmax.f32 %v543, %v545
        %1766 = vmax.xlane.f32.xlu0 %v1765
        %v1767 = vpop.xlane.xlu0 %1766
        %v1768 = vmax.f32 %v547, %v549
        %1769 = vmax.xlane.f32.xlu0 %v1768
        %v1770 = vpop.xlane.xlu0 %1769
        %v1771 = vmax.f32 %v553, %v555
        %1772 = vmax.xlane.f32.xlu0 %v1771
        %v1773 = vpop.xlane.xlu0 %1772
        %v1774 = vmax.f32 %v557, %v559
        %1775 = vmax.xlane.f32.xlu0 %v1774
        %v1776 = vpop.xlane.xlu0 %1775
        %v1777 = vmax.f32 %v563, %v565
        %1778 = vmax.xlane.f32.xlu0 %v1777
        %v1779 = vpop.xlane.xlu0 %1778
        %v1780 = vmax.f32 %v567, %v569
        %1781 = vmax.xlane.f32.xlu0 %v1780
        %v1782 = vpop.xlane.xlu0 %1781
        %v1783 = vmax.f32 %v573, %v575
        %1784 = vmax.xlane.f32.xlu0 %v1783
        %v1785 = vpop.xlane.xlu0 %1784
        %v1786 = vmax.f32 %v577, %v579
        %1787 = vmax.xlane.f32.xlu0 %v1786
        %v1788 = vpop.xlane.xlu0 %1787
        %v1789 = vmax.f32 %v583, %v585
        %1790 = vmax.xlane.f32.xlu0 %v1789
        %v1791 = vpop.xlane.xlu0 %1790
        %v1792 = vmax.f32 %v587, %v589
        %1793 = vmax.xlane.f32.xlu0 %v1792
        %v1794 = vpop.xlane.xlu0 %1793
        %v1795 = vmax.f32 %v593, %v595
        %1796 = vmax.xlane.f32.xlu0 %v1795
        %v1797 = vpop.xlane.xlu0 %1796
        %v1798 = vmax.f32 %v597, %v599
        %1799 = vmax.xlane.f32.xlu0 %v1798
        %v1800 = vpop.xlane.xlu0 %1799
        %v1801 = vmax.f32 %v603, %v605
        %1802 = vmax.xlane.f32.xlu0 %v1801
        %v1803 = vpop.xlane.xlu0 %1802
        %v1804 = vmax.f32 %v607, %v609
        %1805 = vmax.xlane.f32.xlu0 %v1804
        %v1806 = vpop.xlane.xlu0 %1805
        %v1807 = vmax.f32 %v697, %v699
        %1808 = vmax.xlane.f32.xlu0 %v1807
        %v1809 = vpop.xlane.xlu0 %1808
        %v1810 = vmax.f32 %v701, %v703
        %1811 = vmax.xlane.f32.xlu0 %v1810
        %v1812 = vpop.xlane.xlu0 %1811
        %v1813 = vmax.f32 %v707, %v709
        %1814 = vmax.xlane.f32.xlu0 %v1813
        %v1815 = vpop.xlane.xlu0 %1814
        %v1816 = vmax.f32 %v711, %v713
        %1817 = vmax.xlane.f32.xlu0 %v1816
        %v1818 = vpop.xlane.xlu0 %1817
        %v1819 = vmax.f32 %v717, %v719
        %1820 = vmax.xlane.f32.xlu0 %v1819
        %v1821 = vpop.xlane.xlu0 %1820
        %v1822 = vmax.f32 %v721, %v723
        %1823 = vmax.xlane.f32.xlu0 %v1822
        %v1824 = vpop.xlane.xlu0 %1823
        %v1825 = vmax.f32 %v727, %v729
        %1826 = vmax.xlane.f32.xlu0 %v1825
        %v1827 = vpop.xlane.xlu0 %1826
        %v1828 = vmax.f32 %v731, %v733
        %1829 = vmax.xlane.f32.xlu0 %v1828
        %v1830 = vpop.xlane.xlu0 %1829
        %v1831 = vmax.f32 %v737, %v739
        %1832 = vmax.xlane.f32.xlu0 %v1831
        %v1833 = vpop.xlane.xlu0 %1832
        %v1834 = vmax.f32 %v741, %v743
        %1835 = vmax.xlane.f32.xlu0 %v1834
        %v1836 = vpop.xlane.xlu0 %1835
        %v1837 = vmax.f32 %v747, %v749
        %1838 = vmax.xlane.f32.xlu0 %v1837
        %v1839 = vpop.xlane.xlu0 %1838
        %v1840 = vmax.f32 %v751, %v753
        %1841 = vmax.xlane.f32.xlu0 %v1840
        %v1842 = vpop.xlane.xlu0 %1841
        %v1843 = vmax.f32 %v757, %v759
        %1844 = vmax.xlane.f32.xlu0 %v1843
        %v1845 = vpop.xlane.xlu0 %1844
        %v1846 = vmax.f32 %v761, %v763
        %1847 = vmax.xlane.f32.xlu0 %v1846
        %v1848 = vpop.xlane.xlu0 %1847
        %v1849 = vmax.f32 %v767, %v769
        %1850 = vmax.xlane.f32.xlu0 %v1849
        %v1851 = vpop.xlane.xlu0 %1850
        %v1852 = vmax.f32 %v771, %v773
        %1853 = vmax.xlane.f32.xlu0 %v1852
        %v1854 = vpop.xlane.xlu0 %1853
        %v1855 = vmax.f32 %v861, %v863
        %1856 = vmax.xlane.f32.xlu0 %v1855
        %v1857 = vpop.xlane.xlu0 %1856
        %v1858 = vmax.f32 %v865, %v867
        %1859 = vmax.xlane.f32.xlu0 %v1858
        %v1860 = vpop.xlane.xlu0 %1859
        %v1861 = vmax.f32 %v871, %v873
        %1862 = vmax.xlane.f32.xlu0 %v1861
        %v1863 = vpop.xlane.xlu0 %1862
        %v1864 = vmax.f32 %v875, %v877
        %1865 = vmax.xlane.f32.xlu0 %v1864
        %v1866 = vpop.xlane.xlu0 %1865
        %v1867 = vmax.f32 %v881, %v883
        %1868 = vmax.xlane.f32.xlu0 %v1867
        %v1869 = vpop.xlane.xlu0 %1868
        %v1870 = vmax.f32 %v885, %v887
        %1871 = vmax.xlane.f32.xlu0 %v1870
        %v1872 = vpop.xlane.xlu0 %1871
        %v1873 = vmax.f32 %v891, %v893
        %1874 = vmax.xlane.f32.xlu0 %v1873
        %v1875 = vpop.xlane.xlu0 %1874
        %v1876 = vmax.f32 %v895, %v897
        %1877 = vmax.xlane.f32.xlu0 %v1876
        %v1878 = vpop.xlane.xlu0 %1877
        %v1879 = vmax.f32 %v901, %v903
        %1880 = vmax.xlane.f32.xlu0 %v1879
        %v1881 = vpop.xlane.xlu0 %1880
        %v1882 = vmax.f32 %v905, %v907
        %1883 = vmax.xlane.f32.xlu0 %v1882
        %v1884 = vpop.xlane.xlu0 %1883
        %v1885 = vmax.f32 %v911, %v913
        %1886 = vmax.xlane.f32.xlu0 %v1885
        %v1887 = vpop.xlane.xlu0 %1886
        %v1888 = vmax.f32 %v915, %v917
        %1889 = vmax.xlane.f32.xlu0 %v1888
        %v1890 = vpop.xlane.xlu0 %1889
        %v1891 = vmax.f32 %v921, %v923
        %1892 = vmax.xlane.f32.xlu0 %v1891
        %v1893 = vpop.xlane.xlu0 %1892
        %v1894 = vmax.f32 %v925, %v927
        %1895 = vmax.xlane.f32.xlu0 %v1894
        %v1896 = vpop.xlane.xlu0 %1895
        %v1897 = vmax.f32 %v931, %v933
        %1898 = vmax.xlane.f32.xlu0 %v1897
        %v1899 = vpop.xlane.xlu0 %1898
        %v1900 = vmax.f32 %v935, %v937
        %1901 = vmax.xlane.f32.xlu0 %v1900
        %v1902 = vpop.xlane.xlu0 %1901
        %v1903 = vmax.f32 %v1025, %v1027
        %1904 = vmax.xlane.f32.xlu0 %v1903
        %v1905 = vpop.xlane.xlu0 %1904
        %v1906 = vmax.f32 %v1029, %v1031
        %1907 = vmax.xlane.f32.xlu0 %v1906
        %v1908 = vpop.xlane.xlu0 %1907
        %v1909 = vmax.f32 %v1035, %v1037
        %1910 = vmax.xlane.f32.xlu0 %v1909
        %v1911 = vpop.xlane.xlu0 %1910
        %v1912 = vmax.f32 %v1039, %v1041
        %1913 = vmax.xlane.f32.xlu0 %v1912
        %v1914 = vpop.xlane.xlu0 %1913
        %v1915 = vmax.f32 %v1045, %v1047
        %1916 = vmax.xlane.f32.xlu0 %v1915
        %v1917 = vpop.xlane.xlu0 %1916
        %v1918 = vmax.f32 %v1049, %v1051
        %1919 = vmax.xlane.f32.xlu0 %v1918
        %v1920 = vpop.xlane.xlu0 %1919
        %v1921 = vmax.f32 %v1055, %v1057
        %1922 = vmax.xlane.f32.xlu0 %v1921
        %v1923 = vpop.xlane.xlu0 %1922
        %v1924 = vmax.f32 %v1059, %v1061
        %1925 = vmax.xlane.f32.xlu0 %v1924
        %v1926 = vpop.xlane.xlu0 %1925
        %v1927 = vmax.f32 %v1065, %v1067
        %1928 = vmax.xlane.f32.xlu0 %v1927
        %v1929 = vpop.xlane.xlu0 %1928
        %v1930 = vmax.f32 %v1069, %v1071
        %1931 = vmax.xlane.f32.xlu0 %v1930
        %v1932 = vpop.xlane.xlu0 %1931
        %v1933 = vmax.f32 %v1075, %v1077
        %1934 = vmax.xlane.f32.xlu0 %v1933
        %v1935 = vpop.xlane.xlu0 %1934
        %v1936 = vmax.f32 %v1079, %v1081
        %1937 = vmax.xlane.f32.xlu0 %v1936
        %v1938 = vpop.xlane.xlu0 %1937
        %v1939 = vmax.f32 %v1085, %v1087
        %1940 = vmax.xlane.f32.xlu0 %v1939
        %v1941 = vpop.xlane.xlu0 %1940
        %v1942 = vmax.f32 %v1089, %v1091
        %1943 = vmax.xlane.f32.xlu0 %v1942
        %v1944 = vpop.xlane.xlu0 %1943
        %v1945 = vmax.f32 %v1095, %v1097
        %1946 = vmax.xlane.f32.xlu0 %v1945
        %v1947 = vpop.xlane.xlu0 %1946
        %v1948 = vmax.f32 %v1099, %v1101
        %1949 = vmax.xlane.f32.xlu0 %v1948
        %v1950 = vpop.xlane.xlu0 %1949
        %v1951 = vmax.f32 %v1189, %v1191
        %1952 = vmax.xlane.f32.xlu0 %v1951
        %v1953 = vpop.xlane.xlu0 %1952
        %v1954 = vmax.f32 %v1193, %v1195
        %1955 = vmax.xlane.f32.xlu0 %v1954
        %v1956 = vpop.xlane.xlu0 %1955
        %v1957 = vmax.f32 %v1199, %v1201
        %1958 = vmax.xlane.f32.xlu0 %v1957
        %v1959 = vpop.xlane.xlu0 %1958
        %v1960 = vmax.f32 %v1203, %v1205
        %1961 = vmax.xlane.f32.xlu0 %v1960
        %v1962 = vpop.xlane.xlu0 %1961
        %v1963 = vmax.f32 %v1209, %v1211
        %1964 = vmax.xlane.f32.xlu0 %v1963
        %v1965 = vpop.xlane.xlu0 %1964
        %v1966 = vmax.f32 %v1213, %v1215
        %1967 = vmax.xlane.f32.xlu0 %v1966
        %v1968 = vpop.xlane.xlu0 %1967
        %v1969 = vmax.f32 %v1219, %v1221
        %1970 = vmax.xlane.f32.xlu0 %v1969
        %v1971 = vpop.xlane.xlu0 %1970
        %v1972 = vmax.f32 %v1223, %v1225
        %1973 = vmax.xlane.f32.xlu0 %v1972
        %v1974 = vpop.xlane.xlu0 %1973
        %v1975 = vmax.f32 %v1229, %v1231
        %1976 = vmax.xlane.f32.xlu0 %v1975
        %v1977 = vpop.xlane.xlu0 %1976
        %v1978 = vmax.f32 %v1233, %v1235
        %1979 = vmax.xlane.f32.xlu0 %v1978
        %v1980 = vpop.xlane.xlu0 %1979
        %v1981 = vmax.f32 %v1239, %v1241
        %1982 = vmax.xlane.f32.xlu0 %v1981
        %v1983 = vpop.xlane.xlu0 %1982
        %v1984 = vmax.f32 %v1243, %v1245
        %1985 = vmax.xlane.f32.xlu0 %v1984
        %v1986 = vpop.xlane.xlu0 %1985
        %v1987 = vmax.f32 %v1249, %v1251
        %1988 = vmax.xlane.f32.xlu0 %v1987
        %v1989 = vpop.xlane.xlu0 %1988
        %v1990 = vmax.f32 %v1253, %v1255
        %1991 = vmax.xlane.f32.xlu0 %v1990
        %v1992 = vpop.xlane.xlu0 %1991
        %v1993 = vmax.f32 %v1259, %v1261
        %1994 = vmax.xlane.f32.xlu0 %v1993
        %v1995 = vpop.xlane.xlu0 %1994
        %v1996 = vmax.f32 %v1263, %v1265
        %1997 = vmax.xlane.f32.xlu0 %v1996
        %v1998 = vpop.xlane.xlu0 %1997
        %v1999 = vmax.f32 %v1353, %v1355
        %2000 = vmax.xlane.f32.xlu0 %v1999
        %v2001 = vpop.xlane.xlu0 %2000
        %v2002 = vmax.f32 %v1357, %v1359
        %2003 = vmax.xlane.f32.xlu0 %v2002
        %v2004 = vpop.xlane.xlu0 %2003
        %v2005 = vmax.f32 %v1363, %v1365
        %2006 = vmax.xlane.f32.xlu0 %v2005
        %v2007 = vpop.xlane.xlu0 %2006
        %v2008 = vmax.f32 %v1367, %v1369
        %2009 = vmax.xlane.f32.xlu0 %v2008
        %v2010 = vpop.xlane.xlu0 %2009
        %v2011 = vmax.f32 %v1373, %v1375
        %2012 = vmax.xlane.f32.xlu0 %v2011
        %v2013 = vpop.xlane.xlu0 %2012
        %v2014 = vmax.f32 %v1377, %v1379
        %2015 = vmax.xlane.f32.xlu0 %v2014
        %v2016 = vpop.xlane.xlu0 %2015
        %v2017 = vmax.f32 %v1383, %v1385
        %2018 = vmax.xlane.f32.xlu0 %v2017
        %v2019 = vpop.xlane.xlu0 %2018
        %v2020 = vmax.f32 %v1387, %v1389
        %2021 = vmax.xlane.f32.xlu0 %v2020
        %v2022 = vpop.xlane.xlu0 %2021
        %v2023 = vmax.f32 %v1393, %v1395
        %2024 = vmax.xlane.f32.xlu0 %v2023
        %v2025 = vpop.xlane.xlu0 %2024
        %v2026 = vmax.f32 %v1397, %v1399
        %2027 = vmax.xlane.f32.xlu0 %v2026
        %v2028 = vpop.xlane.xlu0 %2027
        %v2029 = vmax.f32 %v1403, %v1405
        %2030 = vmax.xlane.f32.xlu0 %v2029
        %v2031 = vpop.xlane.xlu0 %2030
        %v2032 = vmax.f32 %v1407, %v1409
        %2033 = vmax.xlane.f32.xlu0 %v2032
        %v2034 = vpop.xlane.xlu0 %2033
        %v2035 = vmax.f32 %v1413, %v1415
        %2036 = vmax.xlane.f32.xlu0 %v2035
        %v2037 = vpop.xlane.xlu0 %2036
        %v2038 = vmax.f32 %v1417, %v1419
        %2039 = vmax.xlane.f32.xlu0 %v2038
        %v2040 = vpop.xlane.xlu0 %2039
        %v2041 = vmax.f32 %v1423, %v1425
        %2042 = vmax.xlane.f32.xlu0 %v2041
        %v2043 = vpop.xlane.xlu0 %2042
        %v2044 = vmax.f32 %v1427, %v1429
        %2045 = vmax.xlane.f32.xlu0 %v2044
        %v2046 = vpop.xlane.xlu0 %2045
        %v2047 = vmax.f32 %v1517, %v1519
        %2048 = vmax.xlane.f32.xlu0 %v2047
        %v2049 = vpop.xlane.xlu0 %2048
        %v2050 = vmax.f32 %v1521, %v1523
        %2051 = vmax.xlane.f32.xlu0 %v2050
        %v2052 = vpop.xlane.xlu0 %2051
        %v2053 = vmax.f32 %v1527, %v1529
        %2054 = vmax.xlane.f32.xlu0 %v2053
        %v2055 = vpop.xlane.xlu0 %2054
        %v2056 = vmax.f32 %v1531, %v1533
        %2057 = vmax.xlane.f32.xlu0 %v2056
        %v2058 = vpop.xlane.xlu0 %2057
        %v2059 = vmax.f32 %v1537, %v1539
        %2060 = vmax.xlane.f32.xlu0 %v2059
        %v2061 = vpop.xlane.xlu0 %2060
        %v2062 = vmax.f32 %v1541, %v1543
        %2063 = vmax.xlane.f32.xlu0 %v2062
        %v2064 = vpop.xlane.xlu0 %2063
        %v2065 = vmax.f32 %v1547, %v1549
        %2066 = vmax.xlane.f32.xlu0 %v2065
        %v2067 = vpop.xlane.xlu0 %2066
        %v2068 = vmax.f32 %v1551, %v1553
        %2069 = vmax.xlane.f32.xlu0 %v2068
        %v2070 = vpop.xlane.xlu0 %2069
        %v2071 = vmax.f32 %v1557, %v1559
        %2072 = vmax.xlane.f32.xlu0 %v2071
        %v2073 = vpop.xlane.xlu0 %2072
        %v2074 = vmax.f32 %v1561, %v1563
        %2075 = vmax.xlane.f32.xlu0 %v2074
        %v2076 = vpop.xlane.xlu0 %2075
        %v2077 = vmax.f32 %v1567, %v1569
        %2078 = vmax.xlane.f32.xlu0 %v2077
        %v2079 = vpop.xlane.xlu0 %2078
        %v2080 = vmax.f32 %v1571, %v1573
        %2081 = vmax.xlane.f32.xlu0 %v2080
        %v2082 = vpop.xlane.xlu0 %2081
        %v2083 = vmax.f32 %v1577, %v1579
        %2084 = vmax.xlane.f32.xlu0 %v2083
        %v2085 = vpop.xlane.xlu0 %2084
        %v2086 = vmax.f32 %v1581, %v1583
        %2087 = vmax.xlane.f32.xlu0 %v2086
        %v2088 = vpop.xlane.xlu0 %2087
        %v2089 = vmax.f32 %v1587, %v1589
        %2090 = vmax.xlane.f32.xlu0 %v2089
        %v2091 = vpop.xlane.xlu0 %2090
        %v2092 = vmax.f32 %v1591, %v1593
        %2093 = vmax.xlane.f32.xlu0 %v2092
        %v2094 = vpop.xlane.xlu0 %2093
        %v2095 = vmax.f32 %v1681, %v1683
        %2096 = vmax.xlane.f32.xlu0 %v2095
        %v2097 = vpop.xlane.xlu0 %2096
        %v2098 = vmax.f32 %v1685, %v1687
        %2099 = vmax.xlane.f32.xlu0 %v2098
        %v2100 = vpop.xlane.xlu0 %2099
        %v2101 = vmax.f32 %v1691, %v1693
        %2102 = vmax.xlane.f32.xlu0 %v2101
        %v2103 = vpop.xlane.xlu0 %2102
        %v2104 = vmax.f32 %v1695, %v1697
        %2105 = vmax.xlane.f32.xlu0 %v2104
        %v2106 = vpop.xlane.xlu0 %2105
        %v2107 = vmax.f32 %v1701, %v1703
        %2108 = vmax.xlane.f32.xlu0 %v2107
        %v2109 = vpop.xlane.xlu0 %2108
        %v2110 = vmax.f32 %v1705, %v1707
        %2111 = vmax.xlane.f32.xlu0 %v2110
        %v2112 = vpop.xlane.xlu0 %2111
        %v2113 = vmax.f32 %v1711, %v1713
        %2114 = vmax.xlane.f32.xlu0 %v2113
        %v2115 = vpop.xlane.xlu0 %2114
        %v2116 = vmax.f32 %v1715, %v1717
        %2117 = vmax.xlane.f32.xlu0 %v2116
        %v2118 = vpop.xlane.xlu0 %2117
        %v2119 = vmax.f32 %v1721, %v1723
        %2120 = vmax.xlane.f32.xlu0 %v2119
        %v2121 = vpop.xlane.xlu0 %2120
        %v2122 = vmax.f32 %v1725, %v1727
        %2123 = vmax.xlane.f32.xlu0 %v2122
        %v2124 = vpop.xlane.xlu0 %2123
        %v2125 = vmax.f32 %v1731, %v1733
        %2126 = vmax.xlane.f32.xlu0 %v2125
        %v2127 = vpop.xlane.xlu0 %2126
        %v2128 = vmax.f32 %v1735, %v1737
        %2129 = vmax.xlane.f32.xlu0 %v2128
        %v2130 = vpop.xlane.xlu0 %2129
        %v2131 = vmax.f32 %v1741, %v1743
        %2132 = vmax.xlane.f32.xlu0 %v2131
        %v2133 = vpop.xlane.xlu0 %2132
        %v2134 = vmax.f32 %v1745, %v1747
        %2135 = vmax.xlane.f32.xlu0 %v2134
        %v2136 = vpop.xlane.xlu0 %2135
        %v2137 = vmax.f32 %v1751, %v1753
        %2138 = vmax.xlane.f32.xlu0 %v2137
        %v2139 = vpop.xlane.xlu0 %2138
        %v2140 = vmax.f32 %v1755, %v1757
        %2141 = vmax.xlane.f32.xlu0 %v2140
        %v2142 = vpop.xlane.xlu0 %2141
        %v2143 = vsub.f32 %v533, %v1761
        %v2144 = vsub.f32 %v535, %v1761
        %v2145 = vsub.f32 %v537, %v1764
        %v2146 = vsub.f32 %v539, %v1764
        %v2147 = vsub.f32 %v543, %v1767
        %v2148 = vsub.f32 %v545, %v1767
        %v2149 = vsub.f32 %v547, %v1770
        %v2150 = vsub.f32 %v549, %v1770
        %v2151 = vsub.f32 %v553, %v1773
        %v2152 = vsub.f32 %v555, %v1773
        %v2153 = vsub.f32 %v557, %v1776
        %v2154 = vsub.f32 %v559, %v1776
        %v2155 = vsub.f32 %v563, %v1779
        %v2156 = vsub.f32 %v565, %v1779
        %v2157 = vsub.f32 %v567, %v1782
        %v2158 = vsub.f32 %v569, %v1782
        %v2159 = vsub.f32 %v573, %v1785
        %v2160 = vsub.f32 %v575, %v1785
        %v2161 = vsub.f32 %v577, %v1788
        %v2162 = vsub.f32 %v579, %v1788
        %v2163 = vsub.f32 %v583, %v1791
        %v2164 = vsub.f32 %v585, %v1791
        %v2165 = vsub.f32 %v587, %v1794
        %v2166 = vsub.f32 %v589, %v1794
        %v2167 = vsub.f32 %v593, %v1797
        %v2168 = vsub.f32 %v595, %v1797
        %v2169 = vsub.f32 %v597, %v1800
        %v2170 = vsub.f32 %v599, %v1800
        %v2171 = vsub.f32 %v603, %v1803
        %v2172 = vsub.f32 %v605, %v1803
        %v2173 = vsub.f32 %v607, %v1806
        %v2174 = vsub.f32 %v609, %v1806
        %v2175 = vsub.f32 %v697, %v1809
        %v2176 = vsub.f32 %v699, %v1809
        %v2177 = vsub.f32 %v701, %v1812
        %v2178 = vsub.f32 %v703, %v1812
        %v2179 = vsub.f32 %v707, %v1815
        %v2180 = vsub.f32 %v709, %v1815
        %v2181 = vsub.f32 %v711, %v1818
        %v2182 = vsub.f32 %v713, %v1818
        %v2183 = vsub.f32 %v717, %v1821
        %v2184 = vsub.f32 %v719, %v1821
        %v2185 = vsub.f32 %v721, %v1824
        %v2186 = vsub.f32 %v723, %v1824
        %v2187 = vsub.f32 %v727, %v1827
        %v2188 = vsub.f32 %v729, %v1827
        %v2189 = vsub.f32 %v731, %v1830
        %v2190 = vsub.f32 %v733, %v1830
        %v2191 = vsub.f32 %v737, %v1833
        %v2192 = vsub.f32 %v739, %v1833
        %v2193 = vsub.f32 %v741, %v1836
        %v2194 = vsub.f32 %v743, %v1836
        %v2195 = vsub.f32 %v747, %v1839
        %v2196 = vsub.f32 %v749, %v1839
        %v2197 = vsub.f32 %v751, %v1842
        %v2198 = vsub.f32 %v753, %v1842
        %v2199 = vsub.f32 %v757, %v1845
        %v2200 = vsub.f32 %v759, %v1845
        %v2201 = vsub.f32 %v761, %v1848
        %v2202 = vsub.f32 %v763, %v1848
        %v2203 = vsub.f32 %v767, %v1851
        %v2204 = vsub.f32 %v769, %v1851
        %v2205 = vsub.f32 %v771, %v1854
        %v2206 = vsub.f32 %v773, %v1854
        %v2207 = vsub.f32 %v861, %v1857
        %v2208 = vsub.f32 %v863, %v1857
        %v2209 = vsub.f32 %v865, %v1860
        %v2210 = vsub.f32 %v867, %v1860
        %v2211 = vsub.f32 %v871, %v1863
        %v2212 = vsub.f32 %v873, %v1863
        %v2213 = vsub.f32 %v875, %v1866
        %v2214 = vsub.f32 %v877, %v1866
        %v2215 = vsub.f32 %v881, %v1869
        %v2216 = vsub.f32 %v883, %v1869
        %v2217 = vsub.f32 %v885, %v1872
        %v2218 = vsub.f32 %v887, %v1872
        %v2219 = vsub.f32 %v891, %v1875
        %v2220 = vsub.f32 %v893, %v1875
        %v2221 = vsub.f32 %v895, %v1878
        %v2222 = vsub.f32 %v897, %v1878
        %v2223 = vsub.f32 %v901, %v1881
        %v2224 = vsub.f32 %v903, %v1881
        %v2225 = vsub.f32 %v905, %v1884
        %v2226 = vsub.f32 %v907, %v1884
        %v2227 = vsub.f32 %v911, %v1887
        %v2228 = vsub.f32 %v913, %v1887
        %v2229 = vsub.f32 %v915, %v1890
        %v2230 = vsub.f32 %v917, %v1890
        %v2231 = vsub.f32 %v921, %v1893
        %v2232 = vsub.f32 %v923, %v1893
        %v2233 = vsub.f32 %v925, %v1896
        %v2234 = vsub.f32 %v927, %v1896
        %v2235 = vsub.f32 %v931, %v1899
        %v2236 = vsub.f32 %v933, %v1899
        %v2237 = vsub.f32 %v935, %v1902
        %v2238 = vsub.f32 %v937, %v1902
        %v2239 = vsub.f32 %v1025, %v1905
        %v2240 = vsub.f32 %v1027, %v1905
        %v2241 = vsub.f32 %v1029, %v1908
        %v2242 = vsub.f32 %v1031, %v1908
        %v2243 = vsub.f32 %v1035, %v1911
        %v2244 = vsub.f32 %v1037, %v1911
        %v2245 = vsub.f32 %v1039, %v1914
        %v2246 = vsub.f32 %v1041, %v1914
        %v2247 = vsub.f32 %v1045, %v1917
        %v2248 = vsub.f32 %v1047, %v1917
        %v2249 = vsub.f32 %v1049, %v1920
        %v2250 = vsub.f32 %v1051, %v1920
        %v2251 = vsub.f32 %v1055, %v1923
        %v2252 = vsub.f32 %v1057, %v1923
        %v2253 = vsub.f32 %v1059, %v1926
        %v2254 = vsub.f32 %v1061, %v1926
        %v2255 = vsub.f32 %v1065, %v1929
        %v2256 = vsub.f32 %v1067, %v1929
        %v2257 = vsub.f32 %v1069, %v1932
        %v2258 = vsub.f32 %v1071, %v1932
        %v2259 = vsub.f32 %v1075, %v1935
        %v2260 = vsub.f32 %v1077, %v1935
        %v2261 = vsub.f32 %v1079, %v1938
        %v2262 = vsub.f32 %v1081, %v1938
        %v2263 = vsub.f32 %v1085, %v1941
        %v2264 = vsub.f32 %v1087, %v1941
        %v2265 = vsub.f32 %v1089, %v1944
        %v2266 = vsub.f32 %v1091, %v1944
        %v2267 = vsub.f32 %v1095, %v1947
        %v2268 = vsub.f32 %v1097, %v1947
        %v2269 = vsub.f32 %v1099, %v1950
        %v2270 = vsub.f32 %v1101, %v1950
        %v2271 = vsub.f32 %v1189, %v1953
        %v2272 = vsub.f32 %v1191, %v1953
        %v2273 = vsub.f32 %v1193, %v1956
        %v2274 = vsub.f32 %v1195, %v1956
        %v2275 = vsub.f32 %v1199, %v1959
        %v2276 = vsub.f32 %v1201, %v1959
        %v2277 = vsub.f32 %v1203, %v1962
        %v2278 = vsub.f32 %v1205, %v1962
        %v2279 = vsub.f32 %v1209, %v1965
        %v2280 = vsub.f32 %v1211, %v1965
        %v2281 = vsub.f32 %v1213, %v1968
        %v2282 = vsub.f32 %v1215, %v1968
        %v2283 = vsub.f32 %v1219, %v1971
        %v2284 = vsub.f32 %v1221, %v1971
        %v2285 = vsub.f32 %v1223, %v1974
        %v2286 = vsub.f32 %v1225, %v1974
        %v2287 = vsub.f32 %v1229, %v1977
        %v2288 = vsub.f32 %v1231, %v1977
        %v2289 = vsub.f32 %v1233, %v1980
        %v2290 = vsub.f32 %v1235, %v1980
        %v2291 = vsub.f32 %v1239, %v1983
        %v2292 = vsub.f32 %v1241, %v1983
        %v2293 = vsub.f32 %v1243, %v1986
        %v2294 = vsub.f32 %v1245, %v1986
        %v2295 = vsub.f32 %v1249, %v1989
        %v2296 = vsub.f32 %v1251, %v1989
        %v2297 = vsub.f32 %v1253, %v1992
        %v2298 = vsub.f32 %v1255, %v1992
        %v2299 = vsub.f32 %v1259, %v1995
        %v2300 = vsub.f32 %v1261, %v1995
        %v2301 = vsub.f32 %v1263, %v1998
        %v2302 = vsub.f32 %v1265, %v1998
        %v2303 = vsub.f32 %v1353, %v2001
        %v2304 = vsub.f32 %v1355, %v2001
        %v2305 = vsub.f32 %v1357, %v2004
        %v2306 = vsub.f32 %v1359, %v2004
        %v2307 = vsub.f32 %v1363, %v2007
        %v2308 = vsub.f32 %v1365, %v2007
        %v2309 = vsub.f32 %v1367, %v2010
        %v2310 = vsub.f32 %v1369, %v2010
        %v2311 = vsub.f32 %v1373, %v2013
        %v2312 = vsub.f32 %v1375, %v2013
        %v2313 = vsub.f32 %v1377, %v2016
        %v2314 = vsub.f32 %v1379, %v2016
        %v2315 = vsub.f32 %v1383, %v2019
        %v2316 = vsub.f32 %v1385, %v2019
        %v2317 = vsub.f32 %v1387, %v2022
        %v2318 = vsub.f32 %v1389, %v2022
        %v2319 = vsub.f32 %v1393, %v2025
        %v2320 = vsub.f32 %v1395, %v2025
        %v2321 = vsub.f32 %v1397, %v2028
        %v2322 = vsub.f32 %v1399, %v2028
        %v2323 = vsub.f32 %v1403, %v2031
        %v2324 = vsub.f32 %v1405, %v2031
        %v2325 = vsub.f32 %v1407, %v2034
        %v2326 = vsub.f32 %v1409, %v2034
        %v2327 = vsub.f32 %v1413, %v2037
        %v2328 = vsub.f32 %v1415, %v2037
        %v2329 = vsub.f32 %v1417, %v2040
        %v2330 = vsub.f32 %v1419, %v2040
        %v2331 = vsub.f32 %v1423, %v2043
        %v2332 = vsub.f32 %v1425, %v2043
        %v2333 = vsub.f32 %v1427, %v2046
        %v2334 = vsub.f32 %v1429, %v2046
        %v2335 = vsub.f32 %v1517, %v2049
        %v2336 = vsub.f32 %v1519, %v2049
        %v2337 = vsub.f32 %v1521, %v2052
        %v2338 = vsub.f32 %v1523, %v2052
        %v2339 = vsub.f32 %v1527, %v2055
        %v2340 = vsub.f32 %v1529, %v2055
        %v2341 = vsub.f32 %v1531, %v2058
        %v2342 = vsub.f32 %v1533, %v2058
        %v2343 = vsub.f32 %v1537, %v2061
        %v2344 = vsub.f32 %v1539, %v2061
        %v2345 = vsub.f32 %v1541, %v2064
        %v2346 = vsub.f32 %v1543, %v2064
        %v2347 = vsub.f32 %v1547, %v2067
        %v2348 = vsub.f32 %v1549, %v2067
        %v2349 = vsub.f32 %v1551, %v2070
        %v2350 = vsub.f32 %v1553, %v2070
        %v2351 = vsub.f32 %v1557, %v2073
        %v2352 = vsub.f32 %v1559, %v2073
        %v2353 = vsub.f32 %v1561, %v2076
        %v2354 = vsub.f32 %v1563, %v2076
        %v2355 = vsub.f32 %v1567, %v2079
        %v2356 = vsub.f32 %v1569, %v2079
        %v2357 = vsub.f32 %v1571, %v2082
        %v2358 = vsub.f32 %v1573, %v2082
        %v2359 = vsub.f32 %v1577, %v2085
        %v2360 = vsub.f32 %v1579, %v2085
        %v2361 = vsub.f32 %v1581, %v2088
        %v2362 = vsub.f32 %v1583, %v2088
        %v2363 = vsub.f32 %v1587, %v2091
        %v2364 = vsub.f32 %v1589, %v2091
        %v2365 = vsub.f32 %v1591, %v2094
        %v2366 = vsub.f32 %v1593, %v2094
        %v2367 = vsub.f32 %v1681, %v2097
        %v2368 = vsub.f32 %v1683, %v2097
        %v2369 = vsub.f32 %v1685, %v2100
        %v2370 = vsub.f32 %v1687, %v2100
        %v2371 = vsub.f32 %v1691, %v2103
        %v2372 = vsub.f32 %v1693, %v2103
        %v2373 = vsub.f32 %v1695, %v2106
        %v2374 = vsub.f32 %v1697, %v2106
        %v2375 = vsub.f32 %v1701, %v2109
        %v2376 = vsub.f32 %v1703, %v2109
        %v2377 = vsub.f32 %v1705, %v2112
        %v2378 = vsub.f32 %v1707, %v2112
        %v2379 = vsub.f32 %v1711, %v2115
        %v2380 = vsub.f32 %v1713, %v2115
        %v2381 = vsub.f32 %v1715, %v2118
        %v2382 = vsub.f32 %v1717, %v2118
        %v2383 = vsub.f32 %v1721, %v2121
        %v2384 = vsub.f32 %v1723, %v2121
        %v2385 = vsub.f32 %v1725, %v2124
        %v2386 = vsub.f32 %v1727, %v2124
        %v2387 = vsub.f32 %v1731, %v2127
        %v2388 = vsub.f32 %v1733, %v2127
        %v2389 = vsub.f32 %v1735, %v2130
        %v2390 = vsub.f32 %v1737, %v2130
        %v2391 = vsub.f32 %v1741, %v2133
        %v2392 = vsub.f32 %v1743, %v2133
        %v2393 = vsub.f32 %v1745, %v2136
        %v2394 = vsub.f32 %v1747, %v2136
        %v2395 = vsub.f32 %v1751, %v2139
        %v2396 = vsub.f32 %v1753, %v2139
        %v2397 = vsub.f32 %v1755, %v2142
        %v2398 = vsub.f32 %v1757, %v2142
        %v2399 = vmul.f32 %v2143, 0.35355338
        %v2400 = vmul.f32 %v2144, 0.35355338
        %v2401 = vmul.f32 %v2145, 0.35355338
        %v2402 = vmul.f32 %v2146, 0.35355338
        %v2403 = vmul.f32 %v2147, 0.35355338
        %v2404 = vmul.f32 %v2148, 0.35355338
        %v2405 = vmul.f32 %v2149, 0.35355338
        %v2406 = vmul.f32 %v2150, 0.35355338
        %v2407 = vmul.f32 %v2151, 0.35355338
        %v2408 = vmul.f32 %v2152, 0.35355338
        %v2409 = vmul.f32 %v2153, 0.35355338
        %v2410 = vmul.f32 %v2154, 0.35355338
        %v2411 = vmul.f32 %v2155, 0.35355338
        %v2412 = vmul.f32 %v2156, 0.35355338
        %v2413 = vmul.f32 %v2157, 0.35355338
        %v2414 = vmul.f32 %v2158, 0.35355338
        %v2415 = vmul.f32 %v2159, 0.35355338
        %v2416 = vmul.f32 %v2160, 0.35355338
        %v2417 = vmul.f32 %v2161, 0.35355338
        %v2418 = vmul.f32 %v2162, 0.35355338
        %v2419 = vmul.f32 %v2163, 0.35355338
        %v2420 = vmul.f32 %v2164, 0.35355338
        %v2421 = vmul.f32 %v2165, 0.35355338
        %v2422 = vmul.f32 %v2166, 0.35355338
        %v2423 = vmul.f32 %v2167, 0.35355338
        %v2424 = vmul.f32 %v2168, 0.35355338
        %v2425 = vmul.f32 %v2169, 0.35355338
        %v2426 = vmul.f32 %v2170, 0.35355338
        %v2427 = vmul.f32 %v2171, 0.35355338
        %v2428 = vmul.f32 %v2172, 0.35355338
        %v2429 = vmul.f32 %v2173, 0.35355338
        %v2430 = vmul.f32 %v2174, 0.35355338
        %v2431 = vmul.f32 %v2175, 0.35355338
        %v2432 = vmul.f32 %v2176, 0.35355338
        %v2433 = vmul.f32 %v2177, 0.35355338
        %v2434 = vmul.f32 %v2178, 0.35355338
        %v2435 = vmul.f32 %v2179, 0.35355338
        %v2436 = vmul.f32 %v2180, 0.35355338
        %v2437 = vmul.f32 %v2181, 0.35355338
        %v2438 = vmul.f32 %v2182, 0.35355338
        %v2439 = vmul.f32 %v2183, 0.35355338
        %v2440 = vmul.f32 %v2184, 0.35355338
        %v2441 = vmul.f32 %v2185, 0.35355338
        %v2442 = vmul.f32 %v2186, 0.35355338
        %v2443 = vmul.f32 %v2187, 0.35355338
        %v2444 = vmul.f32 %v2188, 0.35355338
        %v2445 = vmul.f32 %v2189, 0.35355338
        %v2446 = vmul.f32 %v2190, 0.35355338
        %v2447 = vmul.f32 %v2191, 0.35355338
        %v2448 = vmul.f32 %v2192, 0.35355338
        %v2449 = vmul.f32 %v2193, 0.35355338
        %v2450 = vmul.f32 %v2194, 0.35355338
        %v2451 = vmul.f32 %v2195, 0.35355338
        %v2452 = vmul.f32 %v2196, 0.35355338
        %v2453 = vmul.f32 %v2197, 0.35355338
        %v2454 = vmul.f32 %v2198, 0.35355338
        %v2455 = vmul.f32 %v2199, 0.35355338
        %v2456 = vmul.f32 %v2200, 0.35355338
        %v2457 = vmul.f32 %v2201, 0.35355338
        %v2458 = vmul.f32 %v2202, 0.35355338
        %v2459 = vmul.f32 %v2203, 0.35355338
        %v2460 = vmul.f32 %v2204, 0.35355338
        %v2461 = vmul.f32 %v2205, 0.35355338
        %v2462 = vmul.f32 %v2206, 0.35355338
        %v2463 = vmul.f32 %v2207, 0.35355338
        %v2464 = vmul.f32 %v2208, 0.35355338
        %v2465 = vmul.f32 %v2209, 0.35355338
        %v2466 = vmul.f32 %v2210, 0.35355338
        %v2467 = vmul.f32 %v2211, 0.35355338
        %v2468 = vmul.f32 %v2212, 0.35355338
        %v2469 = vmul.f32 %v2213, 0.35355338
        %v2470 = vmul.f32 %v2214, 0.35355338
        %v2471 = vmul.f32 %v2215, 0.35355338
        %v2472 = vmul.f32 %v2216, 0.35355338
        %v2473 = vmul.f32 %v2217, 0.35355338
        %v2474 = vmul.f32 %v2218, 0.35355338
        %v2475 = vmul.f32 %v2219, 0.35355338
        %v2476 = vmul.f32 %v2220, 0.35355338
        %v2477 = vmul.f32 %v2221, 0.35355338
        %v2478 = vmul.f32 %v2222, 0.35355338
        %v2479 = vmul.f32 %v2223, 0.35355338
        %v2480 = vmul.f32 %v2224, 0.35355338
        %v2481 = vmul.f32 %v2225, 0.35355338
        %v2482 = vmul.f32 %v2226, 0.35355338
        %v2483 = vmul.f32 %v2227, 0.35355338
        %v2484 = vmul.f32 %v2228, 0.35355338
        %v2485 = vmul.f32 %v2229, 0.35355338
        %v2486 = vmul.f32 %v2230, 0.35355338
        %v2487 = vmul.f32 %v2231, 0.35355338
        %v2488 = vmul.f32 %v2232, 0.35355338
        %v2489 = vmul.f32 %v2233, 0.35355338
        %v2490 = vmul.f32 %v2234, 0.35355338
        %v2491 = vmul.f32 %v2235, 0.35355338
        %v2492 = vmul.f32 %v2236, 0.35355338
        %v2493 = vmul.f32 %v2237, 0.35355338
        %v2494 = vmul.f32 %v2238, 0.35355338
        %v2495 = vmul.f32 %v2239, 0.35355338
        %v2496 = vmul.f32 %v2240, 0.35355338
        %v2497 = vmul.f32 %v2241, 0.35355338
        %v2498 = vmul.f32 %v2242, 0.35355338
        %v2499 = vmul.f32 %v2243, 0.35355338
        %v2500 = vmul.f32 %v2244, 0.35355338
        %v2501 = vmul.f32 %v2245, 0.35355338
        %v2502 = vmul.f32 %v2246, 0.35355338
        %v2503 = vmul.f32 %v2247, 0.35355338
        %v2504 = vmul.f32 %v2248, 0.35355338
        %v2505 = vmul.f32 %v2249, 0.35355338
        %v2506 = vmul.f32 %v2250, 0.35355338
        %v2507 = vmul.f32 %v2251, 0.35355338
        %v2508 = vmul.f32 %v2252, 0.35355338
        %v2509 = vmul.f32 %v2253, 0.35355338
        %v2510 = vmul.f32 %v2254, 0.35355338
        %v2511 = vmul.f32 %v2255, 0.35355338
        %v2512 = vmul.f32 %v2256, 0.35355338
        %v2513 = vmul.f32 %v2257, 0.35355338
        %v2514 = vmul.f32 %v2258, 0.35355338
        %v2515 = vmul.f32 %v2259, 0.35355338
        %v2516 = vmul.f32 %v2260, 0.35355338
        %v2517 = vmul.f32 %v2261, 0.35355338
        %v2518 = vmul.f32 %v2262, 0.35355338
        %v2519 = vmul.f32 %v2263, 0.35355338
        %v2520 = vmul.f32 %v2264, 0.35355338
        %v2521 = vmul.f32 %v2265, 0.35355338
        %v2522 = vmul.f32 %v2266, 0.35355338
        %v2523 = vmul.f32 %v2267, 0.35355338
        %v2524 = vmul.f32 %v2268, 0.35355338
        %v2525 = vmul.f32 %v2269, 0.35355338
        %v2526 = vmul.f32 %v2270, 0.35355338
        %v2527 = vmul.f32 %v2271, 0.35355338
        %v2528 = vmul.f32 %v2272, 0.35355338
        %v2529 = vmul.f32 %v2273, 0.35355338
        %v2530 = vmul.f32 %v2274, 0.35355338
        %v2531 = vmul.f32 %v2275, 0.35355338
        %v2532 = vmul.f32 %v2276, 0.35355338
        %v2533 = vmul.f32 %v2277, 0.35355338
        %v2534 = vmul.f32 %v2278, 0.35355338
        %v2535 = vmul.f32 %v2279, 0.35355338
        %v2536 = vmul.f32 %v2280, 0.35355338
        %v2537 = vmul.f32 %v2281, 0.35355338
        %v2538 = vmul.f32 %v2282, 0.35355338
        %v2539 = vmul.f32 %v2283, 0.35355338
        %v2540 = vmul.f32 %v2284, 0.35355338
        %v2541 = vmul.f32 %v2285, 0.35355338
        %v2542 = vmul.f32 %v2286, 0.35355338
        %v2543 = vmul.f32 %v2287, 0.35355338
        %v2544 = vmul.f32 %v2288, 0.35355338
        %v2545 = vmul.f32 %v2289, 0.35355338
        %v2546 = vmul.f32 %v2290, 0.35355338
        %v2547 = vmul.f32 %v2291, 0.35355338
        %v2548 = vmul.f32 %v2292, 0.35355338
        %v2549 = vmul.f32 %v2293, 0.35355338
        %v2550 = vmul.f32 %v2294, 0.35355338
        %v2551 = vmul.f32 %v2295, 0.35355338
        %v2552 = vmul.f32 %v2296, 0.35355338
        %v2553 = vmul.f32 %v2297, 0.35355338
        %v2554 = vmul.f32 %v2298, 0.35355338
        %v2555 = vmul.f32 %v2299, 0.35355338
        %v2556 = vmul.f32 %v2300, 0.35355338
        %v2557 = vmul.f32 %v2301, 0.35355338
        %v2558 = vmul.f32 %v2302, 0.35355338
        %v2559 = vmul.f32 %v2303, 0.35355338
        %v2560 = vmul.f32 %v2304, 0.35355338
        %v2561 = vmul.f32 %v2305, 0.35355338
        %v2562 = vmul.f32 %v2306, 0.35355338
        %v2563 = vmul.f32 %v2307, 0.35355338
        %v2564 = vmul.f32 %v2308, 0.35355338
        %v2565 = vmul.f32 %v2309, 0.35355338
        %v2566 = vmul.f32 %v2310, 0.35355338
        %v2567 = vmul.f32 %v2311, 0.35355338
        %v2568 = vmul.f32 %v2312, 0.35355338
        %v2569 = vmul.f32 %v2313, 0.35355338
        %v2570 = vmul.f32 %v2314, 0.35355338
        %v2571 = vmul.f32 %v2315, 0.35355338
        %v2572 = vmul.f32 %v2316, 0.35355338
        %v2573 = vmul.f32 %v2317, 0.35355338
        %v2574 = vmul.f32 %v2318, 0.35355338
        %v2575 = vmul.f32 %v2319, 0.35355338
        %v2576 = vmul.f32 %v2320, 0.35355338
        %v2577 = vmul.f32 %v2321, 0.35355338
        %v2578 = vmul.f32 %v2322, 0.35355338
        %v2579 = vmul.f32 %v2323, 0.35355338
        %v2580 = vmul.f32 %v2324, 0.35355338
        %v2581 = vmul.f32 %v2325, 0.35355338
        %v2582 = vmul.f32 %v2326, 0.35355338
        %v2583 = vmul.f32 %v2327, 0.35355338
        %v2584 = vmul.f32 %v2328, 0.35355338
        %v2585 = vmul.f32 %v2329, 0.35355338
        %v2586 = vmul.f32 %v2330, 0.35355338
        %v2587 = vmul.f32 %v2331, 0.35355338
        %v2588 = vmul.f32 %v2332, 0.35355338
        %v2589 = vmul.f32 %v2333, 0.35355338
        %v2590 = vmul.f32 %v2334, 0.35355338
        %v2591 = vmul.f32 %v2335, 0.35355338
        %v2592 = vmul.f32 %v2336, 0.35355338
        %v2593 = vmul.f32 %v2337, 0.35355338
        %v2594 = vmul.f32 %v2338, 0.35355338
        %v2595 = vmul.f32 %v2339, 0.35355338
        %v2596 = vmul.f32 %v2340, 0.35355338
        %v2597 = vmul.f32 %v2341, 0.35355338
        %v2598 = vmul.f32 %v2342, 0.35355338
        %v2599 = vmul.f32 %v2343, 0.35355338
        %v2600 = vmul.f32 %v2344, 0.35355338
        %v2601 = vmul.f32 %v2345, 0.35355338
        %v2602 = vmul.f32 %v2346, 0.35355338
        %v2603 = vmul.f32 %v2347, 0.35355338
        %v2604 = vmul.f32 %v2348, 0.35355338
        %v2605 = vmul.f32 %v2349, 0.35355338
        %v2606 = vmul.f32 %v2350, 0.35355338
        %v2607 = vmul.f32 %v2351, 0.35355338
        %v2608 = vmul.f32 %v2352, 0.35355338
        %v2609 = vmul.f32 %v2353, 0.35355338
        %v2610 = vmul.f32 %v2354, 0.35355338
        %v2611 = vmul.f32 %v2355, 0.35355338
        %v2612 = vmul.f32 %v2356, 0.35355338
        %v2613 = vmul.f32 %v2357, 0.35355338
        %v2614 = vmul.f32 %v2358, 0.35355338
        %v2615 = vmul.f32 %v2359, 0.35355338
        %v2616 = vmul.f32 %v2360, 0.35355338
        %v2617 = vmul.f32 %v2361, 0.35355338
        %v2618 = vmul.f32 %v2362, 0.35355338
        %v2619 = vmul.f32 %v2363, 0.35355338
        %v2620 = vmul.f32 %v2364, 0.35355338
        %v2621 = vmul.f32 %v2365, 0.35355338
        %v2622 = vmul.f32 %v2366, 0.35355338
        %v2623 = vmul.f32 %v2367, 0.35355338
        %v2624 = vmul.f32 %v2368, 0.35355338
        %v2625 = vmul.f32 %v2369, 0.35355338
        %v2626 = vmul.f32 %v2370, 0.35355338
        %v2627 = vmul.f32 %v2371, 0.35355338
        %v2628 = vmul.f32 %v2372, 0.35355338
        %v2629 = vmul.f32 %v2373, 0.35355338
        %v2630 = vmul.f32 %v2374, 0.35355338
        %v2631 = vmul.f32 %v2375, 0.35355338
        %v2632 = vmul.f32 %v2376, 0.35355338
        %v2633 = vmul.f32 %v2377, 0.35355338
        %v2634 = vmul.f32 %v2378, 0.35355338
        %v2635 = vmul.f32 %v2379, 0.35355338
        %v2636 = vmul.f32 %v2380, 0.35355338
        %v2637 = vmul.f32 %v2381, 0.35355338
        %v2638 = vmul.f32 %v2382, 0.35355338
        %v2639 = vmul.f32 %v2383, 0.35355338
        %v2640 = vmul.f32 %v2384, 0.35355338
        %v2641 = vmul.f32 %v2385, 0.35355338
        %v2642 = vmul.f32 %v2386, 0.35355338
        %v2643 = vmul.f32 %v2387, 0.35355338
        %v2644 = vmul.f32 %v2388, 0.35355338
        %v2645 = vmul.f32 %v2389, 0.35355338
        %v2646 = vmul.f32 %v2390, 0.35355338
        %v2647 = vmul.f32 %v2391, 0.35355338
        %v2648 = vmul.f32 %v2392, 0.35355338
        %v2649 = vmul.f32 %v2393, 0.35355338
        %v2650 = vmul.f32 %v2394, 0.35355338
        %v2651 = vmul.f32 %v2395, 0.35355338
        %v2652 = vmul.f32 %v2396, 0.35355338
        %v2653 = vmul.f32 %v2397, 0.35355338
        %v2654 = vmul.f32 %v2398, 0.35355338
        %v2655 = vmul.f32 %v2399, 1.442695
        %v2656 = vpow.pop %v2655
        %v2657 = vmul.f32 %v2400, 1.442695
        %v2658 = vpow.pop %v2657
        %v2659 = vmul.f32 %v2401, 1.442695
        %v2660 = vpow.pop %v2659
        %v2661 = vmul.f32 %v2402, 1.442695
        %v2662 = vpow.pop %v2661
        %v2663 = vmul.f32 %v2403, 1.442695
        %v2664 = vpow.pop %v2663
        %v2665 = vmul.f32 %v2404, 1.442695
        %v2666 = vpow.pop %v2665
        %v2667 = vmul.f32 %v2405, 1.442695
        %v2668 = vpow.pop %v2667
        %v2669 = vmul.f32 %v2406, 1.442695
        %v2670 = vpow.pop %v2669
        %v2671 = vmul.f32 %v2407, 1.442695
        %v2672 = vpow.pop %v2671
        %v2673 = vmul.f32 %v2408, 1.442695
        %v2674 = vpow.pop %v2673
        %v2675 = vmul.f32 %v2409, 1.442695
        %v2676 = vpow.pop %v2675
        %v2677 = vmul.f32 %v2410, 1.442695
        %v2678 = vpow.pop %v2677
        %v2679 = vmul.f32 %v2411, 1.442695
        %v2680 = vpow.pop %v2679
        %v2681 = vmul.f32 %v2412, 1.442695
        %v2682 = vpow.pop %v2681
        %v2683 = vmul.f32 %v2413, 1.442695
        %v2684 = vpow.pop %v2683
        %v2685 = vmul.f32 %v2414, 1.442695
        %v2686 = vpow.pop %v2685
        %v2687 = vmul.f32 %v2415, 1.442695
        %v2688 = vpow.pop %v2687
        %v2689 = vmul.f32 %v2416, 1.442695
        %v2690 = vpow.pop %v2689
        %v2691 = vmul.f32 %v2417, 1.442695
        %v2692 = vpow.pop %v2691
        %v2693 = vmul.f32 %v2418, 1.442695
        %v2694 = vpow.pop %v2693
        %v2695 = vmul.f32 %v2419, 1.442695
        %v2696 = vpow.pop %v2695
        %v2697 = vmul.f32 %v2420, 1.442695
        %v2698 = vpow.pop %v2697
        %v2699 = vmul.f32 %v2421, 1.442695
        %v2700 = vpow.pop %v2699
        %v2701 = vmul.f32 %v2422, 1.442695
        %v2702 = vpow.pop %v2701
        %v2703 = vmul.f32 %v2423, 1.442695
        %v2704 = vpow.pop %v2703
        %v2705 = vmul.f32 %v2424, 1.442695
        %v2706 = vpow.pop %v2705
        %v2707 = vmul.f32 %v2425, 1.442695
        %v2708 = vpow.pop %v2707
        %v2709 = vmul.f32 %v2426, 1.442695
        %v2710 = vpow.pop %v2709
        %v2711 = vmul.f32 %v2427, 1.442695
        %v2712 = vpow.pop %v2711
        %v2713 = vmul.f32 %v2428, 1.442695
        %v2714 = vpow.pop %v2713
        %v2715 = vmul.f32 %v2429, 1.442695
        %v2716 = vpow.pop %v2715
        %v2717 = vmul.f32 %v2430, 1.442695
        %v2718 = vpow.pop %v2717
        %v2719 = vmul.f32 %v2431, 1.442695
        %v2720 = vpow.pop %v2719
        %v2721 = vmul.f32 %v2432, 1.442695
        %v2722 = vpow.pop %v2721
        %v2723 = vmul.f32 %v2433, 1.442695
        %v2724 = vpow.pop %v2723
        %v2725 = vmul.f32 %v2434, 1.442695
        %v2726 = vpow.pop %v2725
        %v2727 = vmul.f32 %v2435, 1.442695
        %v2728 = vpow.pop %v2727
        %v2729 = vmul.f32 %v2436, 1.442695
        %v2730 = vpow.pop %v2729
        %v2731 = vmul.f32 %v2437, 1.442695
        %v2732 = vpow.pop %v2731
        %v2733 = vmul.f32 %v2438, 1.442695
        %v2734 = vpow.pop %v2733
        %v2735 = vmul.f32 %v2439, 1.442695
        %v2736 = vpow.pop %v2735
        %v2737 = vmul.f32 %v2440, 1.442695
        %v2738 = vpow.pop %v2737
        %v2739 = vmul.f32 %v2441, 1.442695
        %v2740 = vpow.pop %v2739
        %v2741 = vmul.f32 %v2442, 1.442695
        %v2742 = vpow.pop %v2741
        %v2743 = vmul.f32 %v2443, 1.442695
        %v2744 = vpow.pop %v2743
        %v2745 = vmul.f32 %v2444, 1.442695
        %v2746 = vpow.pop %v2745
        %v2747 = vmul.f32 %v2445, 1.442695
        %v2748 = vpow.pop %v2747
        %v2749 = vmul.f32 %v2446, 1.442695
        %v2750 = vpow.pop %v2749
        %v2751 = vmul.f32 %v2447, 1.442695
        %v2752 = vpow.pop %v2751
        %v2753 = vmul.f32 %v2448, 1.442695
        %v2754 = vpow.pop %v2753
        %v2755 = vmul.f32 %v2449, 1.442695
        %v2756 = vpow.pop %v2755
        %v2757 = vmul.f32 %v2450, 1.442695
        %v2758 = vpow.pop %v2757
        %v2759 = vmul.f32 %v2451, 1.442695
        %v2760 = vpow.pop %v2759
        %v2761 = vmul.f32 %v2452, 1.442695
        %v2762 = vpow.pop %v2761
        %v2763 = vmul.f32 %v2453, 1.442695
        %v2764 = vpow.pop %v2763
        %v2765 = vmul.f32 %v2454, 1.442695
        %v2766 = vpow.pop %v2765
        %v2767 = vmul.f32 %v2455, 1.442695
        %v2768 = vpow.pop %v2767
        %v2769 = vmul.f32 %v2456, 1.442695
        %v2770 = vpow.pop %v2769
        %v2771 = vmul.f32 %v2457, 1.442695
        %v2772 = vpow.pop %v2771
        %v2773 = vmul.f32 %v2458, 1.442695
        %v2774 = vpow.pop %v2773
        %v2775 = vmul.f32 %v2459, 1.442695
        %v2776 = vpow.pop %v2775
        %v2777 = vmul.f32 %v2460, 1.442695
        %v2778 = vpow.pop %v2777
        %v2779 = vmul.f32 %v2461, 1.442695
        %v2780 = vpow.pop %v2779
        %v2781 = vmul.f32 %v2462, 1.442695
        %v2782 = vpow.pop %v2781
        %v2783 = vmul.f32 %v2463, 1.442695
        %v2784 = vpow.pop %v2783
        %v2785 = vmul.f32 %v2464, 1.442695
        %v2786 = vpow.pop %v2785
        %v2787 = vmul.f32 %v2465, 1.442695
        %v2788 = vpow.pop %v2787
        %v2789 = vmul.f32 %v2466, 1.442695
        %v2790 = vpow.pop %v2789
        %v2791 = vmul.f32 %v2467, 1.442695
        %v2792 = vpow.pop %v2791
        %v2793 = vmul.f32 %v2468, 1.442695
        %v2794 = vpow.pop %v2793
        %v2795 = vmul.f32 %v2469, 1.442695
        %v2796 = vpow.pop %v2795
        %v2797 = vmul.f32 %v2470, 1.442695
        %v2798 = vpow.pop %v2797
        %v2799 = vmul.f32 %v2471, 1.442695
        %v2800 = vpow.pop %v2799
        %v2801 = vmul.f32 %v2472, 1.442695
        %v2802 = vpow.pop %v2801
        %v2803 = vmul.f32 %v2473, 1.442695
        %v2804 = vpow.pop %v2803
        %v2805 = vmul.f32 %v2474, 1.442695
        %v2806 = vpow.pop %v2805
        %v2807 = vmul.f32 %v2475, 1.442695
        %v2808 = vpow.pop %v2807
        %v2809 = vmul.f32 %v2476, 1.442695
        %v2810 = vpow.pop %v2809
        %v2811 = vmul.f32 %v2477, 1.442695
        %v2812 = vpow.pop %v2811
        %v2813 = vmul.f32 %v2478, 1.442695
        %v2814 = vpow.pop %v2813
        %v2815 = vmul.f32 %v2479, 1.442695
        %v2816 = vpow.pop %v2815
        %v2817 = vmul.f32 %v2480, 1.442695
        %v2818 = vpow.pop %v2817
        %v2819 = vmul.f32 %v2481, 1.442695
        %v2820 = vpow.pop %v2819
        %v2821 = vmul.f32 %v2482, 1.442695
        %v2822 = vpow.pop %v2821
        %v2823 = vmul.f32 %v2483, 1.442695
        %v2824 = vpow.pop %v2823
        %v2825 = vmul.f32 %v2484, 1.442695
        %v2826 = vpow.pop %v2825
        %v2827 = vmul.f32 %v2485, 1.442695
        %v2828 = vpow.pop %v2827
        %v2829 = vmul.f32 %v2486, 1.442695
        %v2830 = vpow.pop %v2829
        %v2831 = vmul.f32 %v2487, 1.442695
        %v2832 = vpow.pop %v2831
        %v2833 = vmul.f32 %v2488, 1.442695
        %v2834 = vpow.pop %v2833
        %v2835 = vmul.f32 %v2489, 1.442695
        %v2836 = vpow.pop %v2835
        %v2837 = vmul.f32 %v2490, 1.442695
        %v2838 = vpow.pop %v2837
        %v2839 = vmul.f32 %v2491, 1.442695
        %v2840 = vpow.pop %v2839
        %v2841 = vmul.f32 %v2492, 1.442695
        %v2842 = vpow.pop %v2841
        %v2843 = vmul.f32 %v2493, 1.442695
        %v2844 = vpow.pop %v2843
        %v2845 = vmul.f32 %v2494, 1.442695
        %v2846 = vpow.pop %v2845
        %v2847 = vmul.f32 %v2495, 1.442695
        %v2848 = vpow.pop %v2847
        %v2849 = vmul.f32 %v2496, 1.442695
        %v2850 = vpow.pop %v2849
        %v2851 = vmul.f32 %v2497, 1.442695
        %v2852 = vpow.pop %v2851
        %v2853 = vmul.f32 %v2498, 1.442695
        %v2854 = vpow.pop %v2853
        %v2855 = vmul.f32 %v2499, 1.442695
        %v2856 = vpow.pop %v2855
        %v2857 = vmul.f32 %v2500, 1.442695
        %v2858 = vpow.pop %v2857
        %v2859 = vmul.f32 %v2501, 1.442695
        %v2860 = vpow.pop %v2859
        %v2861 = vmul.f32 %v2502, 1.442695
        %v2862 = vpow.pop %v2861
        %v2863 = vmul.f32 %v2503, 1.442695
        %v2864 = vpow.pop %v2863
        %v2865 = vmul.f32 %v2504, 1.442695
        %v2866 = vpow.pop %v2865
        %v2867 = vmul.f32 %v2505, 1.442695
        %v2868 = vpow.pop %v2867
        %v2869 = vmul.f32 %v2506, 1.442695
        %v2870 = vpow.pop %v2869
        %v2871 = vmul.f32 %v2507, 1.442695
        %v2872 = vpow.pop %v2871
        %v2873 = vmul.f32 %v2508, 1.442695
        %v2874 = vpow.pop %v2873
        %v2875 = vmul.f32 %v2509, 1.442695
        %v2876 = vpow.pop %v2875
        %v2877 = vmul.f32 %v2510, 1.442695
        %v2878 = vpow.pop %v2877
        %v2879 = vmul.f32 %v2511, 1.442695
        %v2880 = vpow.pop %v2879
        %v2881 = vmul.f32 %v2512, 1.442695
        %v2882 = vpow.pop %v2881
        %v2883 = vmul.f32 %v2513, 1.442695
        %v2884 = vpow.pop %v2883
        %v2885 = vmul.f32 %v2514, 1.442695
        %v2886 = vpow.pop %v2885
        %v2887 = vmul.f32 %v2515, 1.442695
        %v2888 = vpow.pop %v2887
        %v2889 = vmul.f32 %v2516, 1.442695
        %v2890 = vpow.pop %v2889
        %v2891 = vmul.f32 %v2517, 1.442695
        %v2892 = vpow.pop %v2891
        %v2893 = vmul.f32 %v2518, 1.442695
        %v2894 = vpow.pop %v2893
        %v2895 = vmul.f32 %v2519, 1.442695
        %v2896 = vpow.pop %v2895
        %v2897 = vmul.f32 %v2520, 1.442695
        %v2898 = vpow.pop %v2897
        %v2899 = vmul.f32 %v2521, 1.442695
        %v2900 = vpow.pop %v2899
        %v2901 = vmul.f32 %v2522, 1.442695
        %v2902 = vpow.pop %v2901
        %v2903 = vmul.f32 %v2523, 1.442695
        %v2904 = vpow.pop %v2903
        %v2905 = vmul.f32 %v2524, 1.442695
        %v2906 = vpow.pop %v2905
        %v2907 = vmul.f32 %v2525, 1.442695
        %v2908 = vpow.pop %v2907
        %v2909 = vmul.f32 %v2526, 1.442695
        %v2910 = vpow.pop %v2909
        %v2911 = vmul.f32 %v2527, 1.442695
        %v2912 = vpow.pop %v2911
        %v2913 = vmul.f32 %v2528, 1.442695
        %v2914 = vpow.pop %v2913
        %v2915 = vmul.f32 %v2529, 1.442695
        %v2916 = vpow.pop %v2915
        %v2917 = vmul.f32 %v2530, 1.442695
        %v2918 = vpow.pop %v2917
        %v2919 = vmul.f32 %v2531, 1.442695
        %v2920 = vpow.pop %v2919
        %v2921 = vmul.f32 %v2532, 1.442695
        %v2922 = vpow.pop %v2921
        %v2923 = vmul.f32 %v2533, 1.442695
        %v2924 = vpow.pop %v2923
        %v2925 = vmul.f32 %v2534, 1.442695
        %v2926 = vpow.pop %v2925
        %v2927 = vmul.f32 %v2535, 1.442695
        %v2928 = vpow.pop %v2927
        %v2929 = vmul.f32 %v2536, 1.442695
        %v2930 = vpow.pop %v2929
        %v2931 = vmul.f32 %v2537, 1.442695
        %v2932 = vpow.pop %v2931
        %v2933 = vmul.f32 %v2538, 1.442695
        %v2934 = vpow.pop %v2933
        %v2935 = vmul.f32 %v2539, 1.442695
        %v2936 = vpow.pop %v2935
        %v2937 = vmul.f32 %v2540, 1.442695
        %v2938 = vpow.pop %v2937
        %v2939 = vmul.f32 %v2541, 1.442695
        %v2940 = vpow.pop %v2939
        %v2941 = vmul.f32 %v2542, 1.442695
        %v2942 = vpow.pop %v2941
        %v2943 = vmul.f32 %v2543, 1.442695
        %v2944 = vpow.pop %v2943
        %v2945 = vmul.f32 %v2544, 1.442695
        %v2946 = vpow.pop %v2945
        %v2947 = vmul.f32 %v2545, 1.442695
        %v2948 = vpow.pop %v2947
        %v2949 = vmul.f32 %v2546, 1.442695
        %v2950 = vpow.pop %v2949
        %v2951 = vmul.f32 %v2547, 1.442695
        %v2952 = vpow.pop %v2951
        %v2953 = vmul.f32 %v2548, 1.442695
        %v2954 = vpow.pop %v2953
        %v2955 = vmul.f32 %v2549, 1.442695
        %v2956 = vpow.pop %v2955
        %v2957 = vmul.f32 %v2550, 1.442695
        %v2958 = vpow.pop %v2957
        %v2959 = vmul.f32 %v2551, 1.442695
        %v2960 = vpow.pop %v2959
        %v2961 = vmul.f32 %v2552, 1.442695
        %v2962 = vpow.pop %v2961
        %v2963 = vmul.f32 %v2553, 1.442695
        %v2964 = vpow.pop %v2963
        %v2965 = vmul.f32 %v2554, 1.442695
        %v2966 = vpow.pop %v2965
        %v2967 = vmul.f32 %v2555, 1.442695
        %v2968 = vpow.pop %v2967
        %v2969 = vmul.f32 %v2556, 1.442695
        %v2970 = vpow.pop %v2969
        %v2971 = vmul.f32 %v2557, 1.442695
        %v2972 = vpow.pop %v2971
        %v2973 = vmul.f32 %v2558, 1.442695
        %v2974 = vpow.pop %v2973
        %v2975 = vmul.f32 %v2559, 1.442695
        %v2976 = vpow.pop %v2975
        %v2977 = vmul.f32 %v2560, 1.442695
        %v2978 = vpow.pop %v2977
        %v2979 = vmul.f32 %v2561, 1.442695
        %v2980 = vpow.pop %v2979
        %v2981 = vmul.f32 %v2562, 1.442695
        %v2982 = vpow.pop %v2981
        %v2983 = vmul.f32 %v2563, 1.442695
        %v2984 = vpow.pop %v2983
        %v2985 = vmul.f32 %v2564, 1.442695
        %v2986 = vpow.pop %v2985
        %v2987 = vmul.f32 %v2565, 1.442695
        %v2988 = vpow.pop %v2987
        %v2989 = vmul.f32 %v2566, 1.442695
        %v2990 = vpow.pop %v2989
        %v2991 = vmul.f32 %v2567, 1.442695
        %v2992 = vpow.pop %v2991
        %v2993 = vmul.f32 %v2568, 1.442695
        %v2994 = vpow.pop %v2993
        %v2995 = vmul.f32 %v2569, 1.442695
        %v2996 = vpow.pop %v2995
        %v2997 = vmul.f32 %v2570, 1.442695
        %v2998 = vpow.pop %v2997
        %v2999 = vmul.f32 %v2571, 1.442695
        %v3000 = vpow.pop %v2999
        %v3001 = vmul.f32 %v2572, 1.442695
        %v3002 = vpow.pop %v3001
        %v3003 = vmul.f32 %v2573, 1.442695
        %v3004 = vpow.pop %v3003
        %v3005 = vmul.f32 %v2574, 1.442695
        %v3006 = vpow.pop %v3005
        %v3007 = vmul.f32 %v2575, 1.442695
        %v3008 = vpow.pop %v3007
        %v3009 = vmul.f32 %v2576, 1.442695
        %v3010 = vpow.pop %v3009
        %v3011 = vmul.f32 %v2577, 1.442695
        %v3012 = vpow.pop %v3011
        %v3013 = vmul.f32 %v2578, 1.442695
        %v3014 = vpow.pop %v3013
        %v3015 = vmul.f32 %v2579, 1.442695
        %v3016 = vpow.pop %v3015
        %v3017 = vmul.f32 %v2580, 1.442695
        %v3018 = vpow.pop %v3017
        %v3019 = vmul.f32 %v2581, 1.442695
        %v3020 = vpow.pop %v3019
        %v3021 = vmul.f32 %v2582, 1.442695
        %v3022 = vpow.pop %v3021
        %v3023 = vmul.f32 %v2583, 1.442695
        %v3024 = vpow.pop %v3023
        %v3025 = vmul.f32 %v2584, 1.442695
        %v3026 = vpow.pop %v3025
        %v3027 = vmul.f32 %v2585, 1.442695
        %v3028 = vpow.pop %v3027
        %v3029 = vmul.f32 %v2586, 1.442695
        %v3030 = vpow.pop %v3029
        %v3031 = vmul.f32 %v2587, 1.442695
        %v3032 = vpow.pop %v3031
        %v3033 = vmul.f32 %v2588, 1.442695
        %v3034 = vpow.pop %v3033
        %v3035 = vmul.f32 %v2589, 1.442695
        %v3036 = vpow.pop %v3035
        %v3037 = vmul.f32 %v2590, 1.442695
        %v3038 = vpow.pop %v3037
        %v3039 = vmul.f32 %v2591, 1.442695
        %v3040 = vpow.pop %v3039
        %v3041 = vmul.f32 %v2592, 1.442695
        %v3042 = vpow.pop %v3041
        %v3043 = vmul.f32 %v2593, 1.442695
        %v3044 = vpow.pop %v3043
        %v3045 = vmul.f32 %v2594, 1.442695
        %v3046 = vpow.pop %v3045
        %v3047 = vmul.f32 %v2595, 1.442695
        %v3048 = vpow.pop %v3047
        %v3049 = vmul.f32 %v2596, 1.442695
        %v3050 = vpow.pop %v3049
        %v3051 = vmul.f32 %v2597, 1.442695
        %v3052 = vpow.pop %v3051
        %v3053 = vmul.f32 %v2598, 1.442695
        %v3054 = vpow.pop %v3053
        %v3055 = vmul.f32 %v2599, 1.442695
        %v3056 = vpow.pop %v3055
        %v3057 = vmul.f32 %v2600, 1.442695
        %v3058 = vpow.pop %v3057
        %v3059 = vmul.f32 %v2601, 1.442695
        %v3060 = vpow.pop %v3059
        %v3061 = vmul.f32 %v2602, 1.442695
        %v3062 = vpow.pop %v3061
        %v3063 = vmul.f32 %v2603, 1.442695
        %v3064 = vpow.pop %v3063
        %v3065 = vmul.f32 %v2604, 1.442695
        %v3066 = vpow.pop %v3065
        %v3067 = vmul.f32 %v2605, 1.442695
        %v3068 = vpow.pop %v3067
        %v3069 = vmul.f32 %v2606, 1.442695
        %v3070 = vpow.pop %v3069
        %v3071 = vmul.f32 %v2607, 1.442695
        %v3072 = vpow.pop %v3071
        %v3073 = vmul.f32 %v2608, 1.442695
        %v3074 = vpow.pop %v3073
        %v3075 = vmul.f32 %v2609, 1.442695
        %v3076 = vpow.pop %v3075
        %v3077 = vmul.f32 %v2610, 1.442695
        %v3078 = vpow.pop %v3077
        %v3079 = vmul.f32 %v2611, 1.442695
        %v3080 = vpow.pop %v3079
        %v3081 = vmul.f32 %v2612, 1.442695
        %v3082 = vpow.pop %v3081
        %v3083 = vmul.f32 %v2613, 1.442695
        %v3084 = vpow.pop %v3083
        %v3085 = vmul.f32 %v2614, 1.442695
        %v3086 = vpow.pop %v3085
        %v3087 = vmul.f32 %v2615, 1.442695
        %v3088 = vpow.pop %v3087
        %v3089 = vmul.f32 %v2616, 1.442695
        %v3090 = vpow.pop %v3089
        %v3091 = vmul.f32 %v2617, 1.442695
        %v3092 = vpow.pop %v3091
        %v3093 = vmul.f32 %v2618, 1.442695
        %v3094 = vpow.pop %v3093
        %v3095 = vmul.f32 %v2619, 1.442695
        %v3096 = vpow.pop %v3095
        %v3097 = vmul.f32 %v2620, 1.442695
        %v3098 = vpow.pop %v3097
        %v3099 = vmul.f32 %v2621, 1.442695
        %v3100 = vpow.pop %v3099
        %v3101 = vmul.f32 %v2622, 1.442695
        %v3102 = vpow.pop %v3101
        %v3103 = vmul.f32 %v2623, 1.442695
        %v3104 = vpow.pop %v3103
        %v3105 = vmul.f32 %v2624, 1.442695
        %v3106 = vpow.pop %v3105
        %v3107 = vmul.f32 %v2625, 1.442695
        %v3108 = vpow.pop %v3107
        %v3109 = vmul.f32 %v2626, 1.442695
        %v3110 = vpow.pop %v3109
        %v3111 = vmul.f32 %v2627, 1.442695
        %v3112 = vpow.pop %v3111
        %v3113 = vmul.f32 %v2628, 1.442695
        %v3114 = vpow.pop %v3113
        %v3115 = vmul.f32 %v2629, 1.442695
        %v3116 = vpow.pop %v3115
        %v3117 = vmul.f32 %v2630, 1.442695
        %v3118 = vpow.pop %v3117
        %v3119 = vmul.f32 %v2631, 1.442695
        %v3120 = vpow.pop %v3119
        %v3121 = vmul.f32 %v2632, 1.442695
        %v3122 = vpow.pop %v3121
        %v3123 = vmul.f32 %v2633, 1.442695
        %v3124 = vpow.pop %v3123
        %v3125 = vmul.f32 %v2634, 1.442695
        %v3126 = vpow.pop %v3125
        %v3127 = vmul.f32 %v2635, 1.442695
        %v3128 = vpow.pop %v3127
        %v3129 = vmul.f32 %v2636, 1.442695
        %v3130 = vpow.pop %v3129
        %v3131 = vmul.f32 %v2637, 1.442695
        %v3132 = vpow.pop %v3131
        %v3133 = vmul.f32 %v2638, 1.442695
        %v3134 = vpow.pop %v3133
        %v3135 = vmul.f32 %v2639, 1.442695
        %v3136 = vpow.pop %v3135
        %v3137 = vmul.f32 %v2640, 1.442695
        %v3138 = vpow.pop %v3137
        %v3139 = vmul.f32 %v2641, 1.442695
        %v3140 = vpow.pop %v3139
        %v3141 = vmul.f32 %v2642, 1.442695
        %v3142 = vpow.pop %v3141
        %v3143 = vmul.f32 %v2643, 1.442695
        %v3144 = vpow.pop %v3143
        %v3145 = vmul.f32 %v2644, 1.442695
        %v3146 = vpow.pop %v3145
        %v3147 = vmul.f32 %v2645, 1.442695
        %v3148 = vpow.pop %v3147
        %v3149 = vmul.f32 %v2646, 1.442695
        %v3150 = vpow.pop %v3149
        %v3151 = vmul.f32 %v2647, 1.442695
        %v3152 = vpow.pop %v3151
        %v3153 = vmul.f32 %v2648, 1.442695
        %v3154 = vpow.pop %v3153
        %v3155 = vmul.f32 %v2649, 1.442695
        %v3156 = vpow.pop %v3155
        %v3157 = vmul.f32 %v2650, 1.442695
        %v3158 = vpow.pop %v3157
        %v3159 = vmul.f32 %v2651, 1.442695
        %v3160 = vpow.pop %v3159
        %v3161 = vmul.f32 %v2652, 1.442695
        %v3162 = vpow.pop %v3161
        %v3163 = vmul.f32 %v2653, 1.442695
        %v3164 = vpow.pop %v3163
        %v3165 = vmul.f32 %v2654, 1.442695
        %v3166 = vpow.pop %v3165
        %v3167 = vadd.f32 %v2656, %v2658
        %3168 = vadd.xlane.f32.xlu0 %v3167
        %v3169 = vpop.xlane.xlu0 %3168
        %v3170 = vadd.f32 %v2660, %v2662
        %3171 = vadd.xlane.f32.xlu0 %v3170
        %v3172 = vpop.xlane.xlu0 %3171
        %v3173 = vadd.f32 %v2664, %v2666
        %3174 = vadd.xlane.f32.xlu0 %v3173
        %v3175 = vpop.xlane.xlu0 %3174
        %v3176 = vadd.f32 %v2668, %v2670
        %3177 = vadd.xlane.f32.xlu0 %v3176
        %v3178 = vpop.xlane.xlu0 %3177
        %v3179 = vadd.f32 %v2672, %v2674
        %3180 = vadd.xlane.f32.xlu0 %v3179
        %v3181 = vpop.xlane.xlu0 %3180
        %v3182 = vadd.f32 %v2676, %v2678
        %3183 = vadd.xlane.f32.xlu0 %v3182
        %v3184 = vpop.xlane.xlu0 %3183
        %v3185 = vadd.f32 %v2680, %v2682
        %3186 = vadd.xlane.f32.xlu0 %v3185
        %v3187 = vpop.xlane.xlu0 %3186
        %v3188 = vadd.f32 %v2684, %v2686
        %3189 = vadd.xlane.f32.xlu0 %v3188
        %v3190 = vpop.xlane.xlu0 %3189
        %v3191 = vadd.f32 %v2688, %v2690
        %3192 = vadd.xlane.f32.xlu0 %v3191
        %v3193 = vpop.xlane.xlu0 %3192
        %v3194 = vadd.f32 %v2692, %v2694
        %3195 = vadd.xlane.f32.xlu0 %v3194
        %v3196 = vpop.xlane.xlu0 %3195
        %v3197 = vadd.f32 %v2696, %v2698
        %3198 = vadd.xlane.f32.xlu0 %v3197
        %v3199 = vpop.xlane.xlu0 %3198
        %v3200 = vadd.f32 %v2700, %v2702
        %3201 = vadd.xlane.f32.xlu0 %v3200
        %v3202 = vpop.xlane.xlu0 %3201
        %v3203 = vadd.f32 %v2704, %v2706
        %3204 = vadd.xlane.f32.xlu0 %v3203
        %v3205 = vpop.xlane.xlu0 %3204
        %v3206 = vadd.f32 %v2708, %v2710
        %3207 = vadd.xlane.f32.xlu0 %v3206
        %v3208 = vpop.xlane.xlu0 %3207
        %v3209 = vadd.f32 %v2712, %v2714
        %3210 = vadd.xlane.f32.xlu0 %v3209
        %v3211 = vpop.xlane.xlu0 %3210
        %v3212 = vadd.f32 %v2716, %v2718
        %3213 = vadd.xlane.f32.xlu0 %v3212
        %v3214 = vpop.xlane.xlu0 %3213
        %v3215 = vadd.f32 %v2720, %v2722
        %3216 = vadd.xlane.f32.xlu0 %v3215
        %v3217 = vpop.xlane.xlu0 %3216
        %v3218 = vadd.f32 %v2724, %v2726
        %3219 = vadd.xlane.f32.xlu0 %v3218
        %v3220 = vpop.xlane.xlu0 %3219
        %v3221 = vadd.f32 %v2728, %v2730
        %3222 = vadd.xlane.f32.xlu0 %v3221
        %v3223 = vpop.xlane.xlu0 %3222
        %v3224 = vadd.f32 %v2732, %v2734
        %3225 = vadd.xlane.f32.xlu0 %v3224
        %v3226 = vpop.xlane.xlu0 %3225
        %v3227 = vadd.f32 %v2736, %v2738
        %3228 = vadd.xlane.f32.xlu0 %v3227
        %v3229 = vpop.xlane.xlu0 %3228
        %v3230 = vadd.f32 %v2740, %v2742
        %3231 = vadd.xlane.f32.xlu0 %v3230
        %v3232 = vpop.xlane.xlu0 %3231
        %v3233 = vadd.f32 %v2744, %v2746
        %3234 = vadd.xlane.f32.xlu0 %v3233
        %v3235 = vpop.xlane.xlu0 %3234
        %v3236 = vadd.f32 %v2748, %v2750
        %3237 = vadd.xlane.f32.xlu0 %v3236
        %v3238 = vpop.xlane.xlu0 %3237
        %v3239 = vadd.f32 %v2752, %v2754
        %3240 = vadd.xlane.f32.xlu0 %v3239
        %v3241 = vpop.xlane.xlu0 %3240
        %v3242 = vadd.f32 %v2756, %v2758
        %3243 = vadd.xlane.f32.xlu0 %v3242
        %v3244 = vpop.xlane.xlu0 %3243
        %v3245 = vadd.f32 %v2760, %v2762
        %3246 = vadd.xlane.f32.xlu0 %v3245
        %v3247 = vpop.xlane.xlu0 %3246
        %v3248 = vadd.f32 %v2764, %v2766
        %3249 = vadd.xlane.f32.xlu0 %v3248
        %v3250 = vpop.xlane.xlu0 %3249
        %v3251 = vadd.f32 %v2768, %v2770
        %3252 = vadd.xlane.f32.xlu0 %v3251
        %v3253 = vpop.xlane.xlu0 %3252
        %v3254 = vadd.f32 %v2772, %v2774
        %3255 = vadd.xlane.f32.xlu0 %v3254
        %v3256 = vpop.xlane.xlu0 %3255
        %v3257 = vadd.f32 %v2776, %v2778
        %3258 = vadd.xlane.f32.xlu0 %v3257
        %v3259 = vpop.xlane.xlu0 %3258
        %v3260 = vadd.f32 %v2780, %v2782
        %3261 = vadd.xlane.f32.xlu0 %v3260
        %v3262 = vpop.xlane.xlu0 %3261
        %v3263 = vadd.f32 %v2784, %v2786
        %3264 = vadd.xlane.f32.xlu0 %v3263
        %v3265 = vpop.xlane.xlu0 %3264
        %v3266 = vadd.f32 %v2788, %v2790
        %3267 = vadd.xlane.f32.xlu0 %v3266
        %v3268 = vpop.xlane.xlu0 %3267
        %v3269 = vadd.f32 %v2792, %v2794
        %3270 = vadd.xlane.f32.xlu0 %v3269
        %v3271 = vpop.xlane.xlu0 %3270
        %v3272 = vadd.f32 %v2796, %v2798
        %3273 = vadd.xlane.f32.xlu0 %v3272
        %v3274 = vpop.xlane.xlu0 %3273
        %v3275 = vadd.f32 %v2800, %v2802
        %3276 = vadd.xlane.f32.xlu0 %v3275
        %v3277 = vpop.xlane.xlu0 %3276
        %v3278 = vadd.f32 %v2804, %v2806
        %3279 = vadd.xlane.f32.xlu0 %v3278
        %v3280 = vpop.xlane.xlu0 %3279
        %v3281 = vadd.f32 %v2808, %v2810
        %3282 = vadd.xlane.f32.xlu0 %v3281
        %v3283 = vpop.xlane.xlu0 %3282
        %v3284 = vadd.f32 %v2812, %v2814
        %3285 = vadd.xlane.f32.xlu0 %v3284
        %v3286 = vpop.xlane.xlu0 %3285
        %v3287 = vadd.f32 %v2816, %v2818
        %3288 = vadd.xlane.f32.xlu0 %v3287
        %v3289 = vpop.xlane.xlu0 %3288
        %v3290 = vadd.f32 %v2820, %v2822
        %3291 = vadd.xlane.f32.xlu0 %v3290
        %v3292 = vpop.xlane.xlu0 %3291
        %v3293 = vadd.f32 %v2824, %v2826
        %3294 = vadd.xlane.f32.xlu0 %v3293
        %v3295 = vpop.xlane.xlu0 %3294
        %v3296 = vadd.f32 %v2828, %v2830
        %3297 = vadd.xlane.f32.xlu0 %v3296
        %v3298 = vpop.xlane.xlu0 %3297
        %v3299 = vadd.f32 %v2832, %v2834
        %3300 = vadd.xlane.f32.xlu0 %v3299
        %v3301 = vpop.xlane.xlu0 %3300
        %v3302 = vadd.f32 %v2836, %v2838
        %3303 = vadd.xlane.f32.xlu0 %v3302
        %v3304 = vpop.xlane.xlu0 %3303
        %v3305 = vadd.f32 %v2840, %v2842
        %3306 = vadd.xlane.f32.xlu0 %v3305
        %v3307 = vpop.xlane.xlu0 %3306
        %v3308 = vadd.f32 %v2844, %v2846
        %3309 = vadd.xlane.f32.xlu0 %v3308
        %v3310 = vpop.xlane.xlu0 %3309
        %v3311 = vadd.f32 %v2848, %v2850
        %3312 = vadd.xlane.f32.xlu0 %v3311
        %v3313 = vpop.xlane.xlu0 %3312
        %v3314 = vadd.f32 %v2852, %v2854
        %3315 = vadd.xlane.f32.xlu0 %v3314
        %v3316 = vpop.xlane.xlu0 %3315
        %v3317 = vadd.f32 %v2856, %v2858
        %3318 = vadd.xlane.f32.xlu0 %v3317
        %v3319 = vpop.xlane.xlu0 %3318
        %v3320 = vadd.f32 %v2860, %v2862
        %3321 = vadd.xlane.f32.xlu0 %v3320
        %v3322 = vpop.xlane.xlu0 %3321
        %v3323 = vadd.f32 %v2864, %v2866
        %3324 = vadd.xlane.f32.xlu0 %v3323
        %v3325 = vpop.xlane.xlu0 %3324
        %v3326 = vadd.f32 %v2868, %v2870
        %3327 = vadd.xlane.f32.xlu0 %v3326
        %v3328 = vpop.xlane.xlu0 %3327
        %v3329 = vadd.f32 %v2872, %v2874
        %3330 = vadd.xlane.f32.xlu0 %v3329
        %v3331 = vpop.xlane.xlu0 %3330
        %v3332 = vadd.f32 %v2876, %v2878
        %3333 = vadd.xlane.f32.xlu0 %v3332
        %v3334 = vpop.xlane.xlu0 %3333
        %v3335 = vadd.f32 %v2880, %v2882
        %3336 = vadd.xlane.f32.xlu0 %v3335
        %v3337 = vpop.xlane.xlu0 %3336
        %v3338 = vadd.f32 %v2884, %v2886
        %3339 = vadd.xlane.f32.xlu0 %v3338
        %v3340 = vpop.xlane.xlu0 %3339
        %v3341 = vadd.f32 %v2888, %v2890
        %3342 = vadd.xlane.f32.xlu0 %v3341
        %v3343 = vpop.xlane.xlu0 %3342
        %v3344 = vadd.f32 %v2892, %v2894
        %3345 = vadd.xlane.f32.xlu0 %v3344
        %v3346 = vpop.xlane.xlu0 %3345
        %v3347 = vadd.f32 %v2896, %v2898
        %3348 = vadd.xlane.f32.xlu0 %v3347
        %v3349 = vpop.xlane.xlu0 %3348
        %v3350 = vadd.f32 %v2900, %v2902
        %3351 = vadd.xlane.f32.xlu0 %v3350
        %v3352 = vpop.xlane.xlu0 %3351
        %v3353 = vadd.f32 %v2904, %v2906
        %3354 = vadd.xlane.f32.xlu0 %v3353
        %v3355 = vpop.xlane.xlu0 %3354
        %v3356 = vadd.f32 %v2908, %v2910
        %3357 = vadd.xlane.f32.xlu0 %v3356
        %v3358 = vpop.xlane.xlu0 %3357
        %v3359 = vadd.f32 %v2912, %v2914
        %3360 = vadd.xlane.f32.xlu0 %v3359
        %v3361 = vpop.xlane.xlu0 %3360
        %v3362 = vadd.f32 %v2916, %v2918
        %3363 = vadd.xlane.f32.xlu0 %v3362
        %v3364 = vpop.xlane.xlu0 %3363
        %v3365 = vadd.f32 %v2920, %v2922
        %3366 = vadd.xlane.f32.xlu0 %v3365
        %v3367 = vpop.xlane.xlu0 %3366
        %v3368 = vadd.f32 %v2924, %v2926
        %3369 = vadd.xlane.f32.xlu0 %v3368
        %v3370 = vpop.xlane.xlu0 %3369
        %v3371 = vadd.f32 %v2928, %v2930
        %3372 = vadd.xlane.f32.xlu0 %v3371
        %v3373 = vpop.xlane.xlu0 %3372
        %v3374 = vadd.f32 %v2932, %v2934
        %3375 = vadd.xlane.f32.xlu0 %v3374
        %v3376 = vpop.xlane.xlu0 %3375
        %v3377 = vadd.f32 %v2936, %v2938
        %3378 = vadd.xlane.f32.xlu0 %v3377
        %v3379 = vpop.xlane.xlu0 %3378
        %v3380 = vadd.f32 %v2940, %v2942
        %3381 = vadd.xlane.f32.xlu0 %v3380
        %v3382 = vpop.xlane.xlu0 %3381
        %v3383 = vadd.f32 %v2944, %v2946
        %3384 = vadd.xlane.f32.xlu0 %v3383
        %v3385 = vpop.xlane.xlu0 %3384
        %v3386 = vadd.f32 %v2948, %v2950
        %3387 = vadd.xlane.f32.xlu0 %v3386
        %v3388 = vpop.xlane.xlu0 %3387
        %v3389 = vadd.f32 %v2952, %v2954
        %3390 = vadd.xlane.f32.xlu0 %v3389
        %v3391 = vpop.xlane.xlu0 %3390
        %v3392 = vadd.f32 %v2956, %v2958
        %3393 = vadd.xlane.f32.xlu0 %v3392
        %v3394 = vpop.xlane.xlu0 %3393
        %v3395 = vadd.f32 %v2960, %v2962
        %3396 = vadd.xlane.f32.xlu0 %v3395
        %v3397 = vpop.xlane.xlu0 %3396
        %v3398 = vadd.f32 %v2964, %v2966
        %3399 = vadd.xlane.f32.xlu0 %v3398
        %v3400 = vpop.xlane.xlu0 %3399
        %v3401 = vadd.f32 %v2968, %v2970
        %3402 = vadd.xlane.f32.xlu0 %v3401
        %v3403 = vpop.xlane.xlu0 %3402
        %v3404 = vadd.f32 %v2972, %v2974
        %3405 = vadd.xlane.f32.xlu0 %v3404
        %v3406 = vpop.xlane.xlu0 %3405
        %v3407 = vadd.f32 %v2976, %v2978
        %3408 = vadd.xlane.f32.xlu0 %v3407
        %v3409 = vpop.xlane.xlu0 %3408
        %v3410 = vadd.f32 %v2980, %v2982
        %3411 = vadd.xlane.f32.xlu0 %v3410
        %v3412 = vpop.xlane.xlu0 %3411
        %v3413 = vadd.f32 %v2984, %v2986
        %3414 = vadd.xlane.f32.xlu0 %v3413
        %v3415 = vpop.xlane.xlu0 %3414
        %v3416 = vadd.f32 %v2988, %v2990
        %3417 = vadd.xlane.f32.xlu0 %v3416
        %v3418 = vpop.xlane.xlu0 %3417
        %v3419 = vadd.f32 %v2992, %v2994
        %3420 = vadd.xlane.f32.xlu0 %v3419
        %v3421 = vpop.xlane.xlu0 %3420
        %v3422 = vadd.f32 %v2996, %v2998
        %3423 = vadd.xlane.f32.xlu0 %v3422
        %v3424 = vpop.xlane.xlu0 %3423
        %v3425 = vadd.f32 %v3000, %v3002
        %3426 = vadd.xlane.f32.xlu0 %v3425
        %v3427 = vpop.xlane.xlu0 %3426
        %v3428 = vadd.f32 %v3004, %v3006
        %3429 = vadd.xlane.f32.xlu0 %v3428
        %v3430 = vpop.xlane.xlu0 %3429
        %v3431 = vadd.f32 %v3008, %v3010
        %3432 = vadd.xlane.f32.xlu0 %v3431
        %v3433 = vpop.xlane.xlu0 %3432
        %v3434 = vadd.f32 %v3012, %v3014
        %3435 = vadd.xlane.f32.xlu0 %v3434
        %v3436 = vpop.xlane.xlu0 %3435
        %v3437 = vadd.f32 %v3016, %v3018
        %3438 = vadd.xlane.f32.xlu0 %v3437
        %v3439 = vpop.xlane.xlu0 %3438
        %v3440 = vadd.f32 %v3020, %v3022
        %3441 = vadd.xlane.f32.xlu0 %v3440
        %v3442 = vpop.xlane.xlu0 %3441
        %v3443 = vadd.f32 %v3024, %v3026
        %3444 = vadd.xlane.f32.xlu0 %v3443
        %v3445 = vpop.xlane.xlu0 %3444
        %v3446 = vadd.f32 %v3028, %v3030
        %3447 = vadd.xlane.f32.xlu0 %v3446
        %v3448 = vpop.xlane.xlu0 %3447
        %v3449 = vadd.f32 %v3032, %v3034
        %3450 = vadd.xlane.f32.xlu0 %v3449
        %v3451 = vpop.xlane.xlu0 %3450
        %v3452 = vadd.f32 %v3036, %v3038
        %3453 = vadd.xlane.f32.xlu0 %v3452
        %v3454 = vpop.xlane.xlu0 %3453
        %v3455 = vadd.f32 %v3040, %v3042
        %3456 = vadd.xlane.f32.xlu0 %v3455
        %v3457 = vpop.xlane.xlu0 %3456
        %v3458 = vadd.f32 %v3044, %v3046
        %3459 = vadd.xlane.f32.xlu0 %v3458
        %v3460 = vpop.xlane.xlu0 %3459
        %v3461 = vadd.f32 %v3048, %v3050
        %3462 = vadd.xlane.f32.xlu0 %v3461
        %v3463 = vpop.xlane.xlu0 %3462
        %v3464 = vadd.f32 %v3052, %v3054
        %3465 = vadd.xlane.f32.xlu0 %v3464
        %v3466 = vpop.xlane.xlu0 %3465
        %v3467 = vadd.f32 %v3056, %v3058
        %3468 = vadd.xlane.f32.xlu0 %v3467
        %v3469 = vpop.xlane.xlu0 %3468
        %v3470 = vadd.f32 %v3060, %v3062
        %3471 = vadd.xlane.f32.xlu0 %v3470
        %v3472 = vpop.xlane.xlu0 %3471
        %v3473 = vadd.f32 %v3064, %v3066
        %3474 = vadd.xlane.f32.xlu0 %v3473
        %v3475 = vpop.xlane.xlu0 %3474
        %v3476 = vadd.f32 %v3068, %v3070
        %3477 = vadd.xlane.f32.xlu0 %v3476
        %v3478 = vpop.xlane.xlu0 %3477
        %v3479 = vadd.f32 %v3072, %v3074
        %3480 = vadd.xlane.f32.xlu0 %v3479
        %v3481 = vpop.xlane.xlu0 %3480
        %v3482 = vadd.f32 %v3076, %v3078
        %3483 = vadd.xlane.f32.xlu0 %v3482
        %v3484 = vpop.xlane.xlu0 %3483
        %v3485 = vadd.f32 %v3080, %v3082
        %3486 = vadd.xlane.f32.xlu0 %v3485
        %v3487 = vpop.xlane.xlu0 %3486
        %v3488 = vadd.f32 %v3084, %v3086
        %3489 = vadd.xlane.f32.xlu0 %v3488
        %v3490 = vpop.xlane.xlu0 %3489
        %v3491 = vadd.f32 %v3088, %v3090
        %3492 = vadd.xlane.f32.xlu0 %v3491
        %v3493 = vpop.xlane.xlu0 %3492
        %v3494 = vadd.f32 %v3092, %v3094
        %3495 = vadd.xlane.f32.xlu0 %v3494
        %v3496 = vpop.xlane.xlu0 %3495
        %v3497 = vadd.f32 %v3096, %v3098
        %3498 = vadd.xlane.f32.xlu0 %v3497
        %v3499 = vpop.xlane.xlu0 %3498
        %v3500 = vadd.f32 %v3100, %v3102
        %3501 = vadd.xlane.f32.xlu0 %v3500
        %v3502 = vpop.xlane.xlu0 %3501
        %v3503 = vadd.f32 %v3104, %v3106
        %3504 = vadd.xlane.f32.xlu0 %v3503
        %v3505 = vpop.xlane.xlu0 %3504
        %v3506 = vadd.f32 %v3108, %v3110
        %3507 = vadd.xlane.f32.xlu0 %v3506
        %v3508 = vpop.xlane.xlu0 %3507
        %v3509 = vadd.f32 %v3112, %v3114
        %3510 = vadd.xlane.f32.xlu0 %v3509
        %v3511 = vpop.xlane.xlu0 %3510
        %v3512 = vadd.f32 %v3116, %v3118
        %3513 = vadd.xlane.f32.xlu0 %v3512
        %v3514 = vpop.xlane.xlu0 %3513
        %v3515 = vadd.f32 %v3120, %v3122
        %3516 = vadd.xlane.f32.xlu0 %v3515
        %v3517 = vpop.xlane.xlu0 %3516
        %v3518 = vadd.f32 %v3124, %v3126
        %3519 = vadd.xlane.f32.xlu0 %v3518
        %v3520 = vpop.xlane.xlu0 %3519
        %v3521 = vadd.f32 %v3128, %v3130
        %3522 = vadd.xlane.f32.xlu0 %v3521
        %v3523 = vpop.xlane.xlu0 %3522
        %v3524 = vadd.f32 %v3132, %v3134
        %3525 = vadd.xlane.f32.xlu0 %v3524
        %v3526 = vpop.xlane.xlu0 %3525
        %v3527 = vadd.f32 %v3136, %v3138
        %3528 = vadd.xlane.f32.xlu0 %v3527
        %v3529 = vpop.xlane.xlu0 %3528
        %v3530 = vadd.f32 %v3140, %v3142
        %3531 = vadd.xlane.f32.xlu0 %v3530
        %v3532 = vpop.xlane.xlu0 %3531
        %v3533 = vadd.f32 %v3144, %v3146
        %3534 = vadd.xlane.f32.xlu0 %v3533
        %v3535 = vpop.xlane.xlu0 %3534
        %v3536 = vadd.f32 %v3148, %v3150
        %3537 = vadd.xlane.f32.xlu0 %v3536
        %v3538 = vpop.xlane.xlu0 %3537
        %v3539 = vadd.f32 %v3152, %v3154
        %3540 = vadd.xlane.f32.xlu0 %v3539
        %v3541 = vpop.xlane.xlu0 %3540
        %v3542 = vadd.f32 %v3156, %v3158
        %3543 = vadd.xlane.f32.xlu0 %v3542
        %v3544 = vpop.xlane.xlu0 %3543
        %v3545 = vadd.f32 %v3160, %v3162
        %3546 = vadd.xlane.f32.xlu0 %v3545
        %v3547 = vpop.xlane.xlu0 %3546
        %v3548 = vadd.f32 %v3164, %v3166
        %3549 = vadd.xlane.f32.xlu0 %v3548
        %v3550 = vpop.xlane.xlu0 %3549
        %v3551 = vrcp.pop %v3169
        %v3552 = vrcp.pop %v3172
        %v3553 = vrcp.pop %v3175
        %v3554 = vrcp.pop %v3178
        %v3555 = vrcp.pop %v3181
        %v3556 = vrcp.pop %v3184
        %v3557 = vrcp.pop %v3187
        %v3558 = vrcp.pop %v3190
        %v3559 = vrcp.pop %v3193
        %v3560 = vrcp.pop %v3196
        %v3561 = vrcp.pop %v3199
        %v3562 = vrcp.pop %v3202
        %v3563 = vrcp.pop %v3205
        %v3564 = vrcp.pop %v3208
        %v3565 = vrcp.pop %v3211
        %v3566 = vrcp.pop %v3214
        %v3567 = vrcp.pop %v3217
        %v3568 = vrcp.pop %v3220
        %v3569 = vrcp.pop %v3223
        %v3570 = vrcp.pop %v3226
        %v3571 = vrcp.pop %v3229
        %v3572 = vrcp.pop %v3232
        %v3573 = vrcp.pop %v3235
        %v3574 = vrcp.pop %v3238
        %v3575 = vrcp.pop %v3241
        %v3576 = vrcp.pop %v3244
        %v3577 = vrcp.pop %v3247
        %v3578 = vrcp.pop %v3250
        %v3579 = vrcp.pop %v3253
        %v3580 = vrcp.pop %v3256
        %v3581 = vrcp.pop %v3259
        %v3582 = vrcp.pop %v3262
        %v3583 = vrcp.pop %v3265
        %v3584 = vrcp.pop %v3268
        %v3585 = vrcp.pop %v3271
        %v3586 = vrcp.pop %v3274
        %v3587 = vrcp.pop %v3277
        %v3588 = vrcp.pop %v3280
        %v3589 = vrcp.pop %v3283
        %v3590 = vrcp.pop %v3286
        %v3591 = vrcp.pop %v3289
        %v3592 = vrcp.pop %v3292
        %v3593 = vrcp.pop %v3295
        %v3594 = vrcp.pop %v3298
        %v3595 = vrcp.pop %v3301
        %v3596 = vrcp.pop %v3304
        %v3597 = vrcp.pop %v3307
        %v3598 = vrcp.pop %v3310
        %v3599 = vrcp.pop %v3313
        %v3600 = vrcp.pop %v3316
        %v3601 = vrcp.pop %v3319
        %v3602 = vrcp.pop %v3322
        %v3603 = vrcp.pop %v3325
        %v3604 = vrcp.pop %v3328
        %v3605 = vrcp.pop %v3331
        %v3606 = vrcp.pop %v3334
        %v3607 = vrcp.pop %v3337
        %v3608 = vrcp.pop %v3340
        %v3609 = vrcp.pop %v3343
        %v3610 = vrcp.pop %v3346
        %v3611 = vrcp.pop %v3349
        %v3612 = vrcp.pop %v3352
        %v3613 = vrcp.pop %v3355
        %v3614 = vrcp.pop %v3358
        %v3615 = vrcp.pop %v3361
        %v3616 = vrcp.pop %v3364
        %v3617 = vrcp.pop %v3367
        %v3618 = vrcp.pop %v3370
        %v3619 = vrcp.pop %v3373
        %v3620 = vrcp.pop %v3376
        %v3621 = vrcp.pop %v3379
        %v3622 = vrcp.pop %v3382
        %v3623 = vrcp.pop %v3385
        %v3624 = vrcp.pop %v3388
        %v3625 = vrcp.pop %v3391
        %v3626 = vrcp.pop %v3394
        %v3627 = vrcp.pop %v3397
        %v3628 = vrcp.pop %v3400
        %v3629 = vrcp.pop %v3403
        %v3630 = vrcp.pop %v3406
        %v3631 = vrcp.pop %v3409
        %v3632 = vrcp.pop %v3412
        %v3633 = vrcp.pop %v3415
        %v3634 = vrcp.pop %v3418
        %v3635 = vrcp.pop %v3421
        %v3636 = vrcp.pop %v3424
        %v3637 = vrcp.pop %v3427
        %v3638 = vrcp.pop %v3430
        %v3639 = vrcp.pop %v3433
        %v3640 = vrcp.pop %v3436
        %v3641 = vrcp.pop %v3439
        %v3642 = vrcp.pop %v3442
        %v3643 = vrcp.pop %v3445
        %v3644 = vrcp.pop %v3448
        %v3645 = vrcp.pop %v3451
        %v3646 = vrcp.pop %v3454
        %v3647 = vrcp.pop %v3457
        %v3648 = vrcp.pop %v3460
        %v3649 = vrcp.pop %v3463
        %v3650 = vrcp.pop %v3466
        %v3651 = vrcp.pop %v3469
        %v3652 = vrcp.pop %v3472
        %v3653 = vrcp.pop %v3475
        %v3654 = vrcp.pop %v3478
        %v3655 = vrcp.pop %v3481
        %v3656 = vrcp.pop %v3484
        %v3657 = vrcp.pop %v3487
        %v3658 = vrcp.pop %v3490
        %v3659 = vrcp.pop %v3493
        %v3660 = vrcp.pop %v3496
        %v3661 = vrcp.pop %v3499
        %v3662 = vrcp.pop %v3502
        %v3663 = vrcp.pop %v3505
        %v3664 = vrcp.pop %v3508
        %v3665 = vrcp.pop %v3511
        %v3666 = vrcp.pop %v3514
        %v3667 = vrcp.pop %v3517
        %v3668 = vrcp.pop %v3520
        %v3669 = vrcp.pop %v3523
        %v3670 = vrcp.pop %v3526
        %v3671 = vrcp.pop %v3529
        %v3672 = vrcp.pop %v3532
        %v3673 = vrcp.pop %v3535
        %v3674 = vrcp.pop %v3538
        %v3675 = vrcp.pop %v3541
        %v3676 = vrcp.pop %v3544
        %v3677 = vrcp.pop %v3547
        %v3678 = vrcp.pop %v3550
        %v3679 = vmul.f32 %v2656, %v3551
        %v3680 = vmul.f32 %v2658, %v3551
        %v3681 = vmul.f32 %v2660, %v3552
        %v3682 = vmul.f32 %v2662, %v3552
        %v3683 = vmul.f32 %v2664, %v3553
        %v3684 = vmul.f32 %v2666, %v3553
        %v3685 = vmul.f32 %v2668, %v3554
        %v3686 = vmul.f32 %v2670, %v3554
        %v3687 = vmul.f32 %v2672, %v3555
        %v3688 = vmul.f32 %v2674, %v3555
        %v3689 = vmul.f32 %v2676, %v3556
        %v3690 = vmul.f32 %v2678, %v3556
        %v3691 = vmul.f32 %v2680, %v3557
        %v3692 = vmul.f32 %v2682, %v3557
        %v3693 = vmul.f32 %v2684, %v3558
        %v3694 = vmul.f32 %v2686, %v3558
        %v3695 = vmul.f32 %v2688, %v3559
        %v3696 = vmul.f32 %v2690, %v3559
        %v3697 = vmul.f32 %v2692, %v3560
        %v3698 = vmul.f32 %v2694, %v3560
        %v3699 = vmul.f32 %v2696, %v3561
        %v3700 = vmul.f32 %v2698, %v3561
        %v3701 = vmul.f32 %v2700, %v3562
        %v3702 = vmul.f32 %v2702, %v3562
        %v3703 = vmul.f32 %v2704, %v3563
        %v3704 = vmul.f32 %v2706, %v3563
        %v3705 = vmul.f32 %v2708, %v3564
        %v3706 = vmul.f32 %v2710, %v3564
        %v3707 = vmul.f32 %v2712, %v3565
        %v3708 = vmul.f32 %v2714, %v3565
        %v3709 = vmul.f32 %v2716, %v3566
        %v3710 = vmul.f32 %v2718, %v3566
        %v3711 = vmul.f32 %v2720, %v3567
        %v3712 = vmul.f32 %v2722, %v3567
        %v3713 = vmul.f32 %v2724, %v3568
        %v3714 = vmul.f32 %v2726, %v3568
        %v3715 = vmul.f32 %v2728, %v3569
        %v3716 = vmul.f32 %v2730, %v3569
        %v3717 = vmul.f32 %v2732, %v3570
        %v3718 = vmul.f32 %v2734, %v3570
        %v3719 = vmul.f32 %v2736, %v3571
        %v3720 = vmul.f32 %v2738, %v3571
        %v3721 = vmul.f32 %v2740, %v3572
        %v3722 = vmul.f32 %v2742, %v3572
        %v3723 = vmul.f32 %v2744, %v3573
        %v3724 = vmul.f32 %v2746, %v3573
        %v3725 = vmul.f32 %v2748, %v3574
        %v3726 = vmul.f32 %v2750, %v3574
        %v3727 = vmul.f32 %v2752, %v3575
        %v3728 = vmul.f32 %v2754, %v3575
        %v3729 = vmul.f32 %v2756, %v3576
        %v3730 = vmul.f32 %v2758, %v3576
        %v3731 = vmul.f32 %v2760, %v3577
        %v3732 = vmul.f32 %v2762, %v3577
        %v3733 = vmul.f32 %v2764, %v3578
        %v3734 = vmul.f32 %v2766, %v3578
        %v3735 = vmul.f32 %v2768, %v3579
        %v3736 = vmul.f32 %v2770, %v3579
        %v3737 = vmul.f32 %v2772, %v3580
        %v3738 = vmul.f32 %v2774, %v3580
        %v3739 = vmul.f32 %v2776, %v3581
        %v3740 = vmul.f32 %v2778, %v3581
        %v3741 = vmul.f32 %v2780, %v3582
        %v3742 = vmul.f32 %v2782, %v3582
        %v3743 = vmul.f32 %v2784, %v3583
        %v3744 = vmul.f32 %v2786, %v3583
        %v3745 = vmul.f32 %v2788, %v3584
        %v3746 = vmul.f32 %v2790, %v3584
        %v3747 = vmul.f32 %v2792, %v3585
        %v3748 = vmul.f32 %v2794, %v3585
        %v3749 = vmul.f32 %v2796, %v3586
        %v3750 = vmul.f32 %v2798, %v3586
        %v3751 = vmul.f32 %v2800, %v3587
        %v3752 = vmul.f32 %v2802, %v3587
        %v3753 = vmul.f32 %v2804, %v3588
        %v3754 = vmul.f32 %v2806, %v3588
        %v3755 = vmul.f32 %v2808, %v3589
        %v3756 = vmul.f32 %v2810, %v3589
        %v3757 = vmul.f32 %v2812, %v3590
        %v3758 = vmul.f32 %v2814, %v3590
        %v3759 = vmul.f32 %v2816, %v3591
        %v3760 = vmul.f32 %v2818, %v3591
        %v3761 = vmul.f32 %v2820, %v3592
        %v3762 = vmul.f32 %v2822, %v3592
        %v3763 = vmul.f32 %v2824, %v3593
        %v3764 = vmul.f32 %v2826, %v3593
        %v3765 = vmul.f32 %v2828, %v3594
        %v3766 = vmul.f32 %v2830, %v3594
        %v3767 = vmul.f32 %v2832, %v3595
        %v3768 = vmul.f32 %v2834, %v3595
        %v3769 = vmul.f32 %v2836, %v3596
        %v3770 = vmul.f32 %v2838, %v3596
        %v3771 = vmul.f32 %v2840, %v3597
        %v3772 = vmul.f32 %v2842, %v3597
        %v3773 = vmul.f32 %v2844, %v3598
        %v3774 = vmul.f32 %v2846, %v3598
        %v3775 = vmul.f32 %v2848, %v3599
        %v3776 = vmul.f32 %v2850, %v3599
        %v3777 = vmul.f32 %v2852, %v3600
        %v3778 = vmul.f32 %v2854, %v3600
        %v3779 = vmul.f32 %v2856, %v3601
        %v3780 = vmul.f32 %v2858, %v3601
        %v3781 = vmul.f32 %v2860, %v3602
        %v3782 = vmul.f32 %v2862, %v3602
        %v3783 = vmul.f32 %v2864, %v3603
        %v3784 = vmul.f32 %v2866, %v3603
        %v3785 = vmul.f32 %v2868, %v3604
        %v3786 = vmul.f32 %v2870, %v3604
        %v3787 = vmul.f32 %v2872, %v3605
        %v3788 = vmul.f32 %v2874, %v3605
        %v3789 = vmul.f32 %v2876, %v3606
        %v3790 = vmul.f32 %v2878, %v3606
        %v3791 = vmul.f32 %v2880, %v3607
        %v3792 = vmul.f32 %v2882, %v3607
        %v3793 = vmul.f32 %v2884, %v3608
        %v3794 = vmul.f32 %v2886, %v3608
        %v3795 = vmul.f32 %v2888, %v3609
        %v3796 = vmul.f32 %v2890, %v3609
        %v3797 = vmul.f32 %v2892, %v3610
        %v3798 = vmul.f32 %v2894, %v3610
        %v3799 = vmul.f32 %v2896, %v3611
        %v3800 = vmul.f32 %v2898, %v3611
        %v3801 = vmul.f32 %v2900, %v3612
        %v3802 = vmul.f32 %v2902, %v3612
        %v3803 = vmul.f32 %v2904, %v3613
        %v3804 = vmul.f32 %v2906, %v3613
        %v3805 = vmul.f32 %v2908, %v3614
        %v3806 = vmul.f32 %v2910, %v3614
        %v3807 = vmul.f32 %v2912, %v3615
        %v3808 = vmul.f32 %v2914, %v3615
        %v3809 = vmul.f32 %v2916, %v3616
        %v3810 = vmul.f32 %v2918, %v3616
        %v3811 = vmul.f32 %v2920, %v3617
        %v3812 = vmul.f32 %v2922, %v3617
        %v3813 = vmul.f32 %v2924, %v3618
        %v3814 = vmul.f32 %v2926, %v3618
        %v3815 = vmul.f32 %v2928, %v3619
        %v3816 = vmul.f32 %v2930, %v3619
        %v3817 = vmul.f32 %v2932, %v3620
        %v3818 = vmul.f32 %v2934, %v3620
        %v3819 = vmul.f32 %v2936, %v3621
        %v3820 = vmul.f32 %v2938, %v3621
        %v3821 = vmul.f32 %v2940, %v3622
        %v3822 = vmul.f32 %v2942, %v3622
        %v3823 = vmul.f32 %v2944, %v3623
        %v3824 = vmul.f32 %v2946, %v3623
        %v3825 = vmul.f32 %v2948, %v3624
        %v3826 = vmul.f32 %v2950, %v3624
        %v3827 = vmul.f32 %v2952, %v3625
        %v3828 = vmul.f32 %v2954, %v3625
        %v3829 = vmul.f32 %v2956, %v3626
        %v3830 = vmul.f32 %v2958, %v3626
        %v3831 = vmul.f32 %v2960, %v3627
        %v3832 = vmul.f32 %v2962, %v3627
        %v3833 = vmul.f32 %v2964, %v3628
        %v3834 = vmul.f32 %v2966, %v3628
        %v3835 = vmul.f32 %v2968, %v3629
        %v3836 = vmul.f32 %v2970, %v3629
        %v3837 = vmul.f32 %v2972, %v3630
        %v3838 = vmul.f32 %v2974, %v3630
        %v3839 = vmul.f32 %v2976, %v3631
        %v3840 = vmul.f32 %v2978, %v3631
        %v3841 = vmul.f32 %v2980, %v3632
        %v3842 = vmul.f32 %v2982, %v3632
        %v3843 = vmul.f32 %v2984, %v3633
        %v3844 = vmul.f32 %v2986, %v3633
        %v3845 = vmul.f32 %v2988, %v3634
        %v3846 = vmul.f32 %v2990, %v3634
        %v3847 = vmul.f32 %v2992, %v3635
        %v3848 = vmul.f32 %v2994, %v3635
        %v3849 = vmul.f32 %v2996, %v3636
        %v3850 = vmul.f32 %v2998, %v3636
        %v3851 = vmul.f32 %v3000, %v3637
        %v3852 = vmul.f32 %v3002, %v3637
        %v3853 = vmul.f32 %v3004, %v3638
        %v3854 = vmul.f32 %v3006, %v3638
        %v3855 = vmul.f32 %v3008, %v3639
        %v3856 = vmul.f32 %v3010, %v3639
        %v3857 = vmul.f32 %v3012, %v3640
        %v3858 = vmul.f32 %v3014, %v3640
        %v3859 = vmul.f32 %v3016, %v3641
        %v3860 = vmul.f32 %v3018, %v3641
        %v3861 = vmul.f32 %v3020, %v3642
        %v3862 = vmul.f32 %v3022, %v3642
        %v3863 = vmul.f32 %v3024, %v3643
        %v3864 = vmul.f32 %v3026, %v3643
        %v3865 = vmul.f32 %v3028, %v3644
        %v3866 = vmul.f32 %v3030, %v3644
        %v3867 = vmul.f32 %v3032, %v3645
        %v3868 = vmul.f32 %v3034, %v3645
        %v3869 = vmul.f32 %v3036, %v3646
        %v3870 = vmul.f32 %v3038, %v3646
        %v3871 = vmul.f32 %v3040, %v3647
        %v3872 = vmul.f32 %v3042, %v3647
        %v3873 = vmul.f32 %v3044, %v3648
        %v3874 = vmul.f32 %v3046, %v3648
        %v3875 = vmul.f32 %v3048, %v3649
        %v3876 = vmul.f32 %v3050, %v3649
        %v3877 = vmul.f32 %v3052, %v3650
        %v3878 = vmul.f32 %v3054, %v3650
        %v3879 = vmul.f32 %v3056, %v3651
        %v3880 = vmul.f32 %v3058, %v3651
        %v3881 = vmul.f32 %v3060, %v3652
        %v3882 = vmul.f32 %v3062, %v3652
        %v3883 = vmul.f32 %v3064, %v3653
        %v3884 = vmul.f32 %v3066, %v3653
        %v3885 = vmul.f32 %v3068, %v3654
        %v3886 = vmul.f32 %v3070, %v3654
        %v3887 = vmul.f32 %v3072, %v3655
        %v3888 = vmul.f32 %v3074, %v3655
        %v3889 = vmul.f32 %v3076, %v3656
        %v3890 = vmul.f32 %v3078, %v3656
        %v3891 = vmul.f32 %v3080, %v3657
        %v3892 = vmul.f32 %v3082, %v3657
        %v3893 = vmul.f32 %v3084, %v3658
        %v3894 = vmul.f32 %v3086, %v3658
        %v3895 = vmul.f32 %v3088, %v3659
        %v3896 = vmul.f32 %v3090, %v3659
        %v3897 = vmul.f32 %v3092, %v3660
        %v3898 = vmul.f32 %v3094, %v3660
        %v3899 = vmul.f32 %v3096, %v3661
        %v3900 = vmul.f32 %v3098, %v3661
        %v3901 = vmul.f32 %v3100, %v3662
        %v3902 = vmul.f32 %v3102, %v3662
        %v3903 = vmul.f32 %v3104, %v3663
        %v3904 = vmul.f32 %v3106, %v3663
        %v3905 = vmul.f32 %v3108, %v3664
        %v3906 = vmul.f32 %v3110, %v3664
        %v3907 = vmul.f32 %v3112, %v3665
        %v3908 = vmul.f32 %v3114, %v3665
        %v3909 = vmul.f32 %v3116, %v3666
        %v3910 = vmul.f32 %v3118, %v3666
        %v3911 = vmul.f32 %v3120, %v3667
        %v3912 = vmul.f32 %v3122, %v3667
        %v3913 = vmul.f32 %v3124, %v3668
        %v3914 = vmul.f32 %v3126, %v3668
        %v3915 = vmul.f32 %v3128, %v3669
        %v3916 = vmul.f32 %v3130, %v3669
        %v3917 = vmul.f32 %v3132, %v3670
        %v3918 = vmul.f32 %v3134, %v3670
        %v3919 = vmul.f32 %v3136, %v3671
        %v3920 = vmul.f32 %v3138, %v3671
        %v3921 = vmul.f32 %v3140, %v3672
        %v3922 = vmul.f32 %v3142, %v3672
        %v3923 = vmul.f32 %v3144, %v3673
        %v3924 = vmul.f32 %v3146, %v3673
        %v3925 = vmul.f32 %v3148, %v3674
        %v3926 = vmul.f32 %v3150, %v3674
        %v3927 = vmul.f32 %v3152, %v3675
        %v3928 = vmul.f32 %v3154, %v3675
        %v3929 = vmul.f32 %v3156, %v3676
        %v3930 = vmul.f32 %v3158, %v3676
        %v3931 = vmul.f32 %v3160, %v3677
        %v3932 = vmul.f32 %v3162, %v3677
        %v3933 = vmul.f32 %v3164, %v3678
        %v3934 = vmul.f32 %v3166, %v3678
        %v3935 = vunpack.c.l.bf16 %v437
        %v3936 = vunpack.c.h.bf16 %v437
        %v3937 = vunpack.c.l.bf16 %v438
        %v3938 = vunpack.c.h.bf16 %v438
        %v3939 = vunpack.c.l.bf16 %v439
        %v3940 = vunpack.c.h.bf16 %v439
        %v3941 = vunpack.c.l.bf16 %v440
        %v3942 = vunpack.c.h.bf16 %v440
        %v3943 = vunpack.c.l.bf16 %v441
        %v3944 = vunpack.c.h.bf16 %v441
        %v3945 = vunpack.c.l.bf16 %v442
        %v3946 = vunpack.c.h.bf16 %v442
        %v3947 = vunpack.c.l.bf16 %v443
        %v3948 = vunpack.c.h.bf16 %v443
        %v3949 = vunpack.c.l.bf16 %v444
        %v3950 = vunpack.c.h.bf16 %v444
        %v3951 = vld [vmem:[%s381] sm:$0xf]
        %v3952 = vld [vmem:[%s381 + $0x4] sm:$0xf]
        %v3953 = vld [vmem:[%s381 + $0x8] sm:$0xf]
        %v3954 = vld [vmem:[%s381 + $0xc] sm:$0xf]
        %v3955 = vld [vmem:[%s381 + $0x10] sm:$0xf]
        %v3956 = vld [vmem:[%s381 + $0x14] sm:$0xf]
        %v3957 = vld [vmem:[%s381 + $0x18] sm:$0xf]
        %v3958 = vld [vmem:[%s381 + $0x1c] sm:$0xf]
        %v3959 = vunpack.c.l.bf16 %v3951
        %v3960 = vunpack.c.l.bf16 %v3952
        %v3961 = vunpack.c.l.bf16 %v3953
        %v3962 = vunpack.c.l.bf16 %v3954
        %v3963 = vunpack.c.l.bf16 %v3955
        %v3964 = vunpack.c.l.bf16 %v3956
        %v3965 = vunpack.c.l.bf16 %v3957
        %v3966 = vunpack.c.l.bf16 %v3958
        %3967 = vmatprep.subr.mxu0 %v3680
        %3968 = vmatpush1.xpose.msra.mxu0 %v3679
        %3969 = vmatprep.subr.mxu0 %v3682
        %3970 = vmatpush1.xpose.msra.mxu0 %v3681
        %3971 = vmatprep.subr.mxu0 %v3684
        %3972 = vmatpush1.xpose.msra.mxu0 %v3683
        %3973 = vmatprep.subr.mxu0 %v3686
        %3974 = vmatpush1.xpose.msra.mxu0 %v3685
        %3975 = vmatprep.subr.mxu0 %v3688
        %3976 = vmatpush1.xpose.msra.mxu0 %v3687
        %3977 = vmatprep.subr.mxu0 %v3690
        %3978 = vmatpush1.xpose.msra.mxu0 %v3689
        %3979 = vmatprep.subr.mxu0 %v3692
        %3980 = vmatpush1.xpose.msra.mxu0 %v3691
        %3981 = vmatprep.subr.mxu0 %v3694
        %3982 = vmatpush1.xpose.msra.mxu0 %v3693
        %3983 = vmatprep.subr.mxu0 %v3696
        %3984 = vmatpush1.xpose.msra.mxu0 %v3695
        %3985 = vmatprep.subr.mxu0 %v3698
        %3986 = vmatpush1.xpose.msra.mxu0 %v3697
        %3987 = vmatprep.subr.mxu0 %v3700
        %3988 = vmatpush1.xpose.msra.mxu0 %v3699
        %3989 = vmatprep.subr.mxu0 %v3702
        %3990 = vmatpush1.xpose.msra.mxu0 %v3701
        %3991 = vmatprep.subr.mxu0 %v3704
        %3992 = vmatpush1.xpose.msra.mxu0 %v3703
        %3993 = vmatprep.subr.mxu0 %v3706
        %3994 = vmatpush1.xpose.msra.mxu0 %v3705
        %3995 = vmatprep.subr.mxu0 %v3708
        %3996 = vmatpush1.xpose.msra.mxu0 %v3707
        %3997 = vmatprep.subr.mxu0 %v3710
        %3998 = vmatpush1.xpose.msra.mxu0 %v3709
        %3999 = vmatprep.subr.mxu0 0.0
        %4000 = vmatpush1.xpose.msra.mxu0 0.0
        %4001 = vmatprep.subr.mxu0 0.0
        %4002 = vmatpush1.xpose.msra.mxu0 0.0
        %4003 = vmatprep.subr.mxu0 0.0
        %4004 = vmatpush1.xpose.msra.mxu0 0.0
        %4005 = vmatprep.subr.mxu0 0.0
        %4006 = vmatpush1.xpose.msra.mxu0 0.0
        %4007 = vmatprep.subr.mxu0 0.0
        %4008 = vmatpush1.xpose.msra.mxu0 0.0
        %4009 = vmatprep.subr.mxu0 0.0
        %4010 = vmatpush1.xpose.msra.mxu0 0.0
        %4011 = vmatprep.subr.mxu0 0.0
        %4012 = vmatpush1.xpose.msra.mxu0 0.0
        %4013 = vmatprep.subr.mxu0 0.0
        %4014 = vmatpush1.xpose.msra.mxu0 0.0
        %4015 = vmatprep.subr.mxu0 0.0
        %4016 = vmatpush1.xpose.msra.mxu0 0.0
        %4017 = vmatprep.subr.mxu0 0.0
        %4018 = vmatpush1.xpose.msra.mxu0 0.0
        %4019 = vmatprep.subr.mxu0 0.0
        %4020 = vmatpush1.xpose.msra.mxu0 0.0
        %4021 = vmatprep.subr.mxu0 0.0
        %4022 = vmatpush1.xpose.msra.mxu0 0.0
        %4023 = vmatprep.subr.mxu0 0.0
        %4024 = vmatpush1.xpose.msra.mxu0 0.0
        %4025 = vmatprep.subr.mxu0 0.0
        %4026 = vmatpush1.xpose.msra.mxu0 0.0
        %4027 = vmatprep.subr.mxu0 0.0
        %4028 = vmatpush1.xpose.msra.mxu0 0.0
        %4029 = vmatprep.subr.mxu0 0.0
        %4030 = vmatpush1.xpose.msra.mxu0 0.0
        %4031 = vmatprep.mubr.f32.mxu0 %v3936
        %4032 = vmatmul.mubr.f32.gmra.mrb[0].mxu0 %v3935
        %v4033 = vpop.f32.mrb[0].mxu0
        %v4034 = vadd.f32 %v3959, %v4033
        %v4035 = vpop.f32.mrb[0].mxu0
        %4036 = vdwg.mxu0
        %4037 = vmatprep.subr.mxu0 %v3712
        %4038 = vmatpush1.xpose.msra.mxu0 %v3711
        %4039 = vmatprep.subr.mxu0 %v3714
        %4040 = vmatpush1.xpose.msra.mxu0 %v3713
        %4041 = vmatprep.subr.mxu0 %v3716
        %4042 = vmatpush1.xpose.msra.mxu0 %v3715
        %4043 = vmatprep.subr.mxu0 %v3718
        %4044 = vmatpush1.xpose.msra.mxu0 %v3717
        %4045 = vmatprep.subr.mxu0 %v3720
        %4046 = vmatpush1.xpose.msra.mxu0 %v3719
        %4047 = vmatprep.subr.mxu0 %v3722
        %4048 = vmatpush1.xpose.msra.mxu0 %v3721
        %4049 = vmatprep.subr.mxu0 %v3724
        %4050 = vmatpush1.xpose.msra.mxu0 %v3723
        %4051 = vmatprep.subr.mxu0 %v3726
        %4052 = vmatpush1.xpose.msra.mxu0 %v3725
        %4053 = vmatprep.subr.mxu0 %v3728
        %4054 = vmatpush1.xpose.msra.mxu0 %v3727
        %4055 = vmatprep.subr.mxu0 %v3730
        %4056 = vmatpush1.xpose.msra.mxu0 %v3729
        %4057 = vmatprep.subr.mxu0 %v3732
        %4058 = vmatpush1.xpose.msra.mxu0 %v3731
        %4059 = vmatprep.subr.mxu0 %v3734
        %4060 = vmatpush1.xpose.msra.mxu0 %v3733
        %4061 = vmatprep.subr.mxu0 %v3736
        %4062 = vmatpush1.xpose.msra.mxu0 %v3735
        %4063 = vmatprep.subr.mxu0 %v3738
        %4064 = vmatpush1.xpose.msra.mxu0 %v3737
        %4065 = vmatprep.subr.mxu0 %v3740
        %4066 = vmatpush1.xpose.msra.mxu0 %v3739
        %4067 = vmatprep.subr.mxu0 %v3742
        %4068 = vmatpush1.xpose.msra.mxu0 %v3741
        %4069 = vmatprep.subr.mxu0 0.0
        %4070 = vmatpush1.xpose.msra.mxu0 0.0
        %4071 = vmatprep.subr.mxu0 0.0
        %4072 = vmatpush1.xpose.msra.mxu0 0.0
        %4073 = vmatprep.subr.mxu0 0.0
        %4074 = vmatpush1.xpose.msra.mxu0 0.0
        %4075 = vmatprep.subr.mxu0 0.0
        %4076 = vmatpush1.xpose.msra.mxu0 0.0
        %4077 = vmatprep.subr.mxu0 0.0
        %4078 = vmatpush1.xpose.msra.mxu0 0.0
        %4079 = vmatprep.subr.mxu0 0.0
        %4080 = vmatpush1.xpose.msra.mxu0 0.0
        %4081 = vmatprep.subr.mxu0 0.0
        %4082 = vmatpush1.xpose.msra.mxu0 0.0
        %4083 = vmatprep.subr.mxu0 0.0
        %4084 = vmatpush1.xpose.msra.mxu0 0.0
        %4085 = vmatprep.subr.mxu0 0.0
        %4086 = vmatpush1.xpose.msra.mxu0 0.0
        %4087 = vmatprep.subr.mxu0 0.0
        %4088 = vmatpush1.xpose.msra.mxu0 0.0
        %4089 = vmatprep.subr.mxu0 0.0
        %4090 = vmatpush1.xpose.msra.mxu0 0.0
        %4091 = vmatprep.subr.mxu0 0.0
        %4092 = vmatpush1.xpose.msra.mxu0 0.0
        %4093 = vmatprep.subr.mxu0 0.0
        %4094 = vmatpush1.xpose.msra.mxu0 0.0
        %4095 = vmatprep.subr.mxu0 0.0
        %4096 = vmatpush1.xpose.msra.mxu0 0.0
        %4097 = vmatprep.subr.mxu0 0.0
        %4098 = vmatpush1.xpose.msra.mxu0 0.0
        %4099 = vmatprep.subr.mxu0 0.0
        %4100 = vmatpush1.xpose.msra.mxu0 0.0
        %4101 = vmatprep.mubr.f32.mxu0 %v3938
        %4102 = vmatmul.mubr.f32.gmra.mrb[0].mxu0 %v3937
        %v4103 = vpop.f32.mrb[0].mxu0
        %v4104 = vadd.f32 %v3960, %v4103
        %v4105 = vpop.f32.mrb[0].mxu0
        %4106 = vdwg.mxu0
        %4107 = vmatprep.subr.mxu0 %v3744
        %4108 = vmatpush1.xpose.msra.mxu0 %v3743
        %4109 = vmatprep.subr.mxu0 %v3746
        %4110 = vmatpush1.xpose.msra.mxu0 %v3745
        %4111 = vmatprep.subr.mxu0 %v3748
        %4112 = vmatpush1.xpose.msra.mxu0 %v3747
        %4113 = vmatprep.subr.mxu0 %v3750
        %4114 = vmatpush1.xpose.msra.mxu0 %v3749
        %4115 = vmatprep.subr.mxu0 %v3752
        %4116 = vmatpush1.xpose.msra.mxu0 %v3751
        %4117 = vmatprep.subr.mxu0 %v3754
        %4118 = vmatpush1.xpose.msra.mxu0 %v3753
        %4119 = vmatprep.subr.mxu0 %v3756
        %4120 = vmatpush1.xpose.msra.mxu0 %v3755
        %4121 = vmatprep.subr.mxu0 %v3758
        %4122 = vmatpush1.xpose.msra.mxu0 %v3757
        %4123 = vmatprep.subr.mxu0 %v3760
        %4124 = vmatpush1.xpose.msra.mxu0 %v3759
        %4125 = vmatprep.subr.mxu0 %v3762
        %4126 = vmatpush1.xpose.msra.mxu0 %v3761
        %4127 = vmatprep.subr.mxu0 %v3764
        %4128 = vmatpush1.xpose.msra.mxu0 %v3763
        %4129 = vmatprep.subr.mxu0 %v3766
        %4130 = vmatpush1.xpose.msra.mxu0 %v3765
        %4131 = vmatprep.subr.mxu0 %v3768
        %4132 = vmatpush1.xpose.msra.mxu0 %v3767
        %4133 = vmatprep.subr.mxu0 %v3770
        %4134 = vmatpush1.xpose.msra.mxu0 %v3769
        %4135 = vmatprep.subr.mxu0 %v3772
        %4136 = vmatpush1.xpose.msra.mxu0 %v3771
        %4137 = vmatprep.subr.mxu0 %v3774
        %4138 = vmatpush1.xpose.msra.mxu0 %v3773
        %4139 = vmatprep.subr.mxu0 0.0
        %4140 = vmatpush1.xpose.msra.mxu0 0.0
        %4141 = vmatprep.subr.mxu0 0.0
        %4142 = vmatpush1.xpose.msra.mxu0 0.0
        %4143 = vmatprep.subr.mxu0 0.0
        %4144 = vmatpush1.xpose.msra.mxu0 0.0
        %4145 = vmatprep.subr.mxu0 0.0
        %4146 = vmatpush1.xpose.msra.mxu0 0.0
        %4147 = vmatprep.subr.mxu0 0.0
        %4148 = vmatpush1.xpose.msra.mxu0 0.0
        %4149 = vmatprep.subr.mxu0 0.0
        %4150 = vmatpush1.xpose.msra.mxu0 0.0
        %4151 = vmatprep.subr.mxu0 0.0
        %4152 = vmatpush1.xpose.msra.mxu0 0.0
        %4153 = vmatprep.subr.mxu0 0.0
        %4154 = vmatpush1.xpose.msra.mxu0 0.0
        %4155 = vmatprep.subr.mxu0 0.0
        %4156 = vmatpush1.xpose.msra.mxu0 0.0
        %4157 = vmatprep.subr.mxu0 0.0
        %4158 = vmatpush1.xpose.msra.mxu0 0.0
        %4159 = vmatprep.subr.mxu0 0.0
        %4160 = vmatpush1.xpose.msra.mxu0 0.0
        %4161 = vmatprep.subr.mxu0 0.0
        %4162 = vmatpush1.xpose.msra.mxu0 0.0
        %4163 = vmatprep.subr.mxu0 0.0
        %4164 = vmatpush1.xpose.msra.mxu0 0.0
        %4165 = vmatprep.subr.mxu0 0.0
        %4166 = vmatpush1.xpose.msra.mxu0 0.0
        %4167 = vmatprep.subr.mxu0 0.0
        %4168 = vmatpush1.xpose.msra.mxu0 0.0
        %4169 = vmatprep.subr.mxu0 0.0
        %4170 = vmatpush1.xpose.msra.mxu0 0.0
        %4171 = vmatprep.mubr.f32.mxu0 %v3940
        %4172 = vmatmul.mubr.f32.gmra.mrb[0].mxu0 %v3939
        %v4173 = vpop.f32.mrb[0].mxu0
        %v4174 = vadd.f32 %v3961, %v4173
        %v4175 = vpop.f32.mrb[0].mxu0
        %4176 = vdwg.mxu0
        %4177 = vmatprep.subr.mxu0 %v3776
        %4178 = vmatpush1.xpose.msra.mxu0 %v3775
        %4179 = vmatprep.subr.mxu0 %v3778
        %4180 = vmatpush1.xpose.msra.mxu0 %v3777
        %4181 = vmatprep.subr.mxu0 %v3780
        %4182 = vmatpush1.xpose.msra.mxu0 %v3779
        %4183 = vmatprep.subr.mxu0 %v3782
        %4184 = vmatpush1.xpose.msra.mxu0 %v3781
        %4185 = vmatprep.subr.mxu0 %v3784
        %4186 = vmatpush1.xpose.msra.mxu0 %v3783
        %4187 = vmatprep.subr.mxu0 %v3786
        %4188 = vmatpush1.xpose.msra.mxu0 %v3785
        %4189 = vmatprep.subr.mxu0 %v3788
        %4190 = vmatpush1.xpose.msra.mxu0 %v3787
        %4191 = vmatprep.subr.mxu0 %v3790
        %4192 = vmatpush1.xpose.msra.mxu0 %v3789
        %4193 = vmatprep.subr.mxu0 %v3792
        %4194 = vmatpush1.xpose.msra.mxu0 %v3791
        %4195 = vmatprep.subr.mxu0 %v3794
        %4196 = vmatpush1.xpose.msra.mxu0 %v3793
        %4197 = vmatprep.subr.mxu0 %v3796
        %4198 = vmatpush1.xpose.msra.mxu0 %v3795
        %4199 = vmatprep.subr.mxu0 %v3798
        %4200 = vmatpush1.xpose.msra.mxu0 %v3797
        %4201 = vmatprep.subr.mxu0 %v3800
        %4202 = vmatpush1.xpose.msra.mxu0 %v3799
        %4203 = vmatprep.subr.mxu0 %v3802
        %4204 = vmatpush1.xpose.msra.mxu0 %v3801
        %4205 = vmatprep.subr.mxu0 %v3804
        %4206 = vmatpush1.xpose.msra.mxu0 %v3803
        %4207 = vmatprep.subr.mxu0 %v3806
        %4208 = vmatpush1.xpose.msra.mxu0 %v3805
        %4209 = vmatprep.subr.mxu0 0.0
        %4210 = vmatpush1.xpose.msra.mxu0 0.0
        %4211 = vmatprep.subr.mxu0 0.0
        %4212 = vmatpush1.xpose.msra.mxu0 0.0
        %4213 = vmatprep.subr.mxu0 0.0
        %4214 = vmatpush1.xpose.msra.mxu0 0.0
        %4215 = vmatprep.subr.mxu0 0.0
        %4216 = vmatpush1.xpose.msra.mxu0 0.0
        %4217 = vmatprep.subr.mxu0 0.0
        %4218 = vmatpush1.xpose.msra.mxu0 0.0
        %4219 = vmatprep.subr.mxu0 0.0
        %4220 = vmatpush1.xpose.msra.mxu0 0.0
        %4221 = vmatprep.subr.mxu0 0.0
        %4222 = vmatpush1.xpose.msra.mxu0 0.0
        %4223 = vmatprep.subr.mxu0 0.0
        %4224 = vmatpush1.xpose.msra.mxu0 0.0
        %4225 = vmatprep.subr.mxu0 0.0
        %4226 = vmatpush1.xpose.msra.mxu0 0.0
        %4227 = vmatprep.subr.mxu0 0.0
        %4228 = vmatpush1.xpose.msra.mxu0 0.0
        %4229 = vmatprep.subr.mxu0 0.0
        %4230 = vmatpush1.xpose.msra.mxu0 0.0
        %4231 = vmatprep.subr.mxu0 0.0
        %4232 = vmatpush1.xpose.msra.mxu0 0.0
        %4233 = vmatprep.subr.mxu0 0.0
        %4234 = vmatpush1.xpose.msra.mxu0 0.0
        %4235 = vmatprep.subr.mxu0 0.0
        %4236 = vmatpush1.xpose.msra.mxu0 0.0
        %4237 = vmatprep.subr.mxu0 0.0
        %4238 = vmatpush1.xpose.msra.mxu0 0.0
        %4239 = vmatprep.subr.mxu0 0.0
        %4240 = vmatpush1.xpose.msra.mxu0 0.0
        %4241 = vmatprep.mubr.f32.mxu0 %v3942
        %4242 = vmatmul.mubr.f32.gmra.mrb[0].mxu0 %v3941
        %v4243 = vpop.f32.mrb[0].mxu0
        %v4244 = vadd.f32 %v3962, %v4243
        %v4245 = vpop.f32.mrb[0].mxu0
        %4246 = vdwg.mxu0
        %4247 = vmatprep.subr.mxu0 %v3808
        %4248 = vmatpush1.xpose.msra.mxu0 %v3807
        %4249 = vmatprep.subr.mxu0 %v3810
        %4250 = vmatpush1.xpose.msra.mxu0 %v3809
        %4251 = vmatprep.subr.mxu0 %v3812
        %4252 = vmatpush1.xpose.msra.mxu0 %v3811
        %4253 = vmatprep.subr.mxu0 %v3814
        %4254 = vmatpush1.xpose.msra.mxu0 %v3813
        %4255 = vmatprep.subr.mxu0 %v3816
        %4256 = vmatpush1.xpose.msra.mxu0 %v3815
        %4257 = vmatprep.subr.mxu0 %v3818
        %4258 = vmatpush1.xpose.msra.mxu0 %v3817
        %4259 = vmatprep.subr.mxu0 %v3820
        %4260 = vmatpush1.xpose.msra.mxu0 %v3819
        %4261 = vmatprep.subr.mxu0 %v3822
        %4262 = vmatpush1.xpose.msra.mxu0 %v3821
        %4263 = vmatprep.subr.mxu0 %v3824
        %4264 = vmatpush1.xpose.msra.mxu0 %v3823
        %4265 = vmatprep.subr.mxu0 %v3826
        %4266 = vmatpush1.xpose.msra.mxu0 %v3825
        %4267 = vmatprep.subr.mxu0 %v3828
        %4268 = vmatpush1.xpose.msra.mxu0 %v3827
        %4269 = vmatprep.subr.mxu0 %v3830
        %4270 = vmatpush1.xpose.msra.mxu0 %v3829
        %4271 = vmatprep.subr.mxu0 %v3832
        %4272 = vmatpush1.xpose.msra.mxu0 %v3831
        %4273 = vmatprep.subr.mxu0 %v3834
        %4274 = vmatpush1.xpose.msra.mxu0 %v3833
        %4275 = vmatprep.subr.mxu0 %v3836
        %4276 = vmatpush1.xpose.msra.mxu0 %v3835
        %4277 = vmatprep.subr.mxu0 %v3838
        %4278 = vmatpush1.xpose.msra.mxu0 %v3837
        %4279 = vmatprep.subr.mxu0 0.0
        %4280 = vmatpush1.xpose.msra.mxu0 0.0
        %4281 = vmatprep.subr.mxu0 0.0
        %4282 = vmatpush1.xpose.msra.mxu0 0.0
        %4283 = vmatprep.subr.mxu0 0.0
        %4284 = vmatpush1.xpose.msra.mxu0 0.0
        %4285 = vmatprep.subr.mxu0 0.0
        %4286 = vmatpush1.xpose.msra.mxu0 0.0
        %4287 = vmatprep.subr.mxu0 0.0
        %4288 = vmatpush1.xpose.msra.mxu0 0.0
        %4289 = vmatprep.subr.mxu0 0.0
        %4290 = vmatpush1.xpose.msra.mxu0 0.0
        %4291 = vmatprep.subr.mxu0 0.0
        %4292 = vmatpush1.xpose.msra.mxu0 0.0
        %4293 = vmatprep.subr.mxu0 0.0
        %4294 = vmatpush1.xpose.msra.mxu0 0.0
        %4295 = vmatprep.subr.mxu0 0.0
        %4296 = vmatpush1.xpose.msra.mxu0 0.0
        %4297 = vmatprep.subr.mxu0 0.0
        %4298 = vmatpush1.xpose.msra.mxu0 0.0
        %4299 = vmatprep.subr.mxu0 0.0
        %4300 = vmatpush1.xpose.msra.mxu0 0.0
        %4301 = vmatprep.subr.mxu0 0.0
        %4302 = vmatpush1.xpose.msra.mxu0 0.0
        %4303 = vmatprep.subr.mxu0 0.0
        %4304 = vmatpush1.xpose.msra.mxu0 0.0
        %4305 = vmatprep.subr.mxu0 0.0
        %4306 = vmatpush1.xpose.msra.mxu0 0.0
        %4307 = vmatprep.subr.mxu0 0.0
        %4308 = vmatpush1.xpose.msra.mxu0 0.0
        %4309 = vmatprep.subr.mxu0 0.0
        %4310 = vmatpush1.xpose.msra.mxu0 0.0
        %4311 = vmatprep.mubr.f32.mxu0 %v3944
        %4312 = vmatmul.mubr.f32.gmra.mrb[0].mxu0 %v3943
        %v4313 = vpop.f32.mrb[0].mxu0
        %v4314 = vadd.f32 %v3963, %v4313
        %v4315 = vpop.f32.mrb[0].mxu0
        %4316 = vdwg.mxu0
        %4317 = vmatprep.subr.mxu0 %v3840
        %4318 = vmatpush1.xpose.msra.mxu0 %v3839
        %4319 = vmatprep.subr.mxu0 %v3842
        %4320 = vmatpush1.xpose.msra.mxu0 %v3841
        %4321 = vmatprep.subr.mxu0 %v3844
        %4322 = vmatpush1.xpose.msra.mxu0 %v3843
        %4323 = vmatprep.subr.mxu0 %v3846
        %4324 = vmatpush1.xpose.msra.mxu0 %v3845
        %4325 = vmatprep.subr.mxu0 %v3848
        %4326 = vmatpush1.xpose.msra.mxu0 %v3847
        %4327 = vmatprep.subr.mxu0 %v3850
        %4328 = vmatpush1.xpose.msra.mxu0 %v3849
        %4329 = vmatprep.subr.mxu0 %v3852
        %4330 = vmatpush1.xpose.msra.mxu0 %v3851
        %4331 = vmatprep.subr.mxu0 %v3854
        %4332 = vmatpush1.xpose.msra.mxu0 %v3853
        %4333 = vmatprep.subr.mxu0 %v3856
        %4334 = vmatpush1.xpose.msra.mxu0 %v3855
        %4335 = vmatprep.subr.mxu0 %v3858
        %4336 = vmatpush1.xpose.msra.mxu0 %v3857
        %4337 = vmatprep.subr.mxu0 %v3860
        %4338 = vmatpush1.xpose.msra.mxu0 %v3859
        %4339 = vmatprep.subr.mxu0 %v3862
        %4340 = vmatpush1.xpose.msra.mxu0 %v3861
        %4341 = vmatprep.subr.mxu0 %v3864
        %4342 = vmatpush1.xpose.msra.mxu0 %v3863
        %4343 = vmatprep.subr.mxu0 %v3866
        %4344 = vmatpush1.xpose.msra.mxu0 %v3865
        %4345 = vmatprep.subr.mxu0 %v3868
        %4346 = vmatpush1.xpose.msra.mxu0 %v3867
        %4347 = vmatprep.subr.mxu0 %v3870
        %4348 = vmatpush1.xpose.msra.mxu0 %v3869
        %4349 = vmatprep.subr.mxu0 0.0
        %4350 = vmatpush1.xpose.msra.mxu0 0.0
        %4351 = vmatprep.subr.mxu0 0.0
        %4352 = vmatpush1.xpose.msra.mxu0 0.0
        %4353 = vmatprep.subr.mxu0 0.0
        %4354 = vmatpush1.xpose.msra.mxu0 0.0
        %4355 = vmatprep.subr.mxu0 0.0
        %4356 = vmatpush1.xpose.msra.mxu0 0.0
        %4357 = vmatprep.subr.mxu0 0.0
        %4358 = vmatpush1.xpose.msra.mxu0 0.0
        %4359 = vmatprep.subr.mxu0 0.0
        %4360 = vmatpush1.xpose.msra.mxu0 0.0
        %4361 = vmatprep.subr.mxu0 0.0
        %4362 = vmatpush1.xpose.msra.mxu0 0.0
        %4363 = vmatprep.subr.mxu0 0.0
        %4364 = vmatpush1.xpose.msra.mxu0 0.0
        %4365 = vmatprep.subr.mxu0 0.0
        %4366 = vmatpush1.xpose.msra.mxu0 0.0
        %4367 = vmatprep.subr.mxu0 0.0
        %4368 = vmatpush1.xpose.msra.mxu0 0.0
        %4369 = vmatprep.subr.mxu0 0.0
        %4370 = vmatpush1.xpose.msra.mxu0 0.0
        %4371 = vmatprep.subr.mxu0 0.0
        %4372 = vmatpush1.xpose.msra.mxu0 0.0
        %4373 = vmatprep.subr.mxu0 0.0
        %4374 = vmatpush1.xpose.msra.mxu0 0.0
        %4375 = vmatprep.subr.mxu0 0.0
        %4376 = vmatpush1.xpose.msra.mxu0 0.0
        %4377 = vmatprep.subr.mxu0 0.0
        %4378 = vmatpush1.xpose.msra.mxu0 0.0
        %4379 = vmatprep.subr.mxu0 0.0
        %4380 = vmatpush1.xpose.msra.mxu0 0.0
        %4381 = vmatprep.mubr.f32.mxu0 %v3946
        %4382 = vmatmul.mubr.f32.gmra.mrb[0].mxu0 %v3945
        %v4383 = vpop.f32.mrb[0].mxu0
        %v4384 = vadd.f32 %v3964, %v4383
        %v4385 = vpop.f32.mrb[0].mxu0
        %4386 = vdwg.mxu0
        %4387 = vmatprep.subr.mxu0 %v3872
        %4388 = vmatpush1.xpose.msra.mxu0 %v3871
        %4389 = vmatprep.subr.mxu0 %v3874
        %4390 = vmatpush1.xpose.msra.mxu0 %v3873
        %4391 = vmatprep.subr.mxu0 %v3876
        %4392 = vmatpush1.xpose.msra.mxu0 %v3875
        %4393 = vmatprep.subr.mxu0 %v3878
        %4394 = vmatpush1.xpose.msra.mxu0 %v3877
        %4395 = vmatprep.subr.mxu0 %v3880
        %4396 = vmatpush1.xpose.msra.mxu0 %v3879
        %4397 = vmatprep.subr.mxu0 %v3882
        %4398 = vmatpush1.xpose.msra.mxu0 %v3881
        %4399 = vmatprep.subr.mxu0 %v3884
        %4400 = vmatpush1.xpose.msra.mxu0 %v3883
        %4401 = vmatprep.subr.mxu0 %v3886
        %4402 = vmatpush1.xpose.msra.mxu0 %v3885
        %4403 = vmatprep.subr.mxu0 %v3888
        %4404 = vmatpush1.xpose.msra.mxu0 %v3887
        %4405 = vmatprep.subr.mxu0 %v3890
        %4406 = vmatpush1.xpose.msra.mxu0 %v3889
        %4407 = vmatprep.subr.mxu0 %v3892
        %4408 = vmatpush1.xpose.msra.mxu0 %v3891
        %4409 = vmatprep.subr.mxu0 %v3894
        %4410 = vmatpush1.xpose.msra.mxu0 %v3893
        %4411 = vmatprep.subr.mxu0 %v3896
        %4412 = vmatpush1.xpose.msra.mxu0 %v3895
        %4413 = vmatprep.subr.mxu0 %v3898
        %4414 = vmatpush1.xpose.msra.mxu0 %v3897
        %4415 = vmatprep.subr.mxu0 %v3900
        %4416 = vmatpush1.xpose.msra.mxu0 %v3899
        %4417 = vmatprep.subr.mxu0 %v3902
        %4418 = vmatpush1.xpose.msra.mxu0 %v3901
        %4419 = vmatprep.subr.mxu0 0.0
        %4420 = vmatpush1.xpose.msra.mxu0 0.0
        %4421 = vmatprep.subr.mxu0 0.0
        %4422 = vmatpush1.xpose.msra.mxu0 0.0
        %4423 = vmatprep.subr.mxu0 0.0
        %4424 = vmatpush1.xpose.msra.mxu0 0.0
        %4425 = vmatprep.subr.mxu0 0.0
        %4426 = vmatpush1.xpose.msra.mxu0 0.0
        %4427 = vmatprep.subr.mxu0 0.0
        %4428 = vmatpush1.xpose.msra.mxu0 0.0
        %4429 = vmatprep.subr.mxu0 0.0
        %4430 = vmatpush1.xpose.msra.mxu0 0.0
        %4431 = vmatprep.subr.mxu0 0.0
        %4432 = vmatpush1.xpose.msra.mxu0 0.0
        %4433 = vmatprep.subr.mxu0 0.0
        %4434 = vmatpush1.xpose.msra.mxu0 0.0
        %4435 = vmatprep.subr.mxu0 0.0
        %4436 = vmatpush1.xpose.msra.mxu0 0.0
        %4437 = vmatprep.subr.mxu0 0.0
        %4438 = vmatpush1.xpose.msra.mxu0 0.0
        %4439 = vmatprep.subr.mxu0 0.0
        %4440 = vmatpush1.xpose.msra.mxu0 0.0
        %4441 = vmatprep.subr.mxu0 0.0
        %4442 = vmatpush1.xpose.msra.mxu0 0.0
        %4443 = vmatprep.subr.mxu0 0.0
        %4444 = vmatpush1.xpose.msra.mxu0 0.0
        %4445 = vmatprep.subr.mxu0 0.0
        %4446 = vmatpush1.xpose.msra.mxu0 0.0
        %4447 = vmatprep.subr.mxu0 0.0
        %4448 = vmatpush1.xpose.msra.mxu0 0.0
        %4449 = vmatprep.subr.mxu0 0.0
        %4450 = vmatpush1.xpose.msra.mxu0 0.0
        %4451 = vmatprep.mubr.f32.mxu0 %v3948
        %4452 = vmatmul.mubr.f32.gmra.mrb[0].mxu0 %v3947
        %v4453 = vpop.f32.mrb[0].mxu0
        %v4454 = vadd.f32 %v3965, %v4453
        %v4455 = vpop.f32.mrb[0].mxu0
        %4456 = vdwg.mxu0
        %4457 = vmatprep.subr.mxu0 %v3904
        %4458 = vmatpush1.xpose.msra.mxu0 %v3903
        %4459 = vmatprep.subr.mxu0 %v3906
        %4460 = vmatpush1.xpose.msra.mxu0 %v3905
        %4461 = vmatprep.subr.mxu0 %v3908
        %4462 = vmatpush1.xpose.msra.mxu0 %v3907
        %4463 = vmatprep.subr.mxu0 %v3910
        %4464 = vmatpush1.xpose.msra.mxu0 %v3909
        %4465 = vmatprep.subr.mxu0 %v3912
        %4466 = vmatpush1.xpose.msra.mxu0 %v3911
        %4467 = vmatprep.subr.mxu0 %v3914
        %4468 = vmatpush1.xpose.msra.mxu0 %v3913
        %4469 = vmatprep.subr.mxu0 %v3916
        %4470 = vmatpush1.xpose.msra.mxu0 %v3915
        %4471 = vmatprep.subr.mxu0 %v3918
        %4472 = vmatpush1.xpose.msra.mxu0 %v3917
        %4473 = vmatprep.subr.mxu0 %v3920
        %4474 = vmatpush1.xpose.msra.mxu0 %v3919
        %4475 = vmatprep.subr.mxu0 %v3922
        %4476 = vmatpush1.xpose.msra.mxu0 %v3921
        %4477 = vmatprep.subr.mxu0 %v3924
        %4478 = vmatpush1.xpose.msra.mxu0 %v3923
        %4479 = vmatprep.subr.mxu0 %v3926
        %4480 = vmatpush1.xpose.msra.mxu0 %v3925
        %4481 = vmatprep.subr.mxu0 %v3928
        %4482 = vmatpush1.xpose.msra.mxu0 %v3927
        %4483 = vmatprep.subr.mxu0 %v3930
        %4484 = vmatpush1.xpose.msra.mxu0 %v3929
        %4485 = vmatprep.subr.mxu0 %v3932
        %4486 = vmatpush1.xpose.msra.mxu0 %v3931
        %4487 = vmatprep.subr.mxu0 %v3934
        %4488 = vmatpush1.xpose.msra.mxu0 %v3933
        %4489 = vmatprep.subr.mxu0 0.0
        %4490 = vmatpush1.xpose.msra.mxu0 0.0
        %4491 = vmatprep.subr.mxu0 0.0
        %4492 = vmatpush1.xpose.msra.mxu0 0.0
        %4493 = vmatprep.subr.mxu0 0.0
        %4494 = vmatpush1.xpose.msra.mxu0 0.0
        %4495 = vmatprep.subr.mxu0 0.0
        %4496 = vmatpush1.xpose.msra.mxu0 0.0
        %4497 = vmatprep.subr.mxu0 0.0
        %4498 = vmatpush1.xpose.msra.mxu0 0.0
        %4499 = vmatprep.subr.mxu0 0.0
        %4500 = vmatpush1.xpose.msra.mxu0 0.0
        %4501 = vmatprep.subr.mxu0 0.0
        %4502 = vmatpush1.xpose.msra.mxu0 0.0
        %4503 = vmatprep.subr.mxu0 0.0
        %4504 = vmatpush1.xpose.msra.mxu0 0.0
        %4505 = vmatprep.subr.mxu0 0.0
        %4506 = vmatpush1.xpose.msra.mxu0 0.0
        %4507 = vmatprep.subr.mxu0 0.0
        %4508 = vmatpush1.xpose.msra.mxu0 0.0
        %4509 = vmatprep.subr.mxu0 0.0
        %4510 = vmatpush1.xpose.msra.mxu0 0.0
        %4511 = vmatprep.subr.mxu0 0.0
        %4512 = vmatpush1.xpose.msra.mxu0 0.0
        %4513 = vmatprep.subr.mxu0 0.0
        %4514 = vmatpush1.xpose.msra.mxu0 0.0
        %4515 = vmatprep.subr.mxu0 0.0
        %4516 = vmatpush1.xpose.msra.mxu0 0.0
        %4517 = vmatprep.subr.mxu0 0.0
        %4518 = vmatpush1.xpose.msra.mxu0 0.0
        %4519 = vmatprep.subr.mxu0 0.0
        %4520 = vmatpush1.xpose.msra.mxu0 0.0
        %4521 = vmatprep.mubr.f32.mxu0 %v3950
        %4522 = vmatmul.mubr.f32.gmra.mrb[0].mxu0 %v3949
        %v4523 = vpop.f32.mrb[0].mxu0
        %v4524 = vadd.f32 %v3966, %v4523
        %v4525 = vpop.f32.mrb[0].mxu0
        %4526 = vdwg.mxu0
        %v4527 = vld [vmem:[%s3] sm:$0xf]
        %v4528 = vld [vmem:[%s3 + $0x4] sm:$0xf]
        %v4529 = vld [vmem:[%s3 + $0x8] sm:$0xf]
        %v4530 = vld [vmem:[%s3 + $0xc] sm:$0xf]
        %v4531 = vld [vmem:[%s3 + $0x10] sm:$0xf]
        %v4532 = vld [vmem:[%s3 + $0x14] sm:$0xf]
        %v4533 = vld [vmem:[%s3 + $0x18] sm:$0xf]
        %v4534 = vld [vmem:[%s3 + $0x1c] sm:$0xf]
        %v4535 = vpack.c.bf16 %v4104, %v4034
        %v4536 = vpack.c.bf16 %v4244, %v4174
        %v4537 = vpack.c.bf16 %v4384, %v4314
        %v4538 = vpack.c.bf16 %v4524, %v4454
        %v4539 = vld [vmem:[%s4] sm:$0xff]
        %v4540 = vld [vmem:[%s4 + $0x8] sm:$0xff]
        %v4541 = vld [vmem:[%s4 + $0x10] sm:$0xff]
        %v4542 = vld [vmem:[%s4 + $0x18] sm:$0xff]
        %v4543 = vld [vmem:[%s4 + $0x20] sm:$0xff]
        %v4544 = vld [vmem:[%s4 + $0x28] sm:$0xff]
        %v4545 = vld [vmem:[%s4 + $0x30] sm:$0xff]
        %v4546 = vld [vmem:[%s4 + $0x38] sm:$0xff]
        %4548 = vset.pattern.permute.xlu0 0
        %4549 = vperm.xlu0 %4548, %v4539
        %v4550 = vpop.permute.xlu0 %4549
        %4553 = vset.pattern.permute.xlu0 0
        %4554 = vperm.xlu0 %4553, %v4540
        %v4555 = vpop.permute.xlu0 %4554
        %4558 = vset.pattern.permute.xlu0 0
        %4559 = vperm.xlu0 %4558, %v4541
        %v4560 = vpop.permute.xlu0 %4559
        %4563 = vset.pattern.permute.xlu0 0
        %4564 = vperm.xlu0 %4563, %v4542
        %v4565 = vpop.permute.xlu0 %4564
        %4568 = vset.pattern.permute.xlu0 0
        %4569 = vperm.xlu0 %4568, %v4543
        %v4570 = vpop.permute.xlu0 %4569
        %4573 = vset.pattern.permute.xlu0 0
        %4574 = vperm.xlu0 %4573, %v4544
        %v4575 = vpop.permute.xlu0 %4574
        %4578 = vset.pattern.permute.xlu0 0
        %4579 = vperm.xlu0 %4578, %v4545
        %v4580 = vpop.permute.xlu0 %4579
        %4583 = vset.pattern.permute.xlu0 0
        %4584 = vperm.xlu0 %4583, %v4546
        %v4585 = vpop.permute.xlu0 %4584
        %v4595 = vunpack.c.l.b16 %v4527
        %v4596 = vunpack.c.l.b16 %v4528
        %v4597 = vunpack.c.l.b16 %v4529
        %v4598 = vunpack.c.l.b16 %v4530
        %v4599 = vunpack.c.l.b16 %v4531
        %v4600 = vunpack.c.l.b16 %v4532
        %v4601 = vunpack.c.l.b16 %v4533
        %v4602 = vunpack.c.l.b16 %v4534
        %v4603 = vpack.c.b16 %v4596, %v4595
        %v4604 = vpack.c.b16 %v4598, %v4597
        %v4605 = vpack.c.b16 %v4600, %v4599
        %v4606 = vpack.c.b16 %v4602, %v4601
        %vm4607 = vcmask 523264
        %v4609 = vsel %vm4607, %v4603, 0
        %v4612 = vsel %vm4607, %v4604, 0
        %v4615 = vsel %vm4607, %v4605, 0
        %v4618 = vsel %vm4607, %v4606, 0
        %4620 = vmatprep.subr.bf16.mxu0 0
        %4621 = vmatpush1.bf16.msra.mxu0 %v4535
        %4622 = vmatprep.subr.bf16.mxu0 0
        %4623 = vmatpush1.bf16.msra.mxu0 %v4536
        %4624 = vmatprep.subr.bf16.mxu0 0
        %4625 = vmatpush1.bf16.msra.mxu0 %v4537
        %4626 = vmatprep.subr.bf16.mxu0 0
        %4627 = vmatpush1.bf16.msra.mxu0 %v4538
        %4628 = vmatprep.subr.bf16.mxu0 0
        %4629 = vmatpush1.bf16.msra.mxu0 0
        %4630 = vmatprep.subr.bf16.mxu0 0
        %4631 = vmatpush1.bf16.msra.mxu0 0
        %4632 = vmatprep.subr.bf16.mxu0 0
        %4633 = vmatpush1.bf16.msra.mxu0 0
        %4634 = vmatprep.subr.bf16.mxu0 0
        %4635 = vmatpush1.bf16.msra.mxu0 0
        %4636 = vmatprep.subr.bf16.mxu0 0
        %4637 = vmatpush1.bf16.msra.mxu0 0
        %4638 = vmatprep.subr.bf16.mxu0 0
        %4639 = vmatpush1.bf16.msra.mxu0 0
        %4640 = vmatprep.subr.bf16.mxu0 0
        %4641 = vmatpush1.bf16.msra.mxu0 0
        %4642 = vmatprep.subr.bf16.mxu0 0
        %4643 = vmatpush1.bf16.msra.mxu0 0
        %4644 = vmatprep.subr.bf16.mxu0 0
        %4645 = vmatpush1.bf16.msra.mxu0 0
        %4646 = vmatprep.subr.bf16.mxu0 0
        %4647 = vmatpush1.bf16.msra.mxu0 0
        %4648 = vmatprep.subr.bf16.mxu0 0
        %4649 = vmatpush1.bf16.msra.mxu0 0
        %4650 = vmatprep.subr.bf16.mxu0 0
        %4651 = vmatpush1.bf16.msra.mxu0 0
        %4652 = vmatprep.mubr.bf16.mxu0 0
        %4653 = vmatmul.mubr.bf16.gmra.mrb[0].mxu0 %v4609
        %v4654 = vpop.f32.mrb[0].mxu0
        %v4655 = vadd.f32 %v4550, %v4654
        %v4656 = vpop.f32.mrb[0].mxu0
        %v4657 = vpop.f32.mrb[0].mxu0
        %v4658 = vadd.f32 %v4555, %v4657
        %v4659 = vpop.f32.mrb[0].mxu0
        %4660 = vmatprep.mubr.bf16.mxu0 0
        %4661 = vmatmul.mubr.bf16.gmra.mrb[0].mxu0 %v4612
        %v4662 = vpop.f32.mrb[0].mxu0
        %v4663 = vadd.f32 %v4560, %v4662
        %v4664 = vpop.f32.mrb[0].mxu0
        %v4665 = vpop.f32.mrb[0].mxu0
        %v4666 = vadd.f32 %v4565, %v4665
        %v4667 = vpop.f32.mrb[0].mxu0
        %4668 = vmatprep.mubr.bf16.mxu0 0
        %4669 = vmatmul.mubr.bf16.gmra.mrb[0].mxu0 %v4615
        %v4670 = vpop.f32.mrb[0].mxu0
        %v4671 = vadd.f32 %v4570, %v4670
        %v4672 = vpop.f32.mrb[0].mxu0
        %v4673 = vpop.f32.mrb[0].mxu0
        %v4674 = vadd.f32 %v4575, %v4673
        %v4675 = vpop.f32.mrb[0].mxu0
        %4676 = vmatprep.mubr.bf16.mxu0 0
        %4677 = vmatmul.mubr.bf16.gmra.mrb[0].mxu0 %v4618
        %v4678 = vpop.f32.mrb[0].mxu0
        %v4679 = vadd.f32 %v4580, %v4678
        %v4680 = vpop.f32.mrb[0].mxu0
        %v4681 = vpop.f32.mrb[0].mxu0
        %v4682 = vadd.f32 %v4585, %v4681
        %v4683 = vpop.f32.mrb[0].mxu0
        %4684 = vdwg.mxu0
        %4685 = vst [vmem:[%s413] sm:$0xff] %v4655
        %4686 = vst [vmem:[%s413 + $0x8] sm:$0xff] %v4658
        %4687 = vst [vmem:[%s413 + $0x10] sm:$0xff] %v4663
        %4688 = vst [vmem:[%s413 + $0x18] sm:$0xff] %v4666
        %4689 = vst [vmem:[%s413 + $0x20] sm:$0xff] %v4671
        %4690 = vst [vmem:[%s413 + $0x28] sm:$0xff] %v4674
        %4691 = vst [vmem:[%s413 + $0x30] sm:$0xff] %v4679
        %4692 = vst [vmem:[%s413 + $0x38] sm:$0xff] %v4682
        %s4693 = sand.u32 %s162, 1
        %s4694 = sand.u32 %s162, 1
        %s4695 = smul.addr %s4694, 64
        %s4696 = scalar_lea.vmem [#allocation4], %s4695
        // Predicated region
        $region123: #{dattention_forward.7} parent=113 // pred_check
          %p4697 = pneg %p172
        $region124: #{dattention_forward.7} parent=113 // pred_check_branch
          %4699 = sbr.rel (%p4697) target = $region126
        $region125: #{dattention_forward.7} parent=113 // pred_region
          %s4700 = smul.addr %s20, 16
          %s4701 = sadd.s32 %s21, %s4700
          %s4702 = smul.addr %s4701, 8
          %s4703 = scalar_lea.vmem %s5, %s4702
          // Predicated region
          $region127: #{dattention_forward.7} parent=125 // pred_check
            _
          $region128: #{dattention_forward.7} parent=125 // pred_check_branch
            %4705 = sbr.rel (0) target = $region130
          $region129: #{dattention_forward.7} parent=125 // pred_region
            // Predicated region
            $region131: #{dattention_forward.7} parent=129 // pred_check
              _
            $region132: #{dattention_forward.7} parent=129 // pred_check_branch
              %4707 = sbr.rel (0) target = $region134
            $region133: #{dattention_forward.7} parent=129 // pred_region
              // Predicated region
              $region146: #{dattention_forward.7} parent=133 // pred_check
                _
              $region147: #{dattention_forward.7} parent=133 // pred_check_branch
                %4736 = sbr.rel (0) target = $region149
              $region148: #{dattention_forward.7} parent=133 // pred_region
                loop: start=0, step=1, limit=1
                $region150: #{dattention_forward.7} parent=148 // loop_pre_header
                  _
                $region151: #{dattention_forward.7} parent=148 // loop_header
                  %s4738 = sphi 0, %s4742
                  %p4739 = scmp.ge.s32.totalorder %s4738, 1
                  %s4743 = sphi %s4696, %s4696
                  %s4744 = sphi %s4703, %s4703
                $region152: #{dattention_forward.7} parent=148 // loop_header_branch
                  %4741 = sbr.rel (%p4739) target = $region156
                $region153: #{dattention_forward.7} parent=148 // loop_body
                  %v4745 = vld [vmem:[%s4743] sm:$0xff]
                  %4746 = vst [vmem:[%s4744] sm:$0xff] %v4745
                  %v4747 = vld [vmem:[%s4743 + $0x8] sm:$0xff]
                  %4748 = vst [vmem:[%s4744 + $0x10] sm:$0xff] %v4747
                  %v4749 = vld [vmem:[%s4743 + $0x10] sm:$0xff]
                  %4750 = vst [vmem:[%s4744 + $0x20] sm:$0xff] %v4749
                  %v4751 = vld [vmem:[%s4743 + $0x18] sm:$0xff]
                  %4752 = vst [vmem:[%s4744 + $0x30] sm:$0xff] %v4751
                  %v4753 = vld [vmem:[%s4743 + $0x20] sm:$0xff]
                  %4754 = vst [vmem:[%s4744 + $0x40] sm:$0xff] %v4753
                  %v4755 = vld [vmem:[%s4743 + $0x28] sm:$0xff]
                  %4756 = vst [vmem:[%s4744 + $0x50] sm:$0xff] %v4755
                  %v4757 = vld [vmem:[%s4743 + $0x30] sm:$0xff]
                  %4758 = vst [vmem:[%s4744 + $0x60] sm:$0xff] %v4757
                  %v4759 = vld [vmem:[%s4743 + $0x38] sm:$0xff]
                  %4760 = vst [vmem:[%s4744 + $0x70] sm:$0xff] %v4759
                $region154: #{dattention_forward.7} parent=148 // loop_footer
                  %s4742 = sadd.s32 1, %s4738
                $region155: #{dattention_forward.7} parent=148 // loop_footer_branch
                  %4737 = sbr.rel target = $region151
                $region156: #{dattention_forward.7} parent=148 // loop_exit
                  _
              $region149: #{dattention_forward.7} parent=133 // pred_fallthru
                _
              // Predicated region
              $region157: #{dattention_forward.7} parent=133 // pred_check
                _
              $region158: #{dattention_forward.7} parent=133 // pred_check_branch
                %4762 = sbr.rel target = $region160
              $region159: #{dattention_forward.7} parent=133 // pred_region
                _
              $region160: #{dattention_forward.7} parent=133 // pred_fallthru
                _
            $region134: #{dattention_forward.7} parent=129 // pred_fallthru
              _
            // Predicated region
            $region135: #{dattention_forward.7} parent=129 // pred_check
              _
            $region136: #{dattention_forward.7} parent=129 // pred_check_branch
              %4709 = sbr.rel target = $region138
            $region137: #{dattention_forward.7} parent=129 // pred_region
              loop: start=0, step=1, limit=1
              $region139: #{dattention_forward.7} parent=137 // loop_pre_header
                _
              $region140: #{dattention_forward.7} parent=137 // loop_header
                %s4712 = sphi 0, %s4716
                %p4713 = scmp.ge.s32.totalorder %s4712, 1
                %s4717 = sphi %s4696, %s4696
                %s4718 = sphi %s4703, %s4703
              $region141: #{dattention_forward.7} parent=137 // loop_header_branch
                %4715 = sbr.rel (%p4713) target = $region145
              $region142: #{dattention_forward.7} parent=137 // loop_body
                %v4719 = vld [vmem:[%s4717] sm:$0xff]
                %4720 = vst [vmem:[%s4718] sm:$0xff] %v4719
                %v4721 = vld [vmem:[%s4717 + $0x8] sm:$0xff]
                %4722 = vst [vmem:[%s4718 + $0x10] sm:$0xff] %v4721
                %v4723 = vld [vmem:[%s4717 + $0x10] sm:$0xff]
                %4724 = vst [vmem:[%s4718 + $0x20] sm:$0xff] %v4723
                %v4725 = vld [vmem:[%s4717 + $0x18] sm:$0xff]
                %4726 = vst [vmem:[%s4718 + $0x30] sm:$0xff] %v4725
                %v4727 = vld [vmem:[%s4717 + $0x20] sm:$0xff]
                %4728 = vst [vmem:[%s4718 + $0x40] sm:$0xff] %v4727
                %v4729 = vld [vmem:[%s4717 + $0x28] sm:$0xff]
                %4730 = vst [vmem:[%s4718 + $0x50] sm:$0xff] %v4729
                %v4731 = vld [vmem:[%s4717 + $0x30] sm:$0xff]
                %4732 = vst [vmem:[%s4718 + $0x60] sm:$0xff] %v4731
                %v4733 = vld [vmem:[%s4717 + $0x38] sm:$0xff]
                %4734 = vst [vmem:[%s4718 + $0x70] sm:$0xff] %v4733
              $region143: #{dattention_forward.7} parent=137 // loop_footer
                %s4716 = sadd.s32 1, %s4712
              $region144: #{dattention_forward.7} parent=137 // loop_footer_branch
                %4711 = sbr.rel target = $region140
              $region145: #{dattention_forward.7} parent=137 // loop_exit
                _
            $region138: #{dattention_forward.7} parent=129 // pred_fallthru
              _
          $region130: #{dattention_forward.7} parent=125 // pred_fallthru
            _
          %4763 = vnop
        $region126: #{dattention_forward.7} parent=113 // pred_fallthru
          _
      $region114: #{dattention_forward.7} parent=5 // pred_fallthru
        _
      %p4764 = scmp.le.s32.totalorder 2, %s11
      // Predicated region
      $region161: #{dattention_forward.7} parent=5 // pred_check
        %p4765 = pneg %p4764
      $region162: #{dattention_forward.7} parent=5 // pred_check_branch
        %4767 = sbr.rel (%p4765) target = $region164
      $region163: #{dattention_forward.7} parent=5 // pred_region
        %s4768 = ssub.s32 %s11, 2
        // Predicated region
        $region165: #{dattention_forward.7} parent=163 // pred_check
          %p4769 = pneg %p178
        $region166: #{dattention_forward.7} parent=163 // pred_check_branch
          %4771 = sbr.rel (%p4769) target = $region168
        $region167: #{dattention_forward.7} parent=163 // pred_region
          %s4772 = sand.u32 %s163, 1
          %s4773 = sand.u32 %s163, 1
          %s4774 = smul.addr %s4773, 64
          %s4775 = scalar_lea.vmem [#allocation4], %s4774
        $region168: #{dattention_forward.7} parent=163 // pred_fallthru
          _
      $region164: #{dattention_forward.7} parent=5 // pred_fallthru
        _
    $region6: #{dattention_forward.7} parent=1 // loop_footer
      %s15 = sadd.s32 1, %s11
    $region7: #{dattention_forward.7} parent=1 // loop_footer_branch
      %10 = sbr.rel target = $region3
    $region8: #{dattention_forward.7} parent=1 // loop_exit
      _

</llo_original>
